<compile_context>
chip_gen: v5e
topology: v5e:2x2
jax: 0.10.0
libtpu: 0.0.40
codegen_flags: <defaults>
</compile_context>

<pallas_src>
import jax
import jax.numpy as jnp
from jax.experimental import pallas as pl
from jax.experimental.pallas import tpu as pltpu


# ---------------------------------------------------------------------------
# Fused kernel: one batch element per grid step.
#
# Input layout (prepared in the wrapper from NCHW, one tiny reshape):
#   xe_ref: (1, 28, 7, 12)  row h, even-output-column windows: [m, kw*3+c] = x[h, 4m+kw,   c]
#   xo_ref: (1, 28, 6, 12)  row h, odd -output-column windows: [m, kw*3+c] = x[h, 4m+2+kw, c]
# Weights (pre-transformed once in prepare_params):
#   w1: (48, 32)   rows ordered (kh, kw, cin), already divided by 255
#   w2: (288, 64)  rows ordered (kh, kw, cin)
#   w3: (2304,512) rows permuted to the kernel's (oh, ow, c) flatten order
#   w4: (512, 128) zero-padded from (512, 64)  (lane-dense output)
# ---------------------------------------------------------------------------
def _cnn_kernel(xe_ref, xo_ref, w1_ref, b1_ref, w2_ref, b2_ref,
                w3_ref, b3_ref, w4_ref, b4_ref, o_ref,
                h1e_ref, h1o_ref, flat_ref):
    # ---- conv1 (stride 2, k=4) + ReLU; /255 is folded into w1 ----------------
    w1 = w1_ref[...]                                   # (48, 32)
    b1 = b1_ref[...]                                   # (1, 32)
    for oh in range(13):
        pe = [xe_ref[0, 2 * oh + kh] for kh in range(4)]   # 4 x (7, 12)
        po = [xo_ref[0, 2 * oh + kh] for kh in range(4)]   # 4 x (6, 12)
        lhs_e = jnp.concatenate(pe, axis=1)                # (7, 48)  even output cols
        lhs_o = jnp.concatenate(po, axis=1)                # (6, 48)  odd  output cols
        acc_e = jnp.dot(lhs_e, w1, preferred_element_type=jnp.float32) + b1
        acc_o = jnp.dot(lhs_o, w1, preferred_element_type=jnp.float32) + b1
        h1e_ref[oh] = jnp.maximum(acc_e, 0.0)              # h1[oh, 0::2, :]
        h1o_ref[oh] = jnp.maximum(acc_o, 0.0)              # h1[oh, 1::2, :]

    # ---- conv2 (stride 2, k=3) + ReLU; writes the flattened activation -------
    w2 = w2_ref[...]                                   # (288, 64)
    b2 = b2_ref[...]                                   # (1, 64)
    for oh in range(6):
        blocks = []
        for kh in range(3):
            r = 2 * oh + kh
            e = h1e_ref[r]                             # (7, 32)  even columns of h1 row r
            o = h1o_ref[r]                             # (6, 32)  odd  columns of h1 row r
            # columns 2*ow+kw for kw = 0, 1, 2  ->  [even ow.., odd ow.., even (ow+1)..]
            blocks += [e[0:6, :], o, e[1:7, :]]
        lhs = jnp.concatenate(blocks, axis=1)          # (6, 288)
        row = jnp.dot(lhs, w2, preferred_element_type=jnp.float32) + b2
        row = jnp.maximum(row, 0.0)                    # (6, 64)
        # Flatten order (oh, ow, c); w3 rows were permuted to match this order.
        for ow in range(6):
            c0 = (oh * 6 + ow) * 64
            flat_ref[0:1, c0:c0 + 64] = row[ow:ow + 1, :]

    # ---- linear1 + ReLU -------------------------------------------------------
    h3 = jnp.dot(flat_ref[...], w3_ref[...],
                 preferred_element_type=jnp.float32) + b3_ref[...]
    h3 = jnp.maximum(h3, 0.0)                          # (1, 512)

    # ---- linear2 (lane-dense, N padded to 128) --------------------------------
    y = jnp.dot(h3, w4_ref[...], preferred_element_type=jnp.float32) + b4_ref[...]
    o_ref[0] = y                                       # (1, 128)


def _compiler_params():
    cls = getattr(pltpu, "CompilerParams", None) or getattr(pltpu, "TPUCompilerParams", None)
    if cls is None:
        return None
    return cls(dimension_semantics=("parallel",))


def cnn_forward(kp, x_nchw):
    """kp: kernel-layout params (see prepare_params). x_nchw: (B, 3, 28, 28) f32."""
    B = x_nchw.shape[0]
    # Single tiny layout op on the input (19 KB); everything else runs inside
    # the fused Pallas kernel.
    x_rows = jnp.transpose(x_nchw, (0, 2, 3, 1)).reshape(B, 28, 84)   # (W, C) flattened per row
    x_even = x_rows.reshape(B, 28, 7, 12)                 # windows starting at even columns
    x_odd = x_rows[:, :, 6:78].reshape(B, 28, 6, 12)      # windows starting at odd columns

    grid_spec = pltpu.PrefetchScalarGridSpec(
        num_scalar_prefetch=0,
        grid=(B,),
        in_specs=[
            pl.BlockSpec((1, 28, 7, 12), lambda b: (b, 0, 0, 0)),
            pl.BlockSpec((1, 28, 6, 12), lambda b: (b, 0, 0, 0)),
            pl.BlockSpec((48, 32), lambda b: (0, 0)),
            pl.BlockSpec((1, 32), lambda b: (0, 0)),
            pl.BlockSpec((288, 64), lambda b: (0, 0)),
            pl.BlockSpec((1, 64), lambda b: (0, 0)),
            pl.BlockSpec((2304, 512), lambda b: (0, 0)),
            pl.BlockSpec((1, 512), lambda b: (0, 0)),
            pl.BlockSpec((512, 128), lambda b: (0, 0)),
            pl.BlockSpec((1, 128), lambda b: (0, 0)),
        ],
        out_specs=pl.BlockSpec((1, 1, 128), lambda b: (b, 0, 0)),
        scratch_shapes=[
            pltpu.VMEM((13, 7, 32), jnp.float32),   # h1 even output columns
            pltpu.VMEM((13, 6, 32), jnp.float32),   # h1 odd output columns
            pltpu.VMEM((1, 2304), jnp.float32),     # flattened conv2 output
        ],
    )
    out = pl.pallas_call(
        _cnn_kernel,
        out_shape=jax.ShapeDtypeStruct((B, 1, 128), jnp.float32),
        grid_spec=grid_spec,
        compiler_params=_compiler_params(),
    )(x_even, x_odd, kp["w1"], kp["b1"], kp["w2"], kp["b2"],
      kp["w3"], kp["b3"], kp["w4"], kp["b4"])
    return out[:, 0, :64]


# ---------------------------------------------------------------------------
# Parameters (PyTorch layout) and one-time kernel-layout preparation.
# ---------------------------------------------------------------------------
def init_params(key):
    ks = jax.random.split(key, 8)

    def init(k, shape, fan_in):
        return jax.random.normal(k, shape, jnp.float32) / jnp.sqrt(float(fan_in))

    return {
        "w1": init(ks[0], (32, 3, 4, 4), 3 * 4 * 4),    # conv1 weight (OIHW)
        "b1": init(ks[1], (32,), 3 * 4 * 4),
        "w2": init(ks[2], (64, 32, 3, 3), 32 * 3 * 3),  # conv2 weight (OIHW)
        "b2": init(ks[3], (64,), 32 * 3 * 3),
        "w3": init(ks[4], (2304, 512), 2304),           # linear1 (in, out)
        "b3": init(ks[5], (512,), 2304),
        "w4": init(ks[6], (512, 64), 512),              # linear2 (in, out)
        "b4": init(ks[7], (64,), 512),
    }


def prepare_params(p):
    """One-time weight transforms: fold 1/255, im2col ordering, w3 row permute, lane-pad w4."""
    w1 = jnp.transpose(p["w1"], (2, 3, 1, 0)).reshape(48, 32) * (1.0 / 255.0)  # (kh,kw,cin)->rows
    w2 = jnp.transpose(p["w2"], (2, 3, 1, 0)).reshape(288, 64)                 # (kh,kw,cin)->rows
    # PyTorch flatten is (c, oh, ow); kernel flatten is (oh, ow, c) -> permute rows once.
    w3 = p["w3"].reshape(64, 6, 6, 512).transpose(1, 2, 0, 3).reshape(2304, 512)
    w4 = jnp.zeros((512, 128), jnp.float32).at[:, :64].set(p["w4"])
    b4 = jnp.zeros((1, 128), jnp.float32).at[0, :64].set(p["b4"])
    return {
        "w1": w1, "b1": p["b1"].reshape(1, 32),
        "w2": w2, "b2": p["b2"].reshape(1, 64),
        "w3": w3, "b3": p["b3"].reshape(1, 512),
        "w4": w4, "b4": b4,
    }


def cnn_reference(p, x_nchw):
    """Pure-JAX reference (mirrors the PyTorch module) for correctness checking."""
    x = x_nchw / 255.0
    y = jax.lax.conv_general_dilated(
        x, p["w1"], window_strides=(2, 2), padding="VALID",
        dimension_numbers=("NCHW", "OIHW", "NCHW"),
        precision=jax.lax.Precision.HIGHEST)
    y = jax.nn.relu(y + p["b1"].reshape(1, -1, 1, 1))
    y = jax.lax.conv_general_dilated(
        y, p["w2"], window_strides=(2, 2), padding="VALID",
        dimension_numbers=("NCHW", "OIHW", "NCHW"),
        precision=jax.lax.Precision.HIGHEST)
    y = jax.nn.relu(y + p["b2"].reshape(1, -1, 1, 1))
    y = y.reshape(y.shape[0], -1)                      # (B, 2304) in (c, h, w) order
    y = jax.nn.relu(y @ p["w3"] + p["b3"])
    return y @ p["w4"] + p["b4"]


if __name__ == "__main__":
    key = jax.random.PRNGKey(0)
    kx, kp = jax.random.split(key)

    # Batch=2, 3 channels, 28x28 spatial (forced by the hardcoded 2304 flatten).
    x = jax.random.uniform(kx, (2, 3, 28, 28), jnp.float32, 0.0, 255.0)
    params = init_params(kp)
    kparams = prepare_params(params)

    out = jax.block_until_ready(jax.jit(cnn_forward)(kparams, x))
    assert out.shape == (2, 64) and out.dtype == jnp.float32

    ref = jax.block_until_ready(cnn_reference(params, x))
    err = float(jnp.max(jnp.abs(out - ref)))
    assert err < 2e-3, f"kernel/reference mismatch: {err}"
    print("KERNEL_OK")
</pallas_src>

<mosaic_0001>
module attributes {stable_mosaic.version = 11 : i64} {
  func.func @_cnn_kernel(%arg0: i32, %arg1: memref<1x28x7x12xf32, #tpu.memory_space<vmem>>, %arg2: memref<1x28x6x12xf32, #tpu.memory_space<vmem>>, %arg3: memref<48x32xf32, #tpu.memory_space<vmem>>, %arg4: memref<1x32xf32, #tpu.memory_space<vmem>>, %arg5: memref<288x64xf32, #tpu.memory_space<vmem>>, %arg6: memref<1x64xf32, #tpu.memory_space<vmem>>, %arg7: memref<2304x512xf32, #tpu.memory_space<vmem>>, %arg8: memref<1x512xf32, #tpu.memory_space<vmem>>, %arg9: memref<512x128xf32, #tpu.memory_space<vmem>>, %arg10: memref<1x128xf32, #tpu.memory_space<vmem>>, %arg11: memref<1x1x128xf32, #tpu.memory_space<vmem>>, %arg12: memref<13x7x32xf32, #tpu.memory_space<vmem>>, %arg13: memref<13x6x32xf32, #tpu.memory_space<vmem>>, %arg14: memref<1x2304xf32, #tpu.memory_space<vmem>>) attributes {dimension_semantics = [#tpu.dimension_semantics<parallel>], iteration_bounds = array<i64: 2>, scalar_prefetch = 0 : i64, scratch_operands = 3 : i64, tpu.core_type = #tpu.core_type<tc>, window_params = [{transform_indices = @transform_0, window_bounds = array<i64: 1, 28, 7, 12>}, {transform_indices = @transform_1, window_bounds = array<i64: 1, 28, 6, 12>}, {pipeline_mode = #tpu.pipeline_mode<synchronous>, transform_indices = @transform_2, window_bounds = array<i64: 48, 32>}, {pipeline_mode = #tpu.pipeline_mode<synchronous>, transform_indices = @transform_3, window_bounds = array<i64: 1, 32>}, {pipeline_mode = #tpu.pipeline_mode<synchronous>, transform_indices = @transform_4, window_bounds = array<i64: 288, 64>}, {pipeline_mode = #tpu.pipeline_mode<synchronous>, transform_indices = @transform_5, window_bounds = array<i64: 1, 64>}, {pipeline_mode = #tpu.pipeline_mode<synchronous>, transform_indices = @transform_6, window_bounds = array<i64: 2304, 512>}, {pipeline_mode = #tpu.pipeline_mode<synchronous>, transform_indices = @transform_7, window_bounds = array<i64: 1, 512>}, {pipeline_mode = #tpu.pipeline_mode<synchronous>, transform_indices = @transform_8, window_bounds = array<i64: 512, 128>}, {pipeline_mode = #tpu.pipeline_mode<synchronous>, transform_indices = @transform_9, window_bounds = array<i64: 1, 128>}, {transform_indices = @transform_10, window_bounds = array<i64: 1, 1, 128>}]} {
    %c0 = arith.constant 0 : index
    %c0_0 = arith.constant 0 : index
    %0 = vector.load %arg3[%c0, %c0_0] : memref<48x32xf32, #tpu.memory_space<vmem>>, vector<48x32xf32>
    %c0_1 = arith.constant 0 : index
    %c0_2 = arith.constant 0 : index
    %1 = vector.load %arg4[%c0_1, %c0_2] : memref<1x32xf32, #tpu.memory_space<vmem>>, vector<1x32xf32>
    %c0_3 = arith.constant 0 : index
    %c0_4 = arith.constant 0 : index
    %c0_5 = arith.constant 0 : index
    %c0_6 = arith.constant 0 : index
    %2 = vector.load %arg1[%c0_3, %c0_4, %c0_5, %c0_6] : memref<1x28x7x12xf32, #tpu.memory_space<vmem>>, vector<1x1x7x12xf32>
    %3 = vector.shape_cast %2 : vector<1x1x7x12xf32> to vector<7x12xf32>
    %c0_7 = arith.constant 0 : index
    %c1 = arith.constant 1 : index
    %c0_8 = arith.constant 0 : index
    %c0_9 = arith.constant 0 : index
    %4 = vector.load %arg1[%c0_7, %c1, %c0_8, %c0_9] : memref<1x28x7x12xf32, #tpu.memory_space<vmem>>, vector<1x1x7x12xf32>
    %5 = vector.shape_cast %4 : vector<1x1x7x12xf32> to vector<7x12xf32>
    %c0_10 = arith.constant 0 : index
    %c2 = arith.constant 2 : index
    %c0_11 = arith.constant 0 : index
    %c0_12 = arith.constant 0 : index
    %6 = vector.load %arg1[%c0_10, %c2, %c0_11, %c0_12] : memref<1x28x7x12xf32, #tpu.memory_space<vmem>>, vector<1x1x7x12xf32>
    %7 = vector.shape_cast %6 : vector<1x1x7x12xf32> to vector<7x12xf32>
    %c0_13 = arith.constant 0 : index
    %c3 = arith.constant 3 : index
    %c0_14 = arith.constant 0 : index
    %c0_15 = arith.constant 0 : index
    %8 = vector.load %arg1[%c0_13, %c3, %c0_14, %c0_15] : memref<1x28x7x12xf32, #tpu.memory_space<vmem>>, vector<1x1x7x12xf32>
    %9 = vector.shape_cast %8 : vector<1x1x7x12xf32> to vector<7x12xf32>
    %c0_16 = arith.constant 0 : index
    %c0_17 = arith.constant 0 : index
    %c0_18 = arith.constant 0 : index
    %c0_19 = arith.constant 0 : index
    %10 = vector.load %arg2[%c0_16, %c0_17, %c0_18, %c0_19] : memref<1x28x6x12xf32, #tpu.memory_space<vmem>>, vector<1x1x6x12xf32>
    %11 = vector.shape_cast %10 : vector<1x1x6x12xf32> to vector<6x12xf32>
    %c0_20 = arith.constant 0 : index
    %c1_21 = arith.constant 1 : index
    %c0_22 = arith.constant 0 : index
    %c0_23 = arith.constant 0 : index
    %12 = vector.load %arg2[%c0_20, %c1_21, %c0_22, %c0_23] : memref<1x28x6x12xf32, #tpu.memory_space<vmem>>, vector<1x1x6x12xf32>
    %13 = vector.shape_cast %12 : vector<1x1x6x12xf32> to vector<6x12xf32>
    %c0_24 = arith.constant 0 : index
    %c2_25 = arith.constant 2 : index
    %c0_26 = arith.constant 0 : index
    %c0_27 = arith.constant 0 : index
    %14 = vector.load %arg2[%c0_24, %c2_25, %c0_26, %c0_27] : memref<1x28x6x12xf32, #tpu.memory_space<vmem>>, vector<1x1x6x12xf32>
    %15 = vector.shape_cast %14 : vector<1x1x6x12xf32> to vector<6x12xf32>
    %c0_28 = arith.constant 0 : index
    %c3_29 = arith.constant 3 : index
    %c0_30 = arith.constant 0 : index
    %c0_31 = arith.constant 0 : index
    %16 = vector.load %arg2[%c0_28, %c3_29, %c0_30, %c0_31] : memref<1x28x6x12xf32, #tpu.memory_space<vmem>>, vector<1x1x6x12xf32>
    %17 = vector.shape_cast %16 : vector<1x1x6x12xf32> to vector<6x12xf32>
    %18 = tpu.concatenate %3, %5, %7, %9 in 1 : vector<7x12xf32>, vector<7x12xf32>, vector<7x12xf32>, vector<7x12xf32> -> vector<7x48xf32>
    %19 = tpu.concatenate %11, %13, %15, %17 in 1 : vector<6x12xf32>, vector<6x12xf32>, vector<6x12xf32>, vector<6x12xf32> -> vector<6x48xf32>
    %cst = arith.constant dense<0.000000e+00> : vector<7x32xf32>
    %20 = tpu.matmul %18, %0, %cst {dimension_numbers = #tpu.dot_dimension_numbers<[1], [0], [0], [1], [0, 0, 1, 1], [], []>} : vector<7x48xf32>, vector<48x32xf32>, vector<7x32xf32> -> vector<7x32xf32>
    %21 = vector.broadcast %1 : vector<1x32xf32> to vector<7x32xf32>
    %22 = arith.addf %20, %21 : vector<7x32xf32>
    %cst_32 = arith.constant dense<0.000000e+00> : vector<6x32xf32>
    %23 = tpu.matmul %19, %0, %cst_32 {dimension_numbers = #tpu.dot_dimension_numbers<[1], [0], [0], [1], [0, 0, 1, 1], [], []>} : vector<6x48xf32>, vector<48x32xf32>, vector<6x32xf32> -> vector<6x32xf32>
    %24 = vector.broadcast %1 : vector<1x32xf32> to vector<6x32xf32>
    %25 = arith.addf %23, %24 : vector<6x32xf32>
    %cst_33 = arith.constant 0.000000e+00 : f32
    %26 = vector.broadcast %cst_33 : f32 to vector<7x32xf32>
    %27 = arith.maximumf %22, %26 : vector<7x32xf32>
    %c0_34 = arith.constant 0 : index
    %c0_35 = arith.constant 0 : index
    %c0_36 = arith.constant 0 : index
    %28 = vector.load %arg12[%c0_34, %c0_35, %c0_36] : memref<13x7x32xf32, #tpu.memory_space<vmem>>, vector<1x7x32xf32>
    %29 = vector.shape_cast %28 : vector<1x7x32xf32> to vector<7x32xf32>
    %30 = vector.shape_cast %27 : vector<7x32xf32> to vector<1x7x32xf32>
    tpu.vector_store %arg12[%c0_34, %c0_35, %c0_36], %30 {strides = array<i32>} : memref<13x7x32xf32, #tpu.memory_space<vmem>>, vector<1x7x32xf32>,
    %cst_37 = arith.constant 0.000000e+00 : f32
    %31 = vector.broadcast %cst_37 : f32 to vector<6x32xf32>
    %32 = arith.maximumf %25, %31 : vector<6x32xf32>
    %c0_38 = arith.constant 0 : index
    %c0_39 = arith.constant 0 : index
    %c0_40 = arith.constant 0 : index
    %33 = vector.load %arg13[%c0_38, %c0_39, %c0_40] : memref<13x6x32xf32, #tpu.memory_space<vmem>>, vector<1x6x32xf32>
    %34 = vector.shape_cast %33 : vector<1x6x32xf32> to vector<6x32xf32>
    %35 = vector.shape_cast %32 : vector<6x32xf32> to vector<1x6x32xf32>
    tpu.vector_store %arg13[%c0_38, %c0_39, %c0_40], %35 {strides = array<i32>} : memref<13x6x32xf32, #tpu.memory_space<vmem>>, vector<1x6x32xf32>,
    %c0_41 = arith.constant 0 : index
    %c2_42 = arith.constant 2 : index
    %c0_43 = arith.constant 0 : index
    %c0_44 = arith.constant 0 : index
    %36 = vector.load %arg1[%c0_41, %c2_42, %c0_43, %c0_44] : memref<1x28x7x12xf32, #tpu.memory_space<vmem>>, vector<1x1x7x12xf32>
    %37 = vector.shape_cast %36 : vector<1x1x7x12xf32> to vector<7x12xf32>
    %c0_45 = arith.constant 0 : index
    %c3_46 = arith.constant 3 : index
    %c0_47 = arith.constant 0 : index
    %c0_48 = arith.constant 0 : index
    %38 = vector.load %arg1[%c0_45, %c3_46, %c0_47, %c0_48] : memref<1x28x7x12xf32, #tpu.memory_space<vmem>>, vector<1x1x7x12xf32>
    %39 = vector.shape_cast %38 : vector<1x1x7x12xf32> to vector<7x12xf32>
    %c0_49 = arith.constant 0 : index
    %c4 = arith.constant 4 : index
    %c0_50 = arith.constant 0 : index
    %c0_51 = arith.constant 0 : index
    %40 = vector.load %arg1[%c0_49, %c4, %c0_50, %c0_51] : memref<1x28x7x12xf32, #tpu.memory_space<vmem>>, vector<1x1x7x12xf32>
    %41 = vector.shape_cast %40 : vector<1x1x7x12xf32> to vector<7x12xf32>
    %c0_52 = arith.constant 0 : index
    %c5 = arith.constant 5 : index
    %c0_53 = arith.constant 0 : index
    %c0_54 = arith.constant 0 : index
    %42 = vector.load %arg1[%c0_52, %c5, %c0_53, %c0_54] : memref<1x28x7x12xf32, #tpu.memory_space<vmem>>, vector<1x1x7x12xf32>
    %43 = vector.shape_cast %42 : vector<1x1x7x12xf32> to vector<7x12xf32>
    %c0_55 = arith.constant 0 : index
    %c2_56 = arith.constant 2 : index
    %c0_57 = arith.constant 0 : index
    %c0_58 = arith.constant 0 : index
    %44 = vector.load %arg2[%c0_55, %c2_56, %c0_57, %c0_58] : memref<1x28x6x12xf32, #tpu.memory_space<vmem>>, vector<1x1x6x12xf32>
    %45 = vector.shape_cast %44 : vector<1x1x6x12xf32> to vector<6x12xf32>
    %c0_59 = arith.constant 0 : index
    %c3_60 = arith.constant 3 : index
    %c0_61 = arith.constant 0 : index
    %c0_62 = arith.constant 0 : index
    %46 = vector.load %arg2[%c0_59, %c3_60, %c0_61, %c0_62] : memref<1x28x6x12xf32, #tpu.memory_space<vmem>>, vector<1x1x6x12xf32>
    %47 = vector.shape_cast %46 : vector<1x1x6x12xf32> to vector<6x12xf32>
    %c0_63 = arith.constant 0 : index
    %c4_64 = arith.constant 4 : index
    %c0_65 = arith.constant 0 : index
    %c0_66 = arith.constant 0 : index
    %48 = vector.load %arg2[%c0_63, %c4_64, %c0_65, %c0_66] : memref<1x28x6x12xf32, #tpu.memory_space<vmem>>, vector<1x1x6x12xf32>
    %49 = vector.shape_cast %48 : vector<1x1x6x12xf32> to vector<6x12xf32>
    %c0_67 = arith.constant 0 : index
    %c5_68 = arith.constant 5 : index
    %c0_69 = arith.constant 0 : index
    %c0_70 = arith.constant 0 : index
    %50 = vector.load %arg2[%c0_67, %c5_68, %c0_69, %c0_70] : memref<1x28x6x12xf32, #tpu.memory_space<vmem>>, vector<1x1x6x12xf32>
    %51 = vector.shape_cast %50 : vector<1x1x6x12xf32> to vector<6x12xf32>
    %52 = tpu.concatenate %37, %39, %41, %43 in 1 : vector<7x12xf32>, vector<7x12xf32>, vector<7x12xf32>, vector<7x12xf32> -> vector<7x48xf32>
    %53 = tpu.concatenate %45, %47, %49, %51 in 1 : vector<6x12xf32>, vector<6x12xf32>, vector<6x12xf32>, vector<6x12xf32> -> vector<6x48xf32>
    %cst_71 = arith.constant dense<0.000000e+00> : vector<7x32xf32>
    %54 = tpu.matmul %52, %0, %cst_71 {dimension_numbers = #tpu.dot_dimension_numbers<[1], [0], [0], [1], [0, 0, 1, 1], [], []>} : vector<7x48xf32>, vector<48x32xf32>, vector<7x32xf32> -> vector<7x32xf32>
    %55 = vector.broadcast %1 : vector<1x32xf32> to vector<7x32xf32>
    %56 = arith.addf %54, %55 : vector<7x32xf32>
    %cst_72 = arith.constant dense<0.000000e+00> : vector<6x32xf32>
    %57 = tpu.matmul %53, %0, %cst_72 {dimension_numbers = #tpu.dot_dimension_numbers<[1], [0], [0], [1], [0, 0, 1, 1], [], []>} : vector<6x48xf32>, vector<48x32xf32>, vector<6x32xf32> -> vector<6x32xf32>
    %58 = vector.broadcast %1 : vector<1x32xf32> to vector<6x32xf32>
    %59 = arith.addf %57, %58 : vector<6x32xf32>
    %cst_73 = arith.constant 0.000000e+00 : f32
    %60 = vector.broadcast %cst_73 : f32 to vector<7x32xf32>
    %61 = arith.maximumf %56, %60 : vector<7x32xf32>
    %c1_74 = arith.constant 1 : index
    %c0_75 = arith.constant 0 : index
    %c0_76 = arith.constant 0 : index
    %62 = vector.load %arg12[%c1_74, %c0_75, %c0_76] : memref<13x7x32xf32, #tpu.memory_space<vmem>>, vector<1x7x32xf32>
    %63 = vector.shape_cast %62 : vector<1x7x32xf32> to vector<7x32xf32>
    %64 = vector.shape_cast %61 : vector<7x32xf32> to vector<1x7x32xf32>
    tpu.vector_store %arg12[%c1_74, %c0_75, %c0_76], %64 {strides = array<i32>} : memref<13x7x32xf32, #tpu.memory_space<vmem>>, vector<1x7x32xf32>,
    %cst_77 = arith.constant 0.000000e+00 : f32
    %65 = vector.broadcast %cst_77 : f32 to vector<6x32xf32>
    %66 = arith.maximumf %59, %65 : vector<6x32xf32>
    %c1_78 = arith.constant 1 : index
    %c0_79 = arith.constant 0 : index
    %c0_80 = arith.constant 0 : index
    %67 = vector.load %arg13[%c1_78, %c0_79, %c0_80] : memref<13x6x32xf32, #tpu.memory_space<vmem>>, vector<1x6x32xf32>
    %68 = vector.shape_cast %67 : vector<1x6x32xf32> to vector<6x32xf32>
    %69 = vector.shape_cast %66 : vector<6x32xf32> to vector<1x6x32xf32>
    tpu.vector_store %arg13[%c1_78, %c0_79, %c0_80], %69 {strides = array<i32>} : memref<13x6x32xf32, #tpu.memory_space<vmem>>, vector<1x6x32xf32>,
    %c0_81 = arith.constant 0 : index
    %c4_82 = arith.constant 4 : index
    %c0_83 = arith.constant 0 : index
    %c0_84 = arith.constant 0 : index
    %70 = vector.load %arg1[%c0_81, %c4_82, %c0_83, %c0_84] : memref<1x28x7x12xf32, #tpu.memory_space<vmem>>, vector<1x1x7x12xf32>
    %71 = vector.shape_cast %70 : vector<1x1x7x12xf32> to vector<7x12xf32>
    %c0_85 = arith.constant 0 : index
    %c5_86 = arith.constant 5 : index
    %c0_87 = arith.constant 0 : index
    %c0_88 = arith.constant 0 : index
    %72 = vector.load %arg1[%c0_85, %c5_86, %c0_87, %c0_88] : memref<1x28x7x12xf32, #tpu.memory_space<vmem>>, vector<1x1x7x12xf32>
    %73 = vector.shape_cast %72 : vector<1x1x7x12xf32> to vector<7x12xf32>
    %c0_89 = arith.constant 0 : index
    %c6 = arith.constant 6 : index
    %c0_90 = arith.constant 0 : index
    %c0_91 = arith.constant 0 : index
    %74 = vector.load %arg1[%c0_89, %c6, %c0_90, %c0_91] : memref<1x28x7x12xf32, #tpu.memory_space<vmem>>, vector<1x1x7x12xf32>
    %75 = vector.shape_cast %74 : vector<1x1x7x12xf32> to vector<7x12xf32>
    %c0_92 = arith.constant 0 : index
    %c7 = arith.constant 7 : index
    %c0_93 = arith.constant 0 : index
    %c0_94 = arith.constant 0 : index
    %76 = vector.load %arg1[%c0_92, %c7, %c0_93, %c0_94] : memref<1x28x7x12xf32, #tpu.memory_space<vmem>>, vector<1x1x7x12xf32>
    %77 = vector.shape_cast %76 : vector<1x1x7x12xf32> to vector<7x12xf32>
    %c0_95 = arith.constant 0 : index
    %c4_96 = arith.constant 4 : index
    %c0_97 = arith.constant 0 : index
    %c0_98 = arith.constant 0 : index
    %78 = vector.load %arg2[%c0_95, %c4_96, %c0_97, %c0_98] : memref<1x28x6x12xf32, #tpu.memory_space<vmem>>, vector<1x1x6x12xf32>
    %79 = vector.shape_cast %78 : vector<1x1x6x12xf32> to vector<6x12xf32>
    %c0_99 = arith.constant 0 : index
    %c5_100 = arith.constant 5 : index
    %c0_101 = arith.constant 0 : index
    %c0_102 = arith.constant 0 : index
    %80 = vector.load %arg2[%c0_99, %c5_100, %c0_101, %c0_102] : memref<1x28x6x12xf32, #tpu.memory_space<vmem>>, vector<1x1x6x12xf32>
    %81 = vector.shape_cast %80 : vector<1x1x6x12xf32> to vector<6x12xf32>
    %c0_103 = arith.constant 0 : index
    %c6_104 = arith.constant 6 : index
    %c0_105 = arith.constant 0 : index
    %c0_106 = arith.constant 0 : index
    %82 = vector.load %arg2[%c0_103, %c6_104, %c0_105, %c0_106] : memref<1x28x6x12xf32, #tpu.memory_space<vmem>>, vector<1x1x6x12xf32>
    %83 = vector.shape_cast %82 : vector<1x1x6x12xf32> to vector<6x12xf32>
    %c0_107 = arith.constant 0 : index
    %c7_108 = arith.constant 7 : index
    %c0_109 = arith.constant 0 : index
    %c0_110 = arith.constant 0 : index
    %84 = vector.load %arg2[%c0_107, %c7_108, %c0_109, %c0_110] : memref<1x28x6x12xf32, #tpu.memory_space<vmem>>, vector<1x1x6x12xf32>
    %85 = vector.shape_cast %84 : vector<1x1x6x12xf32> to vector<6x12xf32>
    %86 = tpu.concatenate %71, %73, %75, %77 in 1 : vector<7x12xf32>, vector<7x12xf32>, vector<7x12xf32>, vector<7x12xf32> -> vector<7x48xf32>
    %87 = tpu.concatenate %79, %81, %83, %85 in 1 : vector<6x12xf32>, vector<6x12xf32>, vector<6x12xf32>, vector<6x12xf32> -> vector<6x48xf32>
    %cst_111 = arith.constant dense<0.000000e+00> : vector<7x32xf32>
    %88 = tpu.matmul %86, %0, %cst_111 {dimension_numbers = #tpu.dot_dimension_numbers<[1], [0], [0], [1], [0, 0, 1, 1], [], []>} : vector<7x48xf32>, vector<48x32xf32>, vector<7x32xf32> -> vector<7x32xf32>
    %89 = vector.broadcast %1 : vector<1x32xf32> to vector<7x32xf32>
    %90 = arith.addf %88, %89 : vector<7x32xf32>
    %cst_112 = arith.constant dense<0.000000e+00> : vector<6x32xf32>
    %91 = tpu.matmul %87, %0, %cst_112 {dimension_numbers = #tpu.dot_dimension_numbers<[1], [0], [0], [1], [0, 0, 1, 1], [], []>} : vector<6x48xf32>, vector<48x32xf32>, vector<6x32xf32> -> vector<6x32xf32>
    %92 = vector.broadcast %1 : vector<1x32xf32> to vector<6x32xf32>
    %93 = arith.addf %91, %92 : vector<6x32xf32>
    %cst_113 = arith.constant 0.000000e+00 : f32
    %94 = vector.broadcast %cst_113 : f32 to vector<7x32xf32>
    %95 = arith.maximumf %90, %94 : vector<7x32xf32>
    %c2_114 = arith.constant 2 : index
    %c0_115 = arith.constant 0 : index
    %c0_116 = arith.constant 0 : index
    %96 = vector.load %arg12[%c2_114, %c0_115, %c0_116] : memref<13x7x32xf32, #tpu.memory_space<vmem>>, vector<1x7x32xf32>
    %97 = vector.shape_cast %96 : vector<1x7x32xf32> to vector<7x32xf32>
    %98 = vector.shape_cast %95 : vector<7x32xf32> to vector<1x7x32xf32>
    tpu.vector_store %arg12[%c2_114, %c0_115, %c0_116], %98 {strides = array<i32>} : memref<13x7x32xf32, #tpu.memory_space<vmem>>, vector<1x7x32xf32>,
    %cst_117 = arith.constant 0.000000e+00 : f32
    %99 = vector.broadcast %cst_117 : f32 to vector<6x32xf32>
    %100 = arith.maximumf %93, %99 : vector<6x32xf32>
    %c2_118 = arith.constant 2 : index
    %c0_119 = arith.constant 0 : index
    %c0_120 = arith.constant 0 : index
    %101 = vector.load %arg13[%c2_118, %c0_119, %c0_120] : memref<13x6x32xf32, #tpu.memory_space<vmem>>, vector<1x6x32xf32>
    %102 = vector.shape_cast %101 : vector<1x6x32xf32> to vector<6x32xf32>
    %103 = vector.shape_cast %100 : vector<6x32xf32> to vector<1x6x32xf32>
    tpu.vector_store %arg13[%c2_118, %c0_119, %c0_120], %103 {strides = array<i32>} : memref<13x6x32xf32, #tpu.memory_space<vmem>>, vector<1x6x32xf32>,
    %c0_121 = arith.constant 0 : index
    %c6_122 = arith.constant 6 : index
    %c0_123 = arith.constant 0 : index
    %c0_124 = arith.constant 0 : index
    %104 = vector.load %arg1[%c0_121, %c6_122, %c0_123, %c0_124] : memref<1x28x7x12xf32, #tpu.memory_space<vmem>>, vector<1x1x7x12xf32>
    %105 = vector.shape_cast %104 : vector<1x1x7x12xf32> to vector<7x12xf32>
    %c0_125 = arith.constant 0 : index
    %c7_126 = arith.constant 7 : index
    %c0_127 = arith.constant 0 : index
    %c0_128 = arith.constant 0 : index
    %106 = vector.load %arg1[%c0_125, %c7_126, %c0_127, %c0_128] : memref<1x28x7x12xf32, #tpu.memory_space<vmem>>, vector<1x1x7x12xf32>
    %107 = vector.shape_cast %106 : vector<1x1x7x12xf32> to vector<7x12xf32>
    %c0_129 = arith.constant 0 : index
    %c8 = arith.constant 8 : index
    %c0_130 = arith.constant 0 : index
    %c0_131 = arith.constant 0 : index
    %108 = vector.load %arg1[%c0_129, %c8, %c0_130, %c0_131] : memref<1x28x7x12xf32, #tpu.memory_space<vmem>>, vector<1x1x7x12xf32>
    %109 = vector.shape_cast %108 : vector<1x1x7x12xf32> to vector<7x12xf32>
    %c0_132 = arith.constant 0 : index
    %c9 = arith.constant 9 : index
    %c0_133 = arith.constant 0 : index
    %c0_134 = arith.constant 0 : index
    %110 = vector.load %arg1[%c0_132, %c9, %c0_133, %c0_134] : memref<1x28x7x12xf32, #tpu.memory_space<vmem>>, vector<1x1x7x12xf32>
    %111 = vector.shape_cast %110 : vector<1x1x7x12xf32> to vector<7x12xf32>
    %c0_135 = arith.constant 0 : index
    %c6_136 = arith.constant 6 : index
    %c0_137 = arith.constant 0 : index
    %c0_138 = arith.constant 0 : index
    %112 = vector.load %arg2[%c0_135, %c6_136, %c0_137, %c0_138] : memref<1x28x6x12xf32, #tpu.memory_space<vmem>>, vector<1x1x6x12xf32>
    %113 = vector.shape_cast %112 : vector<1x1x6x12xf32> to vector<6x12xf32>
    %c0_139 = arith.constant 0 : index
    %c7_140 = arith.constant 7 : index
    %c0_141 = arith.constant 0 : index
    %c0_142 = arith.constant 0 : index
    %114 = vector.load %arg2[%c0_139, %c7_140, %c0_141, %c0_142] : memref<1x28x6x12xf32, #tpu.memory_space<vmem>>, vector<1x1x6x12xf32>
    %115 = vector.shape_cast %114 : vector<1x1x6x12xf32> to vector<6x12xf32>
    %c0_143 = arith.constant 0 : index
    %c8_144 = arith.constant 8 : index
    %c0_145 = arith.constant 0 : index
    %c0_146 = arith.constant 0 : index
    %116 = vector.load %arg2[%c0_143, %c8_144, %c0_145, %c0_146] : memref<1x28x6x12xf32, #tpu.memory_space<vmem>>, vector<1x1x6x12xf32>
    %117 = vector.shape_cast %116 : vector<1x1x6x12xf32> to vector<6x12xf32>
    %c0_147 = arith.constant 0 : index
    %c9_148 = arith.constant 9 : index
    %c0_149 = arith.constant 0 : index
    %c0_150 = arith.constant 0 : index
    %118 = vector.load %arg2[%c0_147, %c9_148, %c0_149, %c0_150] : memref<1x28x6x12xf32, #tpu.memory_space<vmem>>, vector<1x1x6x12xf32>
    %119 = vector.shape_cast %118 : vector<1x1x6x12xf32> to vector<6x12xf32>
    %120 = tpu.concatenate %105, %107, %109, %111 in 1 : vector<7x12xf32>, vector<7x12xf32>, vector<7x12xf32>, vector<7x12xf32> -> vector<7x48xf32>
    %121 = tpu.concatenate %113, %115, %117, %119 in 1 : vector<6x12xf32>, vector<6x12xf32>, vector<6x12xf32>, vector<6x12xf32> -> vector<6x48xf32>
    %cst_151 = arith.constant dense<0.000000e+00> : vector<7x32xf32>
    %122 = tpu.matmul %120, %0, %cst_151 {dimension_numbers = #tpu.dot_dimension_numbers<[1], [0], [0], [1], [0, 0, 1, 1], [], []>} : vector<7x48xf32>, vector<48x32xf32>, vector<7x32xf32> -> vector<7x32xf32>
    %123 = vector.broadcast %1 : vector<1x32xf32> to vector<7x32xf32>
    %124 = arith.addf %122, %123 : vector<7x32xf32>
    %cst_152 = arith.constant dense<0.000000e+00> : vector<6x32xf32>
    %125 = tpu.matmul %121, %0, %cst_152 {dimension_numbers = #tpu.dot_dimension_numbers<[1], [0], [0], [1], [0, 0, 1, 1], [], []>} : vector<6x48xf32>, vector<48x32xf32>, vector<6x32xf32> -> vector<6x32xf32>
    %126 = vector.broadcast %1 : vector<1x32xf32> to vector<6x32xf32>
    %127 = arith.addf %125, %126 : vector<6x32xf32>
    %cst_153 = arith.constant 0.000000e+00 : f32
    %128 = vector.broadcast %cst_153 : f32 to vector<7x32xf32>
    %129 = arith.maximumf %124, %128 : vector<7x32xf32>
    %c3_154 = arith.constant 3 : index
    %c0_155 = arith.constant 0 : index
    %c0_156 = arith.constant 0 : index
    %130 = vector.load %arg12[%c3_154, %c0_155, %c0_156] : memref<13x7x32xf32, #tpu.memory_space<vmem>>, vector<1x7x32xf32>
    %131 = vector.shape_cast %130 : vector<1x7x32xf32> to vector<7x32xf32>
    %132 = vector.shape_cast %129 : vector<7x32xf32> to vector<1x7x32xf32>
    tpu.vector_store %arg12[%c3_154, %c0_155, %c0_156], %132 {strides = array<i32>} : memref<13x7x32xf32, #tpu.memory_space<vmem>>, vector<1x7x32xf32>,
    %cst_157 = arith.constant 0.000000e+00 : f32
    %133 = vector.broadcast %cst_157 : f32 to vector<6x32xf32>
    %134 = arith.maximumf %127, %133 : vector<6x32xf32>
    %c3_158 = arith.constant 3 : index
    %c0_159 = arith.constant 0 : index
    %c0_160 = arith.constant 0 : index
    %135 = vector.load %arg13[%c3_158, %c0_159, %c0_160] : memref<13x6x32xf32, #tpu.memory_space<vmem>>, vector<1x6x32xf32>
    %136 = vector.shape_cast %135 : vector<1x6x32xf32> to vector<6x32xf32>
    %137 = vector.shape_cast %134 : vector<6x32xf32> to vector<1x6x32xf32>
    tpu.vector_store %arg13[%c3_158, %c0_159, %c0_160], %137 {strides = array<i32>} : memref<13x6x32xf32, #tpu.memory_space<vmem>>, vector<1x6x32xf32>,
    %c0_161 = arith.constant 0 : index
    %c8_162 = arith.constant 8 : index
    %c0_163 = arith.constant 0 : index
    %c0_164 = arith.constant 0 : index
    %138 = vector.load %arg1[%c0_161, %c8_162, %c0_163, %c0_164] : memref<1x28x7x12xf32, #tpu.memory_space<vmem>>, vector<1x1x7x12xf32>
    %139 = vector.shape_cast %138 : vector<1x1x7x12xf32> to vector<7x12xf32>
    %c0_165 = arith.constant 0 : index
    %c9_166 = arith.constant 9 : index
    %c0_167 = arith.constant 0 : index
    %c0_168 = arith.constant 0 : index
    %140 = vector.load %arg1[%c0_165, %c9_166, %c0_167, %c0_168] : memref<1x28x7x12xf32, #tpu.memory_space<vmem>>, vector<1x1x7x12xf32>
    %141 = vector.shape_cast %140 : vector<1x1x7x12xf32> to vector<7x12xf32>
    %c0_169 = arith.constant 0 : index
    %c10 = arith.constant 10 : index
    %c0_170 = arith.constant 0 : index
    %c0_171 = arith.constant 0 : index
    %142 = vector.load %arg1[%c0_169, %c10, %c0_170, %c0_171] : memref<1x28x7x12xf32, #tpu.memory_space<vmem>>, vector<1x1x7x12xf32>
    %143 = vector.shape_cast %142 : vector<1x1x7x12xf32> to vector<7x12xf32>
    %c0_172 = arith.constant 0 : index
    %c11 = arith.constant 11 : index
    %c0_173 = arith.constant 0 : index
    %c0_174 = arith.constant 0 : index
    %144 = vector.load %arg1[%c0_172, %c11, %c0_173, %c0_174] : memref<1x28x7x12xf32, #tpu.memory_space<vmem>>, vector<1x1x7x12xf32>
    %145 = vector.shape_cast %144 : vector<1x1x7x12xf32> to vector<7x12xf32>
    %c0_175 = arith.constant 0 : index
    %c8_176 = arith.constant 8 : index
    %c0_177 = arith.constant 0 : index
    %c0_178 = arith.constant 0 : index
    %146 = vector.load %arg2[%c0_175, %c8_176, %c0_177, %c0_178] : memref<1x28x6x12xf32, #tpu.memory_space<vmem>>, vector<1x1x6x12xf32>
    %147 = vector.shape_cast %146 : vector<1x1x6x12xf32> to vector<6x12xf32>
    %c0_179 = arith.constant 0 : index
    %c9_180 = arith.constant 9 : index
    %c0_181 = arith.constant 0 : index
    %c0_182 = arith.constant 0 : index
    %148 = vector.load %arg2[%c0_179, %c9_180, %c0_181, %c0_182] : memref<1x28x6x12xf32, #tpu.memory_space<vmem>>, vector<1x1x6x12xf32>
    %149 = vector.shape_cast %148 : vector<1x1x6x12xf32> to vector<6x12xf32>
    %c0_183 = arith.constant 0 : index
    %c10_184 = arith.constant 10 : index
    %c0_185 = arith.constant 0 : index
    %c0_186 = arith.constant 0 : index
    %150 = vector.load %arg2[%c0_183, %c10_184, %c0_185, %c0_186] : memref<1x28x6x12xf32, #tpu.memory_space<vmem>>, vector<1x1x6x12xf32>
    %151 = vector.shape_cast %150 : vector<1x1x6x12xf32> to vector<6x12xf32>
    %c0_187 = arith.constant 0 : index
    %c11_188 = arith.constant 11 : index
    %c0_189 = arith.constant 0 : index
    %c0_190 = arith.constant 0 : index
    %152 = vector.load %arg2[%c0_187, %c11_188, %c0_189, %c0_190] : memref<1x28x6x12xf32, #tpu.memory_space<vmem>>, vector<1x1x6x12xf32>
    %153 = vector.shape_cast %152 : vector<1x1x6x12xf32> to vector<6x12xf32>
    %154 = tpu.concatenate %139, %141, %143, %145 in 1 : vector<7x12xf32>, vector<7x12xf32>, vector<7x12xf32>, vector<7x12xf32> -> vector<7x48xf32>
    %155 = tpu.concatenate %147, %149, %151, %153 in 1 : vector<6x12xf32>, vector<6x12xf32>, vector<6x12xf32>, vector<6x12xf32> -> vector<6x48xf32>
    %cst_191 = arith.constant dense<0.000000e+00> : vector<7x32xf32>
    %156 = tpu.matmul %154, %0, %cst_191 {dimension_numbers = #tpu.dot_dimension_numbers<[1], [0], [0], [1], [0, 0, 1, 1], [], []>} : vector<7x48xf32>, vector<48x32xf32>, vector<7x32xf32> -> vector<7x32xf32>
    %157 = vector.broadcast %1 : vector<1x32xf32> to vector<7x32xf32>
    %158 = arith.addf %156, %157 : vector<7x32xf32>
    %cst_192 = arith.constant dense<0.000000e+00> : vector<6x32xf32>
    %159 = tpu.matmul %155, %0, %cst_192 {dimension_numbers = #tpu.dot_dimension_numbers<[1], [0], [0], [1], [0, 0, 1, 1], [], []>} : vector<6x48xf32>, vector<48x32xf32>, vector<6x32xf32> -> vector<6x32xf32>
    %160 = vector.broadcast %1 : vector<1x32xf32> to vector<6x32xf32>
    %161 = arith.addf %159, %160 : vector<6x32xf32>
    %cst_193 = arith.constant 0.000000e+00 : f32
    %162 = vector.broadcast %cst_193 : f32 to vector<7x32xf32>
    %163 = arith.maximumf %158, %162 : vector<7x32xf32>
    %c4_194 = arith.constant 4 : index
    %c0_195 = arith.constant 0 : index
    %c0_196 = arith.constant 0 : index
    %164 = vector.load %arg12[%c4_194, %c0_195, %c0_196] : memref<13x7x32xf32, #tpu.memory_space<vmem>>, vector<1x7x32xf32>
    %165 = vector.shape_cast %164 : vector<1x7x32xf32> to vector<7x32xf32>
    %166 = vector.shape_cast %163 : vector<7x32xf32> to vector<1x7x32xf32>
    tpu.vector_store %arg12[%c4_194, %c0_195, %c0_196], %166 {strides = array<i32>} : memref<13x7x32xf32, #tpu.memory_space<vmem>>, vector<1x7x32xf32>,
    %cst_197 = arith.constant 0.000000e+00 : f32
    %167 = vector.broadcast %cst_197 : f32 to vector<6x32xf32>
    %168 = arith.maximumf %161, %167 : vector<6x32xf32>
    %c4_198 = arith.constant 4 : index
    %c0_199 = arith.constant 0 : index
    %c0_200 = arith.constant 0 : index
    %169 = vector.load %arg13[%c4_198, %c0_199, %c0_200] : memref<13x6x32xf32, #tpu.memory_space<vmem>>, vector<1x6x32xf32>
    %170 = vector.shape_cast %169 : vector<1x6x32xf32> to vector<6x32xf32>
    %171 = vector.shape_cast %168 : vector<6x32xf32> to vector<1x6x32xf32>
    tpu.vector_store %arg13[%c4_198, %c0_199, %c0_200], %171 {strides = array<i32>} : memref<13x6x32xf32, #tpu.memory_space<vmem>>, vector<1x6x32xf32>,
    %c0_201 = arith.constant 0 : index
    %c10_202 = arith.constant 10 : index
    %c0_203 = arith.constant 0 : index
    %c0_204 = arith.constant 0 : index
    %172 = vector.load %arg1[%c0_201, %c10_202, %c0_203, %c0_204] : memref<1x28x7x12xf32, #tpu.memory_space<vmem>>, vector<1x1x7x12xf32>
    %173 = vector.shape_cast %172 : vector<1x1x7x12xf32> to vector<7x12xf32>
    %c0_205 = arith.constant 0 : index
    %c11_206 = arith.constant 11 : index
    %c0_207 = arith.constant 0 : index
    %c0_208 = arith.constant 0 : index
    %174 = vector.load %arg1[%c0_205, %c11_206, %c0_207, %c0_208] : memref<1x28x7x12xf32, #tpu.memory_space<vmem>>, vector<1x1x7x12xf32>
    %175 = vector.shape_cast %174 : vector<1x1x7x12xf32> to vector<7x12xf32>
    %c0_209 = arith.constant 0 : index
    %c12 = arith.constant 12 : index
    %c0_210 = arith.constant 0 : index
    %c0_211 = arith.constant 0 : index
    %176 = vector.load %arg1[%c0_209, %c12, %c0_210, %c0_211] : memref<1x28x7x12xf32, #tpu.memory_space<vmem>>, vector<1x1x7x12xf32>
    %177 = vector.shape_cast %176 : vector<1x1x7x12xf32> to vector<7x12xf32>
    %c0_212 = arith.constant 0 : index
    %c13 = arith.constant 13 : index
    %c0_213 = arith.constant 0 : index
    %c0_214 = arith.constant 0 : index
    %178 = vector.load %arg1[%c0_212, %c13, %c0_213, %c0_214] : memref<1x28x7x12xf32, #tpu.memory_space<vmem>>, vector<1x1x7x12xf32>
    %179 = vector.shape_cast %178 : vector<1x1x7x12xf32> to vector<7x12xf32>
    %c0_215 = arith.constant 0 : index
    %c10_216 = arith.constant 10 : index
    %c0_217 = arith.constant 0 : index
    %c0_218 = arith.constant 0 : index
    %180 = vector.load %arg2[%c0_215, %c10_216, %c0_217, %c0_218] : memref<1x28x6x12xf32, #tpu.memory_space<vmem>>, vector<1x1x6x12xf32>
    %181 = vector.shape_cast %180 : vector<1x1x6x12xf32> to vector<6x12xf32>
    %c0_219 = arith.constant 0 : index
    %c11_220 = arith.constant 11 : index
    %c0_221 = arith.constant 0 : index
    %c0_222 = arith.constant 0 : index
    %182 = vector.load %arg2[%c0_219, %c11_220, %c0_221, %c0_222] : memref<1x28x6x12xf32, #tpu.memory_space<vmem>>, vector<1x1x6x12xf32>
    %183 = vector.shape_cast %182 : vector<1x1x6x12xf32> to vector<6x12xf32>
    %c0_223 = arith.constant 0 : index
    %c12_224 = arith.constant 12 : index
    %c0_225 = arith.constant 0 : index
    %c0_226 = arith.constant 0 : index
    %184 = vector.load %arg2[%c0_223, %c12_224, %c0_225, %c0_226] : memref<1x28x6x12xf32, #tpu.memory_space<vmem>>, vector<1x1x6x12xf32>
    %185 = vector.shape_cast %184 : vector<1x1x6x12xf32> to vector<6x12xf32>
    %c0_227 = arith.constant 0 : index
    %c13_228 = arith.constant 13 : index
    %c0_229 = arith.constant 0 : index
    %c0_230 = arith.constant 0 : index
    %186 = vector.load %arg2[%c0_227, %c13_228, %c0_229, %c0_230] : memref<1x28x6x12xf32, #tpu.memory_space<vmem>>, vector<1x1x6x12xf32>
    %187 = vector.shape_cast %186 : vector<1x1x6x12xf32> to vector<6x12xf32>
    %188 = tpu.concatenate %173, %175, %177, %179 in 1 : vector<7x12xf32>, vector<7x12xf32>, vector<7x12xf32>, vector<7x12xf32> -> vector<7x48xf32>
    %189 = tpu.concatenate %181, %183, %185, %187 in 1 : vector<6x12xf32>, vector<6x12xf32>, vector<6x12xf32>, vector<6x12xf32> -> vector<6x48xf32>
    %cst_231 = arith.constant dense<0.000000e+00> : vector<7x32xf32>
    %190 = tpu.matmul %188, %0, %cst_231 {dimension_numbers = #tpu.dot_dimension_numbers<[1], [0], [0], [1], [0, 0, 1, 1], [], []>} : vector<7x48xf32>, vector<48x32xf32>, vector<7x32xf32> -> vector<7x32xf32>
    %191 = vector.broadcast %1 : vector<1x32xf32> to vector<7x32xf32>
    %192 = arith.addf %190, %191 : vector<7x32xf32>
    %cst_232 = arith.constant dense<0.000000e+00> : vector<6x32xf32>
    %193 = tpu.matmul %189, %0, %cst_232 {dimension_numbers = #tpu.dot_dimension_numbers<[1], [0], [0], [1], [0, 0, 1, 1], [], []>} : vector<6x48xf32>, vector<48x32xf32>, vector<6x32xf32> -> vector<6x32xf32>
    %194 = vector.broadcast %1 : vector<1x32xf32> to vector<6x32xf32>
    %195 = arith.addf %193, %194 : vector<6x32xf32>
    %cst_233 = arith.constant 0.000000e+00 : f32
    %196 = vector.broadcast %cst_233 : f32 to vector<7x32xf32>
    %197 = arith.maximumf %192, %196 : vector<7x32xf32>
    %c5_234 = arith.constant 5 : index
    %c0_235 = arith.constant 0 : index
    %c0_236 = arith.constant 0 : index
    %198 = vector.load %arg12[%c5_234, %c0_235, %c0_236] : memref<13x7x32xf32, #tpu.memory_space<vmem>>, vector<1x7x32xf32>
    %199 = vector.shape_cast %198 : vector<1x7x32xf32> to vector<7x32xf32>
    %200 = vector.shape_cast %197 : vector<7x32xf32> to vector<1x7x32xf32>
    tpu.vector_store %arg12[%c5_234, %c0_235, %c0_236], %200 {strides = array<i32>} : memref<13x7x32xf32, #tpu.memory_space<vmem>>, vector<1x7x32xf32>,
    %cst_237 = arith.constant 0.000000e+00 : f32
    %201 = vector.broadcast %cst_237 : f32 to vector<6x32xf32>
    %202 = arith.maximumf %195, %201 : vector<6x32xf32>
    %c5_238 = arith.constant 5 : index
    %c0_239 = arith.constant 0 : index
    %c0_240 = arith.constant 0 : index
    %203 = vector.load %arg13[%c5_238, %c0_239, %c0_240] : memref<13x6x32xf32, #tpu.memory_space<vmem>>, vector<1x6x32xf32>
    %204 = vector.shape_cast %203 : vector<1x6x32xf32> to vector<6x32xf32>
    %205 = vector.shape_cast %202 : vector<6x32xf32> to vector<1x6x32xf32>
    tpu.vector_store %arg13[%c5_238, %c0_239, %c0_240], %205 {strides = array<i32>} : memref<13x6x32xf32, #tpu.memory_space<vmem>>, vector<1x6x32xf32>,
    %c0_241 = arith.constant 0 : index
    %c12_242 = arith.constant 12 : index
    %c0_243 = arith.constant 0 : index
    %c0_244 = arith.constant 0 : index
    %206 = vector.load %arg1[%c0_241, %c12_242, %c0_243, %c0_244] : memref<1x28x7x12xf32, #tpu.memory_space<vmem>>, vector<1x1x7x12xf32>
    %207 = vector.shape_cast %206 : vector<1x1x7x12xf32> to vector<7x12xf32>
    %c0_245 = arith.constant 0 : index
    %c13_246 = arith.constant 13 : index
    %c0_247 = arith.constant 0 : index
    %c0_248 = arith.constant 0 : index
    %208 = vector.load %arg1[%c0_245, %c13_246, %c0_247, %c0_248] : memref<1x28x7x12xf32, #tpu.memory_space<vmem>>, vector<1x1x7x12xf32>
    %209 = vector.shape_cast %208 : vector<1x1x7x12xf32> to vector<7x12xf32>
    %c0_249 = arith.constant 0 : index
    %c14 = arith.constant 14 : index
    %c0_250 = arith.constant 0 : index
    %c0_251 = arith.constant 0 : index
    %210 = vector.load %arg1[%c0_249, %c14, %c0_250, %c0_251] : memref<1x28x7x12xf32, #tpu.memory_space<vmem>>, vector<1x1x7x12xf32>
    %211 = vector.shape_cast %210 : vector<1x1x7x12xf32> to vector<7x12xf32>
    %c0_252 = arith.constant 0 : index
    %c15 = arith.constant 15 : index
    %c0_253 = arith.constant 0 : index
    %c0_254 = arith.constant 0 : index
    %212 = vector.load %arg1[%c0_252, %c15, %c0_253, %c0_254] : memref<1x28x7x12xf32, #tpu.memory_space<vmem>>, vector<1x1x7x12xf32>
    %213 = vector.shape_cast %212 : vector<1x1x7x12xf32> to vector<7x12xf32>
    %c0_255 = arith.constant 0 : index
    %c12_256 = arith.constant 12 : index
    %c0_257 = arith.constant 0 : index
    %c0_258 = arith.constant 0 : index
    %214 = vector.load %arg2[%c0_255, %c12_256, %c0_257, %c0_258] : memref<1x28x6x12xf32, #tpu.memory_space<vmem>>, vector<1x1x6x12xf32>
    %215 = vector.shape_cast %214 : vector<1x1x6x12xf32> to vector<6x12xf32>
    %c0_259 = arith.constant 0 : index
    %c13_260 = arith.constant 13 : index
    %c0_261 = arith.constant 0 : index
    %c0_262 = arith.constant 0 : index
    %216 = vector.load %arg2[%c0_259, %c13_260, %c0_261, %c0_262] : memref<1x28x6x12xf32, #tpu.memory_space<vmem>>, vector<1x1x6x12xf32>
    %217 = vector.shape_cast %216 : vector<1x1x6x12xf32> to vector<6x12xf32>
    %c0_263 = arith.constant 0 : index
    %c14_264 = arith.constant 14 : index
    %c0_265 = arith.constant 0 : index
    %c0_266 = arith.constant 0 : index
    %218 = vector.load %arg2[%c0_263, %c14_264, %c0_265, %c0_266] : memref<1x28x6x12xf32, #tpu.memory_space<vmem>>, vector<1x1x6x12xf32>
    %219 = vector.shape_cast %218 : vector<1x1x6x12xf32> to vector<6x12xf32>
    %c0_267 = arith.constant 0 : index
    %c15_268 = arith.constant 15 : index
    %c0_269 = arith.constant 0 : index
    %c0_270 = arith.constant 0 : index
    %220 = vector.load %arg2[%c0_267, %c15_268, %c0_269, %c0_270] : memref<1x28x6x12xf32, #tpu.memory_space<vmem>>, vector<1x1x6x12xf32>
    %221 = vector.shape_cast %220 : vector<1x1x6x12xf32> to vector<6x12xf32>
    %222 = tpu.concatenate %207, %209, %211, %213 in 1 : vector<7x12xf32>, vector<7x12xf32>, vector<7x12xf32>, vector<7x12xf32> -> vector<7x48xf32>
    %223 = tpu.concatenate %215, %217, %219, %221 in 1 : vector<6x12xf32>, vector<6x12xf32>, vector<6x12xf32>, vector<6x12xf32> -> vector<6x48xf32>
    %cst_271 = arith.constant dense<0.000000e+00> : vector<7x32xf32>
    %224 = tpu.matmul %222, %0, %cst_271 {dimension_numbers = #tpu.dot_dimension_numbers<[1], [0], [0], [1], [0, 0, 1, 1], [], []>} : vector<7x48xf32>, vector<48x32xf32>, vector<7x32xf32> -> vector<7x32xf32>
    %225 = vector.broadcast %1 : vector<1x32xf32> to vector<7x32xf32>
    %226 = arith.addf %224, %225 : vector<7x32xf32>
    %cst_272 = arith.constant dense<0.000000e+00> : vector<6x32xf32>
    %227 = tpu.matmul %223, %0, %cst_272 {dimension_numbers = #tpu.dot_dimension_numbers<[1], [0], [0], [1], [0, 0, 1, 1], [], []>} : vector<6x48xf32>, vector<48x32xf32>, vector<6x32xf32> -> vector<6x32xf32>
    %228 = vector.broadcast %1 : vector<1x32xf32> to vector<6x32xf32>
    %229 = arith.addf %227, %228 : vector<6x32xf32>
    %cst_273 = arith.constant 0.000000e+00 : f32
    %230 = vector.broadcast %cst_273 : f32 to vector<7x32xf32>
    %231 = arith.maximumf %226, %230 : vector<7x32xf32>
    %c6_274 = arith.constant 6 : index
    %c0_275 = arith.constant 0 : index
    %c0_276 = arith.constant 0 : index
    %232 = vector.load %arg12[%c6_274, %c0_275, %c0_276] : memref<13x7x32xf32, #tpu.memory_space<vmem>>, vector<1x7x32xf32>
    %233 = vector.shape_cast %232 : vector<1x7x32xf32> to vector<7x32xf32>
    %234 = vector.shape_cast %231 : vector<7x32xf32> to vector<1x7x32xf32>
    tpu.vector_store %arg12[%c6_274, %c0_275, %c0_276], %234 {strides = array<i32>} : memref<13x7x32xf32, #tpu.memory_space<vmem>>, vector<1x7x32xf32>,
    %cst_277 = arith.constant 0.000000e+00 : f32
    %235 = vector.broadcast %cst_277 : f32 to vector<6x32xf32>
    %236 = arith.maximumf %229, %235 : vector<6x32xf32>
    %c6_278 = arith.constant 6 : index
    %c0_279 = arith.constant 0 : index
    %c0_280 = arith.constant 0 : index
    %237 = vector.load %arg13[%c6_278, %c0_279, %c0_280] : memref<13x6x32xf32, #tpu.memory_space<vmem>>, vector<1x6x32xf32>
    %238 = vector.shape_cast %237 : vector<1x6x32xf32> to vector<6x32xf32>
    %239 = vector.shape_cast %236 : vector<6x32xf32> to vector<1x6x32xf32>
    tpu.vector_store %arg13[%c6_278, %c0_279, %c0_280], %239 {strides = array<i32>} : memref<13x6x32xf32, #tpu.memory_space<vmem>>, vector<1x6x32xf32>,
    %c0_281 = arith.constant 0 : index
    %c14_282 = arith.constant 14 : index
    %c0_283 = arith.constant 0 : index
    %c0_284 = arith.constant 0 : index
    %240 = vector.load %arg1[%c0_281, %c14_282, %c0_283, %c0_284] : memref<1x28x7x12xf32, #tpu.memory_space<vmem>>, vector<1x1x7x12xf32>
    %241 = vector.shape_cast %240 : vector<1x1x7x12xf32> to vector<7x12xf32>
    %c0_285 = arith.constant 0 : index
    %c15_286 = arith.constant 15 : index
    %c0_287 = arith.constant 0 : index
    %c0_288 = arith.constant 0 : index
    %242 = vector.load %arg1[%c0_285, %c15_286, %c0_287, %c0_288] : memref<1x28x7x12xf32, #tpu.memory_space<vmem>>, vector<1x1x7x12xf32>
    %243 = vector.shape_cast %242 : vector<1x1x7x12xf32> to vector<7x12xf32>
    %c0_289 = arith.constant 0 : index
    %c16 = arith.constant 16 : index
    %c0_290 = arith.constant 0 : index
    %c0_291 = arith.constant 0 : index
    %244 = vector.load %arg1[%c0_289, %c16, %c0_290, %c0_291] : memref<1x28x7x12xf32, #tpu.memory_space<vmem>>, vector<1x1x7x12xf32>
    %245 = vector.shape_cast %244 : vector<1x1x7x12xf32> to vector<7x12xf32>
    %c0_292 = arith.constant 0 : index
    %c17 = arith.constant 17 : index
    %c0_293 = arith.constant 0 : index
    %c0_294 = arith.constant 0 : index
    %246 = vector.load %arg1[%c0_292, %c17, %c0_293, %c0_294] : memref<1x28x7x12xf32, #tpu.memory_space<vmem>>, vector<1x1x7x12xf32>
    %247 = vector.shape_cast %246 : vector<1x1x7x12xf32> to vector<7x12xf32>
    %c0_295 = arith.constant 0 : index
    %c14_296 = arith.constant 14 : index
    %c0_297 = arith.constant 0 : index
    %c0_298 = arith.constant 0 : index
    %248 = vector.load %arg2[%c0_295, %c14_296, %c0_297, %c0_298] : memref<1x28x6x12xf32, #tpu.memory_space<vmem>>, vector<1x1x6x12xf32>
    %249 = vector.shape_cast %248 : vector<1x1x6x12xf32> to vector<6x12xf32>
    %c0_299 = arith.constant 0 : index
    %c15_300 = arith.constant 15 : index
    %c0_301 = arith.constant 0 : index
    %c0_302 = arith.constant 0 : index
    %250 = vector.load %arg2[%c0_299, %c15_300, %c0_301, %c0_302] : memref<1x28x6x12xf32, #tpu.memory_space<vmem>>, vector<1x1x6x12xf32>
    %251 = vector.shape_cast %250 : vector<1x1x6x12xf32> to vector<6x12xf32>
    %c0_303 = arith.constant 0 : index
    %c16_304 = arith.constant 16 : index
    %c0_305 = arith.constant 0 : index
    %c0_306 = arith.constant 0 : index
    %252 = vector.load %arg2[%c0_303, %c16_304, %c0_305, %c0_306] : memref<1x28x6x12xf32, #tpu.memory_space<vmem>>, vector<1x1x6x12xf32>
    %253 = vector.shape_cast %252 : vector<1x1x6x12xf32> to vector<6x12xf32>
    %c0_307 = arith.constant 0 : index
    %c17_308 = arith.constant 17 : index
    %c0_309 = arith.constant 0 : index
    %c0_310 = arith.constant 0 : index
    %254 = vector.load %arg2[%c0_307, %c17_308, %c0_309, %c0_310] : memref<1x28x6x12xf32, #tpu.memory_space<vmem>>, vector<1x1x6x12xf32>
    %255 = vector.shape_cast %254 : vector<1x1x6x12xf32> to vector<6x12xf32>
    %256 = tpu.concatenate %241, %243, %245, %247 in 1 : vector<7x12xf32>, vector<7x12xf32>, vector<7x12xf32>, vector<7x12xf32> -> vector<7x48xf32>
    %257 = tpu.concatenate %249, %251, %253, %255 in 1 : vector<6x12xf32>, vector<6x12xf32>, vector<6x12xf32>, vector<6x12xf32> -> vector<6x48xf32>
    %cst_311 = arith.constant dense<0.000000e+00> : vector<7x32xf32>
    %258 = tpu.matmul %256, %0, %cst_311 {dimension_numbers = #tpu.dot_dimension_numbers<[1], [0], [0], [1], [0, 0, 1, 1], [], []>} : vector<7x48xf32>, vector<48x32xf32>, vector<7x32xf32> -> vector<7x32xf32>
    %259 = vector.broadcast %1 : vector<1x32xf32> to vector<7x32xf32>
    %260 = arith.addf %258, %259 : vector<7x32xf32>
    %cst_312 = arith.constant dense<0.000000e+00> : vector<6x32xf32>
    %261 = tpu.matmul %257, %0, %cst_312 {dimension_numbers = #tpu.dot_dimension_numbers<[1], [0], [0], [1], [0, 0, 1, 1], [], []>} : vector<6x48xf32>, vector<48x32xf32>, vector<6x32xf32> -> vector<6x32xf32>
    %262 = vector.broadcast %1 : vector<1x32xf32> to vector<6x32xf32>
    %263 = arith.addf %261, %262 : vector<6x32xf32>
    %cst_313 = arith.constant 0.000000e+00 : f32
    %264 = vector.broadcast %cst_313 : f32 to vector<7x32xf32>
    %265 = arith.maximumf %260, %264 : vector<7x32xf32>
    %c7_314 = arith.constant 7 : index
    %c0_315 = arith.constant 0 : index
    %c0_316 = arith.constant 0 : index
    %266 = vector.load %arg12[%c7_314, %c0_315, %c0_316] : memref<13x7x32xf32, #tpu.memory_space<vmem>>, vector<1x7x32xf32>
    %267 = vector.shape_cast %266 : vector<1x7x32xf32> to vector<7x32xf32>
    %268 = vector.shape_cast %265 : vector<7x32xf32> to vector<1x7x32xf32>
    tpu.vector_store %arg12[%c7_314, %c0_315, %c0_316], %268 {strides = array<i32>} : memref<13x7x32xf32, #tpu.memory_space<vmem>>, vector<1x7x32xf32>,
    %cst_317 = arith.constant 0.000000e+00 : f32
    %269 = vector.broadcast %cst_317 : f32 to vector<6x32xf32>
    %270 = arith.maximumf %263, %269 : vector<6x32xf32>
    %c7_318 = arith.constant 7 : index
    %c0_319 = arith.constant 0 : index
    %c0_320 = arith.constant 0 : index
    %271 = vector.load %arg13[%c7_318, %c0_319, %c0_320] : memref<13x6x32xf32, #tpu.memory_space<vmem>>, vector<1x6x32xf32>
    %272 = vector.shape_cast %271 : vector<1x6x32xf32> to vector<6x32xf32>
    %273 = vector.shape_cast %270 : vector<6x32xf32> to vector<1x6x32xf32>
    tpu.vector_store %arg13[%c7_318, %c0_319, %c0_320], %273 {strides = array<i32>} : memref<13x6x32xf32, #tpu.memory_space<vmem>>, vector<1x6x32xf32>,
    %c0_321 = arith.constant 0 : index
    %c16_322 = arith.constant 16 : index
    %c0_323 = arith.constant 0 : index
    %c0_324 = arith.constant 0 : index
    %274 = vector.load %arg1[%c0_321, %c16_322, %c0_323, %c0_324] : memref<1x28x7x12xf32, #tpu.memory_space<vmem>>, vector<1x1x7x12xf32>
    %275 = vector.shape_cast %274 : vector<1x1x7x12xf32> to vector<7x12xf32>
    %c0_325 = arith.constant 0 : index
    %c17_326 = arith.constant 17 : index
    %c0_327 = arith.constant 0 : index
    %c0_328 = arith.constant 0 : index
    %276 = vector.load %arg1[%c0_325, %c17_326, %c0_327, %c0_328] : memref<1x28x7x12xf32, #tpu.memory_space<vmem>>, vector<1x1x7x12xf32>
    %277 = vector.shape_cast %276 : vector<1x1x7x12xf32> to vector<7x12xf32>
    %c0_329 = arith.constant 0 : index
    %c18 = arith.constant 18 : index
    %c0_330 = arith.constant 0 : index
    %c0_331 = arith.constant 0 : index
    %278 = vector.load %arg1[%c0_329, %c18, %c0_330, %c0_331] : memref<1x28x7x12xf32, #tpu.memory_space<vmem>>, vector<1x1x7x12xf32>
    %279 = vector.shape_cast %278 : vector<1x1x7x12xf32> to vector<7x12xf32>
    %c0_332 = arith.constant 0 : index
    %c19 = arith.constant 19 : index
    %c0_333 = arith.constant 0 : index
    %c0_334 = arith.constant 0 : index
    %280 = vector.load %arg1[%c0_332, %c19, %c0_333, %c0_334] : memref<1x28x7x12xf32, #tpu.memory_space<vmem>>, vector<1x1x7x12xf32>
    %281 = vector.shape_cast %280 : vector<1x1x7x12xf32> to vector<7x12xf32>
    %c0_335 = arith.constant 0 : index
    %c16_336 = arith.constant 16 : index
    %c0_337 = arith.constant 0 : index
    %c0_338 = arith.constant 0 : index
    %282 = vector.load %arg2[%c0_335, %c16_336, %c0_337, %c0_338] : memref<1x28x6x12xf32, #tpu.memory_space<vmem>>, vector<1x1x6x12xf32>
    %283 = vector.shape_cast %282 : vector<1x1x6x12xf32> to vector<6x12xf32>
    %c0_339 = arith.constant 0 : index
    %c17_340 = arith.constant 17 : index
    %c0_341 = arith.constant 0 : index
    %c0_342 = arith.constant 0 : index
    %284 = vector.load %arg2[%c0_339, %c17_340, %c0_341, %c0_342] : memref<1x28x6x12xf32, #tpu.memory_space<vmem>>, vector<1x1x6x12xf32>
    %285 = vector.shape_cast %284 : vector<1x1x6x12xf32> to vector<6x12xf32>
    %c0_343 = arith.constant 0 : index
    %c18_344 = arith.constant 18 : index
    %c0_345 = arith.constant 0 : index
    %c0_346 = arith.constant 0 : index
    %286 = vector.load %arg2[%c0_343, %c18_344, %c0_345, %c0_346] : memref<1x28x6x12xf32, #tpu.memory_space<vmem>>, vector<1x1x6x12xf32>
    %287 = vector.shape_cast %286 : vector<1x1x6x12xf32> to vector<6x12xf32>
    %c0_347 = arith.constant 0 : index
    %c19_348 = arith.constant 19 : index
    %c0_349 = arith.constant 0 : index
    %c0_350 = arith.constant 0 : index
    %288 = vector.load %arg2[%c0_347, %c19_348, %c0_349, %c0_350] : memref<1x28x6x12xf32, #tpu.memory_space<vmem>>, vector<1x1x6x12xf32>
    %289 = vector.shape_cast %288 : vector<1x1x6x12xf32> to vector<6x12xf32>
    %290 = tpu.concatenate %275, %277, %279, %281 in 1 : vector<7x12xf32>, vector<7x12xf32>, vector<7x12xf32>, vector<7x12xf32> -> vector<7x48xf32>
    %291 = tpu.concatenate %283, %285, %287, %289 in 1 : vector<6x12xf32>, vector<6x12xf32>, vector<6x12xf32>, vector<6x12xf32> -> vector<6x48xf32>
    %cst_351 = arith.constant dense<0.000000e+00> : vector<7x32xf32>
    %292 = tpu.matmul %290, %0, %cst_351 {dimension_numbers = #tpu.dot_dimension_numbers<[1], [0], [0], [1], [0, 0, 1, 1], [], []>} : vector<7x48xf32>, vector<48x32xf32>, vector<7x32xf32> -> vector<7x32xf32>
    %293 = vector.broadcast %1 : vector<1x32xf32> to vector<7x32xf32>
    %294 = arith.addf %292, %293 : vector<7x32xf32>
    %cst_352 = arith.constant dense<0.000000e+00> : vector<6x32xf32>
    %295 = tpu.matmul %291, %0, %cst_352 {dimension_numbers = #tpu.dot_dimension_numbers<[1], [0], [0], [1], [0, 0, 1, 1], [], []>} : vector<6x48xf32>, vector<48x32xf32>, vector<6x32xf32> -> vector<6x32xf32>
    %296 = vector.broadcast %1 : vector<1x32xf32> to vector<6x32xf32>
    %297 = arith.addf %295, %296 : vector<6x32xf32>
    %cst_353 = arith.constant 0.000000e+00 : f32
    %298 = vector.broadcast %cst_353 : f32 to vector<7x32xf32>
    %299 = arith.maximumf %294, %298 : vector<7x32xf32>
    %c8_354 = arith.constant 8 : index
    %c0_355 = arith.constant 0 : index
    %c0_356 = arith.constant 0 : index
    %300 = vector.load %arg12[%c8_354, %c0_355, %c0_356] : memref<13x7x32xf32, #tpu.memory_space<vmem>>, vector<1x7x32xf32>
    %301 = vector.shape_cast %300 : vector<1x7x32xf32> to vector<7x32xf32>
    %302 = vector.shape_cast %299 : vector<7x32xf32> to vector<1x7x32xf32>
    tpu.vector_store %arg12[%c8_354, %c0_355, %c0_356], %302 {strides = array<i32>} : memref<13x7x32xf32, #tpu.memory_space<vmem>>, vector<1x7x32xf32>,
    %cst_357 = arith.constant 0.000000e+00 : f32
    %303 = vector.broadcast %cst_357 : f32 to vector<6x32xf32>
    %304 = arith.maximumf %297, %303 : vector<6x32xf32>
    %c8_358 = arith.constant 8 : index
    %c0_359 = arith.constant 0 : index
    %c0_360 = arith.constant 0 : index
    %305 = vector.load %arg13[%c8_358, %c0_359, %c0_360] : memref<13x6x32xf32, #tpu.memory_space<vmem>>, vector<1x6x32xf32>
    %306 = vector.shape_cast %305 : vector<1x6x32xf32> to vector<6x32xf32>
    %307 = vector.shape_cast %304 : vector<6x32xf32> to vector<1x6x32xf32>
    tpu.vector_store %arg13[%c8_358, %c0_359, %c0_360], %307 {strides = array<i32>} : memref<13x6x32xf32, #tpu.memory_space<vmem>>, vector<1x6x32xf32>,
    %c0_361 = arith.constant 0 : index
    %c18_362 = arith.constant 18 : index
    %c0_363 = arith.constant 0 : index
    %c0_364 = arith.constant 0 : index
    %308 = vector.load %arg1[%c0_361, %c18_362, %c0_363, %c0_364] : memref<1x28x7x12xf32, #tpu.memory_space<vmem>>, vector<1x1x7x12xf32>
    %309 = vector.shape_cast %308 : vector<1x1x7x12xf32> to vector<7x12xf32>
    %c0_365 = arith.constant 0 : index
    %c19_366 = arith.constant 19 : index
    %c0_367 = arith.constant 0 : index
    %c0_368 = arith.constant 0 : index
    %310 = vector.load %arg1[%c0_365, %c19_366, %c0_367, %c0_368] : memref<1x28x7x12xf32, #tpu.memory_space<vmem>>, vector<1x1x7x12xf32>
    %311 = vector.shape_cast %310 : vector<1x1x7x12xf32> to vector<7x12xf32>
    %c0_369 = arith.constant 0 : index
    %c20 = arith.constant 20 : index
    %c0_370 = arith.constant 0 : index
    %c0_371 = arith.constant 0 : index
    %312 = vector.load %arg1[%c0_369, %c20, %c0_370, %c0_371] : memref<1x28x7x12xf32, #tpu.memory_space<vmem>>, vector<1x1x7x12xf32>
    %313 = vector.shape_cast %312 : vector<1x1x7x12xf32> to vector<7x12xf32>
    %c0_372 = arith.constant 0 : index
    %c21 = arith.constant 21 : index
    %c0_373 = arith.constant 0 : index
    %c0_374 = arith.constant 0 : index
    %314 = vector.load %arg1[%c0_372, %c21, %c0_373, %c0_374] : memref<1x28x7x12xf32, #tpu.memory_space<vmem>>, vector<1x1x7x12xf32>
    %315 = vector.shape_cast %314 : vector<1x1x7x12xf32> to vector<7x12xf32>
    %c0_375 = arith.constant 0 : index
    %c18_376 = arith.constant 18 : index
    %c0_377 = arith.constant 0 : index
    %c0_378 = arith.constant 0 : index
    %316 = vector.load %arg2[%c0_375, %c18_376, %c0_377, %c0_378] : memref<1x28x6x12xf32, #tpu.memory_space<vmem>>, vector<1x1x6x12xf32>
    %317 = vector.shape_cast %316 : vector<1x1x6x12xf32> to vector<6x12xf32>
    %c0_379 = arith.constant 0 : index
    %c19_380 = arith.constant 19 : index
    %c0_381 = arith.constant 0 : index
    %c0_382 = arith.constant 0 : index
    %318 = vector.load %arg2[%c0_379, %c19_380, %c0_381, %c0_382] : memref<1x28x6x12xf32, #tpu.memory_space<vmem>>, vector<1x1x6x12xf32>
    %319 = vector.shape_cast %318 : vector<1x1x6x12xf32> to vector<6x12xf32>
    %c0_383 = arith.constant 0 : index
    %c20_384 = arith.constant 20 : index
    %c0_385 = arith.constant 0 : index
    %c0_386 = arith.constant 0 : index
    %320 = vector.load %arg2[%c0_383, %c20_384, %c0_385, %c0_386] : memref<1x28x6x12xf32, #tpu.memory_space<vmem>>, vector<1x1x6x12xf32>
    %321 = vector.shape_cast %320 : vector<1x1x6x12xf32> to vector<6x12xf32>
    %c0_387 = arith.constant 0 : index
    %c21_388 = arith.constant 21 : index
    %c0_389 = arith.constant 0 : index
    %c0_390 = arith.constant 0 : index
    %322 = vector.load %arg2[%c0_387, %c21_388, %c0_389, %c0_390] : memref<1x28x6x12xf32, #tpu.memory_space<vmem>>, vector<1x1x6x12xf32>
    %323 = vector.shape_cast %322 : vector<1x1x6x12xf32> to vector<6x12xf32>
    %324 = tpu.concatenate %309, %311, %313, %315 in 1 : vector<7x12xf32>, vector<7x12xf32>, vector<7x12xf32>, vector<7x12xf32> -> vector<7x48xf32>
    %325 = tpu.concatenate %317, %319, %321, %323 in 1 : vector<6x12xf32>, vector<6x12xf32>, vector<6x12xf32>, vector<6x12xf32> -> vector<6x48xf32>
    %cst_391 = arith.constant dense<0.000000e+00> : vector<7x32xf32>
    %326 = tpu.matmul %324, %0, %cst_391 {dimension_numbers = #tpu.dot_dimension_numbers<[1], [0], [0], [1], [0, 0, 1, 1], [], []>} : vector<7x48xf32>, vector<48x32xf32>, vector<7x32xf32> -> vector<7x32xf32>
    %327 = vector.broadcast %1 : vector<1x32xf32> to vector<7x32xf32>
    %328 = arith.addf %326, %327 : vector<7x32xf32>
    %cst_392 = arith.constant dense<0.000000e+00> : vector<6x32xf32>
    %329 = tpu.matmul %325, %0, %cst_392 {dimension_numbers = #tpu.dot_dimension_numbers<[1], [0], [0], [1], [0, 0, 1, 1], [], []>} : vector<6x48xf32>, vector<48x32xf32>, vector<6x32xf32> -> vector<6x32xf32>
    %330 = vector.broadcast %1 : vector<1x32xf32> to vector<6x32xf32>
    %331 = arith.addf %329, %330 : vector<6x32xf32>
    %cst_393 = arith.constant 0.000000e+00 : f32
    %332 = vector.broadcast %cst_393 : f32 to vector<7x32xf32>
    %333 = arith.maximumf %328, %332 : vector<7x32xf32>
    %c9_394 = arith.constant 9 : index
    %c0_395 = arith.constant 0 : index
    %c0_396 = arith.constant 0 : index
    %334 = vector.load %arg12[%c9_394, %c0_395, %c0_396] : memref<13x7x32xf32, #tpu.memory_space<vmem>>, vector<1x7x32xf32>
    %335 = vector.shape_cast %334 : vector<1x7x32xf32> to vector<7x32xf32>
    %336 = vector.shape_cast %333 : vector<7x32xf32> to vector<1x7x32xf32>
    tpu.vector_store %arg12[%c9_394, %c0_395, %c0_396], %336 {strides = array<i32>} : memref<13x7x32xf32, #tpu.memory_space<vmem>>, vector<1x7x32xf32>,
    %cst_397 = arith.constant 0.000000e+00 : f32
    %337 = vector.broadcast %cst_397 : f32 to vector<6x32xf32>
    %338 = arith.maximumf %331, %337 : vector<6x32xf32>
    %c9_398 = arith.constant 9 : index
    %c0_399 = arith.constant 0 : index
    %c0_400 = arith.constant 0 : index
    %339 = vector.load %arg13[%c9_398, %c0_399, %c0_400] : memref<13x6x32xf32, #tpu.memory_space<vmem>>, vector<1x6x32xf32>
    %340 = vector.shape_cast %339 : vector<1x6x32xf32> to vector<6x32xf32>
    %341 = vector.shape_cast %338 : vector<6x32xf32> to vector<1x6x32xf32>
    tpu.vector_store %arg13[%c9_398, %c0_399, %c0_400], %341 {strides = array<i32>} : memref<13x6x32xf32, #tpu.memory_space<vmem>>, vector<1x6x32xf32>,
    %c0_401 = arith.constant 0 : index
    %c20_402 = arith.constant 20 : index
    %c0_403 = arith.constant 0 : index
    %c0_404 = arith.constant 0 : index
    %342 = vector.load %arg1[%c0_401, %c20_402, %c0_403, %c0_404] : memref<1x28x7x12xf32, #tpu.memory_space<vmem>>, vector<1x1x7x12xf32>
    %343 = vector.shape_cast %342 : vector<1x1x7x12xf32> to vector<7x12xf32>
    %c0_405 = arith.constant 0 : index
    %c21_406 = arith.constant 21 : index
    %c0_407 = arith.constant 0 : index
    %c0_408 = arith.constant 0 : index
    %344 = vector.load %arg1[%c0_405, %c21_406, %c0_407, %c0_408] : memref<1x28x7x12xf32, #tpu.memory_space<vmem>>, vector<1x1x7x12xf32>
    %345 = vector.shape_cast %344 : vector<1x1x7x12xf32> to vector<7x12xf32>
    %c0_409 = arith.constant 0 : index
    %c22 = arith.constant 22 : index
    %c0_410 = arith.constant 0 : index
    %c0_411 = arith.constant 0 : index
    %346 = vector.load %arg1[%c0_409, %c22, %c0_410, %c0_411] : memref<1x28x7x12xf32, #tpu.memory_space<vmem>>, vector<1x1x7x12xf32>
    %347 = vector.shape_cast %346 : vector<1x1x7x12xf32> to vector<7x12xf32>
    %c0_412 = arith.constant 0 : index
    %c23 = arith.constant 23 : index
    %c0_413 = arith.constant 0 : index
    %c0_414 = arith.constant 0 : index
    %348 = vector.load %arg1[%c0_412, %c23, %c0_413, %c0_414] : memref<1x28x7x12xf32, #tpu.memory_space<vmem>>, vector<1x1x7x12xf32>
    %349 = vector.shape_cast %348 : vector<1x1x7x12xf32> to vector<7x12xf32>
    %c0_415 = arith.constant 0 : index
    %c20_416 = arith.constant 20 : index
    %c0_417 = arith.constant 0 : index
    %c0_418 = arith.constant 0 : index
    %350 = vector.load %arg2[%c0_415, %c20_416, %c0_417, %c0_418] : memref<1x28x6x12xf32, #tpu.memory_space<vmem>>, vector<1x1x6x12xf32>
    %351 = vector.shape_cast %350 : vector<1x1x6x12xf32> to vector<6x12xf32>
    %c0_419 = arith.constant 0 : index
    %c21_420 = arith.constant 21 : index
    %c0_421 = arith.constant 0 : index
    %c0_422 = arith.constant 0 : index
    %352 = vector.load %arg2[%c0_419, %c21_420, %c0_421, %c0_422] : memref<1x28x6x12xf32, #tpu.memory_space<vmem>>, vector<1x1x6x12xf32>
    %353 = vector.shape_cast %352 : vector<1x1x6x12xf32> to vector<6x12xf32>
    %c0_423 = arith.constant 0 : index
    %c22_424 = arith.constant 22 : index
    %c0_425 = arith.constant 0 : index
    %c0_426 = arith.constant 0 : index
    %354 = vector.load %arg2[%c0_423, %c22_424, %c0_425, %c0_426] : memref<1x28x6x12xf32, #tpu.memory_space<vmem>>, vector<1x1x6x12xf32>
    %355 = vector.shape_cast %354 : vector<1x1x6x12xf32> to vector<6x12xf32>
    %c0_427 = arith.constant 0 : index
    %c23_428 = arith.constant 23 : index
    %c0_429 = arith.constant 0 : index
    %c0_430 = arith.constant 0 : index
    %356 = vector.load %arg2[%c0_427, %c23_428, %c0_429, %c0_430] : memref<1x28x6x12xf32, #tpu.memory_space<vmem>>, vector<1x1x6x12xf32>
    %357 = vector.shape_cast %356 : vector<1x1x6x12xf32> to vector<6x12xf32>
    %358 = tpu.concatenate %343, %345, %347, %349 in 1 : vector<7x12xf32>, vector<7x12xf32>, vector<7x12xf32>, vector<7x12xf32> -> vector<7x48xf32>
    %359 = tpu.concatenate %351, %353, %355, %357 in 1 : vector<6x12xf32>, vector<6x12xf32>, vector<6x12xf32>, vector<6x12xf32> -> vector<6x48xf32>
    %cst_431 = arith.constant dense<0.000000e+00> : vector<7x32xf32>
    %360 = tpu.matmul %358, %0, %cst_431 {dimension_numbers = #tpu.dot_dimension_numbers<[1], [0], [0], [1], [0, 0, 1, 1], [], []>} : vector<7x48xf32>, vector<48x32xf32>, vector<7x32xf32> -> vector<7x32xf32>
    %361 = vector.broadcast %1 : vector<1x32xf32> to vector<7x32xf32>
    %362 = arith.addf %360, %361 : vector<7x32xf32>
    %cst_432 = arith.constant dense<0.000000e+00> : vector<6x32xf32>
    %363 = tpu.matmul %359, %0, %cst_432 {dimension_numbers = #tpu.dot_dimension_numbers<[1], [0], [0], [1], [0, 0, 1, 1], [], []>} : vector<6x48xf32>, vector<48x32xf32>, vector<6x32xf32> -> vector<6x32xf32>
    %364 = vector.broadcast %1 : vector<1x32xf32> to vector<6x32xf32>
    %365 = arith.addf %363, %364 : vector<6x32xf32>
    %cst_433 = arith.constant 0.000000e+00 : f32
    %366 = vector.broadcast %cst_433 : f32 to vector<7x32xf32>
    %367 = arith.maximumf %362, %366 : vector<7x32xf32>
    %c10_434 = arith.constant 10 : index
    %c0_435 = arith.constant 0 : index
    %c0_436 = arith.constant 0 : index
    %368 = vector.load %arg12[%c10_434, %c0_435, %c0_436] : memref<13x7x32xf32, #tpu.memory_space<vmem>>, vector<1x7x32xf32>
    %369 = vector.shape_cast %368 : vector<1x7x32xf32> to vector<7x32xf32>
    %370 = vector.shape_cast %367 : vector<7x32xf32> to vector<1x7x32xf32>
    tpu.vector_store %arg12[%c10_434, %c0_435, %c0_436], %370 {strides = array<i32>} : memref<13x7x32xf32, #tpu.memory_space<vmem>>, vector<1x7x32xf32>,
    %cst_437 = arith.constant 0.000000e+00 : f32
    %371 = vector.broadcast %cst_437 : f32 to vector<6x32xf32>
    %372 = arith.maximumf %365, %371 : vector<6x32xf32>
    %c10_438 = arith.constant 10 : index
    %c0_439 = arith.constant 0 : index
    %c0_440 = arith.constant 0 : index
    %373 = vector.load %arg13[%c10_438, %c0_439, %c0_440] : memref<13x6x32xf32, #tpu.memory_space<vmem>>, vector<1x6x32xf32>
    %374 = vector.shape_cast %373 : vector<1x6x32xf32> to vector<6x32xf32>
    %375 = vector.shape_cast %372 : vector<6x32xf32> to vector<1x6x32xf32>
    tpu.vector_store %arg13[%c10_438, %c0_439, %c0_440], %375 {strides = array<i32>} : memref<13x6x32xf32, #tpu.memory_space<vmem>>, vector<1x6x32xf32>,
    %c0_441 = arith.constant 0 : index
    %c22_442 = arith.constant 22 : index
    %c0_443 = arith.constant 0 : index
    %c0_444 = arith.constant 0 : index
    %376 = vector.load %arg1[%c0_441, %c22_442, %c0_443, %c0_444] : memref<1x28x7x12xf32, #tpu.memory_space<vmem>>, vector<1x1x7x12xf32>
    %377 = vector.shape_cast %376 : vector<1x1x7x12xf32> to vector<7x12xf32>
    %c0_445 = arith.constant 0 : index
    %c23_446 = arith.constant 23 : index
    %c0_447 = arith.constant 0 : index
    %c0_448 = arith.constant 0 : index
    %378 = vector.load %arg1[%c0_445, %c23_446, %c0_447, %c0_448] : memref<1x28x7x12xf32, #tpu.memory_space<vmem>>, vector<1x1x7x12xf32>
    %379 = vector.shape_cast %378 : vector<1x1x7x12xf32> to vector<7x12xf32>
    %c0_449 = arith.constant 0 : index
    %c24 = arith.constant 24 : index
    %c0_450 = arith.constant 0 : index
    %c0_451 = arith.constant 0 : index
    %380 = vector.load %arg1[%c0_449, %c24, %c0_450, %c0_451] : memref<1x28x7x12xf32, #tpu.memory_space<vmem>>, vector<1x1x7x12xf32>
    %381 = vector.shape_cast %380 : vector<1x1x7x12xf32> to vector<7x12xf32>
    %c0_452 = arith.constant 0 : index
    %c25 = arith.constant 25 : index
    %c0_453 = arith.constant 0 : index
    %c0_454 = arith.constant 0 : index
    %382 = vector.load %arg1[%c0_452, %c25, %c0_453, %c0_454] : memref<1x28x7x12xf32, #tpu.memory_space<vmem>>, vector<1x1x7x12xf32>
    %383 = vector.shape_cast %382 : vector<1x1x7x12xf32> to vector<7x12xf32>
    %c0_455 = arith.constant 0 : index
    %c22_456 = arith.constant 22 : index
    %c0_457 = arith.constant 0 : index
    %c0_458 = arith.constant 0 : index
    %384 = vector.load %arg2[%c0_455, %c22_456, %c0_457, %c0_458] : memref<1x28x6x12xf32, #tpu.memory_space<vmem>>, vector<1x1x6x12xf32>
    %385 = vector.shape_cast %384 : vector<1x1x6x12xf32> to vector<6x12xf32>
    %c0_459 = arith.constant 0 : index
    %c23_460 = arith.constant 23 : index
    %c0_461 = arith.constant 0 : index
    %c0_462 = arith.constant 0 : index
    %386 = vector.load %arg2[%c0_459, %c23_460, %c0_461, %c0_462] : memref<1x28x6x12xf32, #tpu.memory_space<vmem>>, vector<1x1x6x12xf32>
    %387 = vector.shape_cast %386 : vector<1x1x6x12xf32> to vector<6x12xf32>
    %c0_463 = arith.constant 0 : index
    %c24_464 = arith.constant 24 : index
    %c0_465 = arith.constant 0 : index
    %c0_466 = arith.constant 0 : index
    %388 = vector.load %arg2[%c0_463, %c24_464, %c0_465, %c0_466] : memref<1x28x6x12xf32, #tpu.memory_space<vmem>>, vector<1x1x6x12xf32>
    %389 = vector.shape_cast %388 : vector<1x1x6x12xf32> to vector<6x12xf32>
    %c0_467 = arith.constant 0 : index
    %c25_468 = arith.constant 25 : index
    %c0_469 = arith.constant 0 : index
    %c0_470 = arith.constant 0 : index
    %390 = vector.load %arg2[%c0_467, %c25_468, %c0_469, %c0_470] : memref<1x28x6x12xf32, #tpu.memory_space<vmem>>, vector<1x1x6x12xf32>
    %391 = vector.shape_cast %390 : vector<1x1x6x12xf32> to vector<6x12xf32>
    %392 = tpu.concatenate %377, %379, %381, %383 in 1 : vector<7x12xf32>, vector<7x12xf32>, vector<7x12xf32>, vector<7x12xf32> -> vector<7x48xf32>
    %393 = tpu.concatenate %385, %387, %389, %391 in 1 : vector<6x12xf32>, vector<6x12xf32>, vector<6x12xf32>, vector<6x12xf32> -> vector<6x48xf32>
    %cst_471 = arith.constant dense<0.000000e+00> : vector<7x32xf32>
    %394 = tpu.matmul %392, %0, %cst_471 {dimension_numbers = #tpu.dot_dimension_numbers<[1], [0], [0], [1], [0, 0, 1, 1], [], []>} : vector<7x48xf32>, vector<48x32xf32>, vector<7x32xf32> -> vector<7x32xf32>
    %395 = vector.broadcast %1 : vector<1x32xf32> to vector<7x32xf32>
    %396 = arith.addf %394, %395 : vector<7x32xf32>
    %cst_472 = arith.constant dense<0.000000e+00> : vector<6x32xf32>
    %397 = tpu.matmul %393, %0, %cst_472 {dimension_numbers = #tpu.dot_dimension_numbers<[1], [0], [0], [1], [0, 0, 1, 1], [], []>} : vector<6x48xf32>, vector<48x32xf32>, vector<6x32xf32> -> vector<6x32xf32>
    %398 = vector.broadcast %1 : vector<1x32xf32> to vector<6x32xf32>
    %399 = arith.addf %397, %398 : vector<6x32xf32>
    %cst_473 = arith.constant 0.000000e+00 : f32
    %400 = vector.broadcast %cst_473 : f32 to vector<7x32xf32>
    %401 = arith.maximumf %396, %400 : vector<7x32xf32>
    %c11_474 = arith.constant 11 : index
    %c0_475 = arith.constant 0 : index
    %c0_476 = arith.constant 0 : index
    %402 = vector.load %arg12[%c11_474, %c0_475, %c0_476] : memref<13x7x32xf32, #tpu.memory_space<vmem>>, vector<1x7x32xf32>
    %403 = vector.shape_cast %402 : vector<1x7x32xf32> to vector<7x32xf32>
    %404 = vector.shape_cast %401 : vector<7x32xf32> to vector<1x7x32xf32>
    tpu.vector_store %arg12[%c11_474, %c0_475, %c0_476], %404 {strides = array<i32>} : memref<13x7x32xf32, #tpu.memory_space<vmem>>, vector<1x7x32xf32>,
    %cst_477 = arith.constant 0.000000e+00 : f32
    %405 = vector.broadcast %cst_477 : f32 to vector<6x32xf32>
    %406 = arith.maximumf %399, %405 : vector<6x32xf32>
    %c11_478 = arith.constant 11 : index
    %c0_479 = arith.constant 0 : index
    %c0_480 = arith.constant 0 : index
    %407 = vector.load %arg13[%c11_478, %c0_479, %c0_480] : memref<13x6x32xf32, #tpu.memory_space<vmem>>, vector<1x6x32xf32>
    %408 = vector.shape_cast %407 : vector<1x6x32xf32> to vector<6x32xf32>
    %409 = vector.shape_cast %406 : vector<6x32xf32> to vector<1x6x32xf32>
    tpu.vector_store %arg13[%c11_478, %c0_479, %c0_480], %409 {strides = array<i32>} : memref<13x6x32xf32, #tpu.memory_space<vmem>>, vector<1x6x32xf32>,
    %c0_481 = arith.constant 0 : index
    %c24_482 = arith.constant 24 : index
    %c0_483 = arith.constant 0 : index
    %c0_484 = arith.constant 0 : index
    %410 = vector.load %arg1[%c0_481, %c24_482, %c0_483, %c0_484] : memref<1x28x7x12xf32, #tpu.memory_space<vmem>>, vector<1x1x7x12xf32>
    %411 = vector.shape_cast %410 : vector<1x1x7x12xf32> to vector<7x12xf32>
    %c0_485 = arith.constant 0 : index
    %c25_486 = arith.constant 25 : index
    %c0_487 = arith.constant 0 : index
    %c0_488 = arith.constant 0 : index
    %412 = vector.load %arg1[%c0_485, %c25_486, %c0_487, %c0_488] : memref<1x28x7x12xf32, #tpu.memory_space<vmem>>, vector<1x1x7x12xf32>
    %413 = vector.shape_cast %412 : vector<1x1x7x12xf32> to vector<7x12xf32>
    %c0_489 = arith.constant 0 : index
    %c26 = arith.constant 26 : index
    %c0_490 = arith.constant 0 : index
    %c0_491 = arith.constant 0 : index
    %414 = vector.load %arg1[%c0_489, %c26, %c0_490, %c0_491] : memref<1x28x7x12xf32, #tpu.memory_space<vmem>>, vector<1x1x7x12xf32>
    %415 = vector.shape_cast %414 : vector<1x1x7x12xf32> to vector<7x12xf32>
    %c0_492 = arith.constant 0 : index
    %c27 = arith.constant 27 : index
    %c0_493 = arith.constant 0 : index
    %c0_494 = arith.constant 0 : index
    %416 = vector.load %arg1[%c0_492, %c27, %c0_493, %c0_494] : memref<1x28x7x12xf32, #tpu.memory_space<vmem>>, vector<1x1x7x12xf32>
    %417 = vector.shape_cast %416 : vector<1x1x7x12xf32> to vector<7x12xf32>
    %c0_495 = arith.constant 0 : index
    %c24_496 = arith.constant 24 : index
    %c0_497 = arith.constant 0 : index
    %c0_498 = arith.constant 0 : index
    %418 = vector.load %arg2[%c0_495, %c24_496, %c0_497, %c0_498] : memref<1x28x6x12xf32, #tpu.memory_space<vmem>>, vector<1x1x6x12xf32>
    %419 = vector.shape_cast %418 : vector<1x1x6x12xf32> to vector<6x12xf32>
    %c0_499 = arith.constant 0 : index
    %c25_500 = arith.constant 25 : index
    %c0_501 = arith.constant 0 : index
    %c0_502 = arith.constant 0 : index
    %420 = vector.load %arg2[%c0_499, %c25_500, %c0_501, %c0_502] : memref<1x28x6x12xf32, #tpu.memory_space<vmem>>, vector<1x1x6x12xf32>
    %421 = vector.shape_cast %420 : vector<1x1x6x12xf32> to vector<6x12xf32>
    %c0_503 = arith.constant 0 : index
    %c26_504 = arith.constant 26 : index
    %c0_505 = arith.constant 0 : index
    %c0_506 = arith.constant 0 : index
    %422 = vector.load %arg2[%c0_503, %c26_504, %c0_505, %c0_506] : memref<1x28x6x12xf32, #tpu.memory_space<vmem>>, vector<1x1x6x12xf32>
    %423 = vector.shape_cast %422 : vector<1x1x6x12xf32> to vector<6x12xf32>
    %c0_507 = arith.constant 0 : index
    %c27_508 = arith.constant 27 : index
    %c0_509 = arith.constant 0 : index
    %c0_510 = arith.constant 0 : index
    %424 = vector.load %arg2[%c0_507, %c27_508, %c0_509, %c0_510] : memref<1x28x6x12xf32, #tpu.memory_space<vmem>>, vector<1x1x6x12xf32>
    %425 = vector.shape_cast %424 : vector<1x1x6x12xf32> to vector<6x12xf32>
    %426 = tpu.concatenate %411, %413, %415, %417 in 1 : vector<7x12xf32>, vector<7x12xf32>, vector<7x12xf32>, vector<7x12xf32> -> vector<7x48xf32>
    %427 = tpu.concatenate %419, %421, %423, %425 in 1 : vector<6x12xf32>, vector<6x12xf32>, vector<6x12xf32>, vector<6x12xf32> -> vector<6x48xf32>
    %cst_511 = arith.constant dense<0.000000e+00> : vector<7x32xf32>
    %428 = tpu.matmul %426, %0, %cst_511 {dimension_numbers = #tpu.dot_dimension_numbers<[1], [0], [0], [1], [0, 0, 1, 1], [], []>} : vector<7x48xf32>, vector<48x32xf32>, vector<7x32xf32> -> vector<7x32xf32>
    %429 = vector.broadcast %1 : vector<1x32xf32> to vector<7x32xf32>
    %430 = arith.addf %428, %429 : vector<7x32xf32>
    %cst_512 = arith.constant dense<0.000000e+00> : vector<6x32xf32>
    %431 = tpu.matmul %427, %0, %cst_512 {dimension_numbers = #tpu.dot_dimension_numbers<[1], [0], [0], [1], [0, 0, 1, 1], [], []>} : vector<6x48xf32>, vector<48x32xf32>, vector<6x32xf32> -> vector<6x32xf32>
    %432 = vector.broadcast %1 : vector<1x32xf32> to vector<6x32xf32>
    %433 = arith.addf %431, %432 : vector<6x32xf32>
    %cst_513 = arith.constant 0.000000e+00 : f32
    %434 = vector.broadcast %cst_513 : f32 to vector<7x32xf32>
    %435 = arith.maximumf %430, %434 : vector<7x32xf32>
    %c12_514 = arith.constant 12 : index
    %c0_515 = arith.constant 0 : index
    %c0_516 = arith.constant 0 : index
    %436 = vector.load %arg12[%c12_514, %c0_515, %c0_516] : memref<13x7x32xf32, #tpu.memory_space<vmem>>, vector<1x7x32xf32>
    %437 = vector.shape_cast %436 : vector<1x7x32xf32> to vector<7x32xf32>
    %438 = vector.shape_cast %435 : vector<7x32xf32> to vector<1x7x32xf32>
    tpu.vector_store %arg12[%c12_514, %c0_515, %c0_516], %438 {strides = array<i32>} : memref<13x7x32xf32, #tpu.memory_space<vmem>>, vector<1x7x32xf32>,
    %cst_517 = arith.constant 0.000000e+00 : f32
    %439 = vector.broadcast %cst_517 : f32 to vector<6x32xf32>
    %440 = arith.maximumf %433, %439 : vector<6x32xf32>
    %c12_518 = arith.constant 12 : index
    %c0_519 = arith.constant 0 : index
    %c0_520 = arith.constant 0 : index
    %441 = vector.load %arg13[%c12_518, %c0_519, %c0_520] : memref<13x6x32xf32, #tpu.memory_space<vmem>>, vector<1x6x32xf32>
    %442 = vector.shape_cast %441 : vector<1x6x32xf32> to vector<6x32xf32>
    %443 = vector.shape_cast %440 : vector<6x32xf32> to vector<1x6x32xf32>
    tpu.vector_store %arg13[%c12_518, %c0_519, %c0_520], %443 {strides = array<i32>} : memref<13x6x32xf32, #tpu.memory_space<vmem>>, vector<1x6x32xf32>,
    %c0_521 = arith.constant 0 : index
    %c0_522 = arith.constant 0 : index
    %444 = vector.load %arg5[%c0_521, %c0_522] : memref<288x64xf32, #tpu.memory_space<vmem>>, vector<288x64xf32>
    %c0_523 = arith.constant 0 : index
    %c0_524 = arith.constant 0 : index
    %445 = vector.load %arg6[%c0_523, %c0_524] : memref<1x64xf32, #tpu.memory_space<vmem>>, vector<1x64xf32>
    %c0_525 = arith.constant 0 : index
    %c0_526 = arith.constant 0 : index
    %c0_527 = arith.constant 0 : index
    %446 = vector.load %arg12[%c0_525, %c0_526, %c0_527] : memref<13x7x32xf32, #tpu.memory_space<vmem>>, vector<1x7x32xf32>
    %447 = vector.shape_cast %446 : vector<1x7x32xf32> to vector<7x32xf32>
    %c0_528 = arith.constant 0 : index
    %c0_529 = arith.constant 0 : index
    %c0_530 = arith.constant 0 : index
    %448 = vector.load %arg13[%c0_528, %c0_529, %c0_530] : memref<13x6x32xf32, #tpu.memory_space<vmem>>, vector<1x6x32xf32>
    %449 = vector.shape_cast %448 : vector<1x6x32xf32> to vector<6x32xf32>
    %450 = vector.extract_strided_slice %447 {offsets = [0, 0], sizes = [6, 32], strides = [1, 1]} : vector<7x32xf32> to vector<6x32xf32>
    %451 = vector.extract_strided_slice %447 {offsets = [1, 0], sizes = [6, 32], strides = [1, 1]} : vector<7x32xf32> to vector<6x32xf32>
    %c1_531 = arith.constant 1 : index
    %c0_532 = arith.constant 0 : index
    %c0_533 = arith.constant 0 : index
    %452 = vector.load %arg12[%c1_531, %c0_532, %c0_533] : memref<13x7x32xf32, #tpu.memory_space<vmem>>, vector<1x7x32xf32>
    %453 = vector.shape_cast %452 : vector<1x7x32xf32> to vector<7x32xf32>
    %c1_534 = arith.constant 1 : index
    %c0_535 = arith.constant 0 : index
    %c0_536 = arith.constant 0 : index
    %454 = vector.load %arg13[%c1_534, %c0_535, %c0_536] : memref<13x6x32xf32, #tpu.memory_space<vmem>>, vector<1x6x32xf32>
    %455 = vector.shape_cast %454 : vector<1x6x32xf32> to vector<6x32xf32>
    %456 = vector.extract_strided_slice %453 {offsets = [0, 0], sizes = [6, 32], strides = [1, 1]} : vector<7x32xf32> to vector<6x32xf32>
    %457 = vector.extract_strided_slice %453 {offsets = [1, 0], sizes = [6, 32], strides = [1, 1]} : vector<7x32xf32> to vector<6x32xf32>
    %c2_537 = arith.constant 2 : index
    %c0_538 = arith.constant 0 : index
    %c0_539 = arith.constant 0 : index
    %458 = vector.load %arg12[%c2_537, %c0_538, %c0_539] : memref<13x7x32xf32, #tpu.memory_space<vmem>>, vector<1x7x32xf32>
    %459 = vector.shape_cast %458 : vector<1x7x32xf32> to vector<7x32xf32>
    %c2_540 = arith.constant 2 : index
    %c0_541 = arith.constant 0 : index
    %c0_542 = arith.constant 0 : index
    %460 = vector.load %arg13[%c2_540, %c0_541, %c0_542] : memref<13x6x32xf32, #tpu.memory_space<vmem>>, vector<1x6x32xf32>
    %461 = vector.shape_cast %460 : vector<1x6x32xf32> to vector<6x32xf32>
    %462 = vector.extract_strided_slice %459 {offsets = [0, 0], sizes = [6, 32], strides = [1, 1]} : vector<7x32xf32> to vector<6x32xf32>
    %463 = vector.extract_strided_slice %459 {offsets = [1, 0], sizes = [6, 32], strides = [1, 1]} : vector<7x32xf32> to vector<6x32xf32>
    %464 = tpu.concatenate %450, %449, %451, %456, %455, %457, %462, %461, %463 in 1 : vector<6x32xf32>, vector<6x32xf32>, vector<6x32xf32>, vector<6x32xf32>, vector<6x32xf32>, vector<6x32xf32>, vector<6x32xf32>, vector<6x32xf32>, vector<6x32xf32> -> vector<6x288xf32>
    %cst_543 = arith.constant dense<0.000000e+00> : vector<6x64xf32>
    %465 = tpu.matmul %464, %444, %cst_543 {dimension_numbers = #tpu.dot_dimension_numbers<[1], [0], [0], [1], [0, 0, 1, 1], [], []>} : vector<6x288xf32>, vector<288x64xf32>, vector<6x64xf32> -> vector<6x64xf32>
    %466 = vector.broadcast %445 : vector<1x64xf32> to vector<6x64xf32>
    %467 = arith.addf %465, %466 : vector<6x64xf32>
    %cst_544 = arith.constant 0.000000e+00 : f32
    %468 = vector.broadcast %cst_544 : f32 to vector<6x64xf32>
    %469 = arith.maximumf %467, %468 : vector<6x64xf32>
    %470 = vector.extract_strided_slice %469 {offsets = [0, 0], sizes = [1, 64], strides = [1, 1]} : vector<6x64xf32> to vector<1x64xf32>
    %c0_545 = arith.constant 0 : index
    %c0_546 = arith.constant 0 : index
    %471 = vector.load %arg14[%c0_545, %c0_546] : memref<1x2304xf32, #tpu.memory_space<vmem>>, vector<1x64xf32>
    tpu.vector_store %arg14[%c0_545, %c0_546], %470 {strides = array<i32>} : memref<1x2304xf32, #tpu.memory_space<vmem>>, vector<1x64xf32>,
    %472 = vector.extract_strided_slice %469 {offsets = [1, 0], sizes = [1, 64], strides = [1, 1]} : vector<6x64xf32> to vector<1x64xf32>
    %c0_547 = arith.constant 0 : index
    %c64 = arith.constant 64 : index
    %473 = vector.load %arg14[%c0_547, %c64] : memref<1x2304xf32, #tpu.memory_space<vmem>>, vector<1x64xf32>
    tpu.vector_store %arg14[%c0_547, %c64], %472 {strides = array<i32>} : memref<1x2304xf32, #tpu.memory_space<vmem>>, vector<1x64xf32>,
    %474 = vector.extract_strided_slice %469 {offsets = [2, 0], sizes = [1, 64], strides = [1, 1]} : vector<6x64xf32> to vector<1x64xf32>
    %c0_548 = arith.constant 0 : index
    %c128 = arith.constant 128 : index
    %475 = vector.load %arg14[%c0_548, %c128] : memref<1x2304xf32, #tpu.memory_space<vmem>>, vector<1x64xf32>
    tpu.vector_store %arg14[%c0_548, %c128], %474 {strides = array<i32>} : memref<1x2304xf32, #tpu.memory_space<vmem>>, vector<1x64xf32>,
    %476 = vector.extract_strided_slice %469 {offsets = [3, 0], sizes = [1, 64], strides = [1, 1]} : vector<6x64xf32> to vector<1x64xf32>
    %c0_549 = arith.constant 0 : index
    %c192 = arith.constant 192 : index
    %477 = vector.load %arg14[%c0_549, %c192] : memref<1x2304xf32, #tpu.memory_space<vmem>>, vector<1x64xf32>
    tpu.vector_store %arg14[%c0_549, %c192], %476 {strides = array<i32>} : memref<1x2304xf32, #tpu.memory_space<vmem>>, vector<1x64xf32>,
    %478 = vector.extract_strided_slice %469 {offsets = [4, 0], sizes = [1, 64], strides = [1, 1]} : vector<6x64xf32> to vector<1x64xf32>
    %c0_550 = arith.constant 0 : index
    %c256 = arith.constant 256 : index
    %479 = vector.load %arg14[%c0_550, %c256] : memref<1x2304xf32, #tpu.memory_space<vmem>>, vector<1x64xf32>
    tpu.vector_store %arg14[%c0_550, %c256], %478 {strides = array<i32>} : memref<1x2304xf32, #tpu.memory_space<vmem>>, vector<1x64xf32>,
    %480 = vector.extract_strided_slice %469 {offsets = [5, 0], sizes = [1, 64], strides = [1, 1]} : vector<6x64xf32> to vector<1x64xf32>
    %c0_551 = arith.constant 0 : index
    %c320 = arith.constant 320 : index
    %481 = vector.load %arg14[%c0_551, %c320] : memref<1x2304xf32, #tpu.memory_space<vmem>>, vector<1x64xf32>
    tpu.vector_store %arg14[%c0_551, %c320], %480 {strides = array<i32>} : memref<1x2304xf32, #tpu.memory_space<vmem>>, vector<1x64xf32>,
    %c2_552 = arith.constant 2 : index
    %c0_553 = arith.constant 0 : index
    %c0_554 = arith.constant 0 : index
    %482 = vector.load %arg12[%c2_552, %c0_553, %c0_554] : memref<13x7x32xf32, #tpu.memory_space<vmem>>, vector<1x7x32xf32>
    %483 = vector.shape_cast %482 : vector<1x7x32xf32> to vector<7x32xf32>
    %c2_555 = arith.constant 2 : index
    %c0_556 = arith.constant 0 : index
    %c0_557 = arith.constant 0 : index
    %484 = vector.load %arg13[%c2_555, %c0_556, %c0_557] : memref<13x6x32xf32, #tpu.memory_space<vmem>>, vector<1x6x32xf32>
    %485 = vector.shape_cast %484 : vector<1x6x32xf32> to vector<6x32xf32>
    %486 = vector.extract_strided_slice %483 {offsets = [0, 0], sizes = [6, 32], strides = [1, 1]} : vector<7x32xf32> to vector<6x32xf32>
    %487 = vector.extract_strided_slice %483 {offsets = [1, 0], sizes = [6, 32], strides = [1, 1]} : vector<7x32xf32> to vector<6x32xf32>
    %c3_558 = arith.constant 3 : index
    %c0_559 = arith.constant 0 : index
    %c0_560 = arith.constant 0 : index
    %488 = vector.load %arg12[%c3_558, %c0_559, %c0_560] : memref<13x7x32xf32, #tpu.memory_space<vmem>>, vector<1x7x32xf32>
    %489 = vector.shape_cast %488 : vector<1x7x32xf32> to vector<7x32xf32>
    %c3_561 = arith.constant 3 : index
    %c0_562 = arith.constant 0 : index
    %c0_563 = arith.constant 0 : index
    %490 = vector.load %arg13[%c3_561, %c0_562, %c0_563] : memref<13x6x32xf32, #tpu.memory_space<vmem>>, vector<1x6x32xf32>
    %491 = vector.shape_cast %490 : vector<1x6x32xf32> to vector<6x32xf32>
    %492 = vector.extract_strided_slice %489 {offsets = [0, 0], sizes = [6, 32], strides = [1, 1]} : vector<7x32xf32> to vector<6x32xf32>
    %493 = vector.extract_strided_slice %489 {offsets = [1, 0], sizes = [6, 32], strides = [1, 1]} : vector<7x32xf32> to vector<6x32xf32>
    %c4_564 = arith.constant 4 : index
    %c0_565 = arith.constant 0 : index
    %c0_566 = arith.constant 0 : index
    %494 = vector.load %arg12[%c4_564, %c0_565, %c0_566] : memref<13x7x32xf32, #tpu.memory_space<vmem>>, vector<1x7x32xf32>
    %495 = vector.shape_cast %494 : vector<1x7x32xf32> to vector<7x32xf32>
    %c4_567 = arith.constant 4 : index
    %c0_568 = arith.constant 0 : index
    %c0_569 = arith.constant 0 : index
    %496 = vector.load %arg13[%c4_567, %c0_568, %c0_569] : memref<13x6x32xf32, #tpu.memory_space<vmem>>, vector<1x6x32xf32>
    %497 = vector.shape_cast %496 : vector<1x6x32xf32> to vector<6x32xf32>
    %498 = vector.extract_strided_slice %495 {offsets = [0, 0], sizes = [6, 32], strides = [1, 1]} : vector<7x32xf32> to vector<6x32xf32>
    %499 = vector.extract_strided_slice %495 {offsets = [1, 0], sizes = [6, 32], strides = [1, 1]} : vector<7x32xf32> to vector<6x32xf32>
    %500 = tpu.concatenate %486, %485, %487, %492, %491, %493, %498, %497, %499 in 1 : vector<6x32xf32>, vector<6x32xf32>, vector<6x32xf32>, vector<6x32xf32>, vector<6x32xf32>, vector<6x32xf32>, vector<6x32xf32>, vector<6x32xf32>, vector<6x32xf32> -> vector<6x288xf32>
    %cst_570 = arith.constant dense<0.000000e+00> : vector<6x64xf32>
    %501 = tpu.matmul %500, %444, %cst_570 {dimension_numbers = #tpu.dot_dimension_numbers<[1], [0], [0], [1], [0, 0, 1, 1], [], []>} : vector<6x288xf32>, vector<288x64xf32>, vector<6x64xf32> -> vector<6x64xf32>
    %502 = vector.broadcast %445 : vector<1x64xf32> to vector<6x64xf32>
    %503 = arith.addf %501, %502 : vector<6x64xf32>
    %cst_571 = arith.constant 0.000000e+00 : f32
    %504 = vector.broadcast %cst_571 : f32 to vector<6x64xf32>
    %505 = arith.maximumf %503, %504 : vector<6x64xf32>
    %506 = vector.extract_strided_slice %505 {offsets = [0, 0], sizes = [1, 64], strides = [1, 1]} : vector<6x64xf32> to vector<1x64xf32>
    %c0_572 = arith.constant 0 : index
    %c384 = arith.constant 384 : index
    %507 = vector.load %arg14[%c0_572, %c384] : memref<1x2304xf32, #tpu.memory_space<vmem>>, vector<1x64xf32>
    tpu.vector_store %arg14[%c0_572, %c384], %506 {strides = array<i32>} : memref<1x2304xf32, #tpu.memory_space<vmem>>, vector<1x64xf32>,
    %508 = vector.extract_strided_slice %505 {offsets = [1, 0], sizes = [1, 64], strides = [1, 1]} : vector<6x64xf32> to vector<1x64xf32>
    %c0_573 = arith.constant 0 : index
    %c448 = arith.constant 448 : index
    %509 = vector.load %arg14[%c0_573, %c448] : memref<1x2304xf32, #tpu.memory_space<vmem>>, vector<1x64xf32>
    tpu.vector_store %arg14[%c0_573, %c448], %508 {strides = array<i32>} : memref<1x2304xf32, #tpu.memory_space<vmem>>, vector<1x64xf32>,
    %510 = vector.extract_strided_slice %505 {offsets = [2, 0], sizes = [1, 64], strides = [1, 1]} : vector<6x64xf32> to vector<1x64xf32>
    %c0_574 = arith.constant 0 : index
    %c512 = arith.constant 512 : index
    %511 = vector.load %arg14[%c0_574, %c512] : memref<1x2304xf32, #tpu.memory_space<vmem>>, vector<1x64xf32>
    tpu.vector_store %arg14[%c0_574, %c512], %510 {strides = array<i32>} : memref<1x2304xf32, #tpu.memory_space<vmem>>, vector<1x64xf32>,
    %512 = vector.extract_strided_slice %505 {offsets = [3, 0], sizes = [1, 64], strides = [1, 1]} : vector<6x64xf32> to vector<1x64xf32>
    %c0_575 = arith.constant 0 : index
    %c576 = arith.constant 576 : index
    %513 = vector.load %arg14[%c0_575, %c576] : memref<1x2304xf32, #tpu.memory_space<vmem>>, vector<1x64xf32>
    tpu.vector_store %arg14[%c0_575, %c576], %512 {strides = array<i32>} : memref<1x2304xf32, #tpu.memory_space<vmem>>, vector<1x64xf32>,
    %514 = vector.extract_strided_slice %505 {offsets = [4, 0], sizes = [1, 64], strides = [1, 1]} : vector<6x64xf32> to vector<1x64xf32>
    %c0_576 = arith.constant 0 : index
    %c640 = arith.constant 640 : index
    %515 = vector.load %arg14[%c0_576, %c640] : memref<1x2304xf32, #tpu.memory_space<vmem>>, vector<1x64xf32>
    tpu.vector_store %arg14[%c0_576, %c640], %514 {strides = array<i32>} : memref<1x2304xf32, #tpu.memory_space<vmem>>, vector<1x64xf32>,
    %516 = vector.extract_strided_slice %505 {offsets = [5, 0], sizes = [1, 64], strides = [1, 1]} : vector<6x64xf32> to vector<1x64xf32>
    %c0_577 = arith.constant 0 : index
    %c704 = arith.constant 704 : index
    %517 = vector.load %arg14[%c0_577, %c704] : memref<1x2304xf32, #tpu.memory_space<vmem>>, vector<1x64xf32>
    tpu.vector_store %arg14[%c0_577, %c704], %516 {strides = array<i32>} : memref<1x2304xf32, #tpu.memory_space<vmem>>, vector<1x64xf32>,
    %c4_578 = arith.constant 4 : index
    %c0_579 = arith.constant 0 : index
    %c0_580 = arith.constant 0 : index
    %518 = vector.load %arg12[%c4_578, %c0_579, %c0_580] : memref<13x7x32xf32, #tpu.memory_space<vmem>>, vector<1x7x32xf32>
    %519 = vector.shape_cast %518 : vector<1x7x32xf32> to vector<7x32xf32>
    %c4_581 = arith.constant 4 : index
    %c0_582 = arith.constant 0 : index
    %c0_583 = arith.constant 0 : index
    %520 = vector.load %arg13[%c4_581, %c0_582, %c0_583] : memref<13x6x32xf32, #tpu.memory_space<vmem>>, vector<1x6x32xf32>
    %521 = vector.shape_cast %520 : vector<1x6x32xf32> to vector<6x32xf32>
    %522 = vector.extract_strided_slice %519 {offsets = [0, 0], sizes = [6, 32], strides = [1, 1]} : vector<7x32xf32> to vector<6x32xf32>
    %523 = vector.extract_strided_slice %519 {offsets = [1, 0], sizes = [6, 32], strides = [1, 1]} : vector<7x32xf32> to vector<6x32xf32>
    %c5_584 = arith.constant 5 : index
    %c0_585 = arith.constant 0 : index
    %c0_586 = arith.constant 0 : index
    %524 = vector.load %arg12[%c5_584, %c0_585, %c0_586] : memref<13x7x32xf32, #tpu.memory_space<vmem>>, vector<1x7x32xf32>
    %525 = vector.shape_cast %524 : vector<1x7x32xf32> to vector<7x32xf32>
    %c5_587 = arith.constant 5 : index
    %c0_588 = arith.constant 0 : index
    %c0_589 = arith.constant 0 : index
    %526 = vector.load %arg13[%c5_587, %c0_588, %c0_589] : memref<13x6x32xf32, #tpu.memory_space<vmem>>, vector<1x6x32xf32>
    %527 = vector.shape_cast %526 : vector<1x6x32xf32> to vector<6x32xf32>
    %528 = vector.extract_strided_slice %525 {offsets = [0, 0], sizes = [6, 32], strides = [1, 1]} : vector<7x32xf32> to vector<6x32xf32>
    %529 = vector.extract_strided_slice %525 {offsets = [1, 0], sizes = [6, 32], strides = [1, 1]} : vector<7x32xf32> to vector<6x32xf32>
    %c6_590 = arith.constant 6 : index
    %c0_591 = arith.constant 0 : index
    %c0_592 = arith.constant 0 : index
    %530 = vector.load %arg12[%c6_590, %c0_591, %c0_592] : memref<13x7x32xf32, #tpu.memory_space<vmem>>, vector<1x7x32xf32>
    %531 = vector.shape_cast %530 : vector<1x7x32xf32> to vector<7x32xf32>
    %c6_593 = arith.constant 6 : index
    %c0_594 = arith.constant 0 : index
    %c0_595 = arith.constant 0 : index
    %532 = vector.load %arg13[%c6_593, %c0_594, %c0_595] : memref<13x6x32xf32, #tpu.memory_space<vmem>>, vector<1x6x32xf32>
    %533 = vector.shape_cast %532 : vector<1x6x32xf32> to vector<6x32xf32>
    %534 = vector.extract_strided_slice %531 {offsets = [0, 0], sizes = [6, 32], strides = [1, 1]} : vector<7x32xf32> to vector<6x32xf32>
    %535 = vector.extract_strided_slice %531 {offsets = [1, 0], sizes = [6, 32], strides = [1, 1]} : vector<7x32xf32> to vector<6x32xf32>
    %536 = tpu.concatenate %522, %521, %523, %528, %527, %529, %534, %533, %535 in 1 : vector<6x32xf32>, vector<6x32xf32>, vector<6x32xf32>, vector<6x32xf32>, vector<6x32xf32>, vector<6x32xf32>, vector<6x32xf32>, vector<6x32xf32>, vector<6x32xf32> -> vector<6x288xf32>
    %cst_596 = arith.constant dense<0.000000e+00> : vector<6x64xf32>
    %537 = tpu.matmul %536, %444, %cst_596 {dimension_numbers = #tpu.dot_dimension_numbers<[1], [0], [0], [1], [0, 0, 1, 1], [], []>} : vector<6x288xf32>, vector<288x64xf32>, vector<6x64xf32> -> vector<6x64xf32>
    %538 = vector.broadcast %445 : vector<1x64xf32> to vector<6x64xf32>
    %539 = arith.addf %537, %538 : vector<6x64xf32>
    %cst_597 = arith.constant 0.000000e+00 : f32
    %540 = vector.broadcast %cst_597 : f32 to vector<6x64xf32>
    %541 = arith.maximumf %539, %540 : vector<6x64xf32>
    %542 = vector.extract_strided_slice %541 {offsets = [0, 0], sizes = [1, 64], strides = [1, 1]} : vector<6x64xf32> to vector<1x64xf32>
    %c0_598 = arith.constant 0 : index
    %c768 = arith.constant 768 : index
    %543 = vector.load %arg14[%c0_598, %c768] : memref<1x2304xf32, #tpu.memory_space<vmem>>, vector<1x64xf32>
    tpu.vector_store %arg14[%c0_598, %c768], %542 {strides = array<i32>} : memref<1x2304xf32, #tpu.memory_space<vmem>>, vector<1x64xf32>,
    %544 = vector.extract_strided_slice %541 {offsets = [1, 0], sizes = [1, 64], strides = [1, 1]} : vector<6x64xf32> to vector<1x64xf32>
    %c0_599 = arith.constant 0 : index
    %c832 = arith.constant 832 : index
    %545 = vector.load %arg14[%c0_599, %c832] : memref<1x2304xf32, #tpu.memory_space<vmem>>, vector<1x64xf32>
    tpu.vector_store %arg14[%c0_599, %c832], %544 {strides = array<i32>} : memref<1x2304xf32, #tpu.memory_space<vmem>>, vector<1x64xf32>,
    %546 = vector.extract_strided_slice %541 {offsets = [2, 0], sizes = [1, 64], strides = [1, 1]} : vector<6x64xf32> to vector<1x64xf32>
    %c0_600 = arith.constant 0 : index
    %c896 = arith.constant 896 : index
    %547 = vector.load %arg14[%c0_600, %c896] : memref<1x2304xf32, #tpu.memory_space<vmem>>, vector<1x64xf32>
    tpu.vector_store %arg14[%c0_600, %c896], %546 {strides = array<i32>} : memref<1x2304xf32, #tpu.memory_space<vmem>>, vector<1x64xf32>,
    %548 = vector.extract_strided_slice %541 {offsets = [3, 0], sizes = [1, 64], strides = [1, 1]} : vector<6x64xf32> to vector<1x64xf32>
    %c0_601 = arith.constant 0 : index
    %c960 = arith.constant 960 : index
    %549 = vector.load %arg14[%c0_601, %c960] : memref<1x2304xf32, #tpu.memory_space<vmem>>, vector<1x64xf32>
    tpu.vector_store %arg14[%c0_601, %c960], %548 {strides = array<i32>} : memref<1x2304xf32, #tpu.memory_space<vmem>>, vector<1x64xf32>,
    %550 = vector.extract_strided_slice %541 {offsets = [4, 0], sizes = [1, 64], strides = [1, 1]} : vector<6x64xf32> to vector<1x64xf32>
    %c0_602 = arith.constant 0 : index
    %c1024 = arith.constant 1024 : index
    %551 = vector.load %arg14[%c0_602, %c1024] : memref<1x2304xf32, #tpu.memory_space<vmem>>, vector<1x64xf32>
    tpu.vector_store %arg14[%c0_602, %c1024], %550 {strides = array<i32>} : memref<1x2304xf32, #tpu.memory_space<vmem>>, vector<1x64xf32>,
    %552 = vector.extract_strided_slice %541 {offsets = [5, 0], sizes = [1, 64], strides = [1, 1]} : vector<6x64xf32> to vector<1x64xf32>
    %c0_603 = arith.constant 0 : index
    %c1088 = arith.constant 1088 : index
    %553 = vector.load %arg14[%c0_603, %c1088] : memref<1x2304xf32, #tpu.memory_space<vmem>>, vector<1x64xf32>
    tpu.vector_store %arg14[%c0_603, %c1088], %552 {strides = array<i32>} : memref<1x2304xf32, #tpu.memory_space<vmem>>, vector<1x64xf32>,
    %c6_604 = arith.constant 6 : index
    %c0_605 = arith.constant 0 : index
    %c0_606 = arith.constant 0 : index
    %554 = vector.load %arg12[%c6_604, %c0_605, %c0_606] : memref<13x7x32xf32, #tpu.memory_space<vmem>>, vector<1x7x32xf32>
    %555 = vector.shape_cast %554 : vector<1x7x32xf32> to vector<7x32xf32>
    %c6_607 = arith.constant 6 : index
    %c0_608 = arith.constant 0 : index
    %c0_609 = arith.constant 0 : index
    %556 = vector.load %arg13[%c6_607, %c0_608, %c0_609] : memref<13x6x32xf32, #tpu.memory_space<vmem>>, vector<1x6x32xf32>
    %557 = vector.shape_cast %556 : vector<1x6x32xf32> to vector<6x32xf32>
    %558 = vector.extract_strided_slice %555 {offsets = [0, 0], sizes = [6, 32], strides = [1, 1]} : vector<7x32xf32> to vector<6x32xf32>
    %559 = vector.extract_strided_slice %555 {offsets = [1, 0], sizes = [6, 32], strides = [1, 1]} : vector<7x32xf32> to vector<6x32xf32>
    %c7_610 = arith.constant 7 : index
    %c0_611 = arith.constant 0 : index
    %c0_612 = arith.constant 0 : index
    %560 = vector.load %arg12[%c7_610, %c0_611, %c0_612] : memref<13x7x32xf32, #tpu.memory_space<vmem>>, vector<1x7x32xf32>
    %561 = vector.shape_cast %560 : vector<1x7x32xf32> to vector<7x32xf32>
    %c7_613 = arith.constant 7 : index
    %c0_614 = arith.constant 0 : index
    %c0_615 = arith.constant 0 : index
    %562 = vector.load %arg13[%c7_613, %c0_614, %c0_615] : memref<13x6x32xf32, #tpu.memory_space<vmem>>, vector<1x6x32xf32>
    %563 = vector.shape_cast %562 : vector<1x6x32xf32> to vector<6x32xf32>
    %564 = vector.extract_strided_slice %561 {offsets = [0, 0], sizes = [6, 32], strides = [1, 1]} : vector<7x32xf32> to vector<6x32xf32>
    %565 = vector.extract_strided_slice %561 {offsets = [1, 0], sizes = [6, 32], strides = [1, 1]} : vector<7x32xf32> to vector<6x32xf32>
    %c8_616 = arith.constant 8 : index
    %c0_617 = arith.constant 0 : index
    %c0_618 = arith.constant 0 : index
    %566 = vector.load %arg12[%c8_616, %c0_617, %c0_618] : memref<13x7x32xf32, #tpu.memory_space<vmem>>, vector<1x7x32xf32>
    %567 = vector.shape_cast %566 : vector<1x7x32xf32> to vector<7x32xf32>
    %c8_619 = arith.constant 8 : index
    %c0_620 = arith.constant 0 : index
    %c0_621 = arith.constant 0 : index
    %568 = vector.load %arg13[%c8_619, %c0_620, %c0_621] : memref<13x6x32xf32, #tpu.memory_space<vmem>>, vector<1x6x32xf32>
    %569 = vector.shape_cast %568 : vector<1x6x32xf32> to vector<6x32xf32>
    %570 = vector.extract_strided_slice %567 {offsets = [0, 0], sizes = [6, 32], strides = [1, 1]} : vector<7x32xf32> to vector<6x32xf32>
    %571 = vector.extract_strided_slice %567 {offsets = [1, 0], sizes = [6, 32], strides = [1, 1]} : vector<7x32xf32> to vector<6x32xf32>
    %572 = tpu.concatenate %558, %557, %559, %564, %563, %565, %570, %569, %571 in 1 : vector<6x32xf32>, vector<6x32xf32>, vector<6x32xf32>, vector<6x32xf32>, vector<6x32xf32>, vector<6x32xf32>, vector<6x32xf32>, vector<6x32xf32>, vector<6x32xf32> -> vector<6x288xf32>
    %cst_622 = arith.constant dense<0.000000e+00> : vector<6x64xf32>
    %573 = tpu.matmul %572, %444, %cst_622 {dimension_numbers = #tpu.dot_dimension_numbers<[1], [0], [0], [1], [0, 0, 1, 1], [], []>} : vector<6x288xf32>, vector<288x64xf32>, vector<6x64xf32> -> vector<6x64xf32>
    %574 = vector.broadcast %445 : vector<1x64xf32> to vector<6x64xf32>
    %575 = arith.addf %573, %574 : vector<6x64xf32>
    %cst_623 = arith.constant 0.000000e+00 : f32
    %576 = vector.broadcast %cst_623 : f32 to vector<6x64xf32>
    %577 = arith.maximumf %575, %576 : vector<6x64xf32>
    %578 = vector.extract_strided_slice %577 {offsets = [0, 0], sizes = [1, 64], strides = [1, 1]} : vector<6x64xf32> to vector<1x64xf32>
    %c0_624 = arith.constant 0 : index
    %c1152 = arith.constant 1152 : index
    %579 = vector.load %arg14[%c0_624, %c1152] : memref<1x2304xf32, #tpu.memory_space<vmem>>, vector<1x64xf32>
    tpu.vector_store %arg14[%c0_624, %c1152], %578 {strides = array<i32>} : memref<1x2304xf32, #tpu.memory_space<vmem>>, vector<1x64xf32>,
    %580 = vector.extract_strided_slice %577 {offsets = [1, 0], sizes = [1, 64], strides = [1, 1]} : vector<6x64xf32> to vector<1x64xf32>
    %c0_625 = arith.constant 0 : index
    %c1216 = arith.constant 1216 : index
    %581 = vector.load %arg14[%c0_625, %c1216] : memref<1x2304xf32, #tpu.memory_space<vmem>>, vector<1x64xf32>
    tpu.vector_store %arg14[%c0_625, %c1216], %580 {strides = array<i32>} : memref<1x2304xf32, #tpu.memory_space<vmem>>, vector<1x64xf32>,
    %582 = vector.extract_strided_slice %577 {offsets = [2, 0], sizes = [1, 64], strides = [1, 1]} : vector<6x64xf32> to vector<1x64xf32>
    %c0_626 = arith.constant 0 : index
    %c1280 = arith.constant 1280 : index
    %583 = vector.load %arg14[%c0_626, %c1280] : memref<1x2304xf32, #tpu.memory_space<vmem>>, vector<1x64xf32>
    tpu.vector_store %arg14[%c0_626, %c1280], %582 {strides = array<i32>} : memref<1x2304xf32, #tpu.memory_space<vmem>>, vector<1x64xf32>,
    %584 = vector.extract_strided_slice %577 {offsets = [3, 0], sizes = [1, 64], strides = [1, 1]} : vector<6x64xf32> to vector<1x64xf32>
    %c0_627 = arith.constant 0 : index
    %c1344 = arith.constant 1344 : index
    %585 = vector.load %arg14[%c0_627, %c1344] : memref<1x2304xf32, #tpu.memory_space<vmem>>, vector<1x64xf32>
    tpu.vector_store %arg14[%c0_627, %c1344], %584 {strides = array<i32>} : memref<1x2304xf32, #tpu.memory_space<vmem>>, vector<1x64xf32>,
    %586 = vector.extract_strided_slice %577 {offsets = [4, 0], sizes = [1, 64], strides = [1, 1]} : vector<6x64xf32> to vector<1x64xf32>
    %c0_628 = arith.constant 0 : index
    %c1408 = arith.constant 1408 : index
    %587 = vector.load %arg14[%c0_628, %c1408] : memref<1x2304xf32, #tpu.memory_space<vmem>>, vector<1x64xf32>
    tpu.vector_store %arg14[%c0_628, %c1408], %586 {strides = array<i32>} : memref<1x2304xf32, #tpu.memory_space<vmem>>, vector<1x64xf32>,
    %588 = vector.extract_strided_slice %577 {offsets = [5, 0], sizes = [1, 64], strides = [1, 1]} : vector<6x64xf32> to vector<1x64xf32>
    %c0_629 = arith.constant 0 : index
    %c1472 = arith.constant 1472 : index
    %589 = vector.load %arg14[%c0_629, %c1472] : memref<1x2304xf32, #tpu.memory_space<vmem>>, vector<1x64xf32>
    tpu.vector_store %arg14[%c0_629, %c1472], %588 {strides = array<i32>} : memref<1x2304xf32, #tpu.memory_space<vmem>>, vector<1x64xf32>,
    %c8_630 = arith.constant 8 : index
    %c0_631 = arith.constant 0 : index
    %c0_632 = arith.constant 0 : index
    %590 = vector.load %arg12[%c8_630, %c0_631, %c0_632] : memref<13x7x32xf32, #tpu.memory_space<vmem>>, vector<1x7x32xf32>
    %591 = vector.shape_cast %590 : vector<1x7x32xf32> to vector<7x32xf32>
    %c8_633 = arith.constant 8 : index
    %c0_634 = arith.constant 0 : index
    %c0_635 = arith.constant 0 : index
    %592 = vector.load %arg13[%c8_633, %c0_634, %c0_635] : memref<13x6x32xf32, #tpu.memory_space<vmem>>, vector<1x6x32xf32>
    %593 = vector.shape_cast %592 : vector<1x6x32xf32> to vector<6x32xf32>
    %594 = vector.extract_strided_slice %591 {offsets = [0, 0], sizes = [6, 32], strides = [1, 1]} : vector<7x32xf32> to vector<6x32xf32>
    %595 = vector.extract_strided_slice %591 {offsets = [1, 0], sizes = [6, 32], strides = [1, 1]} : vector<7x32xf32> to vector<6x32xf32>
    %c9_636 = arith.constant 9 : index
    %c0_637 = arith.constant 0 : index
    %c0_638 = arith.constant 0 : index
    %596 = vector.load %arg12[%c9_636, %c0_637, %c0_638] : memref<13x7x32xf32, #tpu.memory_space<vmem>>, vector<1x7x32xf32>
    %597 = vector.shape_cast %596 : vector<1x7x32xf32> to vector<7x32xf32>
    %c9_639 = arith.constant 9 : index
    %c0_640 = arith.constant 0 : index
    %c0_641 = arith.constant 0 : index
    %598 = vector.load %arg13[%c9_639, %c0_640, %c0_641] : memref<13x6x32xf32, #tpu.memory_space<vmem>>, vector<1x6x32xf32>
    %599 = vector.shape_cast %598 : vector<1x6x32xf32> to vector<6x32xf32>
    %600 = vector.extract_strided_slice %597 {offsets = [0, 0], sizes = [6, 32], strides = [1, 1]} : vector<7x32xf32> to vector<6x32xf32>
    %601 = vector.extract_strided_slice %597 {offsets = [1, 0], sizes = [6, 32], strides = [1, 1]} : vector<7x32xf32> to vector<6x32xf32>
    %c10_642 = arith.constant 10 : index
    %c0_643 = arith.constant 0 : index
    %c0_644 = arith.constant 0 : index
    %602 = vector.load %arg12[%c10_642, %c0_643, %c0_644] : memref<13x7x32xf32, #tpu.memory_space<vmem>>, vector<1x7x32xf32>
    %603 = vector.shape_cast %602 : vector<1x7x32xf32> to vector<7x32xf32>
    %c10_645 = arith.constant 10 : index
    %c0_646 = arith.constant 0 : index
    %c0_647 = arith.constant 0 : index
    %604 = vector.load %arg13[%c10_645, %c0_646, %c0_647] : memref<13x6x32xf32, #tpu.memory_space<vmem>>, vector<1x6x32xf32>
    %605 = vector.shape_cast %604 : vector<1x6x32xf32> to vector<6x32xf32>
    %606 = vector.extract_strided_slice %603 {offsets = [0, 0], sizes = [6, 32], strides = [1, 1]} : vector<7x32xf32> to vector<6x32xf32>
    %607 = vector.extract_strided_slice %603 {offsets = [1, 0], sizes = [6, 32], strides = [1, 1]} : vector<7x32xf32> to vector<6x32xf32>
    %608 = tpu.concatenate %594, %593, %595, %600, %599, %601, %606, %605, %607 in 1 : vector<6x32xf32>, vector<6x32xf32>, vector<6x32xf32>, vector<6x32xf32>, vector<6x32xf32>, vector<6x32xf32>, vector<6x32xf32>, vector<6x32xf32>, vector<6x32xf32> -> vector<6x288xf32>
    %cst_648 = arith.constant dense<0.000000e+00> : vector<6x64xf32>
    %609 = tpu.matmul %608, %444, %cst_648 {dimension_numbers = #tpu.dot_dimension_numbers<[1], [0], [0], [1], [0, 0, 1, 1], [], []>} : vector<6x288xf32>, vector<288x64xf32>, vector<6x64xf32> -> vector<6x64xf32>
    %610 = vector.broadcast %445 : vector<1x64xf32> to vector<6x64xf32>
    %611 = arith.addf %609, %610 : vector<6x64xf32>
    %cst_649 = arith.constant 0.000000e+00 : f32
    %612 = vector.broadcast %cst_649 : f32 to vector<6x64xf32>
    %613 = arith.maximumf %611, %612 : vector<6x64xf32>
    %614 = vector.extract_strided_slice %613 {offsets = [0, 0], sizes = [1, 64], strides = [1, 1]} : vector<6x64xf32> to vector<1x64xf32>
    %c0_650 = arith.constant 0 : index
    %c1536 = arith.constant 1536 : index
    %615 = vector.load %arg14[%c0_650, %c1536] : memref<1x2304xf32, #tpu.memory_space<vmem>>, vector<1x64xf32>
    tpu.vector_store %arg14[%c0_650, %c1536], %614 {strides = array<i32>} : memref<1x2304xf32, #tpu.memory_space<vmem>>, vector<1x64xf32>,
    %616 = vector.extract_strided_slice %613 {offsets = [1, 0], sizes = [1, 64], strides = [1, 1]} : vector<6x64xf32> to vector<1x64xf32>
    %c0_651 = arith.constant 0 : index
    %c1600 = arith.constant 1600 : index
    %617 = vector.load %arg14[%c0_651, %c1600] : memref<1x2304xf32, #tpu.memory_space<vmem>>, vector<1x64xf32>
    tpu.vector_store %arg14[%c0_651, %c1600], %616 {strides = array<i32>} : memref<1x2304xf32, #tpu.memory_space<vmem>>, vector<1x64xf32>,
    %618 = vector.extract_strided_slice %613 {offsets = [2, 0], sizes = [1, 64], strides = [1, 1]} : vector<6x64xf32> to vector<1x64xf32>
    %c0_652 = arith.constant 0 : index
    %c1664 = arith.constant 1664 : index
    %619 = vector.load %arg14[%c0_652, %c1664] : memref<1x2304xf32, #tpu.memory_space<vmem>>, vector<1x64xf32>
    tpu.vector_store %arg14[%c0_652, %c1664], %618 {strides = array<i32>} : memref<1x2304xf32, #tpu.memory_space<vmem>>, vector<1x64xf32>,
    %620 = vector.extract_strided_slice %613 {offsets = [3, 0], sizes = [1, 64], strides = [1, 1]} : vector<6x64xf32> to vector<1x64xf32>
    %c0_653 = arith.constant 0 : index
    %c1728 = arith.constant 1728 : index
    %621 = vector.load %arg14[%c0_653, %c1728] : memref<1x2304xf32, #tpu.memory_space<vmem>>, vector<1x64xf32>
    tpu.vector_store %arg14[%c0_653, %c1728], %620 {strides = array<i32>} : memref<1x2304xf32, #tpu.memory_space<vmem>>, vector<1x64xf32>,
    %622 = vector.extract_strided_slice %613 {offsets = [4, 0], sizes = [1, 64], strides = [1, 1]} : vector<6x64xf32> to vector<1x64xf32>
    %c0_654 = arith.constant 0 : index
    %c1792 = arith.constant 1792 : index
    %623 = vector.load %arg14[%c0_654, %c1792] : memref<1x2304xf32, #tpu.memory_space<vmem>>, vector<1x64xf32>
    tpu.vector_store %arg14[%c0_654, %c1792], %622 {strides = array<i32>} : memref<1x2304xf32, #tpu.memory_space<vmem>>, vector<1x64xf32>,
    %624 = vector.extract_strided_slice %613 {offsets = [5, 0], sizes = [1, 64], strides = [1, 1]} : vector<6x64xf32> to vector<1x64xf32>
    %c0_655 = arith.constant 0 : index
    %c1856 = arith.constant 1856 : index
    %625 = vector.load %arg14[%c0_655, %c1856] : memref<1x2304xf32, #tpu.memory_space<vmem>>, vector<1x64xf32>
    tpu.vector_store %arg14[%c0_655, %c1856], %624 {strides = array<i32>} : memref<1x2304xf32, #tpu.memory_space<vmem>>, vector<1x64xf32>,
    %c10_656 = arith.constant 10 : index
    %c0_657 = arith.constant 0 : index
    %c0_658 = arith.constant 0 : index
    %626 = vector.load %arg12[%c10_656, %c0_657, %c0_658] : memref<13x7x32xf32, #tpu.memory_space<vmem>>, vector<1x7x32xf32>
    %627 = vector.shape_cast %626 : vector<1x7x32xf32> to vector<7x32xf32>
    %c10_659 = arith.constant 10 : index
    %c0_660 = arith.constant 0 : index
    %c0_661 = arith.constant 0 : index
    %628 = vector.load %arg13[%c10_659, %c0_660, %c0_661] : memref<13x6x32xf32, #tpu.memory_space<vmem>>, vector<1x6x32xf32>
    %629 = vector.shape_cast %628 : vector<1x6x32xf32> to vector<6x32xf32>
    %630 = vector.extract_strided_slice %627 {offsets = [0, 0], sizes = [6, 32], strides = [1, 1]} : vector<7x32xf32> to vector<6x32xf32>
    %631 = vector.extract_strided_slice %627 {offsets = [1, 0], sizes = [6, 32], strides = [1, 1]} : vector<7x32xf32> to vector<6x32xf32>
    %c11_662 = arith.constant 11 : index
    %c0_663 = arith.constant 0 : index
    %c0_664 = arith.constant 0 : index
    %632 = vector.load %arg12[%c11_662, %c0_663, %c0_664] : memref<13x7x32xf32, #tpu.memory_space<vmem>>, vector<1x7x32xf32>
    %633 = vector.shape_cast %632 : vector<1x7x32xf32> to vector<7x32xf32>
    %c11_665 = arith.constant 11 : index
    %c0_666 = arith.constant 0 : index
    %c0_667 = arith.constant 0 : index
    %634 = vector.load %arg13[%c11_665, %c0_666, %c0_667] : memref<13x6x32xf32, #tpu.memory_space<vmem>>, vector<1x6x32xf32>
    %635 = vector.shape_cast %634 : vector<1x6x32xf32> to vector<6x32xf32>
    %636 = vector.extract_strided_slice %633 {offsets = [0, 0], sizes = [6, 32], strides = [1, 1]} : vector<7x32xf32> to vector<6x32xf32>
    %637 = vector.extract_strided_slice %633 {offsets = [1, 0], sizes = [6, 32], strides = [1, 1]} : vector<7x32xf32> to vector<6x32xf32>
    %c12_668 = arith.constant 12 : index
    %c0_669 = arith.constant 0 : index
    %c0_670 = arith.constant 0 : index
    %638 = vector.load %arg12[%c12_668, %c0_669, %c0_670] : memref<13x7x32xf32, #tpu.memory_space<vmem>>, vector<1x7x32xf32>
    %639 = vector.shape_cast %638 : vector<1x7x32xf32> to vector<7x32xf32>
    %c12_671 = arith.constant 12 : index
    %c0_672 = arith.constant 0 : index
    %c0_673 = arith.constant 0 : index
    %640 = vector.load %arg13[%c12_671, %c0_672, %c0_673] : memref<13x6x32xf32, #tpu.memory_space<vmem>>, vector<1x6x32xf32>
    %641 = vector.shape_cast %640 : vector<1x6x32xf32> to vector<6x32xf32>
    %642 = vector.extract_strided_slice %639 {offsets = [0, 0], sizes = [6, 32], strides = [1, 1]} : vector<7x32xf32> to vector<6x32xf32>
    %643 = vector.extract_strided_slice %639 {offsets = [1, 0], sizes = [6, 32], strides = [1, 1]} : vector<7x32xf32> to vector<6x32xf32>
    %644 = tpu.concatenate %630, %629, %631, %636, %635, %637, %642, %641, %643 in 1 : vector<6x32xf32>, vector<6x32xf32>, vector<6x32xf32>, vector<6x32xf32>, vector<6x32xf32>, vector<6x32xf32>, vector<6x32xf32>, vector<6x32xf32>, vector<6x32xf32> -> vector<6x288xf32>
    %cst_674 = arith.constant dense<0.000000e+00> : vector<6x64xf32>
    %645 = tpu.matmul %644, %444, %cst_674 {dimension_numbers = #tpu.dot_dimension_numbers<[1], [0], [0], [1], [0, 0, 1, 1], [], []>} : vector<6x288xf32>, vector<288x64xf32>, vector<6x64xf32> -> vector<6x64xf32>
    %646 = vector.broadcast %445 : vector<1x64xf32> to vector<6x64xf32>
    %647 = arith.addf %645, %646 : vector<6x64xf32>
    %cst_675 = arith.constant 0.000000e+00 : f32
    %648 = vector.broadcast %cst_675 : f32 to vector<6x64xf32>
    %649 = arith.maximumf %647, %648 : vector<6x64xf32>
    %650 = vector.extract_strided_slice %649 {offsets = [0, 0], sizes = [1, 64], strides = [1, 1]} : vector<6x64xf32> to vector<1x64xf32>
    %c0_676 = arith.constant 0 : index
    %c1920 = arith.constant 1920 : index
    %651 = vector.load %arg14[%c0_676, %c1920] : memref<1x2304xf32, #tpu.memory_space<vmem>>, vector<1x64xf32>
    tpu.vector_store %arg14[%c0_676, %c1920], %650 {strides = array<i32>} : memref<1x2304xf32, #tpu.memory_space<vmem>>, vector<1x64xf32>,
    %652 = vector.extract_strided_slice %649 {offsets = [1, 0], sizes = [1, 64], strides = [1, 1]} : vector<6x64xf32> to vector<1x64xf32>
    %c0_677 = arith.constant 0 : index
    %c1984 = arith.constant 1984 : index
    %653 = vector.load %arg14[%c0_677, %c1984] : memref<1x2304xf32, #tpu.memory_space<vmem>>, vector<1x64xf32>
    tpu.vector_store %arg14[%c0_677, %c1984], %652 {strides = array<i32>} : memref<1x2304xf32, #tpu.memory_space<vmem>>, vector<1x64xf32>,
    %654 = vector.extract_strided_slice %649 {offsets = [2, 0], sizes = [1, 64], strides = [1, 1]} : vector<6x64xf32> to vector<1x64xf32>
    %c0_678 = arith.constant 0 : index
    %c2048 = arith.constant 2048 : index
    %655 = vector.load %arg14[%c0_678, %c2048] : memref<1x2304xf32, #tpu.memory_space<vmem>>, vector<1x64xf32>
    tpu.vector_store %arg14[%c0_678, %c2048], %654 {strides = array<i32>} : memref<1x2304xf32, #tpu.memory_space<vmem>>, vector<1x64xf32>,
    %656 = vector.extract_strided_slice %649 {offsets = [3, 0], sizes = [1, 64], strides = [1, 1]} : vector<6x64xf32> to vector<1x64xf32>
    %c0_679 = arith.constant 0 : index
    %c2112 = arith.constant 2112 : index
    %657 = vector.load %arg14[%c0_679, %c2112] : memref<1x2304xf32, #tpu.memory_space<vmem>>, vector<1x64xf32>
    tpu.vector_store %arg14[%c0_679, %c2112], %656 {strides = array<i32>} : memref<1x2304xf32, #tpu.memory_space<vmem>>, vector<1x64xf32>,
    %658 = vector.extract_strided_slice %649 {offsets = [4, 0], sizes = [1, 64], strides = [1, 1]} : vector<6x64xf32> to vector<1x64xf32>
    %c0_680 = arith.constant 0 : index
    %c2176 = arith.constant 2176 : index
    %659 = vector.load %arg14[%c0_680, %c2176] : memref<1x2304xf32, #tpu.memory_space<vmem>>, vector<1x64xf32>
    tpu.vector_store %arg14[%c0_680, %c2176], %658 {strides = array<i32>} : memref<1x2304xf32, #tpu.memory_space<vmem>>, vector<1x64xf32>,
    %660 = vector.extract_strided_slice %649 {offsets = [5, 0], sizes = [1, 64], strides = [1, 1]} : vector<6x64xf32> to vector<1x64xf32>
    %c0_681 = arith.constant 0 : index
    %c2240 = arith.constant 2240 : index
    %661 = vector.load %arg14[%c0_681, %c2240] : memref<1x2304xf32, #tpu.memory_space<vmem>>, vector<1x64xf32>
    tpu.vector_store %arg14[%c0_681, %c2240], %660 {strides = array<i32>} : memref<1x2304xf32, #tpu.memory_space<vmem>>, vector<1x64xf32>,
    %c0_682 = arith.constant 0 : index
    %c0_683 = arith.constant 0 : index
    %662 = vector.load %arg14[%c0_682, %c0_683] : memref<1x2304xf32, #tpu.memory_space<vmem>>, vector<1x2304xf32>
    %c0_684 = arith.constant 0 : index
    %c0_685 = arith.constant 0 : index
    %663 = vector.load %arg7[%c0_684, %c0_685] : memref<2304x512xf32, #tpu.memory_space<vmem>>, vector<2304x512xf32>
    %cst_686 = arith.constant dense<0.000000e+00> : vector<1x512xf32>
    %664 = tpu.matmul %662, %663, %cst_686 {dimension_numbers = #tpu.dot_dimension_numbers<[1], [0], [0], [1], [0, 0, 1, 1], [], []>} : vector<1x2304xf32>, vector<2304x512xf32>, vector<1x512xf32> -> vector<1x512xf32>
    %c0_687 = arith.constant 0 : index
    %c0_688 = arith.constant 0 : index
    %665 = vector.load %arg8[%c0_687, %c0_688] : memref<1x512xf32, #tpu.memory_space<vmem>>, vector<1x512xf32>
    %666 = arith.addf %664, %665 : vector<1x512xf32>
    %cst_689 = arith.constant 0.000000e+00 : f32
    %667 = vector.broadcast %cst_689 : f32 to vector<1x512xf32>
    %668 = arith.maximumf %666, %667 : vector<1x512xf32>
    %c0_690 = arith.constant 0 : index
    %c0_691 = arith.constant 0 : index
    %669 = vector.load %arg9[%c0_690, %c0_691] : memref<512x128xf32, #tpu.memory_space<vmem>>, vector<512x128xf32>
    %cst_692 = arith.constant dense<0.000000e+00> : vector<1x128xf32>
    %670 = tpu.matmul %668, %669, %cst_692 {dimension_numbers = #tpu.dot_dimension_numbers<[1], [0], [0], [1], [0, 0, 1, 1], [], []>} : vector<1x512xf32>, vector<512x128xf32>, vector<1x128xf32> -> vector<1x128xf32>
    %c0_693 = arith.constant 0 : index
    %c0_694 = arith.constant 0 : index
    %671 = vector.load %arg10[%c0_693, %c0_694] : memref<1x128xf32, #tpu.memory_space<vmem>>, vector<1x128xf32>
    %672 = arith.addf %670, %671 : vector<1x128xf32>
    %c0_695 = arith.constant 0 : index
    %c0_696 = arith.constant 0 : index
    %c0_697 = arith.constant 0 : index
    %673 = vector.load %arg11[%c0_695, %c0_696, %c0_697] : memref<1x1x128xf32, #tpu.memory_space<vmem>>, vector<1x1x128xf32>
    %674 = vector.shape_cast %673 : vector<1x1x128xf32> to vector<1x128xf32>
    %675 = vector.shape_cast %672 : vector<1x128xf32> to vector<1x1x128xf32>
    tpu.vector_store %arg11[%c0_695, %c0_696, %c0_697], %675 {strides = array<i32>} : memref<1x1x128xf32, #tpu.memory_space<vmem>>, vector<1x1x128xf32>,
    return
  }
  func.func @transform_0(%arg0: i32) -> (i32, i32, i32, i32) {
    %c0_i32 = arith.constant 0 : i32
    %c0_i32_0 = arith.constant 0 : i32
    %c0_i32_1 = arith.constant 0 : i32
    %c0_i32_2 = arith.constant 0 : i32
    return %arg0, %c0_i32, %c0_i32_0, %c0_i32_1 : i32, i32, i32, i32
  }
  func.func @transform_1(%arg0: i32) -> (i32, i32, i32, i32) {
    %c0_i32 = arith.constant 0 : i32
    %c0_i32_0 = arith.constant 0 : i32
    %c0_i32_1 = arith.constant 0 : i32
    %c0_i32_2 = arith.constant 0 : i32
    return %arg0, %c0_i32, %c0_i32_0, %c0_i32_1 : i32, i32, i32, i32
  }
  func.func @transform_2(%arg0: i32) -> (i32, i32) {
    %c0_i32 = arith.constant 0 : i32
    %c0_i32_0 = arith.constant 0 : i32
    %c0_i32_1 = arith.constant 0 : i32
    return %c0_i32, %c0_i32_0 : i32, i32
  }
  func.func @transform_3(%arg0: i32) -> (i32, i32) {
    %c0_i32 = arith.constant 0 : i32
    %c0_i32_0 = arith.constant 0 : i32
    %c0_i32_1 = arith.constant 0 : i32
    return %c0_i32, %c0_i32_0 : i32, i32
  }
  func.func @transform_4(%arg0: i32) -> (i32, i32) {
    %c0_i32 = arith.constant 0 : i32
    %c0_i32_0 = arith.constant 0 : i32
    %c0_i32_1 = arith.constant 0 : i32
    return %c0_i32, %c0_i32_0 : i32, i32
  }
  func.func @transform_5(%arg0: i32) -> (i32, i32) {
    %c0_i32 = arith.constant 0 : i32
    %c0_i32_0 = arith.constant 0 : i32
    %c0_i32_1 = arith.constant 0 : i32
    return %c0_i32, %c0_i32_0 : i32, i32
  }
  func.func @transform_6(%arg0: i32) -> (i32, i32) {
    %c0_i32 = arith.constant 0 : i32
    %c0_i32_0 = arith.constant 0 : i32
    %c0_i32_1 = arith.constant 0 : i32
    return %c0_i32, %c0_i32_0 : i32, i32
  }
  func.func @transform_7(%arg0: i32) -> (i32, i32) {
    %c0_i32 = arith.constant 0 : i32
    %c0_i32_0 = arith.constant 0 : i32
    %c0_i32_1 = arith.constant 0 : i32
    return %c0_i32, %c0_i32_0 : i32, i32
  }
  func.func @transform_8(%arg0: i32) -> (i32, i32) {
    %c0_i32 = arith.constant 0 : i32
    %c0_i32_0 = arith.constant 0 : i32
    %c0_i32_1 = arith.constant 0 : i32
    return %c0_i32, %c0_i32_0 : i32, i32
  }
  func.func @transform_9(%arg0: i32) -> (i32, i32) {
    %c0_i32 = arith.constant 0 : i32
    %c0_i32_0 = arith.constant 0 : i32
    %c0_i32_1 = arith.constant 0 : i32
    return %c0_i32, %c0_i32_0 : i32, i32
  }
  func.func @transform_10(%arg0: i32) -> (i32, i32, i32) {
    %c0_i32 = arith.constant 0 : i32
    %c0_i32_0 = arith.constant 0 : i32
    %c0_i32_1 = arith.constant 0 : i32
    return %arg0, %c0_i32, %c0_i32_0 : i32, i32, i32
  }
}

</mosaic_0001>

<llo_original>
// kernel: cnn_forward.1
$region0: #{cnn_forward.1}
  #allocation0 [shape = 'u32[]', space=smem, size = 0x4, offset = 0x4, fixed_abs, tag = 'smem constant byte address 0x4 - core index']
  #allocation1 [shape = 'u32[72,128]{1,0:T(1,128)}', space=vmem, size = 0x9000, scoped, tag = 'internal scratch']
  #allocation2 [shape = 'f32[13,7,32]{2,1,0:T(8,128)}', space=vmem, size = 0xd000, scoped, tag = 'scratch operand']
  #allocation3 [shape = 'f32[13,6,32]{2,1,0:T(8,128)}', space=vmem, size = 0xd000, scoped, tag = 'scratch operand']
  #allocation4 [shape = 'f32[1,2304]{1,0:T(1,128)}', space=vmem, size = 0x2400, scoped, tag = 'scratch operand']
  %s0 = inlined_call_operand.vmem [shape: f32[2,28,7,12], index: 0, kind: input, shape index: {}]
  %s1 = inlined_call_operand.vmem [shape: f32[2,28,6,12], index: 1, kind: input, shape index: {}]
  %s2 = inlined_call_operand.vmem [shape: f32[48,32], index: 2, kind: input, shape index: {}]
  %s3 = inlined_call_operand.hbm [shape: f32[1,32], index: 3, kind: input, shape index: {}]
  %s4 = inlined_call_operand.vmem [shape: f32[288,64], index: 4, kind: input, shape index: {}]
  %s5 = inlined_call_operand.hbm [shape: f32[1,64], index: 5, kind: input, shape index: {}]
  %s6 = inlined_call_operand.hbm [shape: f32[2304,512], index: 6, kind: input, shape index: {}]
  %s7 = inlined_call_operand.hbm [shape: f32[1,512], index: 7, kind: input, shape index: {}]
  %s8 = inlined_call_operand.hbm [shape: f32[512,128], index: 8, kind: input, shape index: {}]
  %s9 = inlined_call_operand.hbm [shape: f32[1,128], index: 9, kind: input, shape index: {}]
  %s10 = inlined_call_operand.hbm [shape: f32[2,1,128], index: 10, kind: output, shape index: {}]
  %s11 = sld [smem:[#allocation0]]
  $region97: #{cnn_forward.1} parent=0
    _
  %s13 = ssub.s32 1, %s11
  %s14 = scalar_select 0, %s13, %s11
  $region1: #{cnn_forward.1} parent=0
    #allocation5 [shape = 'u8[512]{0}', space=vmem, size = 0x400, scoped, tag = 'input window, operand 3, single buffered']
    #allocation6 [shape = 's32[2]{0}', space=sflag, size = 0x8, scoped, tag = 'scoped memory for cnn_forward.1']
    #allocation7 [shape = 's32[2]{0}', space=sflag, size = 0x8, scoped, tag = 'scoped memory for cnn_forward.1']
    #allocation8 [shape = 'u8[512]{0}', space=vmem, size = 0x400, scoped, tag = 'input window, operand 5, single buffered']
    #allocation9 [shape = 's32[1]{0}', space=sflag, size = 0x4, scoped, tag = 'scoped memory for cnn_forward.1']
    #allocation10 [shape = 'u8[4718592]{0}', space=vmem, size = 0x480000, scoped, tag = 'input window, operand 6, single buffered']
    #allocation11 [shape = 'u8[2048]{0}', space=vmem, size = 0x800, scoped, tag = 'input window, operand 7, single buffered']
    #allocation12 [shape = 's32[1]{0}', space=sflag, size = 0x4, scoped, tag = 'scoped memory for cnn_forward.1']
    #allocation13 [shape = 'u8[262144]{0}', space=vmem, size = 0x40000, scoped, tag = 'input window, operand 8, single buffered']
    #allocation14 [shape = 'u8[512]{0}', space=vmem, size = 0x400, scoped, tag = 'input window, operand 9, single buffered']
    #allocation15 [shape = 's32[1]{0}', space=sflag, size = 0x4, scoped, tag = 'scoped memory for cnn_forward.1']
    #allocation16 [shape = 'u8[1024]{0}', space=vmem, size = 0x400, scoped, tag = 'output window, operand 0']
    %15 = vsyncpa [#allocation6], 0
    %16 = vsyncpa [#allocation9], 0
    %17 = vsyncpa [#allocation12], 0
    %18 = vsyncpa [#allocation15], 0
    %19 = vsyncpa [#allocation7], 0
    %s20 = scalar_lea.sflag [#allocation7], 1
    %21 = vsyncpa %s20, 0
    loop: start=0, step=1, limit=4
    $region2: #{cnn_forward.1} parent=1 // loop_pre_header
      _
    $region3: #{cnn_forward.1} parent=1 // loop_header
      %s23 = sphi 0, %s27
      %p24 = scmp.ge.s32.totalorder %s23, 4
      %s33 = sphi 0, %s35
      %s36 = sphi 0, %s33
      %s37 = sphi 0, %s36
      %s53 = sphi 0, %s37
      %s59 = sphi 0, %s61
      %s62 = sphi 0, %s59
      %s63 = sphi 0, %s62
      %s79 = sphi 0, %s63
      %s83 = sphi 0, %s83
      %s85 = sphi 0, %s83
      %s86 = sphi 0, %s85
      %s100 = sphi 0, %s86
      %s104 = sphi 0, %s104
      %s106 = sphi 0, %s104
      %s107 = sphi 0, %s106
      %s121 = sphi 0, %s107
      %s125 = sphi 0, %s125
      %s127 = sphi 0, %s125
      %s128 = sphi 0, %s127
      %s142 = sphi 0, %s128
      %s146 = sphi 0, %s146
      %s148 = sphi 0, %s146
      %s149 = sphi 0, %s148
      %s163 = sphi 0, %s149
      %s167 = sphi 0, %s167
      %s169 = sphi 0, %s167
      %s170 = sphi 0, %s169
      %s184 = sphi 0, %s170
      %s188 = sphi 0, %s188
      %s190 = sphi 0, %s188
      %s191 = sphi 0, %s190
      %s205 = sphi 0, %s191
      %s209 = sphi 0, %s209
      %s211 = sphi 0, %s209
      %s212 = sphi 0, %s211
      %s226 = sphi 0, %s212
      %s230 = sphi 0, %s230
      %s232 = sphi 0, %s230
      %s233 = sphi 0, %s232
      %s247 = sphi 0, %s233
      %s253 = sphi 0, %s255
      %s256 = sphi 0, %s253
      %s257 = sphi 0, %s256
      %s273 = sphi 0, %s257
    $region4: #{cnn_forward.1} parent=1 // loop_header_branch
      %26 = sbr.rel (%p24) target = $region8
    $region5: #{cnn_forward.1} parent=1 // loop_body
      %s28 = ssub.s32 %s23, 1
      %s29 = ssub.s32 %s23, 2
      %s30 = sadd.s32 %s23, 1
      %s31 = ssub.s32 %s23, %s30
      %p32 = scmp.eq.s32.totalorder %s31, 0
      %s34 = sadd.s32 %s33, 1
      %s35 = scalar_select %p32, %s33, %s34
      %p38 = pneg %p32
      %p39 = scmp.eq.s32.totalorder %s23, 1
      %p40 = por %p38, %p39
      %p41 = scmp.ne.s32.totalorder %s33, %s36
      %p42 = scmp.eq.s32.totalorder %s23, 0
      %p43 = por %p41, %p42
      %p44 = scmp.ne.s32.totalorder %s33, %s36
      %p45 = scmp.eq.s32.totalorder %s28, 1
      %p46 = por %p44, %p45
      %p47 = scmp.ne.s32.totalorder %s36, %s37
      %p48 = scmp.eq.s32.totalorder %s28, 0
      %p49 = por %p47, %p48
      %p50 = scmp.ne.s32.totalorder %s36, %s37
      %p51 = scmp.eq.s32.totalorder %s29, 1
      %p52 = por %p50, %p51
      %p54 = scmp.ne.s32.totalorder %s37, %s53
      %p55 = scmp.eq.s32.totalorder %s29, 0
      %p56 = por %p54, %p55
      %s57 = ssub.s32 %s23, %s30
      %p58 = scmp.eq.s32.totalorder %s57, 0
      %s60 = sadd.s32 %s59, 1
      %s61 = scalar_select %p58, %s59, %s60
      %p64 = pneg %p58
      %p65 = scmp.eq.s32.totalorder %s23, 1
      %p66 = por %p64, %p65
      %p67 = scmp.ne.s32.totalorder %s59, %s62
      %p68 = scmp.eq.s32.totalorder %s23, 0
      %p69 = por %p67, %p68
      %p70 = scmp.ne.s32.totalorder %s59, %s62
      %p71 = scmp.eq.s32.totalorder %s28, 1
      %p72 = por %p70, %p71
      %p73 = scmp.ne.s32.totalorder %s62, %s63
      %p74 = scmp.eq.s32.totalorder %s28, 0
      %p75 = por %p73, %p74
      %p76 = scmp.ne.s32.totalorder %s62, %s63
      %p77 = scmp.eq.s32.totalorder %s29, 1
      %p78 = por %p76, %p77
      %p80 = scmp.ne.s32.totalorder %s63, %s79
      %p81 = scmp.eq.s32.totalorder %s29, 0
      %p82 = por %p80, %p81
      %s84 = sadd.s32 %s83, 1
      %p87 = scmp.eq.s32.totalorder %s23, 1
      %p88 = scmp.ne.s32.totalorder %s83, %s85
      %p89 = scmp.eq.s32.totalorder %s23, 0
      %p90 = por %p88, %p89
      %p91 = scmp.ne.s32.totalorder %s83, %s85
      %p92 = scmp.eq.s32.totalorder %s28, 1
      %p93 = por %p91, %p92
      %p94 = scmp.ne.s32.totalorder %s85, %s86
      %p95 = scmp.eq.s32.totalorder %s28, 0
      %p96 = por %p94, %p95
      %p97 = scmp.ne.s32.totalorder %s85, %s86
      %p98 = scmp.eq.s32.totalorder %s29, 1
      %p99 = por %p97, %p98
      %p101 = scmp.ne.s32.totalorder %s86, %s100
      %p102 = scmp.eq.s32.totalorder %s29, 0
      %p103 = por %p101, %p102
      %s105 = sadd.s32 %s104, 1
      %p108 = scmp.eq.s32.totalorder %s23, 1
      %p109 = scmp.ne.s32.totalorder %s104, %s106
      %p110 = scmp.eq.s32.totalorder %s23, 0
      %p111 = por %p109, %p110
      %p112 = scmp.ne.s32.totalorder %s104, %s106
      %p113 = scmp.eq.s32.totalorder %s28, 1
      %p114 = por %p112, %p113
      %p115 = scmp.ne.s32.totalorder %s106, %s107
      %p116 = scmp.eq.s32.totalorder %s28, 0
      %p117 = por %p115, %p116
      %p118 = scmp.ne.s32.totalorder %s106, %s107
      %p119 = scmp.eq.s32.totalorder %s29, 1
      %p120 = por %p118, %p119
      %p122 = scmp.ne.s32.totalorder %s107, %s121
      %p123 = scmp.eq.s32.totalorder %s29, 0
      %p124 = por %p122, %p123
      %s126 = sadd.s32 %s125, 1
      %p129 = scmp.eq.s32.totalorder %s23, 1
      %p130 = scmp.ne.s32.totalorder %s125, %s127
      %p131 = scmp.eq.s32.totalorder %s23, 0
      %p132 = por %p130, %p131
      %p133 = scmp.ne.s32.totalorder %s125, %s127
      %p134 = scmp.eq.s32.totalorder %s28, 1
      %p135 = por %p133, %p134
      %p136 = scmp.ne.s32.totalorder %s127, %s128
      %p137 = scmp.eq.s32.totalorder %s28, 0
      %p138 = por %p136, %p137
      %p139 = scmp.ne.s32.totalorder %s127, %s128
      %p140 = scmp.eq.s32.totalorder %s29, 1
      %p141 = por %p139, %p140
      %p143 = scmp.ne.s32.totalorder %s128, %s142
      %p144 = scmp.eq.s32.totalorder %s29, 0
      %p145 = por %p143, %p144
      %s147 = sadd.s32 %s146, 1
      %p150 = scmp.eq.s32.totalorder %s23, 1
      %p151 = scmp.ne.s32.totalorder %s146, %s148
      %p152 = scmp.eq.s32.totalorder %s23, 0
      %p153 = por %p151, %p152
      %p154 = scmp.ne.s32.totalorder %s146, %s148
      %p155 = scmp.eq.s32.totalorder %s28, 1
      %p156 = por %p154, %p155
      %p157 = scmp.ne.s32.totalorder %s148, %s149
      %p158 = scmp.eq.s32.totalorder %s28, 0
      %p159 = por %p157, %p158
      %p160 = scmp.ne.s32.totalorder %s148, %s149
      %p161 = scmp.eq.s32.totalorder %s29, 1
      %p162 = por %p160, %p161
      %p164 = scmp.ne.s32.totalorder %s149, %s163
      %p165 = scmp.eq.s32.totalorder %s29, 0
      %p166 = por %p164, %p165
      %s168 = sadd.s32 %s167, 1
      %p171 = scmp.eq.s32.totalorder %s23, 1
      %p172 = scmp.ne.s32.totalorder %s167, %s169
      %p173 = scmp.eq.s32.totalorder %s23, 0
      %p174 = por %p172, %p173
      %p175 = scmp.ne.s32.totalorder %s167, %s169
      %p176 = scmp.eq.s32.totalorder %s28, 1
      %p177 = por %p175, %p176
      %p178 = scmp.ne.s32.totalorder %s169, %s170
      %p179 = scmp.eq.s32.totalorder %s28, 0
      %p180 = por %p178, %p179
      %p181 = scmp.ne.s32.totalorder %s169, %s170
      %p182 = scmp.eq.s32.totalorder %s29, 1
      %p183 = por %p181, %p182
      %p185 = scmp.ne.s32.totalorder %s170, %s184
      %p186 = scmp.eq.s32.totalorder %s29, 0
      %p187 = por %p185, %p186
      %s189 = sadd.s32 %s188, 1
      %p192 = scmp.eq.s32.totalorder %s23, 1
      %p193 = scmp.ne.s32.totalorder %s188, %s190
      %p194 = scmp.eq.s32.totalorder %s23, 0
      %p195 = por %p193, %p194
      %p196 = scmp.ne.s32.totalorder %s188, %s190
      %p197 = scmp.eq.s32.totalorder %s28, 1
      %p198 = por %p196, %p197
      %p199 = scmp.ne.s32.totalorder %s190, %s191
      %p200 = scmp.eq.s32.totalorder %s28, 0
      %p201 = por %p199, %p200
      %p202 = scmp.ne.s32.totalorder %s190, %s191
      %p203 = scmp.eq.s32.totalorder %s29, 1
      %p204 = por %p202, %p203
      %p206 = scmp.ne.s32.totalorder %s191, %s205
      %p207 = scmp.eq.s32.totalorder %s29, 0
      %p208 = por %p206, %p207
      %s210 = sadd.s32 %s209, 1
      %p213 = scmp.eq.s32.totalorder %s23, 1
      %p214 = scmp.ne.s32.totalorder %s209, %s211
      %p215 = scmp.eq.s32.totalorder %s23, 0
      %p216 = por %p214, %p215
      %p217 = scmp.ne.s32.totalorder %s209, %s211
      %p218 = scmp.eq.s32.totalorder %s28, 1
      %p219 = por %p217, %p218
      %p220 = scmp.ne.s32.totalorder %s211, %s212
      %p221 = scmp.eq.s32.totalorder %s28, 0
      %p222 = por %p220, %p221
      %p223 = scmp.ne.s32.totalorder %s211, %s212
      %p224 = scmp.eq.s32.totalorder %s29, 1
      %p225 = por %p223, %p224
      %p227 = scmp.ne.s32.totalorder %s212, %s226
      %p228 = scmp.eq.s32.totalorder %s29, 0
      %p229 = por %p227, %p228
      %s231 = sadd.s32 %s230, 1
      %p234 = scmp.eq.s32.totalorder %s23, 1
      %p235 = scmp.ne.s32.totalorder %s230, %s232
      %p236 = scmp.eq.s32.totalorder %s23, 0
      %p237 = por %p235, %p236
      %p238 = scmp.ne.s32.totalorder %s230, %s232
      %p239 = scmp.eq.s32.totalorder %s28, 1
      %p240 = por %p238, %p239
      %p241 = scmp.ne.s32.totalorder %s232, %s233
      %p242 = scmp.eq.s32.totalorder %s28, 0
      %p243 = por %p241, %p242
      %p244 = scmp.ne.s32.totalorder %s232, %s233
      %p245 = scmp.eq.s32.totalorder %s29, 1
      %p246 = por %p244, %p245
      %p248 = scmp.ne.s32.totalorder %s233, %s247
      %p249 = scmp.eq.s32.totalorder %s29, 0
      %p250 = por %p248, %p249
      %s251 = ssub.s32 %s23, %s30
      %p252 = scmp.eq.s32.totalorder %s251, 0
      %s254 = sadd.s32 %s253, 1
      %s255 = scalar_select %p252, %s253, %s254
      %p258 = pneg %p252
      %p259 = scmp.eq.s32.totalorder %s23, 1
      %p260 = por %p258, %p259
      %p261 = scmp.ne.s32.totalorder %s253, %s256
      %p262 = scmp.eq.s32.totalorder %s23, 0
      %p263 = por %p261, %p262
      %p264 = scmp.ne.s32.totalorder %s253, %s256
      %p265 = scmp.eq.s32.totalorder %s28, 1
      %p266 = por %p264, %p265
      %p267 = scmp.ne.s32.totalorder %s256, %s257
      %p268 = scmp.eq.s32.totalorder %s28, 0
      %p269 = por %p267, %p268
      %p270 = scmp.ne.s32.totalorder %s256, %s257
      %p271 = scmp.eq.s32.totalorder %s29, 1
      %p272 = por %p270, %p271
      %p274 = scmp.ne.s32.totalorder %s257, %s273
      %p275 = scmp.eq.s32.totalorder %s29, 0
      %p276 = por %p274, %p275
      %p277 = scmp.le.s32.totalorder 1, %s23
      %p278 = scmp.lt.s32.totalorder %s23, 3
      %p279 = pnand %p277, %p278
      %p280 = pneg %p279
      // Predicated region
      $region9: #{cnn_forward.1} parent=5 // pred_check
        _
      $region10: #{cnn_forward.1} parent=5 // pred_check_branch
        %282 = sbr.rel (%p279) target = $region12
      $region11: #{cnn_forward.1} parent=5 // pred_region
        %s283 = ssub.s32 %s23, 1
        // Predicated region
        $region13: #{cnn_forward.1} parent=11 // pred_check
          %p284 = pneg %p96
        $region14: #{cnn_forward.1} parent=11 // pred_check_branch
          %286 = sbr.rel (%p284) target = $region16
        $region15: #{cnn_forward.1} parent=11 // pred_region
          _
        $region16: #{cnn_forward.1} parent=11 // pred_fallthru
          _
        // Predicated region
        $region17: #{cnn_forward.1} parent=11 // pred_check
          %p287 = pneg %p117
        $region18: #{cnn_forward.1} parent=11 // pred_check_branch
          %289 = sbr.rel (%p287) target = $region20
        $region19: #{cnn_forward.1} parent=11 // pred_region
          %291 = vsyncadd [#allocation6], 0
          %s293 = sshll.u32 %s3, 4
          %s294 = int_to_ptr.hbm [resolvable:$true] %s293
          %s295 = sshll.u32 [#allocation5], 4
          %s296 = int_to_ptr.vmem [resolvable:$true] %s295
          %298 = dma.hbm_to_vmem [thread:$0]  %s294, 16, %s296, [#allocation6]
        $region20: #{cnn_forward.1} parent=11 // pred_fallthru
          _
        // Predicated region
        $region21: #{cnn_forward.1} parent=11 // pred_check
          %p299 = pneg %p138
        $region22: #{cnn_forward.1} parent=11 // pred_check_branch
          %301 = sbr.rel (%p299) target = $region24
        $region23: #{cnn_forward.1} parent=11 // pred_region
          _
        $region24: #{cnn_forward.1} parent=11 // pred_fallthru
          _
        // Predicated region
        $region25: #{cnn_forward.1} parent=11 // pred_check
          %p302 = pneg %p159
        $region26: #{cnn_forward.1} parent=11 // pred_check_branch
          %304 = sbr.rel (%p302) target = $region28
        $region27: #{cnn_forward.1} parent=11 // pred_region
          %306 = vsyncadd [#allocation9], 0
          %s308 = sshll.u32 %s5, 4
          %s309 = int_to_ptr.hbm [resolvable:$true] %s308
          %s310 = sshll.u32 [#allocation8], 4
          %s311 = int_to_ptr.vmem [resolvable:$true] %s310
          %313 = dma.hbm_to_vmem [thread:$0]  %s309, 16, %s311, [#allocation9]
        $region28: #{cnn_forward.1} parent=11 // pred_fallthru
          _
        // Predicated region
        $region29: #{cnn_forward.1} parent=11 // pred_check
          %p314 = pneg %p180
        $region30: #{cnn_forward.1} parent=11 // pred_check_branch
          %316 = sbr.rel (%p314) target = $region32
        $region31: #{cnn_forward.1} parent=11 // pred_region
          %318 = vsyncadd [#allocation9], 0
          %s319 = sshll.u32 %s6, 4
          %s320 = int_to_ptr.hbm [resolvable:$true] %s319
          %s321 = sshll.u32 [#allocation10], 4
          %s322 = int_to_ptr.vmem [resolvable:$true] %s321
          %327 = dma.hbm_to_vmem [thread:$0]  %s320, 147456, %s322, [#allocation9], 512, 512, 32
        $region32: #{cnn_forward.1} parent=11 // pred_fallthru
          _
        // Predicated region
        $region33: #{cnn_forward.1} parent=11 // pred_check
          %p328 = pneg %p201
        $region34: #{cnn_forward.1} parent=11 // pred_check_branch
          %330 = sbr.rel (%p328) target = $region36
        $region35: #{cnn_forward.1} parent=11 // pred_region
          %332 = vsyncadd [#allocation12], 0
          %s334 = sshll.u32 %s7, 4
          %s335 = int_to_ptr.hbm [resolvable:$true] %s334
          %s336 = sshll.u32 [#allocation11], 4
          %s337 = int_to_ptr.vmem [resolvable:$true] %s336
          %339 = dma.hbm_to_vmem [thread:$0]  %s335, 64, %s337, [#allocation12]
        $region36: #{cnn_forward.1} parent=11 // pred_fallthru
          _
        // Predicated region
        $region37: #{cnn_forward.1} parent=11 // pred_check
          %p340 = pneg %p222
        $region38: #{cnn_forward.1} parent=11 // pred_check_branch
          %342 = sbr.rel (%p340) target = $region40
        $region39: #{cnn_forward.1} parent=11 // pred_region
          %344 = vsyncadd [#allocation12], 0
          %s345 = sshll.u32 %s8, 4
          %s346 = int_to_ptr.hbm [resolvable:$true] %s345
          %s347 = sshll.u32 [#allocation13], 4
          %s348 = int_to_ptr.vmem [resolvable:$true] %s347
          %353 = dma.hbm_to_vmem [thread:$0]  %s346, 8192, %s348, [#allocation12], 128, 128, 8
        $region40: #{cnn_forward.1} parent=11 // pred_fallthru
          _
        // Predicated region
        $region41: #{cnn_forward.1} parent=11 // pred_check
          %p354 = pneg %p243
        $region42: #{cnn_forward.1} parent=11 // pred_check_branch
          %356 = sbr.rel (%p354) target = $region44
        $region43: #{cnn_forward.1} parent=11 // pred_region
          %358 = vsyncadd [#allocation15], 0
          %s360 = sshll.u32 %s9, 4
          %s361 = int_to_ptr.hbm [resolvable:$true] %s360
          %s362 = sshll.u32 [#allocation14], 4
          %s363 = int_to_ptr.vmem [resolvable:$true] %s362
          %365 = dma.hbm_to_vmem [thread:$0]  %s361, 16, %s363, [#allocation15]
        $region44: #{cnn_forward.1} parent=11 // pred_fallthru
          _
      $region12: #{cnn_forward.1} parent=5 // pred_fallthru
        _
      %p366 = scmp.lt.s32.totalorder %s23, 2
      // Predicated region
      $region45: #{cnn_forward.1} parent=5 // pred_check
        %p367 = pneg %p366
      $region46: #{cnn_forward.1} parent=5 // pred_check_branch
        %369 = sbr.rel (%p367) target = $region48
      $region47: #{cnn_forward.1} parent=5 // pred_region
        // Predicated region
        $region49: #{cnn_forward.1} parent=47 // pred_check
          %p370 = pneg %p43
        $region50: #{cnn_forward.1} parent=47 // pred_check_branch
          %372 = sbr.rel (%p370) target = $region52
        $region51: #{cnn_forward.1} parent=47 // pred_region
          %p373 = scmp.lt.s32.totalorder %s23, 1
          %s374 = scalar_select %p373, %s23, 1
          %s375 = smul.addr %s374, 28
          %s376 = smul.addr %s375, 8
          %s377 = scalar_lea.vmem %s0, %s376
        $region52: #{cnn_forward.1} parent=47 // pred_fallthru
          _
        // Predicated region
        $region53: #{cnn_forward.1} parent=47 // pred_check
          %p378 = pneg %p69
        $region54: #{cnn_forward.1} parent=47 // pred_check_branch
          %380 = sbr.rel (%p378) target = $region56
        $region55: #{cnn_forward.1} parent=47 // pred_region
          %p381 = scmp.lt.s32.totalorder %s23, 1
          %s382 = scalar_select %p381, %s23, 1
          %s383 = smul.addr %s382, 28
          %s384 = smul.addr %s383, 8
          %s385 = scalar_lea.vmem %s1, %s384
        $region56: #{cnn_forward.1} parent=47 // pred_fallthru
          _
      $region48: #{cnn_forward.1} parent=5 // pred_fallthru
        _
      %p386 = scmp.le.s32.totalorder 1, %s23
      %p387 = scmp.lt.s32.totalorder %s23, 3
      %p388 = pnand %p386, %p387
      %p389 = pneg %p388
      // Predicated region
      $region57: #{cnn_forward.1} parent=5 // pred_check
        _
      $region58: #{cnn_forward.1} parent=5 // pred_check_branch
        %391 = sbr.rel (%p388) target = $region60
      $region59: #{cnn_forward.1} parent=5 // pred_region
        %s392 = ssub.s32 %s23, 1
        // Predicated region
        $region61: #{cnn_forward.1} parent=59 // pred_check
          %p393 = pneg %p117
        $region62: #{cnn_forward.1} parent=59 // pred_check_branch
          %395 = sbr.rel (%p393) target = $region64
        $region63: #{cnn_forward.1} parent=59 // pred_region
          %397 = dma.done [#allocation6], 16
        $region64: #{cnn_forward.1} parent=59 // pred_fallthru
          _
        // Predicated region
        $region65: #{cnn_forward.1} parent=59 // pred_check
          %p398 = pneg %p159
        $region66: #{cnn_forward.1} parent=59 // pred_check_branch
          %400 = sbr.rel (%p398) target = $region68
        $region67: #{cnn_forward.1} parent=59 // pred_region
          %402 = dma.done [#allocation9], 16
        $region68: #{cnn_forward.1} parent=59 // pred_fallthru
          _
        // Predicated region
        $region69: #{cnn_forward.1} parent=59 // pred_check
          %p403 = pneg %p180
        $region70: #{cnn_forward.1} parent=59 // pred_check_branch
          %405 = sbr.rel (%p403) target = $region72
        $region71: #{cnn_forward.1} parent=59 // pred_region
          %407 = dma.done [#allocation9], 147456
        $region72: #{cnn_forward.1} parent=59 // pred_fallthru
          _
        // Predicated region
        $region73: #{cnn_forward.1} parent=59 // pred_check
          %p408 = pneg %p201
        $region74: #{cnn_forward.1} parent=59 // pred_check_branch
          %410 = sbr.rel (%p408) target = $region76
        $region75: #{cnn_forward.1} parent=59 // pred_region
          %412 = dma.done [#allocation12], 64
        $region76: #{cnn_forward.1} parent=59 // pred_fallthru
          _
        // Predicated region
        $region77: #{cnn_forward.1} parent=59 // pred_check
          %p413 = pneg %p222
        $region78: #{cnn_forward.1} parent=59 // pred_check_branch
          %415 = sbr.rel (%p413) target = $region80
        $region79: #{cnn_forward.1} parent=59 // pred_region
          %417 = dma.done [#allocation12], 8192
        $region80: #{cnn_forward.1} parent=59 // pred_fallthru
          _
        // Predicated region
        $region81: #{cnn_forward.1} parent=59 // pred_check
          %p418 = pneg %p243
        $region82: #{cnn_forward.1} parent=59 // pred_check_branch
          %420 = sbr.rel (%p418) target = $region84
        $region83: #{cnn_forward.1} parent=59 // pred_region
          %422 = dma.done [#allocation15], 16
        $region84: #{cnn_forward.1} parent=59 // pred_fallthru
          _
        %p423 = scmp.lt.s32.totalorder %s28, 1
        %s424 = scalar_select %p423, %s28, 1
        %s425 = smul.addr %s424, 28
        %s426 = smul.addr %s425, 8
        %s427 = scalar_lea.vmem %s0, %s426
        %p428 = pneg %p49
        %p429 = pneg %p46
        %p430 = scmp.lt.s32.totalorder %s28, 1
        %s431 = scalar_select %p430, %s28, 1
        %s432 = smul.addr %s431, 28
        %s433 = smul.addr %s432, 8
        %s434 = scalar_lea.vmem %s1, %s433
        %p435 = pneg %p75
        %p436 = pneg %p72
        %p437 = pneg %p96
        %p438 = pneg %p93
        %p439 = pneg %p117
        %p440 = pneg %p114
        %p441 = pneg %p138
        %p442 = pneg %p135
        %p443 = pneg %p159
        %p444 = pneg %p156
        %p445 = pneg %p180
        %p446 = pneg %p177
        %p447 = pneg %p201
        %p448 = pneg %p198
        %p449 = pneg %p222
        %p450 = pneg %p219
        %p451 = pneg %p243
        %p452 = pneg %p240
        %p453 = pneg %p269
        %p454 = pneg %p266
        %s455 = sand.u32 %s256, 1
        %s456 = scalar_lea.sflag [#allocation7], %s455
        %s457 = sand.u32 %s256, 1
        %s458 = scalar_lea.vmem [#allocation16], %s457
        %p459 = scmp.lt.s32.totalorder %s28, 1
        %s460 = scalar_select %p459, %s28, 1
        %s461 = smul.addr %s460, 28
        %s462 = smul.addr %s461, 8
        %s463 = scalar_lea.vmem %s0, %s462
        %p464 = scmp.lt.s32.totalorder %s28, 1
        %s465 = scalar_select %p464, %s28, 1
        %s466 = smul.addr %s465, 28
        %s467 = smul.addr %s466, 8
        %s468 = scalar_lea.vmem %s1, %s467
        %v469 = vld [vmem:[%s2] sm:$0xff]
        %v470 = vld [vmem:[%s2 + $0x8] sm:$0xff]
        %v471 = vld [vmem:[%s2 + $0x10] sm:$0xff]
        %v472 = vld [vmem:[%s2 + $0x18] sm:$0xff]
        %v473 = vld [vmem:[%s2 + $0x20] sm:$0xff]
        %v474 = vld [vmem:[%s2 + $0x28] sm:$0xff]
        %v475 = vld [vmem:[#allocation5] sm:$0x1]
        %v476 = vld [vmem:[%s463] sm:$0x7f]
        %s477 = scalar_lea.vmem %s463, 8
        %v478 = vld [vmem:[%s477] sm:$0x7f]
        %s479 = scalar_lea.vmem %s463, 16
        %v480 = vld [vmem:[%s479] sm:$0x7f]
        %s481 = scalar_lea.vmem %s463, 24
        %v482 = vld [vmem:[%s481] sm:$0x7f]
        %v483 = vld [vmem:[%s468] sm:$0x3f]
        %s484 = scalar_lea.vmem %s468, 8
        %v485 = vld [vmem:[%s484] sm:$0x3f]
        %s486 = scalar_lea.vmem %s468, 16
        %v487 = vld [vmem:[%s486] sm:$0x3f]
        %s488 = scalar_lea.vmem %s468, 24
        %v489 = vld [vmem:[%s488] sm:$0x3f]
        %491 = vrot.lane.b32.xlu0 %v478, 12
        %v492 = vpop.permute.xlu0 %491
        %495 = vrot.lane.b32.xlu0 %v480, 24
        %v496 = vpop.permute.xlu0 %495
        %499 = vrot.lane.b32.xlu0 %v482, 36
        %v500 = vpop.permute.xlu0 %499
        %vm502 = vcmask 97280
        %v503 = vsel %vm502, %v476, %v492
        %vm504 = vcmask 195584
        %v505 = vsel %vm504, %v503, %v496
        %vm506 = vcmask 293888
        %v507 = vsel %vm506, %v505, %v500
        %509 = vrot.lane.b32.xlu0 %v485, 12
        %v510 = vpop.permute.xlu0 %509
        %513 = vrot.lane.b32.xlu0 %v487, 24
        %v514 = vpop.permute.xlu0 %513
        %517 = vrot.lane.b32.xlu0 %v489, 36
        %v518 = vpop.permute.xlu0 %517
        %v520 = vsel %vm502, %v483, %v510
        %v521 = vsel %vm504, %v520, %v514
        %v522 = vsel %vm506, %v521, %v518
        %v524 = vperm.slane %v475, 0
        %vm526 = vcmask 392192
        %v528 = vsel %vm526, %v507, 0
        %530 = vmatpush.msra.mxu0 0.0
        %531 = vmatpush.msra.mxu0 0.0
        %532 = vmatpush.msra.mxu0 0.0
        %533 = vmatpush.msra.mxu0 0.0
        %534 = vmatpush.msra.mxu0 0.0
        %535 = vmatpush.msra.mxu0 0.0
        %536 = vmatpush.msra.mxu0 0.0
        %537 = vmatpush.msra.mxu0 0.0
        %538 = vmatpush.msra.mxu0 0.0
        %539 = vmatpush.msra.mxu0 0.0
        %540 = vmatpush.msra.mxu0 %v474
        %541 = vmatpush.msra.mxu0 %v473
        %542 = vmatpush.msra.mxu0 %v472
        %543 = vmatpush.msra.mxu0 %v471
        %544 = vmatpush.msra.mxu0 %v470
        %545 = vmatpush.msra.mxu0 %v469
        %546 = vmatmul.f32.gmra.mxu0 %v528
        %v547 = vpop.f32.mrf.mxu0
        %v548 = vadd.f32 %v524, %v547
        %549 = vdwg.mxu0
        %v551 = vsel %vm526, %v522, 0
        %553 = vmatpush.msra.mxu0 0.0
        %554 = vmatpush.msra.mxu0 0.0
        %555 = vmatpush.msra.mxu0 0.0
        %556 = vmatpush.msra.mxu0 0.0
        %557 = vmatpush.msra.mxu0 0.0
        %558 = vmatpush.msra.mxu0 0.0
        %559 = vmatpush.msra.mxu0 0.0
        %560 = vmatpush.msra.mxu0 0.0
        %561 = vmatpush.msra.mxu0 0.0
        %562 = vmatpush.msra.mxu0 0.0
        %563 = vmatpush.msra.mxu0 %v474
        %564 = vmatpush.msra.mxu0 %v473
        %565 = vmatpush.msra.mxu0 %v472
        %566 = vmatpush.msra.mxu0 %v471
        %567 = vmatpush.msra.mxu0 %v470
        %568 = vmatpush.msra.mxu0 %v469
        %569 = vmatmul.f32.gmra.mxu0 %v551
        %v570 = vpop.f32.mrf.mxu0
        %v571 = vadd.f32 %v524, %v570
        %572 = vdwg.mxu0
        %v573 = vmax.f32 %v548, 0.0
        %vm574 = vcmask 260096
        %575 = vst.msk [vmem:[#allocation2] sm:$0x7f] %vm574, %v573
        %v576 = vmax.f32 %v571, 0.0
        %vm577 = vcmask 259072
        %578 = vst.msk [vmem:[#allocation3] sm:$0x3f] %vm577, %v576
        %v579 = vld [vmem:[%s479] sm:$0x7f]
        %v580 = vld [vmem:[%s481] sm:$0x7f]
        %s581 = scalar_lea.vmem %s463, 32
        %v582 = vld [vmem:[%s581] sm:$0x7f]
        %s583 = scalar_lea.vmem %s463, 40
        %v584 = vld [vmem:[%s583] sm:$0x7f]
        %v585 = vld [vmem:[%s486] sm:$0x3f]
        %v586 = vld [vmem:[%s488] sm:$0x3f]
        %s587 = scalar_lea.vmem %s468, 32
        %v588 = vld [vmem:[%s587] sm:$0x3f]
        %s589 = scalar_lea.vmem %s468, 40
        %v590 = vld [vmem:[%s589] sm:$0x3f]
        %592 = vrot.lane.b32.xlu0 %v580, 12
        %v593 = vpop.permute.xlu0 %592
        %596 = vrot.lane.b32.xlu0 %v582, 24
        %v597 = vpop.permute.xlu0 %596
        %600 = vrot.lane.b32.xlu0 %v584, 36
        %v601 = vpop.permute.xlu0 %600
        %v603 = vsel %vm502, %v579, %v593
        %v604 = vsel %vm504, %v603, %v597
        %v605 = vsel %vm506, %v604, %v601
        %607 = vrot.lane.b32.xlu0 %v586, 12
        %v608 = vpop.permute.xlu0 %607
        %611 = vrot.lane.b32.xlu0 %v588, 24
        %v612 = vpop.permute.xlu0 %611
        %615 = vrot.lane.b32.xlu0 %v590, 36
        %v616 = vpop.permute.xlu0 %615
        %v618 = vsel %vm502, %v585, %v608
        %v619 = vsel %vm504, %v618, %v612
        %v620 = vsel %vm506, %v619, %v616
        %v622 = vsel %vm526, %v605, 0
        %624 = vmatpush.msra.mxu0 0.0
        %625 = vmatpush.msra.mxu0 0.0
        %626 = vmatpush.msra.mxu0 0.0
        %627 = vmatpush.msra.mxu0 0.0
        %628 = vmatpush.msra.mxu0 0.0
        %629 = vmatpush.msra.mxu0 0.0
        %630 = vmatpush.msra.mxu0 0.0
        %631 = vmatpush.msra.mxu0 0.0
        %632 = vmatpush.msra.mxu0 0.0
        %633 = vmatpush.msra.mxu0 0.0
        %634 = vmatpush.msra.mxu0 %v474
        %635 = vmatpush.msra.mxu0 %v473
        %636 = vmatpush.msra.mxu0 %v472
        %637 = vmatpush.msra.mxu0 %v471
        %638 = vmatpush.msra.mxu0 %v470
        %639 = vmatpush.msra.mxu0 %v469
        %640 = vmatmul.f32.gmra.mxu0 %v622
        %v641 = vpop.f32.mrf.mxu0
        %v642 = vadd.f32 %v524, %v641
        %643 = vdwg.mxu0
        %v645 = vsel %vm526, %v620, 0
        %647 = vmatpush.msra.mxu0 0.0
        %648 = vmatpush.msra.mxu0 0.0
        %649 = vmatpush.msra.mxu0 0.0
        %650 = vmatpush.msra.mxu0 0.0
        %651 = vmatpush.msra.mxu0 0.0
        %652 = vmatpush.msra.mxu0 0.0
        %653 = vmatpush.msra.mxu0 0.0
        %654 = vmatpush.msra.mxu0 0.0
        %655 = vmatpush.msra.mxu0 0.0
        %656 = vmatpush.msra.mxu0 0.0
        %657 = vmatpush.msra.mxu0 %v474
        %658 = vmatpush.msra.mxu0 %v473
        %659 = vmatpush.msra.mxu0 %v472
        %660 = vmatpush.msra.mxu0 %v471
        %661 = vmatpush.msra.mxu0 %v470
        %662 = vmatpush.msra.mxu0 %v469
        %663 = vmatmul.f32.gmra.mxu0 %v645
        %v664 = vpop.f32.mrf.mxu0
        %v665 = vadd.f32 %v524, %v664
        %666 = vdwg.mxu0
        %v667 = vmax.f32 %v642, 0.0
        %s668 = scalar_lea.vmem [#allocation2], 8
        %669 = vst.msk [vmem:[%s668] sm:$0x7f] %vm574, %v667
        %v670 = vmax.f32 %v665, 0.0
        %s671 = scalar_lea.vmem [#allocation3], 8
        %672 = vst.msk [vmem:[%s671] sm:$0x3f] %vm577, %v670
        %v673 = vld [vmem:[%s581] sm:$0x7f]
        %v674 = vld [vmem:[%s583] sm:$0x7f]
        %s675 = scalar_lea.vmem %s463, 48
        %v676 = vld [vmem:[%s675] sm:$0x7f]
        %s677 = scalar_lea.vmem %s463, 56
        %v678 = vld [vmem:[%s677] sm:$0x7f]
        %v679 = vld [vmem:[%s587] sm:$0x3f]
        %v680 = vld [vmem:[%s589] sm:$0x3f]
        %s681 = scalar_lea.vmem %s468, 48
        %v682 = vld [vmem:[%s681] sm:$0x3f]
        %s683 = scalar_lea.vmem %s468, 56
        %v684 = vld [vmem:[%s683] sm:$0x3f]
        %686 = vrot.lane.b32.xlu0 %v674, 12
        %v687 = vpop.permute.xlu0 %686
        %690 = vrot.lane.b32.xlu0 %v676, 24
        %v691 = vpop.permute.xlu0 %690
        %694 = vrot.lane.b32.xlu0 %v678, 36
        %v695 = vpop.permute.xlu0 %694
        %v697 = vsel %vm502, %v673, %v687
        %v698 = vsel %vm504, %v697, %v691
        %v699 = vsel %vm506, %v698, %v695
        %701 = vrot.lane.b32.xlu0 %v680, 12
        %v702 = vpop.permute.xlu0 %701
        %705 = vrot.lane.b32.xlu0 %v682, 24
        %v706 = vpop.permute.xlu0 %705
        %709 = vrot.lane.b32.xlu0 %v684, 36
        %v710 = vpop.permute.xlu0 %709
        %v712 = vsel %vm502, %v679, %v702
        %v713 = vsel %vm504, %v712, %v706
        %v714 = vsel %vm506, %v713, %v710
        %v716 = vsel %vm526, %v699, 0
        %718 = vmatpush.msra.mxu0 0.0
        %719 = vmatpush.msra.mxu0 0.0
        %720 = vmatpush.msra.mxu0 0.0
        %721 = vmatpush.msra.mxu0 0.0
        %722 = vmatpush.msra.mxu0 0.0
        %723 = vmatpush.msra.mxu0 0.0
        %724 = vmatpush.msra.mxu0 0.0
        %725 = vmatpush.msra.mxu0 0.0
        %726 = vmatpush.msra.mxu0 0.0
        %727 = vmatpush.msra.mxu0 0.0
        %728 = vmatpush.msra.mxu0 %v474
        %729 = vmatpush.msra.mxu0 %v473
        %730 = vmatpush.msra.mxu0 %v472
        %731 = vmatpush.msra.mxu0 %v471
        %732 = vmatpush.msra.mxu0 %v470
        %733 = vmatpush.msra.mxu0 %v469
        %734 = vmatmul.f32.gmra.mxu0 %v716
        %v735 = vpop.f32.mrf.mxu0
        %v736 = vadd.f32 %v524, %v735
        %737 = vdwg.mxu0
        %v739 = vsel %vm526, %v714, 0
        %741 = vmatpush.msra.mxu0 0.0
        %742 = vmatpush.msra.mxu0 0.0
        %743 = vmatpush.msra.mxu0 0.0
        %744 = vmatpush.msra.mxu0 0.0
        %745 = vmatpush.msra.mxu0 0.0
        %746 = vmatpush.msra.mxu0 0.0
        %747 = vmatpush.msra.mxu0 0.0
        %748 = vmatpush.msra.mxu0 0.0
        %749 = vmatpush.msra.mxu0 0.0
        %750 = vmatpush.msra.mxu0 0.0
        %751 = vmatpush.msra.mxu0 %v474
        %752 = vmatpush.msra.mxu0 %v473
        %753 = vmatpush.msra.mxu0 %v472
        %754 = vmatpush.msra.mxu0 %v471
        %755 = vmatpush.msra.mxu0 %v470
        %756 = vmatpush.msra.mxu0 %v469
        %757 = vmatmul.f32.gmra.mxu0 %v739
        %v758 = vpop.f32.mrf.mxu0
        %v759 = vadd.f32 %v524, %v758
        %760 = vdwg.mxu0
        %v761 = vmax.f32 %v736, 0.0
        %s762 = scalar_lea.vmem [#allocation2], 16
        %763 = vst.msk [vmem:[%s762] sm:$0x7f] %vm574, %v761
        %v764 = vmax.f32 %v759, 0.0
        %s765 = scalar_lea.vmem [#allocation3], 16
        %766 = vst.msk [vmem:[%s765] sm:$0x3f] %vm577, %v764
        %v767 = vld [vmem:[%s675] sm:$0x7f]
        %v768 = vld [vmem:[%s677] sm:$0x7f]
        %s769 = scalar_lea.vmem %s463, 64
        %v770 = vld [vmem:[%s769] sm:$0x7f]
        %s771 = scalar_lea.vmem %s463, 72
        %v772 = vld [vmem:[%s771] sm:$0x7f]
        %v773 = vld [vmem:[%s681] sm:$0x3f]
        %v774 = vld [vmem:[%s683] sm:$0x3f]
        %s775 = scalar_lea.vmem %s468, 64
        %v776 = vld [vmem:[%s775] sm:$0x3f]
        %s777 = scalar_lea.vmem %s468, 72
        %v778 = vld [vmem:[%s777] sm:$0x3f]
        %780 = vrot.lane.b32.xlu0 %v768, 12
        %v781 = vpop.permute.xlu0 %780
        %784 = vrot.lane.b32.xlu0 %v770, 24
        %v785 = vpop.permute.xlu0 %784
        %788 = vrot.lane.b32.xlu0 %v772, 36
        %v789 = vpop.permute.xlu0 %788
        %v791 = vsel %vm502, %v767, %v781
        %v792 = vsel %vm504, %v791, %v785
        %v793 = vsel %vm506, %v792, %v789
        %795 = vrot.lane.b32.xlu0 %v774, 12
        %v796 = vpop.permute.xlu0 %795
        %799 = vrot.lane.b32.xlu0 %v776, 24
        %v800 = vpop.permute.xlu0 %799
        %803 = vrot.lane.b32.xlu0 %v778, 36
        %v804 = vpop.permute.xlu0 %803
        %v806 = vsel %vm502, %v773, %v796
        %v807 = vsel %vm504, %v806, %v800
        %v808 = vsel %vm506, %v807, %v804
        %v810 = vsel %vm526, %v793, 0
        %812 = vmatpush.msra.mxu0 0.0
        %813 = vmatpush.msra.mxu0 0.0
        %814 = vmatpush.msra.mxu0 0.0
        %815 = vmatpush.msra.mxu0 0.0
        %816 = vmatpush.msra.mxu0 0.0
        %817 = vmatpush.msra.mxu0 0.0
        %818 = vmatpush.msra.mxu0 0.0
        %819 = vmatpush.msra.mxu0 0.0
        %820 = vmatpush.msra.mxu0 0.0
        %821 = vmatpush.msra.mxu0 0.0
        %822 = vmatpush.msra.mxu0 %v474
        %823 = vmatpush.msra.mxu0 %v473
        %824 = vmatpush.msra.mxu0 %v472
        %825 = vmatpush.msra.mxu0 %v471
        %826 = vmatpush.msra.mxu0 %v470
        %827 = vmatpush.msra.mxu0 %v469
        %828 = vmatmul.f32.gmra.mxu0 %v810
        %v829 = vpop.f32.mrf.mxu0
        %v830 = vadd.f32 %v524, %v829
        %831 = vdwg.mxu0
        %v833 = vsel %vm526, %v808, 0
        %835 = vmatpush.msra.mxu0 0.0
        %836 = vmatpush.msra.mxu0 0.0
        %837 = vmatpush.msra.mxu0 0.0
        %838 = vmatpush.msra.mxu0 0.0
        %839 = vmatpush.msra.mxu0 0.0
        %840 = vmatpush.msra.mxu0 0.0
        %841 = vmatpush.msra.mxu0 0.0
        %842 = vmatpush.msra.mxu0 0.0
        %843 = vmatpush.msra.mxu0 0.0
        %844 = vmatpush.msra.mxu0 0.0
        %845 = vmatpush.msra.mxu0 %v474
        %846 = vmatpush.msra.mxu0 %v473
        %847 = vmatpush.msra.mxu0 %v472
        %848 = vmatpush.msra.mxu0 %v471
        %849 = vmatpush.msra.mxu0 %v470
        %850 = vmatpush.msra.mxu0 %v469
        %851 = vmatmul.f32.gmra.mxu0 %v833
        %v852 = vpop.f32.mrf.mxu0
        %v853 = vadd.f32 %v524, %v852
        %854 = vdwg.mxu0
        %v855 = vmax.f32 %v830, 0.0
        %s856 = scalar_lea.vmem [#allocation2], 24
        %857 = vst.msk [vmem:[%s856] sm:$0x7f] %vm574, %v855
        %v858 = vmax.f32 %v853, 0.0
        %s859 = scalar_lea.vmem [#allocation3], 24
        %860 = vst.msk [vmem:[%s859] sm:$0x3f] %vm577, %v858
        %v861 = vld [vmem:[%s769] sm:$0x7f]
        %v862 = vld [vmem:[%s771] sm:$0x7f]
        %s863 = scalar_lea.vmem %s463, 80
        %v864 = vld [vmem:[%s863] sm:$0x7f]
        %s865 = scalar_lea.vmem %s463, 88
        %v866 = vld [vmem:[%s865] sm:$0x7f]
        %v867 = vld [vmem:[%s775] sm:$0x3f]
        %v868 = vld [vmem:[%s777] sm:$0x3f]
        %s869 = scalar_lea.vmem %s468, 80
        %v870 = vld [vmem:[%s869] sm:$0x3f]
        %s871 = scalar_lea.vmem %s468, 88
        %v872 = vld [vmem:[%s871] sm:$0x3f]
        %874 = vrot.lane.b32.xlu0 %v862, 12
        %v875 = vpop.permute.xlu0 %874
        %878 = vrot.lane.b32.xlu0 %v864, 24
        %v879 = vpop.permute.xlu0 %878
        %882 = vrot.lane.b32.xlu0 %v866, 36
        %v883 = vpop.permute.xlu0 %882
        %v885 = vsel %vm502, %v861, %v875
        %v886 = vsel %vm504, %v885, %v879
        %v887 = vsel %vm506, %v886, %v883
        %889 = vrot.lane.b32.xlu0 %v868, 12
        %v890 = vpop.permute.xlu0 %889
        %893 = vrot.lane.b32.xlu0 %v870, 24
        %v894 = vpop.permute.xlu0 %893
        %897 = vrot.lane.b32.xlu0 %v872, 36
        %v898 = vpop.permute.xlu0 %897
        %v900 = vsel %vm502, %v867, %v890
        %v901 = vsel %vm504, %v900, %v894
        %v902 = vsel %vm506, %v901, %v898
        %v904 = vsel %vm526, %v887, 0
        %906 = vmatpush.msra.mxu0 0.0
        %907 = vmatpush.msra.mxu0 0.0
        %908 = vmatpush.msra.mxu0 0.0
        %909 = vmatpush.msra.mxu0 0.0
        %910 = vmatpush.msra.mxu0 0.0
        %911 = vmatpush.msra.mxu0 0.0
        %912 = vmatpush.msra.mxu0 0.0
        %913 = vmatpush.msra.mxu0 0.0
        %914 = vmatpush.msra.mxu0 0.0
        %915 = vmatpush.msra.mxu0 0.0
        %916 = vmatpush.msra.mxu0 %v474
        %917 = vmatpush.msra.mxu0 %v473
        %918 = vmatpush.msra.mxu0 %v472
        %919 = vmatpush.msra.mxu0 %v471
        %920 = vmatpush.msra.mxu0 %v470
        %921 = vmatpush.msra.mxu0 %v469
        %922 = vmatmul.f32.gmra.mxu0 %v904
        %v923 = vpop.f32.mrf.mxu0
        %v924 = vadd.f32 %v524, %v923
        %925 = vdwg.mxu0
        %v927 = vsel %vm526, %v902, 0
        %929 = vmatpush.msra.mxu0 0.0
        %930 = vmatpush.msra.mxu0 0.0
        %931 = vmatpush.msra.mxu0 0.0
        %932 = vmatpush.msra.mxu0 0.0
        %933 = vmatpush.msra.mxu0 0.0
        %934 = vmatpush.msra.mxu0 0.0
        %935 = vmatpush.msra.mxu0 0.0
        %936 = vmatpush.msra.mxu0 0.0
        %937 = vmatpush.msra.mxu0 0.0
        %938 = vmatpush.msra.mxu0 0.0
        %939 = vmatpush.msra.mxu0 %v474
        %940 = vmatpush.msra.mxu0 %v473
        %941 = vmatpush.msra.mxu0 %v472
        %942 = vmatpush.msra.mxu0 %v471
        %943 = vmatpush.msra.mxu0 %v470
        %944 = vmatpush.msra.mxu0 %v469
        %945 = vmatmul.f32.gmra.mxu0 %v927
        %v946 = vpop.f32.mrf.mxu0
        %v947 = vadd.f32 %v524, %v946
        %948 = vdwg.mxu0
        %v949 = vmax.f32 %v924, 0.0
        %s950 = scalar_lea.vmem [#allocation2], 32
        %951 = vst.msk [vmem:[%s950] sm:$0x7f] %vm574, %v949
        %v952 = vmax.f32 %v947, 0.0
        %s953 = scalar_lea.vmem [#allocation3], 32
        %954 = vst.msk [vmem:[%s953] sm:$0x3f] %vm577, %v952
        %v955 = vld [vmem:[%s863] sm:$0x7f]
        %v956 = vld [vmem:[%s865] sm:$0x7f]
        %s957 = scalar_lea.vmem %s463, 96
        %v958 = vld [vmem:[%s957] sm:$0x7f]
        %s959 = scalar_lea.vmem %s463, 104
        %v960 = vld [vmem:[%s959] sm:$0x7f]
        %v961 = vld [vmem:[%s869] sm:$0x3f]
        %v962 = vld [vmem:[%s871] sm:$0x3f]
        %s963 = scalar_lea.vmem %s468, 96
        %v964 = vld [vmem:[%s963] sm:$0x3f]
        %s965 = scalar_lea.vmem %s468, 104
        %v966 = vld [vmem:[%s965] sm:$0x3f]
        %968 = vrot.lane.b32.xlu0 %v956, 12
        %v969 = vpop.permute.xlu0 %968
        %972 = vrot.lane.b32.xlu0 %v958, 24
        %v973 = vpop.permute.xlu0 %972
        %976 = vrot.lane.b32.xlu0 %v960, 36
        %v977 = vpop.permute.xlu0 %976
        %v979 = vsel %vm502, %v955, %v969
        %v980 = vsel %vm504, %v979, %v973
        %v981 = vsel %vm506, %v980, %v977
        %983 = vrot.lane.b32.xlu0 %v962, 12
        %v984 = vpop.permute.xlu0 %983
        %987 = vrot.lane.b32.xlu0 %v964, 24
        %v988 = vpop.permute.xlu0 %987
        %991 = vrot.lane.b32.xlu0 %v966, 36
        %v992 = vpop.permute.xlu0 %991
        %v994 = vsel %vm502, %v961, %v984
        %v995 = vsel %vm504, %v994, %v988
        %v996 = vsel %vm506, %v995, %v992
        %v998 = vsel %vm526, %v981, 0
        %1000 = vmatpush.msra.mxu0 0.0
        %1001 = vmatpush.msra.mxu0 0.0
        %1002 = vmatpush.msra.mxu0 0.0
        %1003 = vmatpush.msra.mxu0 0.0
        %1004 = vmatpush.msra.mxu0 0.0
        %1005 = vmatpush.msra.mxu0 0.0
        %1006 = vmatpush.msra.mxu0 0.0
        %1007 = vmatpush.msra.mxu0 0.0
        %1008 = vmatpush.msra.mxu0 0.0
        %1009 = vmatpush.msra.mxu0 0.0
        %1010 = vmatpush.msra.mxu0 %v474
        %1011 = vmatpush.msra.mxu0 %v473
        %1012 = vmatpush.msra.mxu0 %v472
        %1013 = vmatpush.msra.mxu0 %v471
        %1014 = vmatpush.msra.mxu0 %v470
        %1015 = vmatpush.msra.mxu0 %v469
        %1016 = vmatmul.f32.gmra.mxu0 %v998
        %v1017 = vpop.f32.mrf.mxu0
        %v1018 = vadd.f32 %v524, %v1017
        %1019 = vdwg.mxu0
        %v1021 = vsel %vm526, %v996, 0
        %1023 = vmatpush.msra.mxu0 0.0
        %1024 = vmatpush.msra.mxu0 0.0
        %1025 = vmatpush.msra.mxu0 0.0
        %1026 = vmatpush.msra.mxu0 0.0
        %1027 = vmatpush.msra.mxu0 0.0
        %1028 = vmatpush.msra.mxu0 0.0
        %1029 = vmatpush.msra.mxu0 0.0
        %1030 = vmatpush.msra.mxu0 0.0
        %1031 = vmatpush.msra.mxu0 0.0
        %1032 = vmatpush.msra.mxu0 0.0
        %1033 = vmatpush.msra.mxu0 %v474
        %1034 = vmatpush.msra.mxu0 %v473
        %1035 = vmatpush.msra.mxu0 %v472
        %1036 = vmatpush.msra.mxu0 %v471
        %1037 = vmatpush.msra.mxu0 %v470
        %1038 = vmatpush.msra.mxu0 %v469
        %1039 = vmatmul.f32.gmra.mxu0 %v1021
        %v1040 = vpop.f32.mrf.mxu0
        %v1041 = vadd.f32 %v524, %v1040
        %1042 = vdwg.mxu0
        %v1043 = vmax.f32 %v1018, 0.0
        %s1044 = scalar_lea.vmem [#allocation2], 40
        %1045 = vst.msk [vmem:[%s1044] sm:$0x7f] %vm574, %v1043
        %v1046 = vmax.f32 %v1041, 0.0
        %s1047 = scalar_lea.vmem [#allocation3], 40
        %1048 = vst.msk [vmem:[%s1047] sm:$0x3f] %vm577, %v1046
        %v1049 = vld [vmem:[%s957] sm:$0x7f]
        %v1050 = vld [vmem:[%s959] sm:$0x7f]
        %s1051 = scalar_lea.vmem %s463, 112
        %v1052 = vld [vmem:[%s1051] sm:$0x7f]
        %s1053 = scalar_lea.vmem %s463, 120
        %v1054 = vld [vmem:[%s1053] sm:$0x7f]
        %v1055 = vld [vmem:[%s963] sm:$0x3f]
        %v1056 = vld [vmem:[%s965] sm:$0x3f]
        %s1057 = scalar_lea.vmem %s468, 112
        %v1058 = vld [vmem:[%s1057] sm:$0x3f]
        %s1059 = scalar_lea.vmem %s468, 120
        %v1060 = vld [vmem:[%s1059] sm:$0x3f]
        %1062 = vrot.lane.b32.xlu0 %v1050, 12
        %v1063 = vpop.permute.xlu0 %1062
        %1066 = vrot.lane.b32.xlu0 %v1052, 24
        %v1067 = vpop.permute.xlu0 %1066
        %1070 = vrot.lane.b32.xlu0 %v1054, 36
        %v1071 = vpop.permute.xlu0 %1070
        %v1073 = vsel %vm502, %v1049, %v1063
        %v1074 = vsel %vm504, %v1073, %v1067
        %v1075 = vsel %vm506, %v1074, %v1071
        %1077 = vrot.lane.b32.xlu0 %v1056, 12
        %v1078 = vpop.permute.xlu0 %1077
        %1081 = vrot.lane.b32.xlu0 %v1058, 24
        %v1082 = vpop.permute.xlu0 %1081
        %1085 = vrot.lane.b32.xlu0 %v1060, 36
        %v1086 = vpop.permute.xlu0 %1085
        %v1088 = vsel %vm502, %v1055, %v1078
        %v1089 = vsel %vm504, %v1088, %v1082
        %v1090 = vsel %vm506, %v1089, %v1086
        %v1092 = vsel %vm526, %v1075, 0
        %1094 = vmatpush.msra.mxu0 0.0
        %1095 = vmatpush.msra.mxu0 0.0
        %1096 = vmatpush.msra.mxu0 0.0
        %1097 = vmatpush.msra.mxu0 0.0
        %1098 = vmatpush.msra.mxu0 0.0
        %1099 = vmatpush.msra.mxu0 0.0
        %1100 = vmatpush.msra.mxu0 0.0
        %1101 = vmatpush.msra.mxu0 0.0
        %1102 = vmatpush.msra.mxu0 0.0
        %1103 = vmatpush.msra.mxu0 0.0
        %1104 = vmatpush.msra.mxu0 %v474
        %1105 = vmatpush.msra.mxu0 %v473
        %1106 = vmatpush.msra.mxu0 %v472
        %1107 = vmatpush.msra.mxu0 %v471
        %1108 = vmatpush.msra.mxu0 %v470
        %1109 = vmatpush.msra.mxu0 %v469
        %1110 = vmatmul.f32.gmra.mxu0 %v1092
        %v1111 = vpop.f32.mrf.mxu0
        %v1112 = vadd.f32 %v524, %v1111
        %1113 = vdwg.mxu0
        %v1115 = vsel %vm526, %v1090, 0
        %1117 = vmatpush.msra.mxu0 0.0
        %1118 = vmatpush.msra.mxu0 0.0
        %1119 = vmatpush.msra.mxu0 0.0
        %1120 = vmatpush.msra.mxu0 0.0
        %1121 = vmatpush.msra.mxu0 0.0
        %1122 = vmatpush.msra.mxu0 0.0
        %1123 = vmatpush.msra.mxu0 0.0
        %1124 = vmatpush.msra.mxu0 0.0
        %1125 = vmatpush.msra.mxu0 0.0
        %1126 = vmatpush.msra.mxu0 0.0
        %1127 = vmatpush.msra.mxu0 %v474
        %1128 = vmatpush.msra.mxu0 %v473
        %1129 = vmatpush.msra.mxu0 %v472
        %1130 = vmatpush.msra.mxu0 %v471
        %1131 = vmatpush.msra.mxu0 %v470
        %1132 = vmatpush.msra.mxu0 %v469
        %1133 = vmatmul.f32.gmra.mxu0 %v1115
        %v1134 = vpop.f32.mrf.mxu0
        %v1135 = vadd.f32 %v524, %v1134
        %1136 = vdwg.mxu0
        %v1137 = vmax.f32 %v1112, 0.0
        %s1138 = scalar_lea.vmem [#allocation2], 48
        %1139 = vst.msk [vmem:[%s1138] sm:$0x7f] %vm574, %v1137
        %v1140 = vmax.f32 %v1135, 0.0
        %s1141 = scalar_lea.vmem [#allocation3], 48
        %1142 = vst.msk [vmem:[%s1141] sm:$0x3f] %vm577, %v1140
        %v1143 = vld [vmem:[%s1051] sm:$0x7f]
        %v1144 = vld [vmem:[%s1053] sm:$0x7f]
        %s1145 = scalar_lea.vmem %s463, 128
        %v1146 = vld [vmem:[%s1145] sm:$0x7f]
        %s1147 = scalar_lea.vmem %s463, 136
        %v1148 = vld [vmem:[%s1147] sm:$0x7f]
        %v1149 = vld [vmem:[%s1057] sm:$0x3f]
        %v1150 = vld [vmem:[%s1059] sm:$0x3f]
        %s1151 = scalar_lea.vmem %s468, 128
        %v1152 = vld [vmem:[%s1151] sm:$0x3f]
        %s1153 = scalar_lea.vmem %s468, 136
        %v1154 = vld [vmem:[%s1153] sm:$0x3f]
        %1156 = vrot.lane.b32.xlu0 %v1144, 12
        %v1157 = vpop.permute.xlu0 %1156
        %1160 = vrot.lane.b32.xlu0 %v1146, 24
        %v1161 = vpop.permute.xlu0 %1160
        %1164 = vrot.lane.b32.xlu0 %v1148, 36
        %v1165 = vpop.permute.xlu0 %1164
        %v1167 = vsel %vm502, %v1143, %v1157
        %v1168 = vsel %vm504, %v1167, %v1161
        %v1169 = vsel %vm506, %v1168, %v1165
        %1171 = vrot.lane.b32.xlu0 %v1150, 12
        %v1172 = vpop.permute.xlu0 %1171
        %1175 = vrot.lane.b32.xlu0 %v1152, 24
        %v1176 = vpop.permute.xlu0 %1175
        %1179 = vrot.lane.b32.xlu0 %v1154, 36
        %v1180 = vpop.permute.xlu0 %1179
        %v1182 = vsel %vm502, %v1149, %v1172
        %v1183 = vsel %vm504, %v1182, %v1176
        %v1184 = vsel %vm506, %v1183, %v1180
        %v1186 = vsel %vm526, %v1169, 0
        %1188 = vmatpush.msra.mxu0 0.0
        %1189 = vmatpush.msra.mxu0 0.0
        %1190 = vmatpush.msra.mxu0 0.0
        %1191 = vmatpush.msra.mxu0 0.0
        %1192 = vmatpush.msra.mxu0 0.0
        %1193 = vmatpush.msra.mxu0 0.0
        %1194 = vmatpush.msra.mxu0 0.0
        %1195 = vmatpush.msra.mxu0 0.0
        %1196 = vmatpush.msra.mxu0 0.0
        %1197 = vmatpush.msra.mxu0 0.0
        %1198 = vmatpush.msra.mxu0 %v474
        %1199 = vmatpush.msra.mxu0 %v473
        %1200 = vmatpush.msra.mxu0 %v472
        %1201 = vmatpush.msra.mxu0 %v471
        %1202 = vmatpush.msra.mxu0 %v470
        %1203 = vmatpush.msra.mxu0 %v469
        %1204 = vmatmul.f32.gmra.mxu0 %v1186
        %v1205 = vpop.f32.mrf.mxu0
        %v1206 = vadd.f32 %v524, %v1205
        %1207 = vdwg.mxu0
        %v1209 = vsel %vm526, %v1184, 0
        %1211 = vmatpush.msra.mxu0 0.0
        %1212 = vmatpush.msra.mxu0 0.0
        %1213 = vmatpush.msra.mxu0 0.0
        %1214 = vmatpush.msra.mxu0 0.0
        %1215 = vmatpush.msra.mxu0 0.0
        %1216 = vmatpush.msra.mxu0 0.0
        %1217 = vmatpush.msra.mxu0 0.0
        %1218 = vmatpush.msra.mxu0 0.0
        %1219 = vmatpush.msra.mxu0 0.0
        %1220 = vmatpush.msra.mxu0 0.0
        %1221 = vmatpush.msra.mxu0 %v474
        %1222 = vmatpush.msra.mxu0 %v473
        %1223 = vmatpush.msra.mxu0 %v472
        %1224 = vmatpush.msra.mxu0 %v471
        %1225 = vmatpush.msra.mxu0 %v470
        %1226 = vmatpush.msra.mxu0 %v469
        %1227 = vmatmul.f32.gmra.mxu0 %v1209
        %v1228 = vpop.f32.mrf.mxu0
        %v1229 = vadd.f32 %v524, %v1228
        %1230 = vdwg.mxu0
        %v1231 = vmax.f32 %v1206, 0.0
        %s1232 = scalar_lea.vmem [#allocation2], 56
        %1233 = vst.msk [vmem:[%s1232] sm:$0x7f] %vm574, %v1231
        %v1234 = vmax.f32 %v1229, 0.0
        %s1235 = scalar_lea.vmem [#allocation3], 56
        %1236 = vst.msk [vmem:[%s1235] sm:$0x3f] %vm577, %v1234
        %v1237 = vld [vmem:[%s1145] sm:$0x7f]
        %v1238 = vld [vmem:[%s1147] sm:$0x7f]
        %s1239 = scalar_lea.vmem %s463, 144
        %v1240 = vld [vmem:[%s1239] sm:$0x7f]
        %s1241 = scalar_lea.vmem %s463, 152
        %v1242 = vld [vmem:[%s1241] sm:$0x7f]
        %v1243 = vld [vmem:[%s1151] sm:$0x3f]
        %v1244 = vld [vmem:[%s1153] sm:$0x3f]
        %s1245 = scalar_lea.vmem %s468, 144
        %v1246 = vld [vmem:[%s1245] sm:$0x3f]
        %s1247 = scalar_lea.vmem %s468, 152
        %v1248 = vld [vmem:[%s1247] sm:$0x3f]
        %1250 = vrot.lane.b32.xlu0 %v1238, 12
        %v1251 = vpop.permute.xlu0 %1250
        %1254 = vrot.lane.b32.xlu0 %v1240, 24
        %v1255 = vpop.permute.xlu0 %1254
        %1258 = vrot.lane.b32.xlu0 %v1242, 36
        %v1259 = vpop.permute.xlu0 %1258
        %v1261 = vsel %vm502, %v1237, %v1251
        %v1262 = vsel %vm504, %v1261, %v1255
        %v1263 = vsel %vm506, %v1262, %v1259
        %1265 = vrot.lane.b32.xlu0 %v1244, 12
        %v1266 = vpop.permute.xlu0 %1265
        %1269 = vrot.lane.b32.xlu0 %v1246, 24
        %v1270 = vpop.permute.xlu0 %1269
        %1273 = vrot.lane.b32.xlu0 %v1248, 36
        %v1274 = vpop.permute.xlu0 %1273
        %v1276 = vsel %vm502, %v1243, %v1266
        %v1277 = vsel %vm504, %v1276, %v1270
        %v1278 = vsel %vm506, %v1277, %v1274
        %v1280 = vsel %vm526, %v1263, 0
        %1282 = vmatpush.msra.mxu0 0.0
        %1283 = vmatpush.msra.mxu0 0.0
        %1284 = vmatpush.msra.mxu0 0.0
        %1285 = vmatpush.msra.mxu0 0.0
        %1286 = vmatpush.msra.mxu0 0.0
        %1287 = vmatpush.msra.mxu0 0.0
        %1288 = vmatpush.msra.mxu0 0.0
        %1289 = vmatpush.msra.mxu0 0.0
        %1290 = vmatpush.msra.mxu0 0.0
        %1291 = vmatpush.msra.mxu0 0.0
        %1292 = vmatpush.msra.mxu0 %v474
        %1293 = vmatpush.msra.mxu0 %v473
        %1294 = vmatpush.msra.mxu0 %v472
        %1295 = vmatpush.msra.mxu0 %v471
        %1296 = vmatpush.msra.mxu0 %v470
        %1297 = vmatpush.msra.mxu0 %v469
        %1298 = vmatmul.f32.gmra.mxu0 %v1280
        %v1299 = vpop.f32.mrf.mxu0
        %v1300 = vadd.f32 %v524, %v1299
        %1301 = vdwg.mxu0
        %v1303 = vsel %vm526, %v1278, 0
        %1305 = vmatpush.msra.mxu0 0.0
        %1306 = vmatpush.msra.mxu0 0.0
        %1307 = vmatpush.msra.mxu0 0.0
        %1308 = vmatpush.msra.mxu0 0.0
        %1309 = vmatpush.msra.mxu0 0.0
        %1310 = vmatpush.msra.mxu0 0.0
        %1311 = vmatpush.msra.mxu0 0.0
        %1312 = vmatpush.msra.mxu0 0.0
        %1313 = vmatpush.msra.mxu0 0.0
        %1314 = vmatpush.msra.mxu0 0.0
        %1315 = vmatpush.msra.mxu0 %v474
        %1316 = vmatpush.msra.mxu0 %v473
        %1317 = vmatpush.msra.mxu0 %v472
        %1318 = vmatpush.msra.mxu0 %v471
        %1319 = vmatpush.msra.mxu0 %v470
        %1320 = vmatpush.msra.mxu0 %v469
        %1321 = vmatmul.f32.gmra.mxu0 %v1303
        %v1322 = vpop.f32.mrf.mxu0
        %v1323 = vadd.f32 %v524, %v1322
        %1324 = vdwg.mxu0
        %v1325 = vmax.f32 %v1300, 0.0
        %s1326 = scalar_lea.vmem [#allocation2], 64
        %1327 = vst.msk [vmem:[%s1326] sm:$0x7f] %vm574, %v1325
        %v1328 = vmax.f32 %v1323, 0.0
        %s1329 = scalar_lea.vmem [#allocation3], 64
        %1330 = vst.msk [vmem:[%s1329] sm:$0x3f] %vm577, %v1328
        %v1331 = vld [vmem:[%s1239] sm:$0x7f]
        %v1332 = vld [vmem:[%s1241] sm:$0x7f]
        %s1333 = scalar_lea.vmem %s463, 160
        %v1334 = vld [vmem:[%s1333] sm:$0x7f]
        %s1335 = scalar_lea.vmem %s463, 168
        %v1336 = vld [vmem:[%s1335] sm:$0x7f]
        %v1337 = vld [vmem:[%s1245] sm:$0x3f]
        %v1338 = vld [vmem:[%s1247] sm:$0x3f]
        %s1339 = scalar_lea.vmem %s468, 160
        %v1340 = vld [vmem:[%s1339] sm:$0x3f]
        %s1341 = scalar_lea.vmem %s468, 168
        %v1342 = vld [vmem:[%s1341] sm:$0x3f]
        %1344 = vrot.lane.b32.xlu0 %v1332, 12
        %v1345 = vpop.permute.xlu0 %1344
        %1348 = vrot.lane.b32.xlu0 %v1334, 24
        %v1349 = vpop.permute.xlu0 %1348
        %1352 = vrot.lane.b32.xlu0 %v1336, 36
        %v1353 = vpop.permute.xlu0 %1352
        %v1355 = vsel %vm502, %v1331, %v1345
        %v1356 = vsel %vm504, %v1355, %v1349
        %v1357 = vsel %vm506, %v1356, %v1353
        %1359 = vrot.lane.b32.xlu0 %v1338, 12
        %v1360 = vpop.permute.xlu0 %1359
        %1363 = vrot.lane.b32.xlu0 %v1340, 24
        %v1364 = vpop.permute.xlu0 %1363
        %1367 = vrot.lane.b32.xlu0 %v1342, 36
        %v1368 = vpop.permute.xlu0 %1367
        %v1370 = vsel %vm502, %v1337, %v1360
        %v1371 = vsel %vm504, %v1370, %v1364
        %v1372 = vsel %vm506, %v1371, %v1368
        %v1374 = vsel %vm526, %v1357, 0
        %1376 = vmatpush.msra.mxu0 0.0
        %1377 = vmatpush.msra.mxu0 0.0
        %1378 = vmatpush.msra.mxu0 0.0
        %1379 = vmatpush.msra.mxu0 0.0
        %1380 = vmatpush.msra.mxu0 0.0
        %1381 = vmatpush.msra.mxu0 0.0
        %1382 = vmatpush.msra.mxu0 0.0
        %1383 = vmatpush.msra.mxu0 0.0
        %1384 = vmatpush.msra.mxu0 0.0
        %1385 = vmatpush.msra.mxu0 0.0
        %1386 = vmatpush.msra.mxu0 %v474
        %1387 = vmatpush.msra.mxu0 %v473
        %1388 = vmatpush.msra.mxu0 %v472
        %1389 = vmatpush.msra.mxu0 %v471
        %1390 = vmatpush.msra.mxu0 %v470
        %1391 = vmatpush.msra.mxu0 %v469
        %1392 = vmatmul.f32.gmra.mxu0 %v1374
        %v1393 = vpop.f32.mrf.mxu0
        %v1394 = vadd.f32 %v524, %v1393
        %1395 = vdwg.mxu0
        %v1397 = vsel %vm526, %v1372, 0
        %1399 = vmatpush.msra.mxu0 0.0
        %1400 = vmatpush.msra.mxu0 0.0
        %1401 = vmatpush.msra.mxu0 0.0
        %1402 = vmatpush.msra.mxu0 0.0
        %1403 = vmatpush.msra.mxu0 0.0
        %1404 = vmatpush.msra.mxu0 0.0
        %1405 = vmatpush.msra.mxu0 0.0
        %1406 = vmatpush.msra.mxu0 0.0
        %1407 = vmatpush.msra.mxu0 0.0
        %1408 = vmatpush.msra.mxu0 0.0
        %1409 = vmatpush.msra.mxu0 %v474
        %1410 = vmatpush.msra.mxu0 %v473
        %1411 = vmatpush.msra.mxu0 %v472
        %1412 = vmatpush.msra.mxu0 %v471
        %1413 = vmatpush.msra.mxu0 %v470
        %1414 = vmatpush.msra.mxu0 %v469
        %1415 = vmatmul.f32.gmra.mxu0 %v1397
        %v1416 = vpop.f32.mrf.mxu0
        %v1417 = vadd.f32 %v524, %v1416
        %1418 = vdwg.mxu0
        %v1419 = vmax.f32 %v1394, 0.0
        %s1420 = scalar_lea.vmem [#allocation2], 72
        %1421 = vst.msk [vmem:[%s1420] sm:$0x7f] %vm574, %v1419
        %v1422 = vmax.f32 %v1417, 0.0
        %s1423 = scalar_lea.vmem [#allocation3], 72
        %1424 = vst.msk [vmem:[%s1423] sm:$0x3f] %vm577, %v1422
        %v1425 = vld [vmem:[%s1333] sm:$0x7f]
        %v1426 = vld [vmem:[%s1335] sm:$0x7f]
        %s1427 = scalar_lea.vmem %s463, 176
        %v1428 = vld [vmem:[%s1427] sm:$0x7f]
        %s1429 = scalar_lea.vmem %s463, 184
        %v1430 = vld [vmem:[%s1429] sm:$0x7f]
        %v1431 = vld [vmem:[%s1339] sm:$0x3f]
        %v1432 = vld [vmem:[%s1341] sm:$0x3f]
        %s1433 = scalar_lea.vmem %s468, 176
        %v1434 = vld [vmem:[%s1433] sm:$0x3f]
        %s1435 = scalar_lea.vmem %s468, 184
        %v1436 = vld [vmem:[%s1435] sm:$0x3f]
        %1438 = vrot.lane.b32.xlu0 %v1426, 12
        %v1439 = vpop.permute.xlu0 %1438
        %1442 = vrot.lane.b32.xlu0 %v1428, 24
        %v1443 = vpop.permute.xlu0 %1442
        %1446 = vrot.lane.b32.xlu0 %v1430, 36
        %v1447 = vpop.permute.xlu0 %1446
        %v1449 = vsel %vm502, %v1425, %v1439
        %v1450 = vsel %vm504, %v1449, %v1443
        %v1451 = vsel %vm506, %v1450, %v1447
        %1453 = vrot.lane.b32.xlu0 %v1432, 12
        %v1454 = vpop.permute.xlu0 %1453
        %1457 = vrot.lane.b32.xlu0 %v1434, 24
        %v1458 = vpop.permute.xlu0 %1457
        %1461 = vrot.lane.b32.xlu0 %v1436, 36
        %v1462 = vpop.permute.xlu0 %1461
        %v1464 = vsel %vm502, %v1431, %v1454
        %v1465 = vsel %vm504, %v1464, %v1458
        %v1466 = vsel %vm506, %v1465, %v1462
        %v1468 = vsel %vm526, %v1451, 0
        %1470 = vmatpush.msra.mxu0 0.0
        %1471 = vmatpush.msra.mxu0 0.0
        %1472 = vmatpush.msra.mxu0 0.0
        %1473 = vmatpush.msra.mxu0 0.0
        %1474 = vmatpush.msra.mxu0 0.0
        %1475 = vmatpush.msra.mxu0 0.0
        %1476 = vmatpush.msra.mxu0 0.0
        %1477 = vmatpush.msra.mxu0 0.0
        %1478 = vmatpush.msra.mxu0 0.0
        %1479 = vmatpush.msra.mxu0 0.0
        %1480 = vmatpush.msra.mxu0 %v474
        %1481 = vmatpush.msra.mxu0 %v473
        %1482 = vmatpush.msra.mxu0 %v472
        %1483 = vmatpush.msra.mxu0 %v471
        %1484 = vmatpush.msra.mxu0 %v470
        %1485 = vmatpush.msra.mxu0 %v469
        %1486 = vmatmul.f32.gmra.mxu0 %v1468
        %v1487 = vpop.f32.mrf.mxu0
        %v1488 = vadd.f32 %v524, %v1487
        %1489 = vdwg.mxu0
        %v1491 = vsel %vm526, %v1466, 0
        %1493 = vmatpush.msra.mxu0 0.0
        %1494 = vmatpush.msra.mxu0 0.0
        %1495 = vmatpush.msra.mxu0 0.0
        %1496 = vmatpush.msra.mxu0 0.0
        %1497 = vmatpush.msra.mxu0 0.0
        %1498 = vmatpush.msra.mxu0 0.0
        %1499 = vmatpush.msra.mxu0 0.0
        %1500 = vmatpush.msra.mxu0 0.0
        %1501 = vmatpush.msra.mxu0 0.0
        %1502 = vmatpush.msra.mxu0 0.0
        %1503 = vmatpush.msra.mxu0 %v474
        %1504 = vmatpush.msra.mxu0 %v473
        %1505 = vmatpush.msra.mxu0 %v472
        %1506 = vmatpush.msra.mxu0 %v471
        %1507 = vmatpush.msra.mxu0 %v470
        %1508 = vmatpush.msra.mxu0 %v469
        %1509 = vmatmul.f32.gmra.mxu0 %v1491
        %v1510 = vpop.f32.mrf.mxu0
        %v1511 = vadd.f32 %v524, %v1510
        %1512 = vdwg.mxu0
        %v1513 = vmax.f32 %v1488, 0.0
        %s1514 = scalar_lea.vmem [#allocation2], 80
        %1515 = vst.msk [vmem:[%s1514] sm:$0x7f] %vm574, %v1513
        %v1516 = vmax.f32 %v1511, 0.0
        %s1517 = scalar_lea.vmem [#allocation3], 80
        %1518 = vst.msk [vmem:[%s1517] sm:$0x3f] %vm577, %v1516
        %v1519 = vld [vmem:[%s1427] sm:$0x7f]
        %v1520 = vld [vmem:[%s1429] sm:$0x7f]
        %s1521 = scalar_lea.vmem %s463, 192
        %v1522 = vld [vmem:[%s1521] sm:$0x7f]
        %s1523 = scalar_lea.vmem %s463, 200
        %v1524 = vld [vmem:[%s1523] sm:$0x7f]
        %v1525 = vld [vmem:[%s1433] sm:$0x3f]
        %v1526 = vld [vmem:[%s1435] sm:$0x3f]
        %s1527 = scalar_lea.vmem %s468, 192
        %v1528 = vld [vmem:[%s1527] sm:$0x3f]
        %s1529 = scalar_lea.vmem %s468, 200
        %v1530 = vld [vmem:[%s1529] sm:$0x3f]
        %1532 = vrot.lane.b32.xlu0 %v1520, 12
        %v1533 = vpop.permute.xlu0 %1532
        %1536 = vrot.lane.b32.xlu0 %v1522, 24
        %v1537 = vpop.permute.xlu0 %1536
        %1540 = vrot.lane.b32.xlu0 %v1524, 36
        %v1541 = vpop.permute.xlu0 %1540
        %v1543 = vsel %vm502, %v1519, %v1533
        %v1544 = vsel %vm504, %v1543, %v1537
        %v1545 = vsel %vm506, %v1544, %v1541
        %1547 = vrot.lane.b32.xlu0 %v1526, 12
        %v1548 = vpop.permute.xlu0 %1547
        %1551 = vrot.lane.b32.xlu0 %v1528, 24
        %v1552 = vpop.permute.xlu0 %1551
        %1555 = vrot.lane.b32.xlu0 %v1530, 36
        %v1556 = vpop.permute.xlu0 %1555
        %v1558 = vsel %vm502, %v1525, %v1548
        %v1559 = vsel %vm504, %v1558, %v1552
        %v1560 = vsel %vm506, %v1559, %v1556
        %v1562 = vsel %vm526, %v1545, 0
        %1564 = vmatpush.msra.mxu0 0.0
        %1565 = vmatpush.msra.mxu0 0.0
        %1566 = vmatpush.msra.mxu0 0.0
        %1567 = vmatpush.msra.mxu0 0.0
        %1568 = vmatpush.msra.mxu0 0.0
        %1569 = vmatpush.msra.mxu0 0.0
        %1570 = vmatpush.msra.mxu0 0.0
        %1571 = vmatpush.msra.mxu0 0.0
        %1572 = vmatpush.msra.mxu0 0.0
        %1573 = vmatpush.msra.mxu0 0.0
        %1574 = vmatpush.msra.mxu0 %v474
        %1575 = vmatpush.msra.mxu0 %v473
        %1576 = vmatpush.msra.mxu0 %v472
        %1577 = vmatpush.msra.mxu0 %v471
        %1578 = vmatpush.msra.mxu0 %v470
        %1579 = vmatpush.msra.mxu0 %v469
        %1580 = vmatmul.f32.gmra.mxu0 %v1562
        %v1581 = vpop.f32.mrf.mxu0
        %v1582 = vadd.f32 %v524, %v1581
        %1583 = vdwg.mxu0
        %v1585 = vsel %vm526, %v1560, 0
        %1587 = vmatpush.msra.mxu0 0.0
        %1588 = vmatpush.msra.mxu0 0.0
        %1589 = vmatpush.msra.mxu0 0.0
        %1590 = vmatpush.msra.mxu0 0.0
        %1591 = vmatpush.msra.mxu0 0.0
        %1592 = vmatpush.msra.mxu0 0.0
        %1593 = vmatpush.msra.mxu0 0.0
        %1594 = vmatpush.msra.mxu0 0.0
        %1595 = vmatpush.msra.mxu0 0.0
        %1596 = vmatpush.msra.mxu0 0.0
        %1597 = vmatpush.msra.mxu0 %v474
        %1598 = vmatpush.msra.mxu0 %v473
        %1599 = vmatpush.msra.mxu0 %v472
        %1600 = vmatpush.msra.mxu0 %v471
        %1601 = vmatpush.msra.mxu0 %v470
        %1602 = vmatpush.msra.mxu0 %v469
        %1603 = vmatmul.f32.gmra.mxu0 %v1585
        %v1604 = vpop.f32.mrf.mxu0
        %v1605 = vadd.f32 %v524, %v1604
        %1606 = vdwg.mxu0
        %v1607 = vmax.f32 %v1582, 0.0
        %s1608 = scalar_lea.vmem [#allocation2], 88
        %1609 = vst.msk [vmem:[%s1608] sm:$0x7f] %vm574, %v1607
        %v1610 = vmax.f32 %v1605, 0.0
        %s1611 = scalar_lea.vmem [#allocation3], 88
        %1612 = vst.msk [vmem:[%s1611] sm:$0x3f] %vm577, %v1610
        %v1613 = vld [vmem:[%s1521] sm:$0x7f]
        %v1614 = vld [vmem:[%s1523] sm:$0x7f]
        %s1615 = scalar_lea.vmem %s463, 208
        %v1616 = vld [vmem:[%s1615] sm:$0x7f]
        %s1617 = scalar_lea.vmem %s463, 216
        %v1618 = vld [vmem:[%s1617] sm:$0x7f]
        %v1619 = vld [vmem:[%s1527] sm:$0x3f]
        %v1620 = vld [vmem:[%s1529] sm:$0x3f]
        %s1621 = scalar_lea.vmem %s468, 208
        %v1622 = vld [vmem:[%s1621] sm:$0x3f]
        %s1623 = scalar_lea.vmem %s468, 216
        %v1624 = vld [vmem:[%s1623] sm:$0x3f]
        %1626 = vrot.lane.b32.xlu0 %v1614, 12
        %v1627 = vpop.permute.xlu0 %1626
        %1630 = vrot.lane.b32.xlu0 %v1616, 24
        %v1631 = vpop.permute.xlu0 %1630
        %1634 = vrot.lane.b32.xlu0 %v1618, 36
        %v1635 = vpop.permute.xlu0 %1634
        %v1637 = vsel %vm502, %v1613, %v1627
        %v1638 = vsel %vm504, %v1637, %v1631
        %v1639 = vsel %vm506, %v1638, %v1635
        %1641 = vrot.lane.b32.xlu0 %v1620, 12
        %v1642 = vpop.permute.xlu0 %1641
        %1645 = vrot.lane.b32.xlu0 %v1622, 24
        %v1646 = vpop.permute.xlu0 %1645
        %1649 = vrot.lane.b32.xlu0 %v1624, 36
        %v1650 = vpop.permute.xlu0 %1649
        %v1652 = vsel %vm502, %v1619, %v1642
        %v1653 = vsel %vm504, %v1652, %v1646
        %v1654 = vsel %vm506, %v1653, %v1650
        %v1656 = vsel %vm526, %v1639, 0
        %1658 = vmatpush.msra.mxu0 0.0
        %1659 = vmatpush.msra.mxu0 0.0
        %1660 = vmatpush.msra.mxu0 0.0
        %1661 = vmatpush.msra.mxu0 0.0
        %1662 = vmatpush.msra.mxu0 0.0
        %1663 = vmatpush.msra.mxu0 0.0
        %1664 = vmatpush.msra.mxu0 0.0
        %1665 = vmatpush.msra.mxu0 0.0
        %1666 = vmatpush.msra.mxu0 0.0
        %1667 = vmatpush.msra.mxu0 0.0
        %1668 = vmatpush.msra.mxu0 %v474
        %1669 = vmatpush.msra.mxu0 %v473
        %1670 = vmatpush.msra.mxu0 %v472
        %1671 = vmatpush.msra.mxu0 %v471
        %1672 = vmatpush.msra.mxu0 %v470
        %1673 = vmatpush.msra.mxu0 %v469
        %1674 = vmatmul.f32.gmra.mxu0 %v1656
        %v1675 = vpop.f32.mrf.mxu0
        %v1676 = vadd.f32 %v524, %v1675
        %1677 = vdwg.mxu0
        %v1679 = vsel %vm526, %v1654, 0
        %1681 = vmatpush.msra.mxu0 0.0
        %1682 = vmatpush.msra.mxu0 0.0
        %1683 = vmatpush.msra.mxu0 0.0
        %1684 = vmatpush.msra.mxu0 0.0
        %1685 = vmatpush.msra.mxu0 0.0
        %1686 = vmatpush.msra.mxu0 0.0
        %1687 = vmatpush.msra.mxu0 0.0
        %1688 = vmatpush.msra.mxu0 0.0
        %1689 = vmatpush.msra.mxu0 0.0
        %1690 = vmatpush.msra.mxu0 0.0
        %1691 = vmatpush.msra.mxu0 %v474
        %1692 = vmatpush.msra.mxu0 %v473
        %1693 = vmatpush.msra.mxu0 %v472
        %1694 = vmatpush.msra.mxu0 %v471
        %1695 = vmatpush.msra.mxu0 %v470
        %1696 = vmatpush.msra.mxu0 %v469
        %1697 = vmatmul.f32.gmra.mxu0 %v1679
        %v1698 = vpop.f32.mrf.mxu0
        %v1699 = vadd.f32 %v524, %v1698
        %1700 = vdwg.mxu0
        %v1701 = vmax.f32 %v1676, 0.0
        %s1702 = scalar_lea.vmem [#allocation2], 96
        %1703 = vst.msk [vmem:[%s1702] sm:$0x7f] %vm574, %v1701
        %v1704 = vmax.f32 %v1699, 0.0
        %s1705 = scalar_lea.vmem [#allocation3], 96
        %1706 = vst.msk [vmem:[%s1705] sm:$0x3f] %vm577, %v1704
        %v1707 = vld [vmem:[%s4] sm:$0xff]
        %v1708 = vld [vmem:[%s4 + $0x8] sm:$0xff]
        %v1709 = vld [vmem:[%s4 + $0x10] sm:$0xff]
        %v1710 = vld [vmem:[%s4 + $0x18] sm:$0xff]
        %v1711 = vld [vmem:[%s4 + $0x20] sm:$0xff]
        %v1712 = vld [vmem:[%s4 + $0x28] sm:$0xff]
        %v1713 = vld [vmem:[%s4 + $0x30] sm:$0xff]
        %v1714 = vld [vmem:[%s4 + $0x38] sm:$0xff]
        %v1715 = vld [vmem:[%s4 + $0x40] sm:$0xff]
        %v1716 = vld [vmem:[%s4 + $0x48] sm:$0xff]
        %v1717 = vld [vmem:[%s4 + $0x50] sm:$0xff]
        %v1718 = vld [vmem:[%s4 + $0x58] sm:$0xff]
        %v1719 = vld [vmem:[%s4 + $0x60] sm:$0xff]
        %v1720 = vld [vmem:[%s4 + $0x68] sm:$0xff]
        %v1721 = vld [vmem:[%s4 + $0x70] sm:$0xff]
        %v1722 = vld [vmem:[%s4 + $0x78] sm:$0xff]
        %v1723 = vld [vmem:[%s4 + $0x80] sm:$0xff]
        %v1724 = vld [vmem:[%s4 + $0x88] sm:$0xff]
        %v1725 = vld [vmem:[%s4 + $0x90] sm:$0xff]
        %v1726 = vld [vmem:[%s4 + $0x98] sm:$0xff]
        %v1727 = vld [vmem:[%s4 + $0xa0] sm:$0xff]
        %v1728 = vld [vmem:[%s4 + $0xa8] sm:$0xff]
        %v1729 = vld [vmem:[%s4 + $0xb0] sm:$0xff]
        %v1730 = vld [vmem:[%s4 + $0xb8] sm:$0xff]
        %v1731 = vld [vmem:[%s4 + $0xc0] sm:$0xff]
        %v1732 = vld [vmem:[%s4 + $0xc8] sm:$0xff]
        %v1733 = vld [vmem:[%s4 + $0xd0] sm:$0xff]
        %v1734 = vld [vmem:[%s4 + $0xd8] sm:$0xff]
        %v1735 = vld [vmem:[%s4 + $0xe0] sm:$0xff]
        %v1736 = vld [vmem:[%s4 + $0xe8] sm:$0xff]
        %v1737 = vld [vmem:[%s4 + $0xf0] sm:$0xff]
        %v1738 = vld [vmem:[%s4 + $0xf8] sm:$0xff]
        %v1739 = vld [vmem:[%s4 + $0x100] sm:$0xff]
        %v1740 = vld [vmem:[%s4 + $0x108] sm:$0xff]
        %v1741 = vld [vmem:[%s4 + $0x110] sm:$0xff]
        %v1742 = vld [vmem:[%s4 + $0x118] sm:$0xff]
        %v1743 = vld [vmem:[#allocation8] sm:$0x1]
        %v1744 = vld [vmem:[#allocation2] sm:$0x7f]
        %v1745 = vld [vmem:[#allocation3] sm:$0x3f]
        %v1746 = vld [vmem:[%s668] sm:$0x7f]
        %v1747 = vld [vmem:[%s671] sm:$0x3f]
        %v1748 = vld [vmem:[%s762] sm:$0x7f]
        %v1749 = vld [vmem:[%s765] sm:$0x3f]
        %1751 = vrot.lane.b32.xlu0 %v1745, 32
        %v1752 = vpop.permute.xlu0 %1751
        %v1755 = vrot.slane %v1744, 1
        %1756 = vrot.lane.b32.xlu0 %v1755, 64
        %v1757 = vpop.permute.xlu0 %1756
        %1760 = vrot.lane.b32.xlu0 %v1746, 96
        %v1761 = vpop.permute.xlu0 %1760
        %v1763 = vrot.slane %v1746, 1
        %1764 = vrot.lane.b32.xlu0 %v1763, 32
        %v1765 = vpop.permute.xlu0 %1764
        %1768 = vrot.lane.b32.xlu0 %v1748, 64
        %v1769 = vpop.permute.xlu0 %1768
        %1772 = vrot.lane.b32.xlu0 %v1749, 96
        %v1773 = vpop.permute.xlu0 %1772
        %v1775 = vrot.slane %v1748, 1
        %vm1776 = vcmask 261120
        %v1777 = vsel %vm1776, %v1744, %v1752
        %vm1778 = vcmask 523264
        %v1779 = vsel %vm1778, %v1777, %v1757
        %vm1780 = vcmask 785408
        %v1781 = vsel %vm1780, %v1779, %v1761
        %v1782 = vsel %vm1776, %v1747, %v1765
        %v1783 = vsel %vm1778, %v1782, %v1769
        %v1784 = vsel %vm1780, %v1783, %v1773
        %v1786 = vperm.slane %v1743, 0
        %v1788 = vsel %vm1776, %v1775, 0
        %1790 = vmatpush.msra.mxu0 %v1722
        %1791 = vmatpush.msra.mxu0 %v1721
        %1792 = vmatpush.msra.mxu0 %v1720
        %1793 = vmatpush.msra.mxu0 %v1719
        %1794 = vmatpush.msra.mxu0 %v1718
        %1795 = vmatpush.msra.mxu0 %v1717
        %1796 = vmatpush.msra.mxu0 %v1716
        %1797 = vmatpush.msra.mxu0 %v1715
        %1798 = vmatpush.msra.mxu0 %v1714
        %1799 = vmatpush.msra.mxu0 %v1713
        %1800 = vmatpush.msra.mxu0 %v1712
        %1801 = vmatpush.msra.mxu0 %v1711
        %1802 = vmatpush.msra.mxu0 %v1710
        %1803 = vmatpush.msra.mxu0 %v1709
        %1804 = vmatpush.msra.mxu0 %v1708
        %1805 = vmatpush.msra.mxu0 %v1707
        %1806 = vmatmul.f32.gmra.mxu0 %v1781
        %v1807 = vpop.f32.mrf.mxu0
        %v1808 = vadd.f32 %v1786, %v1807
        %1809 = vdwg.mxu0
        %1810 = vmatpush.msra.mxu0 %v1738
        %1811 = vmatpush.msra.mxu0 %v1737
        %1812 = vmatpush.msra.mxu0 %v1736
        %1813 = vmatpush.msra.mxu0 %v1735
        %1814 = vmatpush.msra.mxu0 %v1734
        %1815 = vmatpush.msra.mxu0 %v1733
        %1816 = vmatpush.msra.mxu0 %v1732
        %1817 = vmatpush.msra.mxu0 %v1731
        %1818 = vmatpush.msra.mxu0 %v1730
        %1819 = vmatpush.msra.mxu0 %v1729
        %1820 = vmatpush.msra.mxu0 %v1728
        %1821 = vmatpush.msra.mxu0 %v1727
        %1822 = vmatpush.msra.mxu0 %v1726
        %1823 = vmatpush.msra.mxu0 %v1725
        %1824 = vmatpush.msra.mxu0 %v1724
        %1825 = vmatpush.msra.mxu0 %v1723
        %1826 = vmatmul.f32.gmra.mxu0 %v1784
        %v1827 = vpop.f32.mrf.mxu0
        %v1828 = vadd.f32 %v1808, %v1827
        %1829 = vdwg.mxu0
        %1830 = vmatpush.msra.mxu0 0.0
        %1831 = vmatpush.msra.mxu0 0.0
        %1832 = vmatpush.msra.mxu0 0.0
        %1833 = vmatpush.msra.mxu0 0.0
        %1834 = vmatpush.msra.mxu0 0.0
        %1835 = vmatpush.msra.mxu0 0.0
        %1836 = vmatpush.msra.mxu0 0.0
        %1837 = vmatpush.msra.mxu0 0.0
        %1838 = vmatpush.msra.mxu0 0.0
        %1839 = vmatpush.msra.mxu0 0.0
        %1840 = vmatpush.msra.mxu0 0.0
        %1841 = vmatpush.msra.mxu0 0.0
        %1842 = vmatpush.msra.mxu0 %v1742
        %1843 = vmatpush.msra.mxu0 %v1741
        %1844 = vmatpush.msra.mxu0 %v1740
        %1845 = vmatpush.msra.mxu0 %v1739
        %1846 = vmatmul.f32.gmra.mxu0 %v1788
        %v1847 = vpop.f32.mrf.mxu0
        %v1848 = vadd.f32 %v1828, %v1847
        %1849 = vdwg.mxu0
        %v1850 = vmax.f32 %v1848, 0.0
        %v1851 = vlaneseq
        %vm1852 = vcmp.ge.s32.totalorder %v1851, 0
        %vm1853 = vcmp.lt.s32.totalorder %v1851, 64
        %vm1854 = vmand %vm1852, %vm1853
        %1855 = vst.msk [vmem:[#allocation4] sm:$0x1] %vm1854, %v1850
        %1857 = vst [vmem:[#allocation1] sm:$0xff] %v1850
        %s1858 = scalar_lea.vmem [#allocation1], 1
        %v1859 = vld [vmem:[%s1858] ss:$9 sm:$0xff]
        %1860 = vrot.lane.b32.xlu0 %v1859, 64
        %v1861 = vpop.permute.xlu0 %1860
        %vm1863 = vcmp.ge.s32.totalorder %v1851, 64
        %vm1864 = vcmp.lt.s32.totalorder %v1851, 128
        %vm1865 = vmand %vm1863, %vm1864
        %1866 = vst.msk [vmem:[#allocation4] sm:$0x1] %vm1865, %v1861
        %1867 = vst [vmem:[#allocation1] sm:$0xff] %v1850
        %s1868 = scalar_lea.vmem [#allocation1], 2
        %v1869 = vld [vmem:[%s1868] ss:$9 sm:$0xff]
        %1871 = vst.msk [vmem:[#allocation4 + $0x1] sm:$0x1] %vm1854, %v1869
        %1872 = vst [vmem:[#allocation1] sm:$0xff] %v1850
        %s1873 = scalar_lea.vmem [#allocation1], 3
        %v1874 = vld [vmem:[%s1873] ss:$9 sm:$0xff]
        %1875 = vrot.lane.b32.xlu0 %v1874, 64
        %v1876 = vpop.permute.xlu0 %1875
        %1878 = vst.msk [vmem:[#allocation4 + $0x1] sm:$0x1] %vm1865, %v1876
        %1879 = vst [vmem:[#allocation1] sm:$0xff] %v1850
        %s1880 = scalar_lea.vmem [#allocation1], 4
        %v1881 = vld [vmem:[%s1880] ss:$9 sm:$0xff]
        %1883 = vst.msk [vmem:[#allocation4 + $0x2] sm:$0x1] %vm1854, %v1881
        %1884 = vst [vmem:[#allocation1] sm:$0xff] %v1850
        %s1885 = scalar_lea.vmem [#allocation1], 5
        %v1886 = vld [vmem:[%s1885] ss:$9 sm:$0xff]
        %1887 = vrot.lane.b32.xlu0 %v1886, 64
        %v1888 = vpop.permute.xlu0 %1887
        %1890 = vst.msk [vmem:[#allocation4 + $0x2] sm:$0x1] %vm1865, %v1888
        %v1891 = vld [vmem:[%s762] sm:$0x7f]
        %v1892 = vld [vmem:[%s765] sm:$0x3f]
        %v1893 = vld [vmem:[%s856] sm:$0x7f]
        %v1894 = vld [vmem:[%s859] sm:$0x3f]
        %v1895 = vld [vmem:[%s950] sm:$0x7f]
        %v1896 = vld [vmem:[%s953] sm:$0x3f]
        %1898 = vrot.lane.b32.xlu0 %v1892, 32
        %v1899 = vpop.permute.xlu0 %1898
        %v1902 = vrot.slane %v1891, 1
        %1903 = vrot.lane.b32.xlu0 %v1902, 64
        %v1904 = vpop.permute.xlu0 %1903
        %1907 = vrot.lane.b32.xlu0 %v1893, 96
        %v1908 = vpop.permute.xlu0 %1907
        %v1910 = vrot.slane %v1893, 1
        %1911 = vrot.lane.b32.xlu0 %v1910, 32
        %v1912 = vpop.permute.xlu0 %1911
        %1915 = vrot.lane.b32.xlu0 %v1895, 64
        %v1916 = vpop.permute.xlu0 %1915
        %1919 = vrot.lane.b32.xlu0 %v1896, 96
        %v1920 = vpop.permute.xlu0 %1919
        %v1922 = vrot.slane %v1895, 1
        %v1923 = vsel %vm1776, %v1891, %v1899
        %v1924 = vsel %vm1778, %v1923, %v1904
        %v1925 = vsel %vm1780, %v1924, %v1908
        %v1926 = vsel %vm1776, %v1894, %v1912
        %v1927 = vsel %vm1778, %v1926, %v1916
        %v1928 = vsel %vm1780, %v1927, %v1920
        %v1929 = vsel %vm1776, %v1922, 0
        %1931 = vmatpush.msra.mxu0 %v1722
        %1932 = vmatpush.msra.mxu0 %v1721
        %1933 = vmatpush.msra.mxu0 %v1720
        %1934 = vmatpush.msra.mxu0 %v1719
        %1935 = vmatpush.msra.mxu0 %v1718
        %1936 = vmatpush.msra.mxu0 %v1717
        %1937 = vmatpush.msra.mxu0 %v1716
        %1938 = vmatpush.msra.mxu0 %v1715
        %1939 = vmatpush.msra.mxu0 %v1714
        %1940 = vmatpush.msra.mxu0 %v1713
        %1941 = vmatpush.msra.mxu0 %v1712
        %1942 = vmatpush.msra.mxu0 %v1711
        %1943 = vmatpush.msra.mxu0 %v1710
        %1944 = vmatpush.msra.mxu0 %v1709
        %1945 = vmatpush.msra.mxu0 %v1708
        %1946 = vmatpush.msra.mxu0 %v1707
        %1947 = vmatmul.f32.gmra.mxu0 %v1925
        %v1948 = vpop.f32.mrf.mxu0
        %v1949 = vadd.f32 %v1786, %v1948
        %1950 = vdwg.mxu0
        %1951 = vmatpush.msra.mxu0 %v1738
        %1952 = vmatpush.msra.mxu0 %v1737
        %1953 = vmatpush.msra.mxu0 %v1736
        %1954 = vmatpush.msra.mxu0 %v1735
        %1955 = vmatpush.msra.mxu0 %v1734
        %1956 = vmatpush.msra.mxu0 %v1733
        %1957 = vmatpush.msra.mxu0 %v1732
        %1958 = vmatpush.msra.mxu0 %v1731
        %1959 = vmatpush.msra.mxu0 %v1730
        %1960 = vmatpush.msra.mxu0 %v1729
        %1961 = vmatpush.msra.mxu0 %v1728
        %1962 = vmatpush.msra.mxu0 %v1727
        %1963 = vmatpush.msra.mxu0 %v1726
        %1964 = vmatpush.msra.mxu0 %v1725
        %1965 = vmatpush.msra.mxu0 %v1724
        %1966 = vmatpush.msra.mxu0 %v1723
        %1967 = vmatmul.f32.gmra.mxu0 %v1928
        %v1968 = vpop.f32.mrf.mxu0
        %v1969 = vadd.f32 %v1949, %v1968
        %1970 = vdwg.mxu0
        %1971 = vmatpush.msra.mxu0 0.0
        %1972 = vmatpush.msra.mxu0 0.0
        %1973 = vmatpush.msra.mxu0 0.0
        %1974 = vmatpush.msra.mxu0 0.0
        %1975 = vmatpush.msra.mxu0 0.0
        %1976 = vmatpush.msra.mxu0 0.0
        %1977 = vmatpush.msra.mxu0 0.0
        %1978 = vmatpush.msra.mxu0 0.0
        %1979 = vmatpush.msra.mxu0 0.0
        %1980 = vmatpush.msra.mxu0 0.0
        %1981 = vmatpush.msra.mxu0 0.0
        %1982 = vmatpush.msra.mxu0 0.0
        %1983 = vmatpush.msra.mxu0 %v1742
        %1984 = vmatpush.msra.mxu0 %v1741
        %1985 = vmatpush.msra.mxu0 %v1740
        %1986 = vmatpush.msra.mxu0 %v1739
        %1987 = vmatmul.f32.gmra.mxu0 %v1929
        %v1988 = vpop.f32.mrf.mxu0
        %v1989 = vadd.f32 %v1969, %v1988
        %1990 = vdwg.mxu0
        %v1991 = vmax.f32 %v1989, 0.0
        %1992 = vst.msk [vmem:[#allocation4 + $0x3] sm:$0x1] %vm1854, %v1991
        %1994 = vst [vmem:[#allocation1] sm:$0xff] %v1991
        %s1995 = scalar_lea.vmem [#allocation1], 1
        %v1996 = vld [vmem:[%s1995] ss:$9 sm:$0xff]
        %1997 = vrot.lane.b32.xlu0 %v1996, 64
        %v1998 = vpop.permute.xlu0 %1997
        %2000 = vst.msk [vmem:[#allocation4 + $0x3] sm:$0x1] %vm1865, %v1998
        %2001 = vst [vmem:[#allocation1] sm:$0xff] %v1991
        %s2002 = scalar_lea.vmem [#allocation1], 2
        %v2003 = vld [vmem:[%s2002] ss:$9 sm:$0xff]
        %2005 = vst.msk [vmem:[#allocation4 + $0x4] sm:$0x1] %vm1854, %v2003
        %2006 = vst [vmem:[#allocation1] sm:$0xff] %v1991
        %s2007 = scalar_lea.vmem [#allocation1], 3
        %v2008 = vld [vmem:[%s2007] ss:$9 sm:$0xff]
        %2009 = vrot.lane.b32.xlu0 %v2008, 64
        %v2010 = vpop.permute.xlu0 %2009
        %2012 = vst.msk [vmem:[#allocation4 + $0x4] sm:$0x1] %vm1865, %v2010
        %2013 = vst [vmem:[#allocation1] sm:$0xff] %v1991
        %s2014 = scalar_lea.vmem [#allocation1], 4
        %v2015 = vld [vmem:[%s2014] ss:$9 sm:$0xff]
        %2017 = vst.msk [vmem:[#allocation4 + $0x5] sm:$0x1] %vm1854, %v2015
        %2018 = vst [vmem:[#allocation1] sm:$0xff] %v1991
        %s2019 = scalar_lea.vmem [#allocation1], 5
        %v2020 = vld [vmem:[%s2019] ss:$9 sm:$0xff]
        %2021 = vrot.lane.b32.xlu0 %v2020, 64
        %v2022 = vpop.permute.xlu0 %2021
        %2024 = vst.msk [vmem:[#allocation4 + $0x5] sm:$0x1] %vm1865, %v2022
        %v2025 = vld [vmem:[%s950] sm:$0x7f]
        %v2026 = vld [vmem:[%s953] sm:$0x3f]
        %v2027 = vld [vmem:[%s1044] sm:$0x7f]
        %v2028 = vld [vmem:[%s1047] sm:$0x3f]
        %v2029 = vld [vmem:[%s1138] sm:$0x7f]
        %v2030 = vld [vmem:[%s1141] sm:$0x3f]
        %2032 = vrot.lane.b32.xlu0 %v2026, 32
        %v2033 = vpop.permute.xlu0 %2032
        %v2036 = vrot.slane %v2025, 1
        %2037 = vrot.lane.b32.xlu0 %v2036, 64
        %v2038 = vpop.permute.xlu0 %2037
        %2041 = vrot.lane.b32.xlu0 %v2027, 96
        %v2042 = vpop.permute.xlu0 %2041
        %v2044 = vrot.slane %v2027, 1
        %2045 = vrot.lane.b32.xlu0 %v2044, 32
        %v2046 = vpop.permute.xlu0 %2045
        %2049 = vrot.lane.b32.xlu0 %v2029, 64
        %v2050 = vpop.permute.xlu0 %2049
        %2053 = vrot.lane.b32.xlu0 %v2030, 96
        %v2054 = vpop.permute.xlu0 %2053
        %v2056 = vrot.slane %v2029, 1
        %v2057 = vsel %vm1776, %v2025, %v2033
        %v2058 = vsel %vm1778, %v2057, %v2038
        %v2059 = vsel %vm1780, %v2058, %v2042
        %v2060 = vsel %vm1776, %v2028, %v2046
        %v2061 = vsel %vm1778, %v2060, %v2050
        %v2062 = vsel %vm1780, %v2061, %v2054
        %v2063 = vsel %vm1776, %v2056, 0
        %2065 = vmatpush.msra.mxu0 %v1722
        %2066 = vmatpush.msra.mxu0 %v1721
        %2067 = vmatpush.msra.mxu0 %v1720
        %2068 = vmatpush.msra.mxu0 %v1719
        %2069 = vmatpush.msra.mxu0 %v1718
        %2070 = vmatpush.msra.mxu0 %v1717
        %2071 = vmatpush.msra.mxu0 %v1716
        %2072 = vmatpush.msra.mxu0 %v1715
        %2073 = vmatpush.msra.mxu0 %v1714
        %2074 = vmatpush.msra.mxu0 %v1713
        %2075 = vmatpush.msra.mxu0 %v1712
        %2076 = vmatpush.msra.mxu0 %v1711
        %2077 = vmatpush.msra.mxu0 %v1710
        %2078 = vmatpush.msra.mxu0 %v1709
        %2079 = vmatpush.msra.mxu0 %v1708
        %2080 = vmatpush.msra.mxu0 %v1707
        %2081 = vmatmul.f32.gmra.mxu0 %v2059
        %v2082 = vpop.f32.mrf.mxu0
        %v2083 = vadd.f32 %v1786, %v2082
        %2084 = vdwg.mxu0
        %2085 = vmatpush.msra.mxu0 %v1738
        %2086 = vmatpush.msra.mxu0 %v1737
        %2087 = vmatpush.msra.mxu0 %v1736
        %2088 = vmatpush.msra.mxu0 %v1735
        %2089 = vmatpush.msra.mxu0 %v1734
        %2090 = vmatpush.msra.mxu0 %v1733
        %2091 = vmatpush.msra.mxu0 %v1732
        %2092 = vmatpush.msra.mxu0 %v1731
        %2093 = vmatpush.msra.mxu0 %v1730
        %2094 = vmatpush.msra.mxu0 %v1729
        %2095 = vmatpush.msra.mxu0 %v1728
        %2096 = vmatpush.msra.mxu0 %v1727
        %2097 = vmatpush.msra.mxu0 %v1726
        %2098 = vmatpush.msra.mxu0 %v1725
        %2099 = vmatpush.msra.mxu0 %v1724
        %2100 = vmatpush.msra.mxu0 %v1723
        %2101 = vmatmul.f32.gmra.mxu0 %v2062
        %v2102 = vpop.f32.mrf.mxu0
        %v2103 = vadd.f32 %v2083, %v2102
        %2104 = vdwg.mxu0
        %2105 = vmatpush.msra.mxu0 0.0
        %2106 = vmatpush.msra.mxu0 0.0
        %2107 = vmatpush.msra.mxu0 0.0
        %2108 = vmatpush.msra.mxu0 0.0
        %2109 = vmatpush.msra.mxu0 0.0
        %2110 = vmatpush.msra.mxu0 0.0
        %2111 = vmatpush.msra.mxu0 0.0
        %2112 = vmatpush.msra.mxu0 0.0
        %2113 = vmatpush.msra.mxu0 0.0
        %2114 = vmatpush.msra.mxu0 0.0
        %2115 = vmatpush.msra.mxu0 0.0
        %2116 = vmatpush.msra.mxu0 0.0
        %2117 = vmatpush.msra.mxu0 %v1742
        %2118 = vmatpush.msra.mxu0 %v1741
        %2119 = vmatpush.msra.mxu0 %v1740
        %2120 = vmatpush.msra.mxu0 %v1739
        %2121 = vmatmul.f32.gmra.mxu0 %v2063
        %v2122 = vpop.f32.mrf.mxu0
        %v2123 = vadd.f32 %v2103, %v2122
        %2124 = vdwg.mxu0
        %v2125 = vmax.f32 %v2123, 0.0
        %2126 = vst.msk [vmem:[#allocation4 + $0x6] sm:$0x1] %vm1854, %v2125
        %2128 = vst [vmem:[#allocation1] sm:$0xff] %v2125
        %s2129 = scalar_lea.vmem [#allocation1], 1
        %v2130 = vld [vmem:[%s2129] ss:$9 sm:$0xff]
        %2131 = vrot.lane.b32.xlu0 %v2130, 64
        %v2132 = vpop.permute.xlu0 %2131
        %2134 = vst.msk [vmem:[#allocation4 + $0x6] sm:$0x1] %vm1865, %v2132
        %2135 = vst [vmem:[#allocation1] sm:$0xff] %v2125
        %s2136 = scalar_lea.vmem [#allocation1], 2
        %v2137 = vld [vmem:[%s2136] ss:$9 sm:$0xff]
        %2139 = vst.msk [vmem:[#allocation4 + $0x7] sm:$0x1] %vm1854, %v2137
        %2140 = vst [vmem:[#allocation1] sm:$0xff] %v2125
        %s2141 = scalar_lea.vmem [#allocation1], 3
        %v2142 = vld [vmem:[%s2141] ss:$9 sm:$0xff]
        %2143 = vrot.lane.b32.xlu0 %v2142, 64
        %v2144 = vpop.permute.xlu0 %2143
        %2146 = vst.msk [vmem:[#allocation4 + $0x7] sm:$0x1] %vm1865, %v2144
        %2147 = vst [vmem:[#allocation1] sm:$0xff] %v2125
        %s2148 = scalar_lea.vmem [#allocation1], 4
        %v2149 = vld [vmem:[%s2148] ss:$9 sm:$0xff]
        %2151 = vst.msk [vmem:[#allocation4 + $0x8] sm:$0x1] %vm1854, %v2149
        %2152 = vst [vmem:[#allocation1] sm:$0xff] %v2125
        %s2153 = scalar_lea.vmem [#allocation1], 5
        %v2154 = vld [vmem:[%s2153] ss:$9 sm:$0xff]
        %2155 = vrot.lane.b32.xlu0 %v2154, 64
        %v2156 = vpop.permute.xlu0 %2155
        %2158 = vst.msk [vmem:[#allocation4 + $0x8] sm:$0x1] %vm1865, %v2156
        %v2159 = vld [vmem:[%s1138] sm:$0x7f]
        %v2160 = vld [vmem:[%s1141] sm:$0x3f]
        %v2161 = vld [vmem:[%s1232] sm:$0x7f]
        %v2162 = vld [vmem:[%s1235] sm:$0x3f]
        %v2163 = vld [vmem:[%s1326] sm:$0x7f]
        %v2164 = vld [vmem:[%s1329] sm:$0x3f]
        %2166 = vrot.lane.b32.xlu0 %v2160, 32
        %v2167 = vpop.permute.xlu0 %2166
        %v2170 = vrot.slane %v2159, 1
        %2171 = vrot.lane.b32.xlu0 %v2170, 64
        %v2172 = vpop.permute.xlu0 %2171
        %2175 = vrot.lane.b32.xlu0 %v2161, 96
        %v2176 = vpop.permute.xlu0 %2175
        %v2178 = vrot.slane %v2161, 1
        %2179 = vrot.lane.b32.xlu0 %v2178, 32
        %v2180 = vpop.permute.xlu0 %2179
        %2183 = vrot.lane.b32.xlu0 %v2163, 64
        %v2184 = vpop.permute.xlu0 %2183
        %2187 = vrot.lane.b32.xlu0 %v2164, 96
        %v2188 = vpop.permute.xlu0 %2187
        %v2190 = vrot.slane %v2163, 1
        %v2191 = vsel %vm1776, %v2159, %v2167
        %v2192 = vsel %vm1778, %v2191, %v2172
        %v2193 = vsel %vm1780, %v2192, %v2176
        %v2194 = vsel %vm1776, %v2162, %v2180
        %v2195 = vsel %vm1778, %v2194, %v2184
        %v2196 = vsel %vm1780, %v2195, %v2188
        %v2197 = vsel %vm1776, %v2190, 0
        %2199 = vmatpush.msra.mxu0 %v1722
        %2200 = vmatpush.msra.mxu0 %v1721
        %2201 = vmatpush.msra.mxu0 %v1720
        %2202 = vmatpush.msra.mxu0 %v1719
        %2203 = vmatpush.msra.mxu0 %v1718
        %2204 = vmatpush.msra.mxu0 %v1717
        %2205 = vmatpush.msra.mxu0 %v1716
        %2206 = vmatpush.msra.mxu0 %v1715
        %2207 = vmatpush.msra.mxu0 %v1714
        %2208 = vmatpush.msra.mxu0 %v1713
        %2209 = vmatpush.msra.mxu0 %v1712
        %2210 = vmatpush.msra.mxu0 %v1711
        %2211 = vmatpush.msra.mxu0 %v1710
        %2212 = vmatpush.msra.mxu0 %v1709
        %2213 = vmatpush.msra.mxu0 %v1708
        %2214 = vmatpush.msra.mxu0 %v1707
        %2215 = vmatmul.f32.gmra.mxu0 %v2193
        %v2216 = vpop.f32.mrf.mxu0
        %v2217 = vadd.f32 %v1786, %v2216
        %2218 = vdwg.mxu0
        %2219 = vmatpush.msra.mxu0 %v1738
        %2220 = vmatpush.msra.mxu0 %v1737
        %2221 = vmatpush.msra.mxu0 %v1736
        %2222 = vmatpush.msra.mxu0 %v1735
        %2223 = vmatpush.msra.mxu0 %v1734
        %2224 = vmatpush.msra.mxu0 %v1733
        %2225 = vmatpush.msra.mxu0 %v1732
        %2226 = vmatpush.msra.mxu0 %v1731
        %2227 = vmatpush.msra.mxu0 %v1730
        %2228 = vmatpush.msra.mxu0 %v1729
        %2229 = vmatpush.msra.mxu0 %v1728
        %2230 = vmatpush.msra.mxu0 %v1727
        %2231 = vmatpush.msra.mxu0 %v1726
        %2232 = vmatpush.msra.mxu0 %v1725
        %2233 = vmatpush.msra.mxu0 %v1724
        %2234 = vmatpush.msra.mxu0 %v1723
        %2235 = vmatmul.f32.gmra.mxu0 %v2196
        %v2236 = vpop.f32.mrf.mxu0
        %v2237 = vadd.f32 %v2217, %v2236
        %2238 = vdwg.mxu0
        %2239 = vmatpush.msra.mxu0 0.0
        %2240 = vmatpush.msra.mxu0 0.0
        %2241 = vmatpush.msra.mxu0 0.0
        %2242 = vmatpush.msra.mxu0 0.0
        %2243 = vmatpush.msra.mxu0 0.0
        %2244 = vmatpush.msra.mxu0 0.0
        %2245 = vmatpush.msra.mxu0 0.0
        %2246 = vmatpush.msra.mxu0 0.0
        %2247 = vmatpush.msra.mxu0 0.0
        %2248 = vmatpush.msra.mxu0 0.0
        %2249 = vmatpush.msra.mxu0 0.0
        %2250 = vmatpush.msra.mxu0 0.0
        %2251 = vmatpush.msra.mxu0 %v1742
        %2252 = vmatpush.msra.mxu0 %v1741
        %2253 = vmatpush.msra.mxu0 %v1740
        %2254 = vmatpush.msra.mxu0 %v1739
        %2255 = vmatmul.f32.gmra.mxu0 %v2197
        %v2256 = vpop.f32.mrf.mxu0
        %v2257 = vadd.f32 %v2237, %v2256
        %2258 = vdwg.mxu0
        %v2259 = vmax.f32 %v2257, 0.0
        %2260 = vst.msk [vmem:[#allocation4 + $0x9] sm:$0x1] %vm1854, %v2259
        %2262 = vst [vmem:[#allocation1] sm:$0xff] %v2259
        %s2263 = scalar_lea.vmem [#allocation1], 1
        %v2264 = vld [vmem:[%s2263] ss:$9 sm:$0xff]
        %2265 = vrot.lane.b32.xlu0 %v2264, 64
        %v2266 = vpop.permute.xlu0 %2265
        %2268 = vst.msk [vmem:[#allocation4 + $0x9] sm:$0x1] %vm1865, %v2266
        %2269 = vst [vmem:[#allocation1] sm:$0xff] %v2259
        %s2270 = scalar_lea.vmem [#allocation1], 2
        %v2271 = vld [vmem:[%s2270] ss:$9 sm:$0xff]
        %2273 = vst.msk [vmem:[#allocation4 + $0xa] sm:$0x1] %vm1854, %v2271
        %2274 = vst [vmem:[#allocation1] sm:$0xff] %v2259
        %s2275 = scalar_lea.vmem [#allocation1], 3
        %v2276 = vld [vmem:[%s2275] ss:$9 sm:$0xff]
        %2277 = vrot.lane.b32.xlu0 %v2276, 64
        %v2278 = vpop.permute.xlu0 %2277
        %2280 = vst.msk [vmem:[#allocation4 + $0xa] sm:$0x1] %vm1865, %v2278
        %2281 = vst [vmem:[#allocation1] sm:$0xff] %v2259
        %s2282 = scalar_lea.vmem [#allocation1], 4
        %v2283 = vld [vmem:[%s2282] ss:$9 sm:$0xff]
        %2285 = vst.msk [vmem:[#allocation4 + $0xb] sm:$0x1] %vm1854, %v2283
        %2286 = vst [vmem:[#allocation1] sm:$0xff] %v2259
        %s2287 = scalar_lea.vmem [#allocation1], 5
        %v2288 = vld [vmem:[%s2287] ss:$9 sm:$0xff]
        %2289 = vrot.lane.b32.xlu0 %v2288, 64
        %v2290 = vpop.permute.xlu0 %2289
        %2292 = vst.msk [vmem:[#allocation4 + $0xb] sm:$0x1] %vm1865, %v2290
        %v2293 = vld [vmem:[%s1326] sm:$0x7f]
        %v2294 = vld [vmem:[%s1329] sm:$0x3f]
        %v2295 = vld [vmem:[%s1420] sm:$0x7f]
        %v2296 = vld [vmem:[%s1423] sm:$0x3f]
        %v2297 = vld [vmem:[%s1514] sm:$0x7f]
        %v2298 = vld [vmem:[%s1517] sm:$0x3f]
        %2300 = vrot.lane.b32.xlu0 %v2294, 32
        %v2301 = vpop.permute.xlu0 %2300
        %v2304 = vrot.slane %v2293, 1
        %2305 = vrot.lane.b32.xlu0 %v2304, 64
        %v2306 = vpop.permute.xlu0 %2305
        %2309 = vrot.lane.b32.xlu0 %v2295, 96
        %v2310 = vpop.permute.xlu0 %2309
        %v2312 = vrot.slane %v2295, 1
        %2313 = vrot.lane.b32.xlu0 %v2312, 32
        %v2314 = vpop.permute.xlu0 %2313
        %2317 = vrot.lane.b32.xlu0 %v2297, 64
        %v2318 = vpop.permute.xlu0 %2317
        %2321 = vrot.lane.b32.xlu0 %v2298, 96
        %v2322 = vpop.permute.xlu0 %2321
        %v2324 = vrot.slane %v2297, 1
        %v2325 = vsel %vm1776, %v2293, %v2301
        %v2326 = vsel %vm1778, %v2325, %v2306
        %v2327 = vsel %vm1780, %v2326, %v2310
        %v2328 = vsel %vm1776, %v2296, %v2314
        %v2329 = vsel %vm1778, %v2328, %v2318
        %v2330 = vsel %vm1780, %v2329, %v2322
        %v2331 = vsel %vm1776, %v2324, 0
        %2333 = vmatpush.msra.mxu0 %v1722
        %2334 = vmatpush.msra.mxu0 %v1721
        %2335 = vmatpush.msra.mxu0 %v1720
        %2336 = vmatpush.msra.mxu0 %v1719
        %2337 = vmatpush.msra.mxu0 %v1718
        %2338 = vmatpush.msra.mxu0 %v1717
        %2339 = vmatpush.msra.mxu0 %v1716
        %2340 = vmatpush.msra.mxu0 %v1715
        %2341 = vmatpush.msra.mxu0 %v1714
        %2342 = vmatpush.msra.mxu0 %v1713
        %2343 = vmatpush.msra.mxu0 %v1712
        %2344 = vmatpush.msra.mxu0 %v1711
        %2345 = vmatpush.msra.mxu0 %v1710
        %2346 = vmatpush.msra.mxu0 %v1709
        %2347 = vmatpush.msra.mxu0 %v1708
        %2348 = vmatpush.msra.mxu0 %v1707
        %2349 = vmatmul.f32.gmra.mxu0 %v2327
        %v2350 = vpop.f32.mrf.mxu0
        %v2351 = vadd.f32 %v1786, %v2350
        %2352 = vdwg.mxu0
        %2353 = vmatpush.msra.mxu0 %v1738
        %2354 = vmatpush.msra.mxu0 %v1737
        %2355 = vmatpush.msra.mxu0 %v1736
        %2356 = vmatpush.msra.mxu0 %v1735
        %2357 = vmatpush.msra.mxu0 %v1734
        %2358 = vmatpush.msra.mxu0 %v1733
        %2359 = vmatpush.msra.mxu0 %v1732
        %2360 = vmatpush.msra.mxu0 %v1731
        %2361 = vmatpush.msra.mxu0 %v1730
        %2362 = vmatpush.msra.mxu0 %v1729
        %2363 = vmatpush.msra.mxu0 %v1728
        %2364 = vmatpush.msra.mxu0 %v1727
        %2365 = vmatpush.msra.mxu0 %v1726
        %2366 = vmatpush.msra.mxu0 %v1725
        %2367 = vmatpush.msra.mxu0 %v1724
        %2368 = vmatpush.msra.mxu0 %v1723
        %2369 = vmatmul.f32.gmra.mxu0 %v2330
        %v2370 = vpop.f32.mrf.mxu0
        %v2371 = vadd.f32 %v2351, %v2370
        %2372 = vdwg.mxu0
        %2373 = vmatpush.msra.mxu0 0.0
        %2374 = vmatpush.msra.mxu0 0.0
        %2375 = vmatpush.msra.mxu0 0.0
        %2376 = vmatpush.msra.mxu0 0.0
        %2377 = vmatpush.msra.mxu0 0.0
        %2378 = vmatpush.msra.mxu0 0.0
        %2379 = vmatpush.msra.mxu0 0.0
        %2380 = vmatpush.msra.mxu0 0.0
        %2381 = vmatpush.msra.mxu0 0.0
        %2382 = vmatpush.msra.mxu0 0.0
        %2383 = vmatpush.msra.mxu0 0.0
        %2384 = vmatpush.msra.mxu0 0.0
        %2385 = vmatpush.msra.mxu0 %v1742
        %2386 = vmatpush.msra.mxu0 %v1741
        %2387 = vmatpush.msra.mxu0 %v1740
        %2388 = vmatpush.msra.mxu0 %v1739
        %2389 = vmatmul.f32.gmra.mxu0 %v2331
        %v2390 = vpop.f32.mrf.mxu0
        %v2391 = vadd.f32 %v2371, %v2390
        %2392 = vdwg.mxu0
        %v2393 = vmax.f32 %v2391, 0.0
        %2394 = vst.msk [vmem:[#allocation4 + $0xc] sm:$0x1] %vm1854, %v2393
        %2396 = vst [vmem:[#allocation1] sm:$0xff] %v2393
        %s2397 = scalar_lea.vmem [#allocation1], 1
        %v2398 = vld [vmem:[%s2397] ss:$9 sm:$0xff]
        %2399 = vrot.lane.b32.xlu0 %v2398, 64
        %v2400 = vpop.permute.xlu0 %2399
        %2402 = vst.msk [vmem:[#allocation4 + $0xc] sm:$0x1] %vm1865, %v2400
        %2403 = vst [vmem:[#allocation1] sm:$0xff] %v2393
        %s2404 = scalar_lea.vmem [#allocation1], 2
        %v2405 = vld [vmem:[%s2404] ss:$9 sm:$0xff]
        %2407 = vst.msk [vmem:[#allocation4 + $0xd] sm:$0x1] %vm1854, %v2405
        %2408 = vst [vmem:[#allocation1] sm:$0xff] %v2393
        %s2409 = scalar_lea.vmem [#allocation1], 3
        %v2410 = vld [vmem:[%s2409] ss:$9 sm:$0xff]
        %2411 = vrot.lane.b32.xlu0 %v2410, 64
        %v2412 = vpop.permute.xlu0 %2411
        %2414 = vst.msk [vmem:[#allocation4 + $0xd] sm:$0x1] %vm1865, %v2412
        %2415 = vst [vmem:[#allocation1] sm:$0xff] %v2393
        %s2416 = scalar_lea.vmem [#allocation1], 4
        %v2417 = vld [vmem:[%s2416] ss:$9 sm:$0xff]
        %2419 = vst.msk [vmem:[#allocation4 + $0xe] sm:$0x1] %vm1854, %v2417
        %2420 = vst [vmem:[#allocation1] sm:$0xff] %v2393
        %s2421 = scalar_lea.vmem [#allocation1], 5
        %v2422 = vld [vmem:[%s2421] ss:$9 sm:$0xff]
        %2423 = vrot.lane.b32.xlu0 %v2422, 64
        %v2424 = vpop.permute.xlu0 %2423
        %2426 = vst.msk [vmem:[#allocation4 + $0xe] sm:$0x1] %vm1865, %v2424
        %v2427 = vld [vmem:[%s1514] sm:$0x7f]
        %v2428 = vld [vmem:[%s1517] sm:$0x3f]
        %v2429 = vld [vmem:[%s1608] sm:$0x7f]
        %v2430 = vld [vmem:[%s1611] sm:$0x3f]
        %v2431 = vld [vmem:[%s1702] sm:$0x7f]
        %v2432 = vld [vmem:[%s1705] sm:$0x3f]
        %2434 = vrot.lane.b32.xlu0 %v2428, 32
        %v2435 = vpop.permute.xlu0 %2434
        %v2438 = vrot.slane %v2427, 1
        %2439 = vrot.lane.b32.xlu0 %v2438, 64
        %v2440 = vpop.permute.xlu0 %2439
        %2443 = vrot.lane.b32.xlu0 %v2429, 96
        %v2444 = vpop.permute.xlu0 %2443
        %v2446 = vrot.slane %v2429, 1
        %2447 = vrot.lane.b32.xlu0 %v2446, 32
        %v2448 = vpop.permute.xlu0 %2447
        %2451 = vrot.lane.b32.xlu0 %v2431, 64
        %v2452 = vpop.permute.xlu0 %2451
        %2455 = vrot.lane.b32.xlu0 %v2432, 96
        %v2456 = vpop.permute.xlu0 %2455
        %v2458 = vrot.slane %v2431, 1
        %v2459 = vsel %vm1776, %v2427, %v2435
        %v2460 = vsel %vm1778, %v2459, %v2440
        %v2461 = vsel %vm1780, %v2460, %v2444
        %v2462 = vsel %vm1776, %v2430, %v2448
        %v2463 = vsel %vm1778, %v2462, %v2452
        %v2464 = vsel %vm1780, %v2463, %v2456
        %v2465 = vsel %vm1776, %v2458, 0
        %2467 = vmatpush.msra.mxu0 %v1722
        %2468 = vmatpush.msra.mxu0 %v1721
        %2469 = vmatpush.msra.mxu0 %v1720
        %2470 = vmatpush.msra.mxu0 %v1719
        %2471 = vmatpush.msra.mxu0 %v1718
        %2472 = vmatpush.msra.mxu0 %v1717
        %2473 = vmatpush.msra.mxu0 %v1716
        %2474 = vmatpush.msra.mxu0 %v1715
        %2475 = vmatpush.msra.mxu0 %v1714
        %2476 = vmatpush.msra.mxu0 %v1713
        %2477 = vmatpush.msra.mxu0 %v1712
        %2478 = vmatpush.msra.mxu0 %v1711
        %2479 = vmatpush.msra.mxu0 %v1710
        %2480 = vmatpush.msra.mxu0 %v1709
        %2481 = vmatpush.msra.mxu0 %v1708
        %2482 = vmatpush.msra.mxu0 %v1707
        %2483 = vmatmul.f32.gmra.mxu0 %v2461
        %v2484 = vpop.f32.mrf.mxu0
        %v2485 = vadd.f32 %v1786, %v2484
        %2486 = vdwg.mxu0
        %2487 = vmatpush.msra.mxu0 %v1738
        %2488 = vmatpush.msra.mxu0 %v1737
        %2489 = vmatpush.msra.mxu0 %v1736
        %2490 = vmatpush.msra.mxu0 %v1735
        %2491 = vmatpush.msra.mxu0 %v1734
        %2492 = vmatpush.msra.mxu0 %v1733
        %2493 = vmatpush.msra.mxu0 %v1732
        %2494 = vmatpush.msra.mxu0 %v1731
        %2495 = vmatpush.msra.mxu0 %v1730
        %2496 = vmatpush.msra.mxu0 %v1729
        %2497 = vmatpush.msra.mxu0 %v1728
        %2498 = vmatpush.msra.mxu0 %v1727
        %2499 = vmatpush.msra.mxu0 %v1726
        %2500 = vmatpush.msra.mxu0 %v1725
        %2501 = vmatpush.msra.mxu0 %v1724
        %2502 = vmatpush.msra.mxu0 %v1723
        %2503 = vmatmul.f32.gmra.mxu0 %v2464
        %v2504 = vpop.f32.mrf.mxu0
        %v2505 = vadd.f32 %v2485, %v2504
        %2506 = vdwg.mxu0
        %2507 = vmatpush.msra.mxu0 0.0
        %2508 = vmatpush.msra.mxu0 0.0
        %2509 = vmatpush.msra.mxu0 0.0
        %2510 = vmatpush.msra.mxu0 0.0
        %2511 = vmatpush.msra.mxu0 0.0
        %2512 = vmatpush.msra.mxu0 0.0
        %2513 = vmatpush.msra.mxu0 0.0
        %2514 = vmatpush.msra.mxu0 0.0
        %2515 = vmatpush.msra.mxu0 0.0
        %2516 = vmatpush.msra.mxu0 0.0
        %2517 = vmatpush.msra.mxu0 0.0
        %2518 = vmatpush.msra.mxu0 0.0
        %2519 = vmatpush.msra.mxu0 %v1742
        %2520 = vmatpush.msra.mxu0 %v1741
        %2521 = vmatpush.msra.mxu0 %v1740
        %2522 = vmatpush.msra.mxu0 %v1739
        %2523 = vmatmul.f32.gmra.mxu0 %v2465
        %v2524 = vpop.f32.mrf.mxu0
        %v2525 = vadd.f32 %v2505, %v2524
        %2526 = vdwg.mxu0
        %v2527 = vmax.f32 %v2525, 0.0
        %2528 = vst.msk [vmem:[#allocation4 + $0xf] sm:$0x1] %vm1854, %v2527
        %2530 = vst [vmem:[#allocation1] sm:$0xff] %v2527
        %s2531 = scalar_lea.vmem [#allocation1], 1
        %v2532 = vld [vmem:[%s2531] ss:$9 sm:$0xff]
        %2533 = vrot.lane.b32.xlu0 %v2532, 64
        %v2534 = vpop.permute.xlu0 %2533
        %2536 = vst.msk [vmem:[#allocation4 + $0xf] sm:$0x1] %vm1865, %v2534
        %2537 = vst [vmem:[#allocation1] sm:$0xff] %v2527
        %s2538 = scalar_lea.vmem [#allocation1], 2
        %v2539 = vld [vmem:[%s2538] ss:$9 sm:$0xff]
        %2541 = vst.msk [vmem:[#allocation4 + $0x10] sm:$0x1] %vm1854, %v2539
        %2542 = vst [vmem:[#allocation1] sm:$0xff] %v2527
        %s2543 = scalar_lea.vmem [#allocation1], 3
        %v2544 = vld [vmem:[%s2543] ss:$9 sm:$0xff]
        %2545 = vrot.lane.b32.xlu0 %v2544, 64
        %v2546 = vpop.permute.xlu0 %2545
        %2548 = vst.msk [vmem:[#allocation4 + $0x10] sm:$0x1] %vm1865, %v2546
        %2549 = vst [vmem:[#allocation1] sm:$0xff] %v2527
        %s2550 = scalar_lea.vmem [#allocation1], 4
        %v2551 = vld [vmem:[%s2550] ss:$9 sm:$0xff]
        %2553 = vst.msk [vmem:[#allocation4 + $0x11] sm:$0x1] %vm1854, %v2551
        %2554 = vst [vmem:[#allocation1] sm:$0xff] %v2527
        %s2555 = scalar_lea.vmem [#allocation1], 5
        %v2556 = vld [vmem:[%s2555] ss:$9 sm:$0xff]
        %2557 = vrot.lane.b32.xlu0 %v2556, 64
        %v2558 = vpop.permute.xlu0 %2557
        %2560 = vst.msk [vmem:[#allocation4 + $0x11] sm:$0x1] %vm1865, %v2558
        %v2561 = vld [vmem:[#allocation4] sm:$0xff]
        %v2562 = vld [vmem:[#allocation4 + $0x8] sm:$0xff]
        %v2563 = vld [vmem:[#allocation4 + $0x10] sm:$0x3]
        %v2564 = vld [vmem:[#allocation10] sm:$0xff]
        %v2565 = vld [vmem:[#allocation10 + $0x8] sm:$0xff]
        %v2566 = vld [vmem:[#allocation10 + $0x10] sm:$0xff]
        %v2567 = vld [vmem:[#allocation10 + $0x18] sm:$0xff]
        %v2568 = vld [vmem:[#allocation10 + $0x20] sm:$0xff]
        %v2569 = vld [vmem:[#allocation10 + $0x28] sm:$0xff]
        %v2570 = vld [vmem:[#allocation10 + $0x30] sm:$0xff]
        %v2571 = vld [vmem:[#allocation10 + $0x38] sm:$0xff]
        %v2572 = vld [vmem:[#allocation10 + $0x40] sm:$0xff]
        %v2573 = vld [vmem:[#allocation10 + $0x48] sm:$0xff]
        %v2574 = vld [vmem:[#allocation10 + $0x50] sm:$0xff]
        %v2575 = vld [vmem:[#allocation10 + $0x58] sm:$0xff]
        %v2576 = vld [vmem:[#allocation10 + $0x60] sm:$0xff]
        %v2577 = vld [vmem:[#allocation10 + $0x68] sm:$0xff]
        %v2578 = vld [vmem:[#allocation10 + $0x70] sm:$0xff]
        %v2579 = vld [vmem:[#allocation10 + $0x78] sm:$0xff]
        %v2580 = vld [vmem:[#allocation10 + $0x80] sm:$0xff]
        %v2581 = vld [vmem:[#allocation10 + $0x88] sm:$0xff]
        %v2582 = vld [vmem:[#allocation10 + $0x90] sm:$0xff]
        %v2583 = vld [vmem:[#allocation10 + $0x98] sm:$0xff]
        %v2584 = vld [vmem:[#allocation10 + $0xa0] sm:$0xff]
        %v2585 = vld [vmem:[#allocation10 + $0xa8] sm:$0xff]
        %v2586 = vld [vmem:[#allocation10 + $0xb0] sm:$0xff]
        %v2587 = vld [vmem:[#allocation10 + $0xb8] sm:$0xff]
        %v2588 = vld [vmem:[#allocation10 + $0xc0] sm:$0xff]
        %v2589 = vld [vmem:[#allocation10 + $0xc8] sm:$0xff]
        %v2590 = vld [vmem:[#allocation10 + $0xd0] sm:$0xff]
        %v2591 = vld [vmem:[#allocation10 + $0xd8] sm:$0xff]
        %v2592 = vld [vmem:[#allocation10 + $0xe0] sm:$0xff]
        %v2593 = vld [vmem:[#allocation10 + $0xe8] sm:$0xff]
        %v2594 = vld [vmem:[#allocation10 + $0xf0] sm:$0xff]
        %v2595 = vld [vmem:[#allocation10 + $0xf8] sm:$0xff]
        %v2596 = vld [vmem:[#allocation10 + $0x100] sm:$0xff]
        %v2597 = vld [vmem:[#allocation10 + $0x108] sm:$0xff]
        %v2598 = vld [vmem:[#allocation10 + $0x110] sm:$0xff]
        %v2599 = vld [vmem:[#allocation10 + $0x118] sm:$0xff]
        %v2600 = vld [vmem:[#allocation10 + $0x120] sm:$0xff]
        %v2601 = vld [vmem:[#allocation10 + $0x128] sm:$0xff]
        %v2602 = vld [vmem:[#allocation10 + $0x130] sm:$0xff]
        %v2603 = vld [vmem:[#allocation10 + $0x138] sm:$0xff]
        %v2604 = vld [vmem:[#allocation10 + $0x140] sm:$0xff]
        %v2605 = vld [vmem:[#allocation10 + $0x148] sm:$0xff]
        %v2606 = vld [vmem:[#allocation10 + $0x150] sm:$0xff]
        %v2607 = vld [vmem:[#allocation10 + $0x158] sm:$0xff]
        %v2608 = vld [vmem:[#allocation10 + $0x160] sm:$0xff]
        %v2609 = vld [vmem:[#allocation10 + $0x168] sm:$0xff]
        %v2610 = vld [vmem:[#allocation10 + $0x170] sm:$0xff]
        %v2611 = vld [vmem:[#allocation10 + $0x178] sm:$0xff]
        %v2612 = vld [vmem:[#allocation10 + $0x180] sm:$0xff]
        %v2613 = vld [vmem:[#allocation10 + $0x188] sm:$0xff]
        %v2614 = vld [vmem:[#allocation10 + $0x190] sm:$0xff]
        %v2615 = vld [vmem:[#allocation10 + $0x198] sm:$0xff]
        %v2616 = vld [vmem:[#allocation10 + $0x1a0] sm:$0xff]
        %v2617 = vld [vmem:[#allocation10 + $0x1a8] sm:$0xff]
        %v2618 = vld [vmem:[#allocation10 + $0x1b0] sm:$0xff]
        %v2619 = vld [vmem:[#allocation10 + $0x1b8] sm:$0xff]
        %v2620 = vld [vmem:[#allocation10 + $0x1c0] sm:$0xff]
        %v2621 = vld [vmem:[#allocation10 + $0x1c8] sm:$0xff]
        %v2622 = vld [vmem:[#allocation10 + $0x1d0] sm:$0xff]
        %v2623 = vld [vmem:[#allocation10 + $0x1d8] sm:$0xff]
        %v2624 = vld [vmem:[#allocation10 + $0x1e0] sm:$0xff]
        %v2625 = vld [vmem:[#allocation10 + $0x1e8] sm:$0xff]
        %v2626 = vld [vmem:[#allocation10 + $0x1f0] sm:$0xff]
        %v2627 = vld [vmem:[#allocation10 + $0x1f8] sm:$0xff]
        %v2628 = vld [vmem:[#allocation10 + $0x200] sm:$0xff]
        %v2629 = vld [vmem:[#allocation10 + $0x208] sm:$0xff]
        %v2630 = vld [vmem:[#allocation10 + $0x210] sm:$0xff]
        %v2631 = vld [vmem:[#allocation10 + $0x218] sm:$0xff]
        %v2632 = vld [vmem:[#allocation10 + $0x220] sm:$0xff]
        %v2633 = vld [vmem:[#allocation10 + $0x228] sm:$0xff]
        %v2634 = vld [vmem:[#allocation10 + $0x230] sm:$0xff]
        %v2635 = vld [vmem:[#allocation10 + $0x238] sm:$0xff]
        %v2636 = vld [vmem:[#allocation10 + $0x240] sm:$0xff]
        %v2637 = vld [vmem:[#allocation10 + $0x248] sm:$0xff]
        %v2638 = vld [vmem:[#allocation10 + $0x250] sm:$0xff]
        %v2639 = vld [vmem:[#allocation10 + $0x258] sm:$0xff]
        %v2640 = vld [vmem:[#allocation10 + $0x260] sm:$0xff]
        %v2641 = vld [vmem:[#allocation10 + $0x268] sm:$0xff]
        %v2642 = vld [vmem:[#allocation10 + $0x270] sm:$0xff]
        %v2643 = vld [vmem:[#allocation10 + $0x278] sm:$0xff]
        %v2644 = vld [vmem:[#allocation10 + $0x280] sm:$0xff]
        %v2645 = vld [vmem:[#allocation10 + $0x288] sm:$0xff]
        %v2646 = vld [vmem:[#allocation10 + $0x290] sm:$0xff]
        %v2647 = vld [vmem:[#allocation10 + $0x298] sm:$0xff]
        %v2648 = vld [vmem:[#allocation10 + $0x2a0] sm:$0xff]
        %v2649 = vld [vmem:[#allocation10 + $0x2a8] sm:$0xff]
        %v2650 = vld [vmem:[#allocation10 + $0x2b0] sm:$0xff]
        %v2651 = vld [vmem:[#allocation10 + $0x2b8] sm:$0xff]
        %v2652 = vld [vmem:[#allocation10 + $0x2c0] sm:$0xff]
        %v2653 = vld [vmem:[#allocation10 + $0x2c8] sm:$0xff]
        %v2654 = vld [vmem:[#allocation10 + $0x2d0] sm:$0xff]
        %v2655 = vld [vmem:[#allocation10 + $0x2d8] sm:$0xff]
        %v2656 = vld [vmem:[#allocation10 + $0x2e0] sm:$0xff]
        %v2657 = vld [vmem:[#allocation10 + $0x2e8] sm:$0xff]
        %v2658 = vld [vmem:[#allocation10 + $0x2f0] sm:$0xff]
        %v2659 = vld [vmem:[#allocation10 + $0x2f8] sm:$0xff]
        %v2660 = vld [vmem:[#allocation10 + $0x300] sm:$0xff]
        %v2661 = vld [vmem:[#allocation10 + $0x308] sm:$0xff]
        %v2662 = vld [vmem:[#allocation10 + $0x310] sm:$0xff]
        %v2663 = vld [vmem:[#allocation10 + $0x318] sm:$0xff]
        %v2664 = vld [vmem:[#allocation10 + $0x320] sm:$0xff]
        %v2665 = vld [vmem:[#allocation10 + $0x328] sm:$0xff]
        %v2666 = vld [vmem:[#allocation10 + $0x330] sm:$0xff]
        %v2667 = vld [vmem:[#allocation10 + $0x338] sm:$0xff]
        %v2668 = vld [vmem:[#allocation10 + $0x340] sm:$0xff]
        %v2669 = vld [vmem:[#allocation10 + $0x348] sm:$0xff]
        %v2670 = vld [vmem:[#allocation10 + $0x350] sm:$0xff]
        %v2671 = vld [vmem:[#allocation10 + $0x358] sm:$0xff]
        %v2672 = vld [vmem:[#allocation10 + $0x360] sm:$0xff]
        %v2673 = vld [vmem:[#allocation10 + $0x368] sm:$0xff]
        %v2674 = vld [vmem:[#allocation10 + $0x370] sm:$0xff]
        %v2675 = vld [vmem:[#allocation10 + $0x378] sm:$0xff]
        %v2676 = vld [vmem:[#allocation10 + $0x380] sm:$0xff]
        %v2677 = vld [vmem:[#allocation10 + $0x388] sm:$0xff]
        %v2678 = vld [vmem:[#allocation10 + $0x390] sm:$0xff]
        %v2679 = vld [vmem:[#allocation10 + $0x398] sm:$0xff]
        %v2680 = vld [vmem:[#allocation10 + $0x3a0] sm:$0xff]
        %v2681 = vld [vmem:[#allocation10 + $0x3a8] sm:$0xff]
        %v2682 = vld [vmem:[#allocation10 + $0x3b0] sm:$0xff]
        %v2683 = vld [vmem:[#allocation10 + $0x3b8] sm:$0xff]
        %v2684 = vld [vmem:[#allocation10 + $0x3c0] sm:$0xff]
        %v2685 = vld [vmem:[#allocation10 + $0x3c8] sm:$0xff]
        %v2686 = vld [vmem:[#allocation10 + $0x3d0] sm:$0xff]
        %v2687 = vld [vmem:[#allocation10 + $0x3d8] sm:$0xff]
        %v2688 = vld [vmem:[#allocation10 + $0x3e0] sm:$0xff]
        %v2689 = vld [vmem:[#allocation10 + $0x3e8] sm:$0xff]
        %v2690 = vld [vmem:[#allocation10 + $0x3f0] sm:$0xff]
        %v2691 = vld [vmem:[#allocation10 + $0x3f8] sm:$0xff]
        %v2692 = vld [vmem:[#allocation10 + $0x400] sm:$0xff]
        %v2693 = vld [vmem:[#allocation10 + $0x408] sm:$0xff]
        %v2694 = vld [vmem:[#allocation10 + $0x410] sm:$0xff]
        %v2695 = vld [vmem:[#allocation10 + $0x418] sm:$0xff]
        %v2696 = vld [vmem:[#allocation10 + $0x420] sm:$0xff]
        %v2697 = vld [vmem:[#allocation10 + $0x428] sm:$0xff]
        %v2698 = vld [vmem:[#allocation10 + $0x430] sm:$0xff]
        %v2699 = vld [vmem:[#allocation10 + $0x438] sm:$0xff]
        %v2700 = vld [vmem:[#allocation10 + $0x440] sm:$0xff]
        %v2701 = vld [vmem:[#allocation10 + $0x448] sm:$0xff]
        %v2702 = vld [vmem:[#allocation10 + $0x450] sm:$0xff]
        %v2703 = vld [vmem:[#allocation10 + $0x458] sm:$0xff]
        %v2704 = vld [vmem:[#allocation10 + $0x460] sm:$0xff]
        %v2705 = vld [vmem:[#allocation10 + $0x468] sm:$0xff]
        %v2706 = vld [vmem:[#allocation10 + $0x470] sm:$0xff]
        %v2707 = vld [vmem:[#allocation10 + $0x478] sm:$0xff]
        %v2708 = vld [vmem:[#allocation10 + $0x480] sm:$0xff]
        %v2709 = vld [vmem:[#allocation10 + $0x488] sm:$0xff]
        %v2710 = vld [vmem:[#allocation10 + $0x490] sm:$0xff]
        %v2711 = vld [vmem:[#allocation10 + $0x498] sm:$0xff]
        %v2712 = vld [vmem:[#allocation10 + $0x4a0] sm:$0xff]
        %v2713 = vld [vmem:[#allocation10 + $0x4a8] sm:$0xff]
        %v2714 = vld [vmem:[#allocation10 + $0x4b0] sm:$0xff]
        %v2715 = vld [vmem:[#allocation10 + $0x4b8] sm:$0xff]
        %v2716 = vld [vmem:[#allocation10 + $0x4c0] sm:$0xff]
        %v2717 = vld [vmem:[#allocation10 + $0x4c8] sm:$0xff]
        %v2718 = vld [vmem:[#allocation10 + $0x4d0] sm:$0xff]
        %v2719 = vld [vmem:[#allocation10 + $0x4d8] sm:$0xff]
        %v2720 = vld [vmem:[#allocation10 + $0x4e0] sm:$0xff]
        %v2721 = vld [vmem:[#allocation10 + $0x4e8] sm:$0xff]
        %v2722 = vld [vmem:[#allocation10 + $0x4f0] sm:$0xff]
        %v2723 = vld [vmem:[#allocation10 + $0x4f8] sm:$0xff]
        %v2724 = vld [vmem:[#allocation10 + $0x500] sm:$0xff]
        %v2725 = vld [vmem:[#allocation10 + $0x508] sm:$0xff]
        %v2726 = vld [vmem:[#allocation10 + $0x510] sm:$0xff]
        %v2727 = vld [vmem:[#allocation10 + $0x518] sm:$0xff]
        %v2728 = vld [vmem:[#allocation10 + $0x520] sm:$0xff]
        %v2729 = vld [vmem:[#allocation10 + $0x528] sm:$0xff]
        %v2730 = vld [vmem:[#allocation10 + $0x530] sm:$0xff]
        %v2731 = vld [vmem:[#allocation10 + $0x538] sm:$0xff]
        %v2732 = vld [vmem:[#allocation10 + $0x540] sm:$0xff]
        %v2733 = vld [vmem:[#allocation10 + $0x548] sm:$0xff]
        %v2734 = vld [vmem:[#allocation10 + $0x550] sm:$0xff]
        %v2735 = vld [vmem:[#allocation10 + $0x558] sm:$0xff]
        %v2736 = vld [vmem:[#allocation10 + $0x560] sm:$0xff]
        %v2737 = vld [vmem:[#allocation10 + $0x568] sm:$0xff]
        %v2738 = vld [vmem:[#allocation10 + $0x570] sm:$0xff]
        %v2739 = vld [vmem:[#allocation10 + $0x578] sm:$0xff]
        %v2740 = vld [vmem:[#allocation10 + $0x580] sm:$0xff]
        %v2741 = vld [vmem:[#allocation10 + $0x588] sm:$0xff]
        %v2742 = vld [vmem:[#allocation10 + $0x590] sm:$0xff]
        %v2743 = vld [vmem:[#allocation10 + $0x598] sm:$0xff]
        %v2744 = vld [vmem:[#allocation10 + $0x5a0] sm:$0xff]
        %v2745 = vld [vmem:[#allocation10 + $0x5a8] sm:$0xff]
        %v2746 = vld [vmem:[#allocation10 + $0x5b0] sm:$0xff]
        %v2747 = vld [vmem:[#allocation10 + $0x5b8] sm:$0xff]
        %v2748 = vld [vmem:[#allocation10 + $0x5c0] sm:$0xff]
        %v2749 = vld [vmem:[#allocation10 + $0x5c8] sm:$0xff]
        %v2750 = vld [vmem:[#allocation10 + $0x5d0] sm:$0xff]
        %v2751 = vld [vmem:[#allocation10 + $0x5d8] sm:$0xff]
        %v2752 = vld [vmem:[#allocation10 + $0x5e0] sm:$0xff]
        %v2753 = vld [vmem:[#allocation10 + $0x5e8] sm:$0xff]
        %v2754 = vld [vmem:[#allocation10 + $0x5f0] sm:$0xff]
        %v2755 = vld [vmem:[#allocation10 + $0x5f8] sm:$0xff]
        %v2756 = vld [vmem:[#allocation10 + $0x600] sm:$0xff]
        %v2757 = vld [vmem:[#allocation10 + $0x608] sm:$0xff]
        %v2758 = vld [vmem:[#allocation10 + $0x610] sm:$0xff]
        %v2759 = vld [vmem:[#allocation10 + $0x618] sm:$0xff]
        %v2760 = vld [vmem:[#allocation10 + $0x620] sm:$0xff]
        %v2761 = vld [vmem:[#allocation10 + $0x628] sm:$0xff]
        %v2762 = vld [vmem:[#allocation10 + $0x630] sm:$0xff]
        %v2763 = vld [vmem:[#allocation10 + $0x638] sm:$0xff]
        %v2764 = vld [vmem:[#allocation10 + $0x640] sm:$0xff]
        %v2765 = vld [vmem:[#allocation10 + $0x648] sm:$0xff]
        %v2766 = vld [vmem:[#allocation10 + $0x650] sm:$0xff]
        %v2767 = vld [vmem:[#allocation10 + $0x658] sm:$0xff]
        %v2768 = vld [vmem:[#allocation10 + $0x660] sm:$0xff]
        %v2769 = vld [vmem:[#allocation10 + $0x668] sm:$0xff]
        %v2770 = vld [vmem:[#allocation10 + $0x670] sm:$0xff]
        %v2771 = vld [vmem:[#allocation10 + $0x678] sm:$0xff]
        %v2772 = vld [vmem:[#allocation10 + $0x680] sm:$0xff]
        %v2773 = vld [vmem:[#allocation10 + $0x688] sm:$0xff]
        %v2774 = vld [vmem:[#allocation10 + $0x690] sm:$0xff]
        %v2775 = vld [vmem:[#allocation10 + $0x698] sm:$0xff]
        %v2776 = vld [vmem:[#allocation10 + $0x6a0] sm:$0xff]
        %v2777 = vld [vmem:[#allocation10 + $0x6a8] sm:$0xff]
        %v2778 = vld [vmem:[#allocation10 + $0x6b0] sm:$0xff]
        %v2779 = vld [vmem:[#allocation10 + $0x6b8] sm:$0xff]
        %v2780 = vld [vmem:[#allocation10 + $0x6c0] sm:$0xff]
        %v2781 = vld [vmem:[#allocation10 + $0x6c8] sm:$0xff]
        %v2782 = vld [vmem:[#allocation10 + $0x6d0] sm:$0xff]
        %v2783 = vld [vmem:[#allocation10 + $0x6d8] sm:$0xff]
        %v2784 = vld [vmem:[#allocation10 + $0x6e0] sm:$0xff]
        %v2785 = vld [vmem:[#allocation10 + $0x6e8] sm:$0xff]
        %v2786 = vld [vmem:[#allocation10 + $0x6f0] sm:$0xff]
        %v2787 = vld [vmem:[#allocation10 + $0x6f8] sm:$0xff]
        %v2788 = vld [vmem:[#allocation10 + $0x700] sm:$0xff]
        %v2789 = vld [vmem:[#allocation10 + $0x708] sm:$0xff]
        %v2790 = vld [vmem:[#allocation10 + $0x710] sm:$0xff]
        %v2791 = vld [vmem:[#allocation10 + $0x718] sm:$0xff]
        %v2792 = vld [vmem:[#allocation10 + $0x720] sm:$0xff]
        %v2793 = vld [vmem:[#allocation10 + $0x728] sm:$0xff]
        %v2794 = vld [vmem:[#allocation10 + $0x730] sm:$0xff]
        %v2795 = vld [vmem:[#allocation10 + $0x738] sm:$0xff]
        %v2796 = vld [vmem:[#allocation10 + $0x740] sm:$0xff]
        %v2797 = vld [vmem:[#allocation10 + $0x748] sm:$0xff]
        %v2798 = vld [vmem:[#allocation10 + $0x750] sm:$0xff]
        %v2799 = vld [vmem:[#allocation10 + $0x758] sm:$0xff]
        %v2800 = vld [vmem:[#allocation10 + $0x760] sm:$0xff]
        %v2801 = vld [vmem:[#allocation10 + $0x768] sm:$0xff]
        %v2802 = vld [vmem:[#allocation10 + $0x770] sm:$0xff]
        %v2803 = vld [vmem:[#allocation10 + $0x778] sm:$0xff]
        %v2804 = vld [vmem:[#allocation10 + $0x780] sm:$0xff]
        %v2805 = vld [vmem:[#allocation10 + $0x788] sm:$0xff]
        %v2806 = vld [vmem:[#allocation10 + $0x790] sm:$0xff]
        %v2807 = vld [vmem:[#allocation10 + $0x798] sm:$0xff]
        %v2808 = vld [vmem:[#allocation10 + $0x7a0] sm:$0xff]
        %v2809 = vld [vmem:[#allocation10 + $0x7a8] sm:$0xff]
        %v2810 = vld [vmem:[#allocation10 + $0x7b0] sm:$0xff]
        %v2811 = vld [vmem:[#allocation10 + $0x7b8] sm:$0xff]
        %v2812 = vld [vmem:[#allocation10 + $0x7c0] sm:$0xff]
        %v2813 = vld [vmem:[#allocation10 + $0x7c8] sm:$0xff]
        %v2814 = vld [vmem:[#allocation10 + $0x7d0] sm:$0xff]
        %v2815 = vld [vmem:[#allocation10 + $0x7d8] sm:$0xff]
        %v2816 = vld [vmem:[#allocation10 + $0x7e0] sm:$0xff]
        %v2817 = vld [vmem:[#allocation10 + $0x7e8] sm:$0xff]
        %v2818 = vld [vmem:[#allocation10 + $0x7f0] sm:$0xff]
        %v2819 = vld [vmem:[#allocation10 + $0x7f8] sm:$0xff]
        %v2820 = vld [vmem:[#allocation10 + $0x800] sm:$0xff]
        %v2821 = vld [vmem:[#allocation10 + $0x808] sm:$0xff]
        %v2822 = vld [vmem:[#allocation10 + $0x810] sm:$0xff]
        %v2823 = vld [vmem:[#allocation10 + $0x818] sm:$0xff]
        %v2824 = vld [vmem:[#allocation10 + $0x820] sm:$0xff]
        %v2825 = vld [vmem:[#allocation10 + $0x828] sm:$0xff]
        %v2826 = vld [vmem:[#allocation10 + $0x830] sm:$0xff]
        %v2827 = vld [vmem:[#allocation10 + $0x838] sm:$0xff]
        %v2828 = vld [vmem:[#allocation10 + $0x840] sm:$0xff]
        %v2829 = vld [vmem:[#allocation10 + $0x848] sm:$0xff]
        %v2830 = vld [vmem:[#allocation10 + $0x850] sm:$0xff]
        %v2831 = vld [vmem:[#allocation10 + $0x858] sm:$0xff]
        %v2832 = vld [vmem:[#allocation10 + $0x860] sm:$0xff]
        %v2833 = vld [vmem:[#allocation10 + $0x868] sm:$0xff]
        %v2834 = vld [vmem:[#allocation10 + $0x870] sm:$0xff]
        %v2835 = vld [vmem:[#allocation10 + $0x878] sm:$0xff]
        %v2836 = vld [vmem:[#allocation10 + $0x880] sm:$0xff]
        %v2837 = vld [vmem:[#allocation10 + $0x888] sm:$0xff]
        %v2838 = vld [vmem:[#allocation10 + $0x890] sm:$0xff]
        %v2839 = vld [vmem:[#allocation10 + $0x898] sm:$0xff]
        %v2840 = vld [vmem:[#allocation10 + $0x8a0] sm:$0xff]
        %v2841 = vld [vmem:[#allocation10 + $0x8a8] sm:$0xff]
        %v2842 = vld [vmem:[#allocation10 + $0x8b0] sm:$0xff]
        %v2843 = vld [vmem:[#allocation10 + $0x8b8] sm:$0xff]
        %v2844 = vld [vmem:[#allocation10 + $0x8c0] sm:$0xff]
        %v2845 = vld [vmem:[#allocation10 + $0x8c8] sm:$0xff]
        %v2846 = vld [vmem:[#allocation10 + $0x8d0] sm:$0xff]
        %v2847 = vld [vmem:[#allocation10 + $0x8d8] sm:$0xff]
        %v2848 = vld [vmem:[#allocation10 + $0x8e0] sm:$0xff]
        %v2849 = vld [vmem:[#allocation10 + $0x8e8] sm:$0xff]
        %v2850 = vld [vmem:[#allocation10 + $0x8f0] sm:$0xff]
        %v2851 = vld [vmem:[#allocation10 + $0x8f8] sm:$0xff]
        %v2852 = vld [vmem:[#allocation10 + $0x900] sm:$0xff]
        %v2853 = vld [vmem:[#allocation10 + $0x908] sm:$0xff]
        %v2854 = vld [vmem:[#allocation10 + $0x910] sm:$0xff]
        %v2855 = vld [vmem:[#allocation10 + $0x918] sm:$0xff]
        %v2856 = vld [vmem:[#allocation10 + $0x920] sm:$0xff]
        %v2857 = vld [vmem:[#allocation10 + $0x928] sm:$0xff]
        %v2858 = vld [vmem:[#allocation10 + $0x930] sm:$0xff]
        %v2859 = vld [vmem:[#allocation10 + $0x938] sm:$0xff]
        %v2860 = vld [vmem:[#allocation10 + $0x940] sm:$0xff]
        %v2861 = vld [vmem:[#allocation10 + $0x948] sm:$0xff]
        %v2862 = vld [vmem:[#allocation10 + $0x950] sm:$0xff]
        %v2863 = vld [vmem:[#allocation10 + $0x958] sm:$0xff]
        %v2864 = vld [vmem:[#allocation10 + $0x960] sm:$0xff]
        %v2865 = vld [vmem:[#allocation10 + $0x968] sm:$0xff]
        %v2866 = vld [vmem:[#allocation10 + $0x970] sm:$0xff]
        %v2867 = vld [vmem:[#allocation10 + $0x978] sm:$0xff]
        %v2868 = vld [vmem:[#allocation10 + $0x980] sm:$0xff]
        %v2869 = vld [vmem:[#allocation10 + $0x988] sm:$0xff]
        %v2870 = vld [vmem:[#allocation10 + $0x990] sm:$0xff]
        %v2871 = vld [vmem:[#allocation10 + $0x998] sm:$0xff]
        %v2872 = vld [vmem:[#allocation10 + $0x9a0] sm:$0xff]
        %v2873 = vld [vmem:[#allocation10 + $0x9a8] sm:$0xff]
        %v2874 = vld [vmem:[#allocation10 + $0x9b0] sm:$0xff]
        %v2875 = vld [vmem:[#allocation10 + $0x9b8] sm:$0xff]
        %v2876 = vld [vmem:[#allocation10 + $0x9c0] sm:$0xff]
        %v2877 = vld [vmem:[#allocation10 + $0x9c8] sm:$0xff]
        %v2878 = vld [vmem:[#allocation10 + $0x9d0] sm:$0xff]
        %v2879 = vld [vmem:[#allocation10 + $0x9d8] sm:$0xff]
        %v2880 = vld [vmem:[#allocation10 + $0x9e0] sm:$0xff]
        %v2881 = vld [vmem:[#allocation10 + $0x9e8] sm:$0xff]
        %v2882 = vld [vmem:[#allocation10 + $0x9f0] sm:$0xff]
        %v2883 = vld [vmem:[#allocation10 + $0x9f8] sm:$0xff]
        %v2884 = vld [vmem:[#allocation10 + $0xa00] sm:$0xff]
        %v2885 = vld [vmem:[#allocation10 + $0xa08] sm:$0xff]
        %v2886 = vld [vmem:[#allocation10 + $0xa10] sm:$0xff]
        %v2887 = vld [vmem:[#allocation10 + $0xa18] sm:$0xff]
        %v2888 = vld [vmem:[#allocation10 + $0xa20] sm:$0xff]
        %v2889 = vld [vmem:[#allocation10 + $0xa28] sm:$0xff]
        %v2890 = vld [vmem:[#allocation10 + $0xa30] sm:$0xff]
        %v2891 = vld [vmem:[#allocation10 + $0xa38] sm:$0xff]
        %v2892 = vld [vmem:[#allocation10 + $0xa40] sm:$0xff]
        %v2893 = vld [vmem:[#allocation10 + $0xa48] sm:$0xff]
        %v2894 = vld [vmem:[#allocation10 + $0xa50] sm:$0xff]
        %v2895 = vld [vmem:[#allocation10 + $0xa58] sm:$0xff]
        %v2896 = vld [vmem:[#allocation10 + $0xa60] sm:$0xff]
        %v2897 = vld [vmem:[#allocation10 + $0xa68] sm:$0xff]
        %v2898 = vld [vmem:[#allocation10 + $0xa70] sm:$0xff]
        %v2899 = vld [vmem:[#allocation10 + $0xa78] sm:$0xff]
        %v2900 = vld [vmem:[#allocation10 + $0xa80] sm:$0xff]
        %v2901 = vld [vmem:[#allocation10 + $0xa88] sm:$0xff]
        %v2902 = vld [vmem:[#allocation10 + $0xa90] sm:$0xff]
        %v2903 = vld [vmem:[#allocation10 + $0xa98] sm:$0xff]
        %v2904 = vld [vmem:[#allocation10 + $0xaa0] sm:$0xff]
        %v2905 = vld [vmem:[#allocation10 + $0xaa8] sm:$0xff]
        %v2906 = vld [vmem:[#allocation10 + $0xab0] sm:$0xff]
        %v2907 = vld [vmem:[#allocation10 + $0xab8] sm:$0xff]
        %v2908 = vld [vmem:[#allocation10 + $0xac0] sm:$0xff]
        %v2909 = vld [vmem:[#allocation10 + $0xac8] sm:$0xff]
        %v2910 = vld [vmem:[#allocation10 + $0xad0] sm:$0xff]
        %v2911 = vld [vmem:[#allocation10 + $0xad8] sm:$0xff]
        %v2912 = vld [vmem:[#allocation10 + $0xae0] sm:$0xff]
        %v2913 = vld [vmem:[#allocation10 + $0xae8] sm:$0xff]
        %v2914 = vld [vmem:[#allocation10 + $0xaf0] sm:$0xff]
        %v2915 = vld [vmem:[#allocation10 + $0xaf8] sm:$0xff]
        %v2916 = vld [vmem:[#allocation10 + $0xb00] sm:$0xff]
        %v2917 = vld [vmem:[#allocation10 + $0xb08] sm:$0xff]
        %v2918 = vld [vmem:[#allocation10 + $0xb10] sm:$0xff]
        %v2919 = vld [vmem:[#allocation10 + $0xb18] sm:$0xff]
        %v2920 = vld [vmem:[#allocation10 + $0xb20] sm:$0xff]
        %v2921 = vld [vmem:[#allocation10 + $0xb28] sm:$0xff]
        %v2922 = vld [vmem:[#allocation10 + $0xb30] sm:$0xff]
        %v2923 = vld [vmem:[#allocation10 + $0xb38] sm:$0xff]
        %v2924 = vld [vmem:[#allocation10 + $0xb40] sm:$0xff]
        %v2925 = vld [vmem:[#allocation10 + $0xb48] sm:$0xff]
        %v2926 = vld [vmem:[#allocation10 + $0xb50] sm:$0xff]
        %v2927 = vld [vmem:[#allocation10 + $0xb58] sm:$0xff]
        %v2928 = vld [vmem:[#allocation10 + $0xb60] sm:$0xff]
        %v2929 = vld [vmem:[#allocation10 + $0xb68] sm:$0xff]
        %v2930 = vld [vmem:[#allocation10 + $0xb70] sm:$0xff]
        %v2931 = vld [vmem:[#allocation10 + $0xb78] sm:$0xff]
        %v2932 = vld [vmem:[#allocation10 + $0xb80] sm:$0xff]
        %v2933 = vld [vmem:[#allocation10 + $0xb88] sm:$0xff]
        %v2934 = vld [vmem:[#allocation10 + $0xb90] sm:$0xff]
        %v2935 = vld [vmem:[#allocation10 + $0xb98] sm:$0xff]
        %v2936 = vld [vmem:[#allocation10 + $0xba0] sm:$0xff]
        %v2937 = vld [vmem:[#allocation10 + $0xba8] sm:$0xff]
        %v2938 = vld [vmem:[#allocation10 + $0xbb0] sm:$0xff]
        %v2939 = vld [vmem:[#allocation10 + $0xbb8] sm:$0xff]
        %v2940 = vld [vmem:[#allocation10 + $0xbc0] sm:$0xff]
        %v2941 = vld [vmem:[#allocation10 + $0xbc8] sm:$0xff]
        %v2942 = vld [vmem:[#allocation10 + $0xbd0] sm:$0xff]
        %v2943 = vld [vmem:[#allocation10 + $0xbd8] sm:$0xff]
        %v2944 = vld [vmem:[#allocation10 + $0xbe0] sm:$0xff]
        %v2945 = vld [vmem:[#allocation10 + $0xbe8] sm:$0xff]
        %v2946 = vld [vmem:[#allocation10 + $0xbf0] sm:$0xff]
        %v2947 = vld [vmem:[#allocation10 + $0xbf8] sm:$0xff]
        %v2948 = vld [vmem:[#allocation10 + $0xc00] sm:$0xff]
        %v2949 = vld [vmem:[#allocation10 + $0xc08] sm:$0xff]
        %v2950 = vld [vmem:[#allocation10 + $0xc10] sm:$0xff]
        %v2951 = vld [vmem:[#allocation10 + $0xc18] sm:$0xff]
        %v2952 = vld [vmem:[#allocation10 + $0xc20] sm:$0xff]
        %v2953 = vld [vmem:[#allocation10 + $0xc28] sm:$0xff]
        %v2954 = vld [vmem:[#allocation10 + $0xc30] sm:$0xff]
        %v2955 = vld [vmem:[#allocation10 + $0xc38] sm:$0xff]
        %v2956 = vld [vmem:[#allocation10 + $0xc40] sm:$0xff]
        %v2957 = vld [vmem:[#allocation10 + $0xc48] sm:$0xff]
        %v2958 = vld [vmem:[#allocation10 + $0xc50] sm:$0xff]
        %v2959 = vld [vmem:[#allocation10 + $0xc58] sm:$0xff]
        %v2960 = vld [vmem:[#allocation10 + $0xc60] sm:$0xff]
        %v2961 = vld [vmem:[#allocation10 + $0xc68] sm:$0xff]
        %v2962 = vld [vmem:[#allocation10 + $0xc70] sm:$0xff]
        %v2963 = vld [vmem:[#allocation10 + $0xc78] sm:$0xff]
        %v2964 = vld [vmem:[#allocation10 + $0xc80] sm:$0xff]
        %v2965 = vld [vmem:[#allocation10 + $0xc88] sm:$0xff]
        %v2966 = vld [vmem:[#allocation10 + $0xc90] sm:$0xff]
        %v2967 = vld [vmem:[#allocation10 + $0xc98] sm:$0xff]
        %v2968 = vld [vmem:[#allocation10 + $0xca0] sm:$0xff]
        %v2969 = vld [vmem:[#allocation10 + $0xca8] sm:$0xff]
        %v2970 = vld [vmem:[#allocation10 + $0xcb0] sm:$0xff]
        %v2971 = vld [vmem:[#allocation10 + $0xcb8] sm:$0xff]
        %v2972 = vld [vmem:[#allocation10 + $0xcc0] sm:$0xff]
        %v2973 = vld [vmem:[#allocation10 + $0xcc8] sm:$0xff]
        %v2974 = vld [vmem:[#allocation10 + $0xcd0] sm:$0xff]
        %v2975 = vld [vmem:[#allocation10 + $0xcd8] sm:$0xff]
        %v2976 = vld [vmem:[#allocation10 + $0xce0] sm:$0xff]
        %v2977 = vld [vmem:[#allocation10 + $0xce8] sm:$0xff]
        %v2978 = vld [vmem:[#allocation10 + $0xcf0] sm:$0xff]
        %v2979 = vld [vmem:[#allocation10 + $0xcf8] sm:$0xff]
        %v2980 = vld [vmem:[#allocation10 + $0xd00] sm:$0xff]
        %v2981 = vld [vmem:[#allocation10 + $0xd08] sm:$0xff]
        %v2982 = vld [vmem:[#allocation10 + $0xd10] sm:$0xff]
        %v2983 = vld [vmem:[#allocation10 + $0xd18] sm:$0xff]
        %v2984 = vld [vmem:[#allocation10 + $0xd20] sm:$0xff]
        %v2985 = vld [vmem:[#allocation10 + $0xd28] sm:$0xff]
        %v2986 = vld [vmem:[#allocation10 + $0xd30] sm:$0xff]
        %v2987 = vld [vmem:[#allocation10 + $0xd38] sm:$0xff]
        %v2988 = vld [vmem:[#allocation10 + $0xd40] sm:$0xff]
        %v2989 = vld [vmem:[#allocation10 + $0xd48] sm:$0xff]
        %v2990 = vld [vmem:[#allocation10 + $0xd50] sm:$0xff]
        %v2991 = vld [vmem:[#allocation10 + $0xd58] sm:$0xff]
        %v2992 = vld [vmem:[#allocation10 + $0xd60] sm:$0xff]
        %v2993 = vld [vmem:[#allocation10 + $0xd68] sm:$0xff]
        %v2994 = vld [vmem:[#allocation10 + $0xd70] sm:$0xff]
        %v2995 = vld [vmem:[#allocation10 + $0xd78] sm:$0xff]
        %v2996 = vld [vmem:[#allocation10 + $0xd80] sm:$0xff]
        %v2997 = vld [vmem:[#allocation10 + $0xd88] sm:$0xff]
        %v2998 = vld [vmem:[#allocation10 + $0xd90] sm:$0xff]
        %v2999 = vld [vmem:[#allocation10 + $0xd98] sm:$0xff]
        %v3000 = vld [vmem:[#allocation10 + $0xda0] sm:$0xff]
        %v3001 = vld [vmem:[#allocation10 + $0xda8] sm:$0xff]
        %v3002 = vld [vmem:[#allocation10 + $0xdb0] sm:$0xff]
        %v3003 = vld [vmem:[#allocation10 + $0xdb8] sm:$0xff]
        %v3004 = vld [vmem:[#allocation10 + $0xdc0] sm:$0xff]
        %v3005 = vld [vmem:[#allocation10 + $0xdc8] sm:$0xff]
        %v3006 = vld [vmem:[#allocation10 + $0xdd0] sm:$0xff]
        %v3007 = vld [vmem:[#allocation10 + $0xdd8] sm:$0xff]
        %v3008 = vld [vmem:[#allocation10 + $0xde0] sm:$0xff]
        %v3009 = vld [vmem:[#allocation10 + $0xde8] sm:$0xff]
        %v3010 = vld [vmem:[#allocation10 + $0xdf0] sm:$0xff]
        %v3011 = vld [vmem:[#allocation10 + $0xdf8] sm:$0xff]
        %v3012 = vld [vmem:[#allocation10 + $0xe00] sm:$0xff]
        %v3013 = vld [vmem:[#allocation10 + $0xe08] sm:$0xff]
        %v3014 = vld [vmem:[#allocation10 + $0xe10] sm:$0xff]
        %v3015 = vld [vmem:[#allocation10 + $0xe18] sm:$0xff]
        %v3016 = vld [vmem:[#allocation10 + $0xe20] sm:$0xff]
        %v3017 = vld [vmem:[#allocation10 + $0xe28] sm:$0xff]
        %v3018 = vld [vmem:[#allocation10 + $0xe30] sm:$0xff]
        %v3019 = vld [vmem:[#allocation10 + $0xe38] sm:$0xff]
        %v3020 = vld [vmem:[#allocation10 + $0xe40] sm:$0xff]
        %v3021 = vld [vmem:[#allocation10 + $0xe48] sm:$0xff]
        %v3022 = vld [vmem:[#allocation10 + $0xe50] sm:$0xff]
        %v3023 = vld [vmem:[#allocation10 + $0xe58] sm:$0xff]
        %v3024 = vld [vmem:[#allocation10 + $0xe60] sm:$0xff]
        %v3025 = vld [vmem:[#allocation10 + $0xe68] sm:$0xff]
        %v3026 = vld [vmem:[#allocation10 + $0xe70] sm:$0xff]
        %v3027 = vld [vmem:[#allocation10 + $0xe78] sm:$0xff]
        %v3028 = vld [vmem:[#allocation10 + $0xe80] sm:$0xff]
        %v3029 = vld [vmem:[#allocation10 + $0xe88] sm:$0xff]
        %v3030 = vld [vmem:[#allocation10 + $0xe90] sm:$0xff]
        %v3031 = vld [vmem:[#allocation10 + $0xe98] sm:$0xff]
        %v3032 = vld [vmem:[#allocation10 + $0xea0] sm:$0xff]
        %v3033 = vld [vmem:[#allocation10 + $0xea8] sm:$0xff]
        %v3034 = vld [vmem:[#allocation10 + $0xeb0] sm:$0xff]
        %v3035 = vld [vmem:[#allocation10 + $0xeb8] sm:$0xff]
        %v3036 = vld [vmem:[#allocation10 + $0xec0] sm:$0xff]
        %v3037 = vld [vmem:[#allocation10 + $0xec8] sm:$0xff]
        %v3038 = vld [vmem:[#allocation10 + $0xed0] sm:$0xff]
        %v3039 = vld [vmem:[#allocation10 + $0xed8] sm:$0xff]
        %v3040 = vld [vmem:[#allocation10 + $0xee0] sm:$0xff]
        %v3041 = vld [vmem:[#allocation10 + $0xee8] sm:$0xff]
        %v3042 = vld [vmem:[#allocation10 + $0xef0] sm:$0xff]
        %v3043 = vld [vmem:[#allocation10 + $0xef8] sm:$0xff]
        %v3044 = vld [vmem:[#allocation10 + $0xf00] sm:$0xff]
        %v3045 = vld [vmem:[#allocation10 + $0xf08] sm:$0xff]
        %v3046 = vld [vmem:[#allocation10 + $0xf10] sm:$0xff]
        %v3047 = vld [vmem:[#allocation10 + $0xf18] sm:$0xff]
        %v3048 = vld [vmem:[#allocation10 + $0xf20] sm:$0xff]
        %v3049 = vld [vmem:[#allocation10 + $0xf28] sm:$0xff]
        %v3050 = vld [vmem:[#allocation10 + $0xf30] sm:$0xff]
        %v3051 = vld [vmem:[#allocation10 + $0xf38] sm:$0xff]
        %v3052 = vld [vmem:[#allocation10 + $0xf40] sm:$0xff]
        %v3053 = vld [vmem:[#allocation10 + $0xf48] sm:$0xff]
        %v3054 = vld [vmem:[#allocation10 + $0xf50] sm:$0xff]
        %v3055 = vld [vmem:[#allocation10 + $0xf58] sm:$0xff]
        %v3056 = vld [vmem:[#allocation10 + $0xf60] sm:$0xff]
        %v3057 = vld [vmem:[#allocation10 + $0xf68] sm:$0xff]
        %v3058 = vld [vmem:[#allocation10 + $0xf70] sm:$0xff]
        %v3059 = vld [vmem:[#allocation10 + $0xf78] sm:$0xff]
        %v3060 = vld [vmem:[#allocation10 + $0xf80] sm:$0xff]
        %v3061 = vld [vmem:[#allocation10 + $0xf88] sm:$0xff]
        %v3062 = vld [vmem:[#allocation10 + $0xf90] sm:$0xff]
        %v3063 = vld [vmem:[#allocation10 + $0xf98] sm:$0xff]
        %v3064 = vld [vmem:[#allocation10 + $0xfa0] sm:$0xff]
        %v3065 = vld [vmem:[#allocation10 + $0xfa8] sm:$0xff]
        %v3066 = vld [vmem:[#allocation10 + $0xfb0] sm:$0xff]
        %v3067 = vld [vmem:[#allocation10 + $0xfb8] sm:$0xff]
        %v3068 = vld [vmem:[#allocation10 + $0xfc0] sm:$0xff]
        %v3069 = vld [vmem:[#allocation10 + $0xfc8] sm:$0xff]
        %v3070 = vld [vmem:[#allocation10 + $0xfd0] sm:$0xff]
        %v3071 = vld [vmem:[#allocation10 + $0xfd8] sm:$0xff]
        %v3072 = vld [vmem:[#allocation10 + $0xfe0] sm:$0xff]
        %v3073 = vld [vmem:[#allocation10 + $0xfe8] sm:$0xff]
        %v3074 = vld [vmem:[#allocation10 + $0xff0] sm:$0xff]
        %v3075 = vld [vmem:[#allocation10 + $0xff8] sm:$0xff]
        %v3076 = vld [vmem:[#allocation10 + $0x1000] sm:$0xff]
        %v3077 = vld [vmem:[#allocation10 + $0x1008] sm:$0xff]
        %v3078 = vld [vmem:[#allocation10 + $0x1010] sm:$0xff]
        %v3079 = vld [vmem:[#allocation10 + $0x1018] sm:$0xff]
        %v3080 = vld [vmem:[#allocation10 + $0x1020] sm:$0xff]
        %v3081 = vld [vmem:[#allocation10 + $0x1028] sm:$0xff]
        %v3082 = vld [vmem:[#allocation10 + $0x1030] sm:$0xff]
        %v3083 = vld [vmem:[#allocation10 + $0x1038] sm:$0xff]
        %v3084 = vld [vmem:[#allocation10 + $0x1040] sm:$0xff]
        %v3085 = vld [vmem:[#allocation10 + $0x1048] sm:$0xff]
        %v3086 = vld [vmem:[#allocation10 + $0x1050] sm:$0xff]
        %v3087 = vld [vmem:[#allocation10 + $0x1058] sm:$0xff]
        %v3088 = vld [vmem:[#allocation10 + $0x1060] sm:$0xff]
        %v3089 = vld [vmem:[#allocation10 + $0x1068] sm:$0xff]
        %v3090 = vld [vmem:[#allocation10 + $0x1070] sm:$0xff]
        %v3091 = vld [vmem:[#allocation10 + $0x1078] sm:$0xff]
        %v3092 = vld [vmem:[#allocation10 + $0x1080] sm:$0xff]
        %v3093 = vld [vmem:[#allocation10 + $0x1088] sm:$0xff]
        %v3094 = vld [vmem:[#allocation10 + $0x1090] sm:$0xff]
        %v3095 = vld [vmem:[#allocation10 + $0x1098] sm:$0xff]
        %v3096 = vld [vmem:[#allocation10 + $0x10a0] sm:$0xff]
        %v3097 = vld [vmem:[#allocation10 + $0x10a8] sm:$0xff]
        %v3098 = vld [vmem:[#allocation10 + $0x10b0] sm:$0xff]
        %v3099 = vld [vmem:[#allocation10 + $0x10b8] sm:$0xff]
        %v3100 = vld [vmem:[#allocation10 + $0x10c0] sm:$0xff]
        %v3101 = vld [vmem:[#allocation10 + $0x10c8] sm:$0xff]
        %v3102 = vld [vmem:[#allocation10 + $0x10d0] sm:$0xff]
        %v3103 = vld [vmem:[#allocation10 + $0x10d8] sm:$0xff]
        %v3104 = vld [vmem:[#allocation10 + $0x10e0] sm:$0xff]
        %v3105 = vld [vmem:[#allocation10 + $0x10e8] sm:$0xff]
        %v3106 = vld [vmem:[#allocation10 + $0x10f0] sm:$0xff]
        %v3107 = vld [vmem:[#allocation10 + $0x10f8] sm:$0xff]
        %v3108 = vld [vmem:[#allocation10 + $0x1100] sm:$0xff]
        %v3109 = vld [vmem:[#allocation10 + $0x1108] sm:$0xff]
        %v3110 = vld [vmem:[#allocation10 + $0x1110] sm:$0xff]
        %v3111 = vld [vmem:[#allocation10 + $0x1118] sm:$0xff]
        %v3112 = vld [vmem:[#allocation10 + $0x1120] sm:$0xff]
        %v3113 = vld [vmem:[#allocation10 + $0x1128] sm:$0xff]
        %v3114 = vld [vmem:[#allocation10 + $0x1130] sm:$0xff]
        %v3115 = vld [vmem:[#allocation10 + $0x1138] sm:$0xff]
        %v3116 = vld [vmem:[#allocation10 + $0x1140] sm:$0xff]
        %v3117 = vld [vmem:[#allocation10 + $0x1148] sm:$0xff]
        %v3118 = vld [vmem:[#allocation10 + $0x1150] sm:$0xff]
        %v3119 = vld [vmem:[#allocation10 + $0x1158] sm:$0xff]
        %v3120 = vld [vmem:[#allocation10 + $0x1160] sm:$0xff]
        %v3121 = vld [vmem:[#allocation10 + $0x1168] sm:$0xff]
        %v3122 = vld [vmem:[#allocation10 + $0x1170] sm:$0xff]
        %v3123 = vld [vmem:[#allocation10 + $0x1178] sm:$0xff]
        %v3124 = vld [vmem:[#allocation10 + $0x1180] sm:$0xff]
        %v3125 = vld [vmem:[#allocation10 + $0x1188] sm:$0xff]
        %v3126 = vld [vmem:[#allocation10 + $0x1190] sm:$0xff]
        %v3127 = vld [vmem:[#allocation10 + $0x1198] sm:$0xff]
        %v3128 = vld [vmem:[#allocation10 + $0x11a0] sm:$0xff]
        %v3129 = vld [vmem:[#allocation10 + $0x11a8] sm:$0xff]
        %v3130 = vld [vmem:[#allocation10 + $0x11b0] sm:$0xff]
        %v3131 = vld [vmem:[#allocation10 + $0x11b8] sm:$0xff]
        %v3132 = vld [vmem:[#allocation10 + $0x11c0] sm:$0xff]
        %v3133 = vld [vmem:[#allocation10 + $0x11c8] sm:$0xff]
        %v3134 = vld [vmem:[#allocation10 + $0x11d0] sm:$0xff]
        %v3135 = vld [vmem:[#allocation10 + $0x11d8] sm:$0xff]
        %v3136 = vld [vmem:[#allocation10 + $0x11e0] sm:$0xff]
        %v3137 = vld [vmem:[#allocation10 + $0x11e8] sm:$0xff]
        %v3138 = vld [vmem:[#allocation10 + $0x11f0] sm:$0xff]
        %v3139 = vld [vmem:[#allocation10 + $0x11f8] sm:$0xff]
        %v3140 = vld [vmem:[#allocation10 + $0x1200] sm:$0xff]
        %v3141 = vld [vmem:[#allocation10 + $0x1208] sm:$0xff]
        %v3142 = vld [vmem:[#allocation10 + $0x1210] sm:$0xff]
        %v3143 = vld [vmem:[#allocation10 + $0x1218] sm:$0xff]
        %v3144 = vld [vmem:[#allocation10 + $0x1220] sm:$0xff]
        %v3145 = vld [vmem:[#allocation10 + $0x1228] sm:$0xff]
        %v3146 = vld [vmem:[#allocation10 + $0x1230] sm:$0xff]
        %v3147 = vld [vmem:[#allocation10 + $0x1238] sm:$0xff]
        %v3148 = vld [vmem:[#allocation10 + $0x1240] sm:$0xff]
        %v3149 = vld [vmem:[#allocation10 + $0x1248] sm:$0xff]
        %v3150 = vld [vmem:[#allocation10 + $0x1250] sm:$0xff]
        %v3151 = vld [vmem:[#allocation10 + $0x1258] sm:$0xff]
        %v3152 = vld [vmem:[#allocation10 + $0x1260] sm:$0xff]
        %v3153 = vld [vmem:[#allocation10 + $0x1268] sm:$0xff]
        %v3154 = vld [vmem:[#allocation10 + $0x1270] sm:$0xff]
        %v3155 = vld [vmem:[#allocation10 + $0x1278] sm:$0xff]
        %v3156 = vld [vmem:[#allocation10 + $0x1280] sm:$0xff]
        %v3157 = vld [vmem:[#allocation10 + $0x1288] sm:$0xff]
        %v3158 = vld [vmem:[#allocation10 + $0x1290] sm:$0xff]
        %v3159 = vld [vmem:[#allocation10 + $0x1298] sm:$0xff]
        %v3160 = vld [vmem:[#allocation10 + $0x12a0] sm:$0xff]
        %v3161 = vld [vmem:[#allocation10 + $0x12a8] sm:$0xff]
        %v3162 = vld [vmem:[#allocation10 + $0x12b0] sm:$0xff]
        %v3163 = vld [vmem:[#allocation10 + $0x12b8] sm:$0xff]
        %v3164 = vld [vmem:[#allocation10 + $0x12c0] sm:$0xff]
        %v3165 = vld [vmem:[#allocation10 + $0x12c8] sm:$0xff]
        %v3166 = vld [vmem:[#allocation10 + $0x12d0] sm:$0xff]
        %v3167 = vld [vmem:[#allocation10 + $0x12d8] sm:$0xff]
        %v3168 = vld [vmem:[#allocation10 + $0x12e0] sm:$0xff]
        %v3169 = vld [vmem:[#allocation10 + $0x12e8] sm:$0xff]
        %v3170 = vld [vmem:[#allocation10 + $0x12f0] sm:$0xff]
        %v3171 = vld [vmem:[#allocation10 + $0x12f8] sm:$0xff]
        %v3172 = vld [vmem:[#allocation10 + $0x1300] sm:$0xff]
        %v3173 = vld [vmem:[#allocation10 + $0x1308] sm:$0xff]
        %v3174 = vld [vmem:[#allocation10 + $0x1310] sm:$0xff]
        %v3175 = vld [vmem:[#allocation10 + $0x1318] sm:$0xff]
        %v3176 = vld [vmem:[#allocation10 + $0x1320] sm:$0xff]
        %v3177 = vld [vmem:[#allocation10 + $0x1328] sm:$0xff]
        %v3178 = vld [vmem:[#allocation10 + $0x1330] sm:$0xff]
        %v3179 = vld [vmem:[#allocation10 + $0x1338] sm:$0xff]
        %v3180 = vld [vmem:[#allocation10 + $0x1340] sm:$0xff]
        %v3181 = vld [vmem:[#allocation10 + $0x1348] sm:$0xff]
        %v3182 = vld [vmem:[#allocation10 + $0x1350] sm:$0xff]
        %v3183 = vld [vmem:[#allocation10 + $0x1358] sm:$0xff]
        %v3184 = vld [vmem:[#allocation10 + $0x1360] sm:$0xff]
        %v3185 = vld [vmem:[#allocation10 + $0x1368] sm:$0xff]
        %v3186 = vld [vmem:[#allocation10 + $0x1370] sm:$0xff]
        %v3187 = vld [vmem:[#allocation10 + $0x1378] sm:$0xff]
        %v3188 = vld [vmem:[#allocation10 + $0x1380] sm:$0xff]
        %v3189 = vld [vmem:[#allocation10 + $0x1388] sm:$0xff]
        %v3190 = vld [vmem:[#allocation10 + $0x1390] sm:$0xff]
        %v3191 = vld [vmem:[#allocation10 + $0x1398] sm:$0xff]
        %v3192 = vld [vmem:[#allocation10 + $0x13a0] sm:$0xff]
        %v3193 = vld [vmem:[#allocation10 + $0x13a8] sm:$0xff]
        %v3194 = vld [vmem:[#allocation10 + $0x13b0] sm:$0xff]
        %v3195 = vld [vmem:[#allocation10 + $0x13b8] sm:$0xff]
        %v3196 = vld [vmem:[#allocation10 + $0x13c0] sm:$0xff]
        %v3197 = vld [vmem:[#allocation10 + $0x13c8] sm:$0xff]
        %v3198 = vld [vmem:[#allocation10 + $0x13d0] sm:$0xff]
        %v3199 = vld [vmem:[#allocation10 + $0x13d8] sm:$0xff]
        %v3200 = vld [vmem:[#allocation10 + $0x13e0] sm:$0xff]
        %v3201 = vld [vmem:[#allocation10 + $0x13e8] sm:$0xff]
        %v3202 = vld [vmem:[#allocation10 + $0x13f0] sm:$0xff]
        %v3203 = vld [vmem:[#allocation10 + $0x13f8] sm:$0xff]
        %v3204 = vld [vmem:[#allocation10 + $0x1400] sm:$0xff]
        %v3205 = vld [vmem:[#allocation10 + $0x1408] sm:$0xff]
        %v3206 = vld [vmem:[#allocation10 + $0x1410] sm:$0xff]
        %v3207 = vld [vmem:[#allocation10 + $0x1418] sm:$0xff]
        %v3208 = vld [vmem:[#allocation10 + $0x1420] sm:$0xff]
        %v3209 = vld [vmem:[#allocation10 + $0x1428] sm:$0xff]
        %v3210 = vld [vmem:[#allocation10 + $0x1430] sm:$0xff]
        %v3211 = vld [vmem:[#allocation10 + $0x1438] sm:$0xff]
        %v3212 = vld [vmem:[#allocation10 + $0x1440] sm:$0xff]
        %v3213 = vld [vmem:[#allocation10 + $0x1448] sm:$0xff]
        %v3214 = vld [vmem:[#allocation10 + $0x1450] sm:$0xff]
        %v3215 = vld [vmem:[#allocation10 + $0x1458] sm:$0xff]
        %v3216 = vld [vmem:[#allocation10 + $0x1460] sm:$0xff]
        %v3217 = vld [vmem:[#allocation10 + $0x1468] sm:$0xff]
        %v3218 = vld [vmem:[#allocation10 + $0x1470] sm:$0xff]
        %v3219 = vld [vmem:[#allocation10 + $0x1478] sm:$0xff]
        %v3220 = vld [vmem:[#allocation10 + $0x1480] sm:$0xff]
        %v3221 = vld [vmem:[#allocation10 + $0x1488] sm:$0xff]
        %v3222 = vld [vmem:[#allocation10 + $0x1490] sm:$0xff]
        %v3223 = vld [vmem:[#allocation10 + $0x1498] sm:$0xff]
        %v3224 = vld [vmem:[#allocation10 + $0x14a0] sm:$0xff]
        %v3225 = vld [vmem:[#allocation10 + $0x14a8] sm:$0xff]
        %v3226 = vld [vmem:[#allocation10 + $0x14b0] sm:$0xff]
        %v3227 = vld [vmem:[#allocation10 + $0x14b8] sm:$0xff]
        %v3228 = vld [vmem:[#allocation10 + $0x14c0] sm:$0xff]
        %v3229 = vld [vmem:[#allocation10 + $0x14c8] sm:$0xff]
        %v3230 = vld [vmem:[#allocation10 + $0x14d0] sm:$0xff]
        %v3231 = vld [vmem:[#allocation10 + $0x14d8] sm:$0xff]
        %v3232 = vld [vmem:[#allocation10 + $0x14e0] sm:$0xff]
        %v3233 = vld [vmem:[#allocation10 + $0x14e8] sm:$0xff]
        %v3234 = vld [vmem:[#allocation10 + $0x14f0] sm:$0xff]
        %v3235 = vld [vmem:[#allocation10 + $0x14f8] sm:$0xff]
        %v3236 = vld [vmem:[#allocation10 + $0x1500] sm:$0xff]
        %v3237 = vld [vmem:[#allocation10 + $0x1508] sm:$0xff]
        %v3238 = vld [vmem:[#allocation10 + $0x1510] sm:$0xff]
        %v3239 = vld [vmem:[#allocation10 + $0x1518] sm:$0xff]
        %v3240 = vld [vmem:[#allocation10 + $0x1520] sm:$0xff]
        %v3241 = vld [vmem:[#allocation10 + $0x1528] sm:$0xff]
        %v3242 = vld [vmem:[#allocation10 + $0x1530] sm:$0xff]
        %v3243 = vld [vmem:[#allocation10 + $0x1538] sm:$0xff]
        %v3244 = vld [vmem:[#allocation10 + $0x1540] sm:$0xff]
        %v3245 = vld [vmem:[#allocation10 + $0x1548] sm:$0xff]
        %v3246 = vld [vmem:[#allocation10 + $0x1550] sm:$0xff]
        %v3247 = vld [vmem:[#allocation10 + $0x1558] sm:$0xff]
        %v3248 = vld [vmem:[#allocation10 + $0x1560] sm:$0xff]
        %v3249 = vld [vmem:[#allocation10 + $0x1568] sm:$0xff]
        %v3250 = vld [vmem:[#allocation10 + $0x1570] sm:$0xff]
        %v3251 = vld [vmem:[#allocation10 + $0x1578] sm:$0xff]
        %v3252 = vld [vmem:[#allocation10 + $0x1580] sm:$0xff]
        %v3253 = vld [vmem:[#allocation10 + $0x1588] sm:$0xff]
        %v3254 = vld [vmem:[#allocation10 + $0x1590] sm:$0xff]
        %v3255 = vld [vmem:[#allocation10 + $0x1598] sm:$0xff]
        %v3256 = vld [vmem:[#allocation10 + $0x15a0] sm:$0xff]
        %v3257 = vld [vmem:[#allocation10 + $0x15a8] sm:$0xff]
        %v3258 = vld [vmem:[#allocation10 + $0x15b0] sm:$0xff]
        %v3259 = vld [vmem:[#allocation10 + $0x15b8] sm:$0xff]
        %v3260 = vld [vmem:[#allocation10 + $0x15c0] sm:$0xff]
        %v3261 = vld [vmem:[#allocation10 + $0x15c8] sm:$0xff]
        %v3262 = vld [vmem:[#allocation10 + $0x15d0] sm:$0xff]
        %v3263 = vld [vmem:[#allocation10 + $0x15d8] sm:$0xff]
        %v3264 = vld [vmem:[#allocation10 + $0x15e0] sm:$0xff]
        %v3265 = vld [vmem:[#allocation10 + $0x15e8] sm:$0xff]
        %v3266 = vld [vmem:[#allocation10 + $0x15f0] sm:$0xff]
        %v3267 = vld [vmem:[#allocation10 + $0x15f8] sm:$0xff]
        %v3268 = vld [vmem:[#allocation10 + $0x1600] sm:$0xff]
        %v3269 = vld [vmem:[#allocation10 + $0x1608] sm:$0xff]
        %v3270 = vld [vmem:[#allocation10 + $0x1610] sm:$0xff]
        %v3271 = vld [vmem:[#allocation10 + $0x1618] sm:$0xff]
        %v3272 = vld [vmem:[#allocation10 + $0x1620] sm:$0xff]
        %v3273 = vld [vmem:[#allocation10 + $0x1628] sm:$0xff]
        %v3274 = vld [vmem:[#allocation10 + $0x1630] sm:$0xff]
        %v3275 = vld [vmem:[#allocation10 + $0x1638] sm:$0xff]
        %v3276 = vld [vmem:[#allocation10 + $0x1640] sm:$0xff]
        %v3277 = vld [vmem:[#allocation10 + $0x1648] sm:$0xff]
        %v3278 = vld [vmem:[#allocation10 + $0x1650] sm:$0xff]
        %v3279 = vld [vmem:[#allocation10 + $0x1658] sm:$0xff]
        %v3280 = vld [vmem:[#allocation10 + $0x1660] sm:$0xff]
        %v3281 = vld [vmem:[#allocation10 + $0x1668] sm:$0xff]
        %v3282 = vld [vmem:[#allocation10 + $0x1670] sm:$0xff]
        %v3283 = vld [vmem:[#allocation10 + $0x1678] sm:$0xff]
        %v3284 = vld [vmem:[#allocation10 + $0x1680] sm:$0xff]
        %v3285 = vld [vmem:[#allocation10 + $0x1688] sm:$0xff]
        %v3286 = vld [vmem:[#allocation10 + $0x1690] sm:$0xff]
        %v3287 = vld [vmem:[#allocation10 + $0x1698] sm:$0xff]
        %v3288 = vld [vmem:[#allocation10 + $0x16a0] sm:$0xff]
        %v3289 = vld [vmem:[#allocation10 + $0x16a8] sm:$0xff]
        %v3290 = vld [vmem:[#allocation10 + $0x16b0] sm:$0xff]
        %v3291 = vld [vmem:[#allocation10 + $0x16b8] sm:$0xff]
        %v3292 = vld [vmem:[#allocation10 + $0x16c0] sm:$0xff]
        %v3293 = vld [vmem:[#allocation10 + $0x16c8] sm:$0xff]
        %v3294 = vld [vmem:[#allocation10 + $0x16d0] sm:$0xff]
        %v3295 = vld [vmem:[#allocation10 + $0x16d8] sm:$0xff]
        %v3296 = vld [vmem:[#allocation10 + $0x16e0] sm:$0xff]
        %v3297 = vld [vmem:[#allocation10 + $0x16e8] sm:$0xff]
        %v3298 = vld [vmem:[#allocation10 + $0x16f0] sm:$0xff]
        %v3299 = vld [vmem:[#allocation10 + $0x16f8] sm:$0xff]
        %v3300 = vld [vmem:[#allocation10 + $0x1700] sm:$0xff]
        %v3301 = vld [vmem:[#allocation10 + $0x1708] sm:$0xff]
        %v3302 = vld [vmem:[#allocation10 + $0x1710] sm:$0xff]
        %v3303 = vld [vmem:[#allocation10 + $0x1718] sm:$0xff]
        %v3304 = vld [vmem:[#allocation10 + $0x1720] sm:$0xff]
        %v3305 = vld [vmem:[#allocation10 + $0x1728] sm:$0xff]
        %v3306 = vld [vmem:[#allocation10 + $0x1730] sm:$0xff]
        %v3307 = vld [vmem:[#allocation10 + $0x1738] sm:$0xff]
        %v3308 = vld [vmem:[#allocation10 + $0x1740] sm:$0xff]
        %v3309 = vld [vmem:[#allocation10 + $0x1748] sm:$0xff]
        %v3310 = vld [vmem:[#allocation10 + $0x1750] sm:$0xff]
        %v3311 = vld [vmem:[#allocation10 + $0x1758] sm:$0xff]
        %v3312 = vld [vmem:[#allocation10 + $0x1760] sm:$0xff]
        %v3313 = vld [vmem:[#allocation10 + $0x1768] sm:$0xff]
        %v3314 = vld [vmem:[#allocation10 + $0x1770] sm:$0xff]
        %v3315 = vld [vmem:[#allocation10 + $0x1778] sm:$0xff]
        %v3316 = vld [vmem:[#allocation10 + $0x1780] sm:$0xff]
        %v3317 = vld [vmem:[#allocation10 + $0x1788] sm:$0xff]
        %v3318 = vld [vmem:[#allocation10 + $0x1790] sm:$0xff]
        %v3319 = vld [vmem:[#allocation10 + $0x1798] sm:$0xff]
        %v3320 = vld [vmem:[#allocation10 + $0x17a0] sm:$0xff]
        %v3321 = vld [vmem:[#allocation10 + $0x17a8] sm:$0xff]
        %v3322 = vld [vmem:[#allocation10 + $0x17b0] sm:$0xff]
        %v3323 = vld [vmem:[#allocation10 + $0x17b8] sm:$0xff]
        %v3324 = vld [vmem:[#allocation10 + $0x17c0] sm:$0xff]
        %v3325 = vld [vmem:[#allocation10 + $0x17c8] sm:$0xff]
        %v3326 = vld [vmem:[#allocation10 + $0x17d0] sm:$0xff]
        %v3327 = vld [vmem:[#allocation10 + $0x17d8] sm:$0xff]
        %v3328 = vld [vmem:[#allocation10 + $0x17e0] sm:$0xff]
        %v3329 = vld [vmem:[#allocation10 + $0x17e8] sm:$0xff]
        %v3330 = vld [vmem:[#allocation10 + $0x17f0] sm:$0xff]
        %v3331 = vld [vmem:[#allocation10 + $0x17f8] sm:$0xff]
        %v3332 = vld [vmem:[#allocation10 + $0x1800] sm:$0xff]
        %v3333 = vld [vmem:[#allocation10 + $0x1808] sm:$0xff]
        %v3334 = vld [vmem:[#allocation10 + $0x1810] sm:$0xff]
        %v3335 = vld [vmem:[#allocation10 + $0x1818] sm:$0xff]
        %v3336 = vld [vmem:[#allocation10 + $0x1820] sm:$0xff]
        %v3337 = vld [vmem:[#allocation10 + $0x1828] sm:$0xff]
        %v3338 = vld [vmem:[#allocation10 + $0x1830] sm:$0xff]
        %v3339 = vld [vmem:[#allocation10 + $0x1838] sm:$0xff]
        %v3340 = vld [vmem:[#allocation10 + $0x1840] sm:$0xff]
        %v3341 = vld [vmem:[#allocation10 + $0x1848] sm:$0xff]
        %v3342 = vld [vmem:[#allocation10 + $0x1850] sm:$0xff]
        %v3343 = vld [vmem:[#allocation10 + $0x1858] sm:$0xff]
        %v3344 = vld [vmem:[#allocation10 + $0x1860] sm:$0xff]
        %v3345 = vld [vmem:[#allocation10 + $0x1868] sm:$0xff]
        %v3346 = vld [vmem:[#allocation10 + $0x1870] sm:$0xff]
        %v3347 = vld [vmem:[#allocation10 + $0x1878] sm:$0xff]
        %v3348 = vld [vmem:[#allocation10 + $0x1880] sm:$0xff]
        %v3349 = vld [vmem:[#allocation10 + $0x1888] sm:$0xff]
        %v3350 = vld [vmem:[#allocation10 + $0x1890] sm:$0xff]
        %v3351 = vld [vmem:[#allocation10 + $0x1898] sm:$0xff]
        %v3352 = vld [vmem:[#allocation10 + $0x18a0] sm:$0xff]
        %v3353 = vld [vmem:[#allocation10 + $0x18a8] sm:$0xff]
        %v3354 = vld [vmem:[#allocation10 + $0x18b0] sm:$0xff]
        %v3355 = vld [vmem:[#allocation10 + $0x18b8] sm:$0xff]
        %v3356 = vld [vmem:[#allocation10 + $0x18c0] sm:$0xff]
        %v3357 = vld [vmem:[#allocation10 + $0x18c8] sm:$0xff]
        %v3358 = vld [vmem:[#allocation10 + $0x18d0] sm:$0xff]
        %v3359 = vld [vmem:[#allocation10 + $0x18d8] sm:$0xff]
        %v3360 = vld [vmem:[#allocation10 + $0x18e0] sm:$0xff]
        %v3361 = vld [vmem:[#allocation10 + $0x18e8] sm:$0xff]
        %v3362 = vld [vmem:[#allocation10 + $0x18f0] sm:$0xff]
        %v3363 = vld [vmem:[#allocation10 + $0x18f8] sm:$0xff]
        %v3364 = vld [vmem:[#allocation10 + $0x1900] sm:$0xff]
        %v3365 = vld [vmem:[#allocation10 + $0x1908] sm:$0xff]
        %v3366 = vld [vmem:[#allocation10 + $0x1910] sm:$0xff]
        %v3367 = vld [vmem:[#allocation10 + $0x1918] sm:$0xff]
        %v3368 = vld [vmem:[#allocation10 + $0x1920] sm:$0xff]
        %v3369 = vld [vmem:[#allocation10 + $0x1928] sm:$0xff]
        %v3370 = vld [vmem:[#allocation10 + $0x1930] sm:$0xff]
        %v3371 = vld [vmem:[#allocation10 + $0x1938] sm:$0xff]
        %v3372 = vld [vmem:[#allocation10 + $0x1940] sm:$0xff]
        %v3373 = vld [vmem:[#allocation10 + $0x1948] sm:$0xff]
        %v3374 = vld [vmem:[#allocation10 + $0x1950] sm:$0xff]
        %v3375 = vld [vmem:[#allocation10 + $0x1958] sm:$0xff]
        %v3376 = vld [vmem:[#allocation10 + $0x1960] sm:$0xff]
        %v3377 = vld [vmem:[#allocation10 + $0x1968] sm:$0xff]
        %v3378 = vld [vmem:[#allocation10 + $0x1970] sm:$0xff]
        %v3379 = vld [vmem:[#allocation10 + $0x1978] sm:$0xff]
        %v3380 = vld [vmem:[#allocation10 + $0x1980] sm:$0xff]
        %v3381 = vld [vmem:[#allocation10 + $0x1988] sm:$0xff]
        %v3382 = vld [vmem:[#allocation10 + $0x1990] sm:$0xff]
        %v3383 = vld [vmem:[#allocation10 + $0x1998] sm:$0xff]
        %v3384 = vld [vmem:[#allocation10 + $0x19a0] sm:$0xff]
        %v3385 = vld [vmem:[#allocation10 + $0x19a8] sm:$0xff]
        %v3386 = vld [vmem:[#allocation10 + $0x19b0] sm:$0xff]
        %v3387 = vld [vmem:[#allocation10 + $0x19b8] sm:$0xff]
        %v3388 = vld [vmem:[#allocation10 + $0x19c0] sm:$0xff]
        %v3389 = vld [vmem:[#allocation10 + $0x19c8] sm:$0xff]
        %v3390 = vld [vmem:[#allocation10 + $0x19d0] sm:$0xff]
        %v3391 = vld [vmem:[#allocation10 + $0x19d8] sm:$0xff]
        %v3392 = vld [vmem:[#allocation10 + $0x19e0] sm:$0xff]
        %v3393 = vld [vmem:[#allocation10 + $0x19e8] sm:$0xff]
        %v3394 = vld [vmem:[#allocation10 + $0x19f0] sm:$0xff]
        %v3395 = vld [vmem:[#allocation10 + $0x19f8] sm:$0xff]
        %v3396 = vld [vmem:[#allocation10 + $0x1a00] sm:$0xff]
        %v3397 = vld [vmem:[#allocation10 + $0x1a08] sm:$0xff]
        %v3398 = vld [vmem:[#allocation10 + $0x1a10] sm:$0xff]
        %v3399 = vld [vmem:[#allocation10 + $0x1a18] sm:$0xff]
        %v3400 = vld [vmem:[#allocation10 + $0x1a20] sm:$0xff]
        %v3401 = vld [vmem:[#allocation10 + $0x1a28] sm:$0xff]
        %v3402 = vld [vmem:[#allocation10 + $0x1a30] sm:$0xff]
        %v3403 = vld [vmem:[#allocation10 + $0x1a38] sm:$0xff]
        %v3404 = vld [vmem:[#allocation10 + $0x1a40] sm:$0xff]
        %v3405 = vld [vmem:[#allocation10 + $0x1a48] sm:$0xff]
        %v3406 = vld [vmem:[#allocation10 + $0x1a50] sm:$0xff]
        %v3407 = vld [vmem:[#allocation10 + $0x1a58] sm:$0xff]
        %v3408 = vld [vmem:[#allocation10 + $0x1a60] sm:$0xff]
        %v3409 = vld [vmem:[#allocation10 + $0x1a68] sm:$0xff]
        %v3410 = vld [vmem:[#allocation10 + $0x1a70] sm:$0xff]
        %v3411 = vld [vmem:[#allocation10 + $0x1a78] sm:$0xff]
        %v3412 = vld [vmem:[#allocation10 + $0x1a80] sm:$0xff]
        %v3413 = vld [vmem:[#allocation10 + $0x1a88] sm:$0xff]
        %v3414 = vld [vmem:[#allocation10 + $0x1a90] sm:$0xff]
        %v3415 = vld [vmem:[#allocation10 + $0x1a98] sm:$0xff]
        %v3416 = vld [vmem:[#allocation10 + $0x1aa0] sm:$0xff]
        %v3417 = vld [vmem:[#allocation10 + $0x1aa8] sm:$0xff]
        %v3418 = vld [vmem:[#allocation10 + $0x1ab0] sm:$0xff]
        %v3419 = vld [vmem:[#allocation10 + $0x1ab8] sm:$0xff]
        %v3420 = vld [vmem:[#allocation10 + $0x1ac0] sm:$0xff]
        %v3421 = vld [vmem:[#allocation10 + $0x1ac8] sm:$0xff]
        %v3422 = vld [vmem:[#allocation10 + $0x1ad0] sm:$0xff]
        %v3423 = vld [vmem:[#allocation10 + $0x1ad8] sm:$0xff]
        %v3424 = vld [vmem:[#allocation10 + $0x1ae0] sm:$0xff]
        %v3425 = vld [vmem:[#allocation10 + $0x1ae8] sm:$0xff]
        %v3426 = vld [vmem:[#allocation10 + $0x1af0] sm:$0xff]
        %v3427 = vld [vmem:[#allocation10 + $0x1af8] sm:$0xff]
        %v3428 = vld [vmem:[#allocation10 + $0x1b00] sm:$0xff]
        %v3429 = vld [vmem:[#allocation10 + $0x1b08] sm:$0xff]
        %v3430 = vld [vmem:[#allocation10 + $0x1b10] sm:$0xff]
        %v3431 = vld [vmem:[#allocation10 + $0x1b18] sm:$0xff]
        %v3432 = vld [vmem:[#allocation10 + $0x1b20] sm:$0xff]
        %v3433 = vld [vmem:[#allocation10 + $0x1b28] sm:$0xff]
        %v3434 = vld [vmem:[#allocation10 + $0x1b30] sm:$0xff]
        %v3435 = vld [vmem:[#allocation10 + $0x1b38] sm:$0xff]
        %v3436 = vld [vmem:[#allocation10 + $0x1b40] sm:$0xff]
        %v3437 = vld [vmem:[#allocation10 + $0x1b48] sm:$0xff]
        %v3438 = vld [vmem:[#allocation10 + $0x1b50] sm:$0xff]
        %v3439 = vld [vmem:[#allocation10 + $0x1b58] sm:$0xff]
        %v3440 = vld [vmem:[#allocation10 + $0x1b60] sm:$0xff]
        %v3441 = vld [vmem:[#allocation10 + $0x1b68] sm:$0xff]
        %v3442 = vld [vmem:[#allocation10 + $0x1b70] sm:$0xff]
        %v3443 = vld [vmem:[#allocation10 + $0x1b78] sm:$0xff]
        %v3444 = vld [vmem:[#allocation10 + $0x1b80] sm:$0xff]
        %v3445 = vld [vmem:[#allocation10 + $0x1b88] sm:$0xff]
        %v3446 = vld [vmem:[#allocation10 + $0x1b90] sm:$0xff]
        %v3447 = vld [vmem:[#allocation10 + $0x1b98] sm:$0xff]
        %v3448 = vld [vmem:[#allocation10 + $0x1ba0] sm:$0xff]
        %v3449 = vld [vmem:[#allocation10 + $0x1ba8] sm:$0xff]
        %v3450 = vld [vmem:[#allocation10 + $0x1bb0] sm:$0xff]
        %v3451 = vld [vmem:[#allocation10 + $0x1bb8] sm:$0xff]
        %v3452 = vld [vmem:[#allocation10 + $0x1bc0] sm:$0xff]
        %v3453 = vld [vmem:[#allocation10 + $0x1bc8] sm:$0xff]
        %v3454 = vld [vmem:[#allocation10 + $0x1bd0] sm:$0xff]
        %v3455 = vld [vmem:[#allocation10 + $0x1bd8] sm:$0xff]
        %v3456 = vld [vmem:[#allocation10 + $0x1be0] sm:$0xff]
        %v3457 = vld [vmem:[#allocation10 + $0x1be8] sm:$0xff]
        %v3458 = vld [vmem:[#allocation10 + $0x1bf0] sm:$0xff]
        %v3459 = vld [vmem:[#allocation10 + $0x1bf8] sm:$0xff]
        %v3460 = vld [vmem:[#allocation10 + $0x1c00] sm:$0xff]
        %v3461 = vld [vmem:[#allocation10 + $0x1c08] sm:$0xff]
        %v3462 = vld [vmem:[#allocation10 + $0x1c10] sm:$0xff]
        %v3463 = vld [vmem:[#allocation10 + $0x1c18] sm:$0xff]
        %v3464 = vld [vmem:[#allocation10 + $0x1c20] sm:$0xff]
        %v3465 = vld [vmem:[#allocation10 + $0x1c28] sm:$0xff]
        %v3466 = vld [vmem:[#allocation10 + $0x1c30] sm:$0xff]
        %v3467 = vld [vmem:[#allocation10 + $0x1c38] sm:$0xff]
        %v3468 = vld [vmem:[#allocation10 + $0x1c40] sm:$0xff]
        %v3469 = vld [vmem:[#allocation10 + $0x1c48] sm:$0xff]
        %v3470 = vld [vmem:[#allocation10 + $0x1c50] sm:$0xff]
        %v3471 = vld [vmem:[#allocation10 + $0x1c58] sm:$0xff]
        %v3472 = vld [vmem:[#allocation10 + $0x1c60] sm:$0xff]
        %v3473 = vld [vmem:[#allocation10 + $0x1c68] sm:$0xff]
        %v3474 = vld [vmem:[#allocation10 + $0x1c70] sm:$0xff]
        %v3475 = vld [vmem:[#allocation10 + $0x1c78] sm:$0xff]
        %v3476 = vld [vmem:[#allocation10 + $0x1c80] sm:$0xff]
        %v3477 = vld [vmem:[#allocation10 + $0x1c88] sm:$0xff]
        %v3478 = vld [vmem:[#allocation10 + $0x1c90] sm:$0xff]
        %v3479 = vld [vmem:[#allocation10 + $0x1c98] sm:$0xff]
        %v3480 = vld [vmem:[#allocation10 + $0x1ca0] sm:$0xff]
        %v3481 = vld [vmem:[#allocation10 + $0x1ca8] sm:$0xff]
        %v3482 = vld [vmem:[#allocation10 + $0x1cb0] sm:$0xff]
        %v3483 = vld [vmem:[#allocation10 + $0x1cb8] sm:$0xff]
        %v3484 = vld [vmem:[#allocation10 + $0x1cc0] sm:$0xff]
        %v3485 = vld [vmem:[#allocation10 + $0x1cc8] sm:$0xff]
        %v3486 = vld [vmem:[#allocation10 + $0x1cd0] sm:$0xff]
        %v3487 = vld [vmem:[#allocation10 + $0x1cd8] sm:$0xff]
        %v3488 = vld [vmem:[#allocation10 + $0x1ce0] sm:$0xff]
        %v3489 = vld [vmem:[#allocation10 + $0x1ce8] sm:$0xff]
        %v3490 = vld [vmem:[#allocation10 + $0x1cf0] sm:$0xff]
        %v3491 = vld [vmem:[#allocation10 + $0x1cf8] sm:$0xff]
        %v3492 = vld [vmem:[#allocation10 + $0x1d00] sm:$0xff]
        %v3493 = vld [vmem:[#allocation10 + $0x1d08] sm:$0xff]
        %v3494 = vld [vmem:[#allocation10 + $0x1d10] sm:$0xff]
        %v3495 = vld [vmem:[#allocation10 + $0x1d18] sm:$0xff]
        %v3496 = vld [vmem:[#allocation10 + $0x1d20] sm:$0xff]
        %v3497 = vld [vmem:[#allocation10 + $0x1d28] sm:$0xff]
        %v3498 = vld [vmem:[#allocation10 + $0x1d30] sm:$0xff]
        %v3499 = vld [vmem:[#allocation10 + $0x1d38] sm:$0xff]
        %v3500 = vld [vmem:[#allocation10 + $0x1d40] sm:$0xff]
        %v3501 = vld [vmem:[#allocation10 + $0x1d48] sm:$0xff]
        %v3502 = vld [vmem:[#allocation10 + $0x1d50] sm:$0xff]
        %v3503 = vld [vmem:[#allocation10 + $0x1d58] sm:$0xff]
        %v3504 = vld [vmem:[#allocation10 + $0x1d60] sm:$0xff]
        %v3505 = vld [vmem:[#allocation10 + $0x1d68] sm:$0xff]
        %v3506 = vld [vmem:[#allocation10 + $0x1d70] sm:$0xff]
        %v3507 = vld [vmem:[#allocation10 + $0x1d78] sm:$0xff]
        %v3508 = vld [vmem:[#allocation10 + $0x1d80] sm:$0xff]
        %v3509 = vld [vmem:[#allocation10 + $0x1d88] sm:$0xff]
        %v3510 = vld [vmem:[#allocation10 + $0x1d90] sm:$0xff]
        %v3511 = vld [vmem:[#allocation10 + $0x1d98] sm:$0xff]
        %v3512 = vld [vmem:[#allocation10 + $0x1da0] sm:$0xff]
        %v3513 = vld [vmem:[#allocation10 + $0x1da8] sm:$0xff]
        %v3514 = vld [vmem:[#allocation10 + $0x1db0] sm:$0xff]
        %v3515 = vld [vmem:[#allocation10 + $0x1db8] sm:$0xff]
        %v3516 = vld [vmem:[#allocation10 + $0x1dc0] sm:$0xff]
        %v3517 = vld [vmem:[#allocation10 + $0x1dc8] sm:$0xff]
        %v3518 = vld [vmem:[#allocation10 + $0x1dd0] sm:$0xff]
        %v3519 = vld [vmem:[#allocation10 + $0x1dd8] sm:$0xff]
        %v3520 = vld [vmem:[#allocation10 + $0x1de0] sm:$0xff]
        %v3521 = vld [vmem:[#allocation10 + $0x1de8] sm:$0xff]
        %v3522 = vld [vmem:[#allocation10 + $0x1df0] sm:$0xff]
        %v3523 = vld [vmem:[#allocation10 + $0x1df8] sm:$0xff]
        %v3524 = vld [vmem:[#allocation10 + $0x1e00] sm:$0xff]
        %v3525 = vld [vmem:[#allocation10 + $0x1e08] sm:$0xff]
        %v3526 = vld [vmem:[#allocation10 + $0x1e10] sm:$0xff]
        %v3527 = vld [vmem:[#allocation10 + $0x1e18] sm:$0xff]
        %v3528 = vld [vmem:[#allocation10 + $0x1e20] sm:$0xff]
        %v3529 = vld [vmem:[#allocation10 + $0x1e28] sm:$0xff]
        %v3530 = vld [vmem:[#allocation10 + $0x1e30] sm:$0xff]
        %v3531 = vld [vmem:[#allocation10 + $0x1e38] sm:$0xff]
        %v3532 = vld [vmem:[#allocation10 + $0x1e40] sm:$0xff]
        %v3533 = vld [vmem:[#allocation10 + $0x1e48] sm:$0xff]
        %v3534 = vld [vmem:[#allocation10 + $0x1e50] sm:$0xff]
        %v3535 = vld [vmem:[#allocation10 + $0x1e58] sm:$0xff]
        %v3536 = vld [vmem:[#allocation10 + $0x1e60] sm:$0xff]
        %v3537 = vld [vmem:[#allocation10 + $0x1e68] sm:$0xff]
        %v3538 = vld [vmem:[#allocation10 + $0x1e70] sm:$0xff]
        %v3539 = vld [vmem:[#allocation10 + $0x1e78] sm:$0xff]
        %v3540 = vld [vmem:[#allocation10 + $0x1e80] sm:$0xff]
        %v3541 = vld [vmem:[#allocation10 + $0x1e88] sm:$0xff]
        %v3542 = vld [vmem:[#allocation10 + $0x1e90] sm:$0xff]
        %v3543 = vld [vmem:[#allocation10 + $0x1e98] sm:$0xff]
        %v3544 = vld [vmem:[#allocation10 + $0x1ea0] sm:$0xff]
        %v3545 = vld [vmem:[#allocation10 + $0x1ea8] sm:$0xff]
        %v3546 = vld [vmem:[#allocation10 + $0x1eb0] sm:$0xff]
        %v3547 = vld [vmem:[#allocation10 + $0x1eb8] sm:$0xff]
        %v3548 = vld [vmem:[#allocation10 + $0x1ec0] sm:$0xff]
        %v3549 = vld [vmem:[#allocation10 + $0x1ec8] sm:$0xff]
        %v3550 = vld [vmem:[#allocation10 + $0x1ed0] sm:$0xff]
        %v3551 = vld [vmem:[#allocation10 + $0x1ed8] sm:$0xff]
        %v3552 = vld [vmem:[#allocation10 + $0x1ee0] sm:$0xff]
        %v3553 = vld [vmem:[#allocation10 + $0x1ee8] sm:$0xff]
        %v3554 = vld [vmem:[#allocation10 + $0x1ef0] sm:$0xff]
        %v3555 = vld [vmem:[#allocation10 + $0x1ef8] sm:$0xff]
        %v3556 = vld [vmem:[#allocation10 + $0x1f00] sm:$0xff]
        %v3557 = vld [vmem:[#allocation10 + $0x1f08] sm:$0xff]
        %v3558 = vld [vmem:[#allocation10 + $0x1f10] sm:$0xff]
        %v3559 = vld [vmem:[#allocation10 + $0x1f18] sm:$0xff]
        %v3560 = vld [vmem:[#allocation10 + $0x1f20] sm:$0xff]
        %v3561 = vld [vmem:[#allocation10 + $0x1f28] sm:$0xff]
        %v3562 = vld [vmem:[#allocation10 + $0x1f30] sm:$0xff]
        %v3563 = vld [vmem:[#allocation10 + $0x1f38] sm:$0xff]
        %v3564 = vld [vmem:[#allocation10 + $0x1f40] sm:$0xff]
        %v3565 = vld [vmem:[#allocation10 + $0x1f48] sm:$0xff]
        %v3566 = vld [vmem:[#allocation10 + $0x1f50] sm:$0xff]
        %v3567 = vld [vmem:[#allocation10 + $0x1f58] sm:$0xff]
        %v3568 = vld [vmem:[#allocation10 + $0x1f60] sm:$0xff]
        %v3569 = vld [vmem:[#allocation10 + $0x1f68] sm:$0xff]
        %v3570 = vld [vmem:[#allocation10 + $0x1f70] sm:$0xff]
        %v3571 = vld [vmem:[#allocation10 + $0x1f78] sm:$0xff]
        %v3572 = vld [vmem:[#allocation10 + $0x1f80] sm:$0xff]
        %v3573 = vld [vmem:[#allocation10 + $0x1f88] sm:$0xff]
        %v3574 = vld [vmem:[#allocation10 + $0x1f90] sm:$0xff]
        %v3575 = vld [vmem:[#allocation10 + $0x1f98] sm:$0xff]
        %v3576 = vld [vmem:[#allocation10 + $0x1fa0] sm:$0xff]
        %v3577 = vld [vmem:[#allocation10 + $0x1fa8] sm:$0xff]
        %v3578 = vld [vmem:[#allocation10 + $0x1fb0] sm:$0xff]
        %v3579 = vld [vmem:[#allocation10 + $0x1fb8] sm:$0xff]
        %v3580 = vld [vmem:[#allocation10 + $0x1fc0] sm:$0xff]
        %v3581 = vld [vmem:[#allocation10 + $0x1fc8] sm:$0xff]
        %v3582 = vld [vmem:[#allocation10 + $0x1fd0] sm:$0xff]
        %v3583 = vld [vmem:[#allocation10 + $0x1fd8] sm:$0xff]
        %v3584 = vld [vmem:[#allocation10 + $0x1fe0] sm:$0xff]
        %v3585 = vld [vmem:[#allocation10 + $0x1fe8] sm:$0xff]
        %v3586 = vld [vmem:[#allocation10 + $0x1ff0] sm:$0xff]
        %v3587 = vld [vmem:[#allocation10 + $0x1ff8] sm:$0xff]
        %v3588 = vld [vmem:[#allocation10 + $0x2000] sm:$0xff]
        %v3589 = vld [vmem:[#allocation10 + $0x2008] sm:$0xff]
        %v3590 = vld [vmem:[#allocation10 + $0x2010] sm:$0xff]
        %v3591 = vld [vmem:[#allocation10 + $0x2018] sm:$0xff]
        %v3592 = vld [vmem:[#allocation10 + $0x2020] sm:$0xff]
        %v3593 = vld [vmem:[#allocation10 + $0x2028] sm:$0xff]
        %v3594 = vld [vmem:[#allocation10 + $0x2030] sm:$0xff]
        %v3595 = vld [vmem:[#allocation10 + $0x2038] sm:$0xff]
        %v3596 = vld [vmem:[#allocation10 + $0x2040] sm:$0xff]
        %v3597 = vld [vmem:[#allocation10 + $0x2048] sm:$0xff]
        %v3598 = vld [vmem:[#allocation10 + $0x2050] sm:$0xff]
        %v3599 = vld [vmem:[#allocation10 + $0x2058] sm:$0xff]
        %v3600 = vld [vmem:[#allocation10 + $0x2060] sm:$0xff]
        %v3601 = vld [vmem:[#allocation10 + $0x2068] sm:$0xff]
        %v3602 = vld [vmem:[#allocation10 + $0x2070] sm:$0xff]
        %v3603 = vld [vmem:[#allocation10 + $0x2078] sm:$0xff]
        %v3604 = vld [vmem:[#allocation10 + $0x2080] sm:$0xff]
        %v3605 = vld [vmem:[#allocation10 + $0x2088] sm:$0xff]
        %v3606 = vld [vmem:[#allocation10 + $0x2090] sm:$0xff]
        %v3607 = vld [vmem:[#allocation10 + $0x2098] sm:$0xff]
        %v3608 = vld [vmem:[#allocation10 + $0x20a0] sm:$0xff]
        %v3609 = vld [vmem:[#allocation10 + $0x20a8] sm:$0xff]
        %v3610 = vld [vmem:[#allocation10 + $0x20b0] sm:$0xff]
        %v3611 = vld [vmem:[#allocation10 + $0x20b8] sm:$0xff]
        %v3612 = vld [vmem:[#allocation10 + $0x20c0] sm:$0xff]
        %v3613 = vld [vmem:[#allocation10 + $0x20c8] sm:$0xff]
        %v3614 = vld [vmem:[#allocation10 + $0x20d0] sm:$0xff]
        %v3615 = vld [vmem:[#allocation10 + $0x20d8] sm:$0xff]
        %v3616 = vld [vmem:[#allocation10 + $0x20e0] sm:$0xff]
        %v3617 = vld [vmem:[#allocation10 + $0x20e8] sm:$0xff]
        %v3618 = vld [vmem:[#allocation10 + $0x20f0] sm:$0xff]
        %v3619 = vld [vmem:[#allocation10 + $0x20f8] sm:$0xff]
        %v3620 = vld [vmem:[#allocation10 + $0x2100] sm:$0xff]
        %v3621 = vld [vmem:[#allocation10 + $0x2108] sm:$0xff]
        %v3622 = vld [vmem:[#allocation10 + $0x2110] sm:$0xff]
        %v3623 = vld [vmem:[#allocation10 + $0x2118] sm:$0xff]
        %v3624 = vld [vmem:[#allocation10 + $0x2120] sm:$0xff]
        %v3625 = vld [vmem:[#allocation10 + $0x2128] sm:$0xff]
        %v3626 = vld [vmem:[#allocation10 + $0x2130] sm:$0xff]
        %v3627 = vld [vmem:[#allocation10 + $0x2138] sm:$0xff]
        %v3628 = vld [vmem:[#allocation10 + $0x2140] sm:$0xff]
        %v3629 = vld [vmem:[#allocation10 + $0x2148] sm:$0xff]
        %v3630 = vld [vmem:[#allocation10 + $0x2150] sm:$0xff]
        %v3631 = vld [vmem:[#allocation10 + $0x2158] sm:$0xff]
        %v3632 = vld [vmem:[#allocation10 + $0x2160] sm:$0xff]
        %v3633 = vld [vmem:[#allocation10 + $0x2168] sm:$0xff]
        %v3634 = vld [vmem:[#allocation10 + $0x2170] sm:$0xff]
        %v3635 = vld [vmem:[#allocation10 + $0x2178] sm:$0xff]
        %v3636 = vld [vmem:[#allocation10 + $0x2180] sm:$0xff]
        %v3637 = vld [vmem:[#allocation10 + $0x2188] sm:$0xff]
        %v3638 = vld [vmem:[#allocation10 + $0x2190] sm:$0xff]
        %v3639 = vld [vmem:[#allocation10 + $0x2198] sm:$0xff]
        %v3640 = vld [vmem:[#allocation10 + $0x21a0] sm:$0xff]
        %v3641 = vld [vmem:[#allocation10 + $0x21a8] sm:$0xff]
        %v3642 = vld [vmem:[#allocation10 + $0x21b0] sm:$0xff]
        %v3643 = vld [vmem:[#allocation10 + $0x21b8] sm:$0xff]
        %v3644 = vld [vmem:[#allocation10 + $0x21c0] sm:$0xff]
        %v3645 = vld [vmem:[#allocation10 + $0x21c8] sm:$0xff]
        %v3646 = vld [vmem:[#allocation10 + $0x21d0] sm:$0xff]
        %v3647 = vld [vmem:[#allocation10 + $0x21d8] sm:$0xff]
        %v3648 = vld [vmem:[#allocation10 + $0x21e0] sm:$0xff]
        %v3649 = vld [vmem:[#allocation10 + $0x21e8] sm:$0xff]
        %v3650 = vld [vmem:[#allocation10 + $0x21f0] sm:$0xff]
        %v3651 = vld [vmem:[#allocation10 + $0x21f8] sm:$0xff]
        %v3652 = vld [vmem:[#allocation10 + $0x2200] sm:$0xff]
        %v3653 = vld [vmem:[#allocation10 + $0x2208] sm:$0xff]
        %v3654 = vld [vmem:[#allocation10 + $0x2210] sm:$0xff]
        %v3655 = vld [vmem:[#allocation10 + $0x2218] sm:$0xff]
        %v3656 = vld [vmem:[#allocation10 + $0x2220] sm:$0xff]
        %v3657 = vld [vmem:[#allocation10 + $0x2228] sm:$0xff]
        %v3658 = vld [vmem:[#allocation10 + $0x2230] sm:$0xff]
        %v3659 = vld [vmem:[#allocation10 + $0x2238] sm:$0xff]
        %v3660 = vld [vmem:[#allocation10 + $0x2240] sm:$0xff]
        %v3661 = vld [vmem:[#allocation10 + $0x2248] sm:$0xff]
        %v3662 = vld [vmem:[#allocation10 + $0x2250] sm:$0xff]
        %v3663 = vld [vmem:[#allocation10 + $0x2258] sm:$0xff]
        %v3664 = vld [vmem:[#allocation10 + $0x2260] sm:$0xff]
        %v3665 = vld [vmem:[#allocation10 + $0x2268] sm:$0xff]
        %v3666 = vld [vmem:[#allocation10 + $0x2270] sm:$0xff]
        %v3667 = vld [vmem:[#allocation10 + $0x2278] sm:$0xff]
        %v3668 = vld [vmem:[#allocation10 + $0x2280] sm:$0xff]
        %v3669 = vld [vmem:[#allocation10 + $0x2288] sm:$0xff]
        %v3670 = vld [vmem:[#allocation10 + $0x2290] sm:$0xff]
        %v3671 = vld [vmem:[#allocation10 + $0x2298] sm:$0xff]
        %v3672 = vld [vmem:[#allocation10 + $0x22a0] sm:$0xff]
        %v3673 = vld [vmem:[#allocation10 + $0x22a8] sm:$0xff]
        %v3674 = vld [vmem:[#allocation10 + $0x22b0] sm:$0xff]
        %v3675 = vld [vmem:[#allocation10 + $0x22b8] sm:$0xff]
        %v3676 = vld [vmem:[#allocation10 + $0x22c0] sm:$0xff]
        %v3677 = vld [vmem:[#allocation10 + $0x22c8] sm:$0xff]
        %v3678 = vld [vmem:[#allocation10 + $0x22d0] sm:$0xff]
        %v3679 = vld [vmem:[#allocation10 + $0x22d8] sm:$0xff]
        %v3680 = vld [vmem:[#allocation10 + $0x22e0] sm:$0xff]
        %v3681 = vld [vmem:[#allocation10 + $0x22e8] sm:$0xff]
        %v3682 = vld [vmem:[#allocation10 + $0x22f0] sm:$0xff]
        %v3683 = vld [vmem:[#allocation10 + $0x22f8] sm:$0xff]
        %v3684 = vld [vmem:[#allocation10 + $0x2300] sm:$0xff]
        %v3685 = vld [vmem:[#allocation10 + $0x2308] sm:$0xff]
        %v3686 = vld [vmem:[#allocation10 + $0x2310] sm:$0xff]
        %v3687 = vld [vmem:[#allocation10 + $0x2318] sm:$0xff]
        %v3688 = vld [vmem:[#allocation10 + $0x2320] sm:$0xff]
        %v3689 = vld [vmem:[#allocation10 + $0x2328] sm:$0xff]
        %v3690 = vld [vmem:[#allocation10 + $0x2330] sm:$0xff]
        %v3691 = vld [vmem:[#allocation10 + $0x2338] sm:$0xff]
        %v3692 = vld [vmem:[#allocation10 + $0x2340] sm:$0xff]
        %v3693 = vld [vmem:[#allocation10 + $0x2348] sm:$0xff]
        %v3694 = vld [vmem:[#allocation10 + $0x2350] sm:$0xff]
        %v3695 = vld [vmem:[#allocation10 + $0x2358] sm:$0xff]
        %v3696 = vld [vmem:[#allocation10 + $0x2360] sm:$0xff]
        %v3697 = vld [vmem:[#allocation10 + $0x2368] sm:$0xff]
        %v3698 = vld [vmem:[#allocation10 + $0x2370] sm:$0xff]
        %v3699 = vld [vmem:[#allocation10 + $0x2378] sm:$0xff]
        %v3700 = vld [vmem:[#allocation10 + $0x2380] sm:$0xff]
        %v3701 = vld [vmem:[#allocation10 + $0x2388] sm:$0xff]
        %v3702 = vld [vmem:[#allocation10 + $0x2390] sm:$0xff]
        %v3703 = vld [vmem:[#allocation10 + $0x2398] sm:$0xff]
        %v3704 = vld [vmem:[#allocation10 + $0x23a0] sm:$0xff]
        %v3705 = vld [vmem:[#allocation10 + $0x23a8] sm:$0xff]
        %v3706 = vld [vmem:[#allocation10 + $0x23b0] sm:$0xff]
        %v3707 = vld [vmem:[#allocation10 + $0x23b8] sm:$0xff]
        %v3708 = vld [vmem:[#allocation10 + $0x23c0] sm:$0xff]
        %v3709 = vld [vmem:[#allocation10 + $0x23c8] sm:$0xff]
        %v3710 = vld [vmem:[#allocation10 + $0x23d0] sm:$0xff]
        %v3711 = vld [vmem:[#allocation10 + $0x23d8] sm:$0xff]
        %v3712 = vld [vmem:[#allocation10 + $0x23e0] sm:$0xff]
        %v3713 = vld [vmem:[#allocation10 + $0x23e8] sm:$0xff]
        %v3714 = vld [vmem:[#allocation10 + $0x23f0] sm:$0xff]
        %v3715 = vld [vmem:[#allocation10 + $0x23f8] sm:$0xff]
        %v3716 = vld [vmem:[#allocation11] sm:$0xf]
        %v3720 = vperm.slane %v2561, 0
        %v3721 = vperm.slane %v2561, 1
        %v3722 = vperm.slane %v2561, 2
        %v3723 = vperm.slane %v2561, 3
        %v3724 = vperm.slane %v2561, 4
        %v3725 = vperm.slane %v2561, 5
        %v3726 = vperm.slane %v2561, 6
        %v3727 = vperm.slane %v2561, 7
        %v3728 = vperm.slane %v2562, 0
        %v3729 = vperm.slane %v2562, 1
        %v3730 = vperm.slane %v2562, 2
        %v3731 = vperm.slane %v2562, 3
        %v3732 = vperm.slane %v2562, 4
        %v3733 = vperm.slane %v2562, 5
        %v3734 = vperm.slane %v2562, 6
        %v3735 = vperm.slane %v2562, 7
        %v3736 = vperm.slane %v2563, 0
        %v3737 = vperm.slane %v2563, 1
        %v3757 = vperm.slane %v3716, 0
        %v3758 = vperm.slane %v3716, 1
        %v3759 = vperm.slane %v3716, 2
        %v3760 = vperm.slane %v3716, 3
        %3765 = vmatpush.msra.mxu0 %v2624
        %3766 = vmatpush.msra.mxu0 %v2620
        %3767 = vmatpush.msra.mxu0 %v2616
        %3768 = vmatpush.msra.mxu0 %v2612
        %3769 = vmatpush.msra.mxu0 %v2608
        %3770 = vmatpush.msra.mxu0 %v2604
        %3771 = vmatpush.msra.mxu0 %v2600
        %3772 = vmatpush.msra.mxu0 %v2596
        %3773 = vmatpush.msra.mxu0 %v2592
        %3774 = vmatpush.msra.mxu0 %v2588
        %3775 = vmatpush.msra.mxu0 %v2584
        %3776 = vmatpush.msra.mxu0 %v2580
        %3777 = vmatpush.msra.mxu0 %v2576
        %3778 = vmatpush.msra.mxu0 %v2572
        %3779 = vmatpush.msra.mxu0 %v2568
        %3780 = vmatpush.msra.mxu0 %v2564
        %3781 = vmatmul.f32.gmra.mxu0 %v3720
        %v3782 = vpop.f32.mrf.mxu0
        %v3783 = vadd.f32 %v3757, %v3782
        %3784 = vdwg.mxu0
        %3785 = vmatpush.msra.mxu0 %v2688
        %3786 = vmatpush.msra.mxu0 %v2684
        %3787 = vmatpush.msra.mxu0 %v2680
        %3788 = vmatpush.msra.mxu0 %v2676
        %3789 = vmatpush.msra.mxu0 %v2672
        %3790 = vmatpush.msra.mxu0 %v2668
        %3791 = vmatpush.msra.mxu0 %v2664
        %3792 = vmatpush.msra.mxu0 %v2660
        %3793 = vmatpush.msra.mxu0 %v2656
        %3794 = vmatpush.msra.mxu0 %v2652
        %3795 = vmatpush.msra.mxu0 %v2648
        %3796 = vmatpush.msra.mxu0 %v2644
        %3797 = vmatpush.msra.mxu0 %v2640
        %3798 = vmatpush.msra.mxu0 %v2636
        %3799 = vmatpush.msra.mxu0 %v2632
        %3800 = vmatpush.msra.mxu0 %v2628
        %3801 = vmatmul.f32.gmra.mxu0 %v3721
        %v3802 = vpop.f32.mrf.mxu0
        %v3803 = vadd.f32 %v3783, %v3802
        %3804 = vdwg.mxu0
        %3805 = vmatpush.msra.mxu0 %v2752
        %3806 = vmatpush.msra.mxu0 %v2748
        %3807 = vmatpush.msra.mxu0 %v2744
        %3808 = vmatpush.msra.mxu0 %v2740
        %3809 = vmatpush.msra.mxu0 %v2736
        %3810 = vmatpush.msra.mxu0 %v2732
        %3811 = vmatpush.msra.mxu0 %v2728
        %3812 = vmatpush.msra.mxu0 %v2724
        %3813 = vmatpush.msra.mxu0 %v2720
        %3814 = vmatpush.msra.mxu0 %v2716
        %3815 = vmatpush.msra.mxu0 %v2712
        %3816 = vmatpush.msra.mxu0 %v2708
        %3817 = vmatpush.msra.mxu0 %v2704
        %3818 = vmatpush.msra.mxu0 %v2700
        %3819 = vmatpush.msra.mxu0 %v2696
        %3820 = vmatpush.msra.mxu0 %v2692
        %3821 = vmatmul.f32.gmra.mxu0 %v3722
        %v3822 = vpop.f32.mrf.mxu0
        %v3823 = vadd.f32 %v3803, %v3822
        %3824 = vdwg.mxu0
        %3825 = vmatpush.msra.mxu0 %v2816
        %3826 = vmatpush.msra.mxu0 %v2812
        %3827 = vmatpush.msra.mxu0 %v2808
        %3828 = vmatpush.msra.mxu0 %v2804
        %3829 = vmatpush.msra.mxu0 %v2800
        %3830 = vmatpush.msra.mxu0 %v2796
        %3831 = vmatpush.msra.mxu0 %v2792
        %3832 = vmatpush.msra.mxu0 %v2788
        %3833 = vmatpush.msra.mxu0 %v2784
        %3834 = vmatpush.msra.mxu0 %v2780
        %3835 = vmatpush.msra.mxu0 %v2776
        %3836 = vmatpush.msra.mxu0 %v2772
        %3837 = vmatpush.msra.mxu0 %v2768
        %3838 = vmatpush.msra.mxu0 %v2764
        %3839 = vmatpush.msra.mxu0 %v2760
        %3840 = vmatpush.msra.mxu0 %v2756
        %3841 = vmatmul.f32.gmra.mxu0 %v3723
        %v3842 = vpop.f32.mrf.mxu0
        %v3843 = vadd.f32 %v3823, %v3842
        %3844 = vdwg.mxu0
        %3845 = vmatpush.msra.mxu0 %v2880
        %3846 = vmatpush.msra.mxu0 %v2876
        %3847 = vmatpush.msra.mxu0 %v2872
        %3848 = vmatpush.msra.mxu0 %v2868
        %3849 = vmatpush.msra.mxu0 %v2864
        %3850 = vmatpush.msra.mxu0 %v2860
        %3851 = vmatpush.msra.mxu0 %v2856
        %3852 = vmatpush.msra.mxu0 %v2852
        %3853 = vmatpush.msra.mxu0 %v2848
        %3854 = vmatpush.msra.mxu0 %v2844
        %3855 = vmatpush.msra.mxu0 %v2840
        %3856 = vmatpush.msra.mxu0 %v2836
        %3857 = vmatpush.msra.mxu0 %v2832
        %3858 = vmatpush.msra.mxu0 %v2828
        %3859 = vmatpush.msra.mxu0 %v2824
        %3860 = vmatpush.msra.mxu0 %v2820
        %3861 = vmatmul.f32.gmra.mxu0 %v3724
        %v3862 = vpop.f32.mrf.mxu0
        %v3863 = vadd.f32 %v3843, %v3862
        %3864 = vdwg.mxu0
        %3865 = vmatpush.msra.mxu0 %v2944
        %3866 = vmatpush.msra.mxu0 %v2940
        %3867 = vmatpush.msra.mxu0 %v2936
        %3868 = vmatpush.msra.mxu0 %v2932
        %3869 = vmatpush.msra.mxu0 %v2928
        %3870 = vmatpush.msra.mxu0 %v2924
        %3871 = vmatpush.msra.mxu0 %v2920
        %3872 = vmatpush.msra.mxu0 %v2916
        %3873 = vmatpush.msra.mxu0 %v2912
        %3874 = vmatpush.msra.mxu0 %v2908
        %3875 = vmatpush.msra.mxu0 %v2904
        %3876 = vmatpush.msra.mxu0 %v2900
        %3877 = vmatpush.msra.mxu0 %v2896
        %3878 = vmatpush.msra.mxu0 %v2892
        %3879 = vmatpush.msra.mxu0 %v2888
        %3880 = vmatpush.msra.mxu0 %v2884
        %3881 = vmatmul.f32.gmra.mxu0 %v3725
        %v3882 = vpop.f32.mrf.mxu0
        %v3883 = vadd.f32 %v3863, %v3882
        %3884 = vdwg.mxu0
        %3885 = vmatpush.msra.mxu0 %v3008
        %3886 = vmatpush.msra.mxu0 %v3004
        %3887 = vmatpush.msra.mxu0 %v3000
        %3888 = vmatpush.msra.mxu0 %v2996
        %3889 = vmatpush.msra.mxu0 %v2992
        %3890 = vmatpush.msra.mxu0 %v2988
        %3891 = vmatpush.msra.mxu0 %v2984
        %3892 = vmatpush.msra.mxu0 %v2980
        %3893 = vmatpush.msra.mxu0 %v2976
        %3894 = vmatpush.msra.mxu0 %v2972
        %3895 = vmatpush.msra.mxu0 %v2968
        %3896 = vmatpush.msra.mxu0 %v2964
        %3897 = vmatpush.msra.mxu0 %v2960
        %3898 = vmatpush.msra.mxu0 %v2956
        %3899 = vmatpush.msra.mxu0 %v2952
        %3900 = vmatpush.msra.mxu0 %v2948
        %3901 = vmatmul.f32.gmra.mxu0 %v3726
        %v3902 = vpop.f32.mrf.mxu0
        %v3903 = vadd.f32 %v3883, %v3902
        %3904 = vdwg.mxu0
        %3905 = vmatpush.msra.mxu0 %v3072
        %3906 = vmatpush.msra.mxu0 %v3068
        %3907 = vmatpush.msra.mxu0 %v3064
        %3908 = vmatpush.msra.mxu0 %v3060
        %3909 = vmatpush.msra.mxu0 %v3056
        %3910 = vmatpush.msra.mxu0 %v3052
        %3911 = vmatpush.msra.mxu0 %v3048
        %3912 = vmatpush.msra.mxu0 %v3044
        %3913 = vmatpush.msra.mxu0 %v3040
        %3914 = vmatpush.msra.mxu0 %v3036
        %3915 = vmatpush.msra.mxu0 %v3032
        %3916 = vmatpush.msra.mxu0 %v3028
        %3917 = vmatpush.msra.mxu0 %v3024
        %3918 = vmatpush.msra.mxu0 %v3020
        %3919 = vmatpush.msra.mxu0 %v3016
        %3920 = vmatpush.msra.mxu0 %v3012
        %3921 = vmatmul.f32.gmra.mxu0 %v3727
        %v3922 = vpop.f32.mrf.mxu0
        %v3923 = vadd.f32 %v3903, %v3922
        %3924 = vdwg.mxu0
        %3925 = vmatpush.msra.mxu0 %v3136
        %3926 = vmatpush.msra.mxu0 %v3132
        %3927 = vmatpush.msra.mxu0 %v3128
        %3928 = vmatpush.msra.mxu0 %v3124
        %3929 = vmatpush.msra.mxu0 %v3120
        %3930 = vmatpush.msra.mxu0 %v3116
        %3931 = vmatpush.msra.mxu0 %v3112
        %3932 = vmatpush.msra.mxu0 %v3108
        %3933 = vmatpush.msra.mxu0 %v3104
        %3934 = vmatpush.msra.mxu0 %v3100
        %3935 = vmatpush.msra.mxu0 %v3096
        %3936 = vmatpush.msra.mxu0 %v3092
        %3937 = vmatpush.msra.mxu0 %v3088
        %3938 = vmatpush.msra.mxu0 %v3084
        %3939 = vmatpush.msra.mxu0 %v3080
        %3940 = vmatpush.msra.mxu0 %v3076
        %3941 = vmatmul.f32.gmra.mxu0 %v3728
        %v3942 = vpop.f32.mrf.mxu0
        %v3943 = vadd.f32 %v3923, %v3942
        %3944 = vdwg.mxu0
        %3945 = vmatpush.msra.mxu0 %v3200
        %3946 = vmatpush.msra.mxu0 %v3196
        %3947 = vmatpush.msra.mxu0 %v3192
        %3948 = vmatpush.msra.mxu0 %v3188
        %3949 = vmatpush.msra.mxu0 %v3184
        %3950 = vmatpush.msra.mxu0 %v3180
        %3951 = vmatpush.msra.mxu0 %v3176
        %3952 = vmatpush.msra.mxu0 %v3172
        %3953 = vmatpush.msra.mxu0 %v3168
        %3954 = vmatpush.msra.mxu0 %v3164
        %3955 = vmatpush.msra.mxu0 %v3160
        %3956 = vmatpush.msra.mxu0 %v3156
        %3957 = vmatpush.msra.mxu0 %v3152
        %3958 = vmatpush.msra.mxu0 %v3148
        %3959 = vmatpush.msra.mxu0 %v3144
        %3960 = vmatpush.msra.mxu0 %v3140
        %3961 = vmatmul.f32.gmra.mxu0 %v3729
        %v3962 = vpop.f32.mrf.mxu0
        %v3963 = vadd.f32 %v3943, %v3962
        %3964 = vdwg.mxu0
        %3965 = vmatpush.msra.mxu0 %v3264
        %3966 = vmatpush.msra.mxu0 %v3260
        %3967 = vmatpush.msra.mxu0 %v3256
        %3968 = vmatpush.msra.mxu0 %v3252
        %3969 = vmatpush.msra.mxu0 %v3248
        %3970 = vmatpush.msra.mxu0 %v3244
        %3971 = vmatpush.msra.mxu0 %v3240
        %3972 = vmatpush.msra.mxu0 %v3236
        %3973 = vmatpush.msra.mxu0 %v3232
        %3974 = vmatpush.msra.mxu0 %v3228
        %3975 = vmatpush.msra.mxu0 %v3224
        %3976 = vmatpush.msra.mxu0 %v3220
        %3977 = vmatpush.msra.mxu0 %v3216
        %3978 = vmatpush.msra.mxu0 %v3212
        %3979 = vmatpush.msra.mxu0 %v3208
        %3980 = vmatpush.msra.mxu0 %v3204
        %3981 = vmatmul.f32.gmra.mxu0 %v3730
        %v3982 = vpop.f32.mrf.mxu0
        %v3983 = vadd.f32 %v3963, %v3982
        %3984 = vdwg.mxu0
        %3985 = vmatpush.msra.mxu0 %v3328
        %3986 = vmatpush.msra.mxu0 %v3324
        %3987 = vmatpush.msra.mxu0 %v3320
        %3988 = vmatpush.msra.mxu0 %v3316
        %3989 = vmatpush.msra.mxu0 %v3312
        %3990 = vmatpush.msra.mxu0 %v3308
        %3991 = vmatpush.msra.mxu0 %v3304
        %3992 = vmatpush.msra.mxu0 %v3300
        %3993 = vmatpush.msra.mxu0 %v3296
        %3994 = vmatpush.msra.mxu0 %v3292
        %3995 = vmatpush.msra.mxu0 %v3288
        %3996 = vmatpush.msra.mxu0 %v3284
        %3997 = vmatpush.msra.mxu0 %v3280
        %3998 = vmatpush.msra.mxu0 %v3276
        %3999 = vmatpush.msra.mxu0 %v3272
        %4000 = vmatpush.msra.mxu0 %v3268
        %4001 = vmatmul.f32.gmra.mxu0 %v3731
        %v4002 = vpop.f32.mrf.mxu0
        %v4003 = vadd.f32 %v3983, %v4002
        %4004 = vdwg.mxu0
        %4005 = vmatpush.msra.mxu0 %v3392
        %4006 = vmatpush.msra.mxu0 %v3388
        %4007 = vmatpush.msra.mxu0 %v3384
        %4008 = vmatpush.msra.mxu0 %v3380
        %4009 = vmatpush.msra.mxu0 %v3376
        %4010 = vmatpush.msra.mxu0 %v3372
        %4011 = vmatpush.msra.mxu0 %v3368
        %4012 = vmatpush.msra.mxu0 %v3364
        %4013 = vmatpush.msra.mxu0 %v3360
        %4014 = vmatpush.msra.mxu0 %v3356
        %4015 = vmatpush.msra.mxu0 %v3352
        %4016 = vmatpush.msra.mxu0 %v3348
        %4017 = vmatpush.msra.mxu0 %v3344
        %4018 = vmatpush.msra.mxu0 %v3340
        %4019 = vmatpush.msra.mxu0 %v3336
        %4020 = vmatpush.msra.mxu0 %v3332
        %4021 = vmatmul.f32.gmra.mxu0 %v3732
        %v4022 = vpop.f32.mrf.mxu0
        %v4023 = vadd.f32 %v4003, %v4022
        %4024 = vdwg.mxu0
        %4025 = vmatpush.msra.mxu0 %v3456
        %4026 = vmatpush.msra.mxu0 %v3452
        %4027 = vmatpush.msra.mxu0 %v3448
        %4028 = vmatpush.msra.mxu0 %v3444
        %4029 = vmatpush.msra.mxu0 %v3440
        %4030 = vmatpush.msra.mxu0 %v3436
        %4031 = vmatpush.msra.mxu0 %v3432
        %4032 = vmatpush.msra.mxu0 %v3428
        %4033 = vmatpush.msra.mxu0 %v3424
        %4034 = vmatpush.msra.mxu0 %v3420
        %4035 = vmatpush.msra.mxu0 %v3416
        %4036 = vmatpush.msra.mxu0 %v3412
        %4037 = vmatpush.msra.mxu0 %v3408
        %4038 = vmatpush.msra.mxu0 %v3404
        %4039 = vmatpush.msra.mxu0 %v3400
        %4040 = vmatpush.msra.mxu0 %v3396
        %4041 = vmatmul.f32.gmra.mxu0 %v3733
        %v4042 = vpop.f32.mrf.mxu0
        %v4043 = vadd.f32 %v4023, %v4042
        %4044 = vdwg.mxu0
        %4045 = vmatpush.msra.mxu0 %v3520
        %4046 = vmatpush.msra.mxu0 %v3516
        %4047 = vmatpush.msra.mxu0 %v3512
        %4048 = vmatpush.msra.mxu0 %v3508
        %4049 = vmatpush.msra.mxu0 %v3504
        %4050 = vmatpush.msra.mxu0 %v3500
        %4051 = vmatpush.msra.mxu0 %v3496
        %4052 = vmatpush.msra.mxu0 %v3492
        %4053 = vmatpush.msra.mxu0 %v3488
        %4054 = vmatpush.msra.mxu0 %v3484
        %4055 = vmatpush.msra.mxu0 %v3480
        %4056 = vmatpush.msra.mxu0 %v3476
        %4057 = vmatpush.msra.mxu0 %v3472
        %4058 = vmatpush.msra.mxu0 %v3468
        %4059 = vmatpush.msra.mxu0 %v3464
        %4060 = vmatpush.msra.mxu0 %v3460
        %4061 = vmatmul.f32.gmra.mxu0 %v3734
        %v4062 = vpop.f32.mrf.mxu0
        %v4063 = vadd.f32 %v4043, %v4062
        %4064 = vdwg.mxu0
        %4065 = vmatpush.msra.mxu0 %v3584
        %4066 = vmatpush.msra.mxu0 %v3580
        %4067 = vmatpush.msra.mxu0 %v3576
        %4068 = vmatpush.msra.mxu0 %v3572
        %4069 = vmatpush.msra.mxu0 %v3568
        %4070 = vmatpush.msra.mxu0 %v3564
        %4071 = vmatpush.msra.mxu0 %v3560
        %4072 = vmatpush.msra.mxu0 %v3556
        %4073 = vmatpush.msra.mxu0 %v3552
        %4074 = vmatpush.msra.mxu0 %v3548
        %4075 = vmatpush.msra.mxu0 %v3544
        %4076 = vmatpush.msra.mxu0 %v3540
        %4077 = vmatpush.msra.mxu0 %v3536
        %4078 = vmatpush.msra.mxu0 %v3532
        %4079 = vmatpush.msra.mxu0 %v3528
        %4080 = vmatpush.msra.mxu0 %v3524
        %4081 = vmatmul.f32.gmra.mxu0 %v3735
        %v4082 = vpop.f32.mrf.mxu0
        %v4083 = vadd.f32 %v4063, %v4082
        %4084 = vdwg.mxu0
        %4085 = vmatpush.msra.mxu0 %v3648
        %4086 = vmatpush.msra.mxu0 %v3644
        %4087 = vmatpush.msra.mxu0 %v3640
        %4088 = vmatpush.msra.mxu0 %v3636
        %4089 = vmatpush.msra.mxu0 %v3632
        %4090 = vmatpush.msra.mxu0 %v3628
        %4091 = vmatpush.msra.mxu0 %v3624
        %4092 = vmatpush.msra.mxu0 %v3620
        %4093 = vmatpush.msra.mxu0 %v3616
        %4094 = vmatpush.msra.mxu0 %v3612
        %4095 = vmatpush.msra.mxu0 %v3608
        %4096 = vmatpush.msra.mxu0 %v3604
        %4097 = vmatpush.msra.mxu0 %v3600
        %4098 = vmatpush.msra.mxu0 %v3596
        %4099 = vmatpush.msra.mxu0 %v3592
        %4100 = vmatpush.msra.mxu0 %v3588
        %4101 = vmatmul.f32.gmra.mxu0 %v3736
        %v4102 = vpop.f32.mrf.mxu0
        %v4103 = vadd.f32 %v4083, %v4102
        %4104 = vdwg.mxu0
        %4105 = vmatpush.msra.mxu0 %v3712
        %4106 = vmatpush.msra.mxu0 %v3708
        %4107 = vmatpush.msra.mxu0 %v3704
        %4108 = vmatpush.msra.mxu0 %v3700
        %4109 = vmatpush.msra.mxu0 %v3696
        %4110 = vmatpush.msra.mxu0 %v3692
        %4111 = vmatpush.msra.mxu0 %v3688
        %4112 = vmatpush.msra.mxu0 %v3684
        %4113 = vmatpush.msra.mxu0 %v3680
        %4114 = vmatpush.msra.mxu0 %v3676
        %4115 = vmatpush.msra.mxu0 %v3672
        %4116 = vmatpush.msra.mxu0 %v3668
        %4117 = vmatpush.msra.mxu0 %v3664
        %4118 = vmatpush.msra.mxu0 %v3660
        %4119 = vmatpush.msra.mxu0 %v3656
        %4120 = vmatpush.msra.mxu0 %v3652
        %4121 = vmatmul.f32.gmra.mxu0 %v3737
        %v4122 = vpop.f32.mrf.mxu0
        %v4123 = vadd.f32 %v4103, %v4122
        %4124 = vdwg.mxu0
        %4125 = vmatpush.msra.mxu0 %v2625
        %4126 = vmatpush.msra.mxu0 %v2621
        %4127 = vmatpush.msra.mxu0 %v2617
        %4128 = vmatpush.msra.mxu0 %v2613
        %4129 = vmatpush.msra.mxu0 %v2609
        %4130 = vmatpush.msra.mxu0 %v2605
        %4131 = vmatpush.msra.mxu0 %v2601
        %4132 = vmatpush.msra.mxu0 %v2597
        %4133 = vmatpush.msra.mxu0 %v2593
        %4134 = vmatpush.msra.mxu0 %v2589
        %4135 = vmatpush.msra.mxu0 %v2585
        %4136 = vmatpush.msra.mxu0 %v2581
        %4137 = vmatpush.msra.mxu0 %v2577
        %4138 = vmatpush.msra.mxu0 %v2573
        %4139 = vmatpush.msra.mxu0 %v2569
        %4140 = vmatpush.msra.mxu0 %v2565
        %4141 = vmatmul.f32.gmra.mxu0 %v3720
        %v4142 = vpop.f32.mrf.mxu0
        %v4143 = vadd.f32 %v3758, %v4142
        %4144 = vdwg.mxu0
        %4145 = vmatpush.msra.mxu0 %v2689
        %4146 = vmatpush.msra.mxu0 %v2685
        %4147 = vmatpush.msra.mxu0 %v2681
        %4148 = vmatpush.msra.mxu0 %v2677
        %4149 = vmatpush.msra.mxu0 %v2673
        %4150 = vmatpush.msra.mxu0 %v2669
        %4151 = vmatpush.msra.mxu0 %v2665
        %4152 = vmatpush.msra.mxu0 %v2661
        %4153 = vmatpush.msra.mxu0 %v2657
        %4154 = vmatpush.msra.mxu0 %v2653
        %4155 = vmatpush.msra.mxu0 %v2649
        %4156 = vmatpush.msra.mxu0 %v2645
        %4157 = vmatpush.msra.mxu0 %v2641
        %4158 = vmatpush.msra.mxu0 %v2637
        %4159 = vmatpush.msra.mxu0 %v2633
        %4160 = vmatpush.msra.mxu0 %v2629
        %4161 = vmatmul.f32.gmra.mxu0 %v3721
        %v4162 = vpop.f32.mrf.mxu0
        %v4163 = vadd.f32 %v4143, %v4162
        %4164 = vdwg.mxu0
        %4165 = vmatpush.msra.mxu0 %v2753
        %4166 = vmatpush.msra.mxu0 %v2749
        %4167 = vmatpush.msra.mxu0 %v2745
        %4168 = vmatpush.msra.mxu0 %v2741
        %4169 = vmatpush.msra.mxu0 %v2737
        %4170 = vmatpush.msra.mxu0 %v2733
        %4171 = vmatpush.msra.mxu0 %v2729
        %4172 = vmatpush.msra.mxu0 %v2725
        %4173 = vmatpush.msra.mxu0 %v2721
        %4174 = vmatpush.msra.mxu0 %v2717
        %4175 = vmatpush.msra.mxu0 %v2713
        %4176 = vmatpush.msra.mxu0 %v2709
        %4177 = vmatpush.msra.mxu0 %v2705
        %4178 = vmatpush.msra.mxu0 %v2701
        %4179 = vmatpush.msra.mxu0 %v2697
        %4180 = vmatpush.msra.mxu0 %v2693
        %4181 = vmatmul.f32.gmra.mxu0 %v3722
        %v4182 = vpop.f32.mrf.mxu0
        %v4183 = vadd.f32 %v4163, %v4182
        %4184 = vdwg.mxu0
        %4185 = vmatpush.msra.mxu0 %v2817
        %4186 = vmatpush.msra.mxu0 %v2813
        %4187 = vmatpush.msra.mxu0 %v2809
        %4188 = vmatpush.msra.mxu0 %v2805
        %4189 = vmatpush.msra.mxu0 %v2801
        %4190 = vmatpush.msra.mxu0 %v2797
        %4191 = vmatpush.msra.mxu0 %v2793
        %4192 = vmatpush.msra.mxu0 %v2789
        %4193 = vmatpush.msra.mxu0 %v2785
        %4194 = vmatpush.msra.mxu0 %v2781
        %4195 = vmatpush.msra.mxu0 %v2777
        %4196 = vmatpush.msra.mxu0 %v2773
        %4197 = vmatpush.msra.mxu0 %v2769
        %4198 = vmatpush.msra.mxu0 %v2765
        %4199 = vmatpush.msra.mxu0 %v2761
        %4200 = vmatpush.msra.mxu0 %v2757
        %4201 = vmatmul.f32.gmra.mxu0 %v3723
        %v4202 = vpop.f32.mrf.mxu0
        %v4203 = vadd.f32 %v4183, %v4202
        %4204 = vdwg.mxu0
        %4205 = vmatpush.msra.mxu0 %v2881
        %4206 = vmatpush.msra.mxu0 %v2877
        %4207 = vmatpush.msra.mxu0 %v2873
        %4208 = vmatpush.msra.mxu0 %v2869
        %4209 = vmatpush.msra.mxu0 %v2865
        %4210 = vmatpush.msra.mxu0 %v2861
        %4211 = vmatpush.msra.mxu0 %v2857
        %4212 = vmatpush.msra.mxu0 %v2853
        %4213 = vmatpush.msra.mxu0 %v2849
        %4214 = vmatpush.msra.mxu0 %v2845
        %4215 = vmatpush.msra.mxu0 %v2841
        %4216 = vmatpush.msra.mxu0 %v2837
        %4217 = vmatpush.msra.mxu0 %v2833
        %4218 = vmatpush.msra.mxu0 %v2829
        %4219 = vmatpush.msra.mxu0 %v2825
        %4220 = vmatpush.msra.mxu0 %v2821
        %4221 = vmatmul.f32.gmra.mxu0 %v3724
        %v4222 = vpop.f32.mrf.mxu0
        %v4223 = vadd.f32 %v4203, %v4222
        %4224 = vdwg.mxu0
        %4225 = vmatpush.msra.mxu0 %v2945
        %4226 = vmatpush.msra.mxu0 %v2941
        %4227 = vmatpush.msra.mxu0 %v2937
        %4228 = vmatpush.msra.mxu0 %v2933
        %4229 = vmatpush.msra.mxu0 %v2929
        %4230 = vmatpush.msra.mxu0 %v2925
        %4231 = vmatpush.msra.mxu0 %v2921
        %4232 = vmatpush.msra.mxu0 %v2917
        %4233 = vmatpush.msra.mxu0 %v2913
        %4234 = vmatpush.msra.mxu0 %v2909
        %4235 = vmatpush.msra.mxu0 %v2905
        %4236 = vmatpush.msra.mxu0 %v2901
        %4237 = vmatpush.msra.mxu0 %v2897
        %4238 = vmatpush.msra.mxu0 %v2893
        %4239 = vmatpush.msra.mxu0 %v2889
        %4240 = vmatpush.msra.mxu0 %v2885
        %4241 = vmatmul.f32.gmra.mxu0 %v3725
        %v4242 = vpop.f32.mrf.mxu0
        %v4243 = vadd.f32 %v4223, %v4242
        %4244 = vdwg.mxu0
        %4245 = vmatpush.msra.mxu0 %v3009
        %4246 = vmatpush.msra.mxu0 %v3005
        %4247 = vmatpush.msra.mxu0 %v3001
        %4248 = vmatpush.msra.mxu0 %v2997
        %4249 = vmatpush.msra.mxu0 %v2993
        %4250 = vmatpush.msra.mxu0 %v2989
        %4251 = vmatpush.msra.mxu0 %v2985
        %4252 = vmatpush.msra.mxu0 %v2981
        %4253 = vmatpush.msra.mxu0 %v2977
        %4254 = vmatpush.msra.mxu0 %v2973
        %4255 = vmatpush.msra.mxu0 %v2969
        %4256 = vmatpush.msra.mxu0 %v2965
        %4257 = vmatpush.msra.mxu0 %v2961
        %4258 = vmatpush.msra.mxu0 %v2957
        %4259 = vmatpush.msra.mxu0 %v2953
        %4260 = vmatpush.msra.mxu0 %v2949
        %4261 = vmatmul.f32.gmra.mxu0 %v3726
        %v4262 = vpop.f32.mrf.mxu0
        %v4263 = vadd.f32 %v4243, %v4262
        %4264 = vdwg.mxu0
        %4265 = vmatpush.msra.mxu0 %v3073
        %4266 = vmatpush.msra.mxu0 %v3069
        %4267 = vmatpush.msra.mxu0 %v3065
        %4268 = vmatpush.msra.mxu0 %v3061
        %4269 = vmatpush.msra.mxu0 %v3057
        %4270 = vmatpush.msra.mxu0 %v3053
        %4271 = vmatpush.msra.mxu0 %v3049
        %4272 = vmatpush.msra.mxu0 %v3045
        %4273 = vmatpush.msra.mxu0 %v3041
        %4274 = vmatpush.msra.mxu0 %v3037
        %4275 = vmatpush.msra.mxu0 %v3033
        %4276 = vmatpush.msra.mxu0 %v3029
        %4277 = vmatpush.msra.mxu0 %v3025
        %4278 = vmatpush.msra.mxu0 %v3021
        %4279 = vmatpush.msra.mxu0 %v3017
        %4280 = vmatpush.msra.mxu0 %v3013
        %4281 = vmatmul.f32.gmra.mxu0 %v3727
        %v4282 = vpop.f32.mrf.mxu0
        %v4283 = vadd.f32 %v4263, %v4282
        %4284 = vdwg.mxu0
        %4285 = vmatpush.msra.mxu0 %v3137
        %4286 = vmatpush.msra.mxu0 %v3133
        %4287 = vmatpush.msra.mxu0 %v3129
        %4288 = vmatpush.msra.mxu0 %v3125
        %4289 = vmatpush.msra.mxu0 %v3121
        %4290 = vmatpush.msra.mxu0 %v3117
        %4291 = vmatpush.msra.mxu0 %v3113
        %4292 = vmatpush.msra.mxu0 %v3109
        %4293 = vmatpush.msra.mxu0 %v3105
        %4294 = vmatpush.msra.mxu0 %v3101
        %4295 = vmatpush.msra.mxu0 %v3097
        %4296 = vmatpush.msra.mxu0 %v3093
        %4297 = vmatpush.msra.mxu0 %v3089
        %4298 = vmatpush.msra.mxu0 %v3085
        %4299 = vmatpush.msra.mxu0 %v3081
        %4300 = vmatpush.msra.mxu0 %v3077
        %4301 = vmatmul.f32.gmra.mxu0 %v3728
        %v4302 = vpop.f32.mrf.mxu0
        %v4303 = vadd.f32 %v4283, %v4302
        %4304 = vdwg.mxu0
        %4305 = vmatpush.msra.mxu0 %v3201
        %4306 = vmatpush.msra.mxu0 %v3197
        %4307 = vmatpush.msra.mxu0 %v3193
        %4308 = vmatpush.msra.mxu0 %v3189
        %4309 = vmatpush.msra.mxu0 %v3185
        %4310 = vmatpush.msra.mxu0 %v3181
        %4311 = vmatpush.msra.mxu0 %v3177
        %4312 = vmatpush.msra.mxu0 %v3173
        %4313 = vmatpush.msra.mxu0 %v3169
        %4314 = vmatpush.msra.mxu0 %v3165
        %4315 = vmatpush.msra.mxu0 %v3161
        %4316 = vmatpush.msra.mxu0 %v3157
        %4317 = vmatpush.msra.mxu0 %v3153
        %4318 = vmatpush.msra.mxu0 %v3149
        %4319 = vmatpush.msra.mxu0 %v3145
        %4320 = vmatpush.msra.mxu0 %v3141
        %4321 = vmatmul.f32.gmra.mxu0 %v3729
        %v4322 = vpop.f32.mrf.mxu0
        %v4323 = vadd.f32 %v4303, %v4322
        %4324 = vdwg.mxu0
        %4325 = vmatpush.msra.mxu0 %v3265
        %4326 = vmatpush.msra.mxu0 %v3261
        %4327 = vmatpush.msra.mxu0 %v3257
        %4328 = vmatpush.msra.mxu0 %v3253
        %4329 = vmatpush.msra.mxu0 %v3249
        %4330 = vmatpush.msra.mxu0 %v3245
        %4331 = vmatpush.msra.mxu0 %v3241
        %4332 = vmatpush.msra.mxu0 %v3237
        %4333 = vmatpush.msra.mxu0 %v3233
        %4334 = vmatpush.msra.mxu0 %v3229
        %4335 = vmatpush.msra.mxu0 %v3225
        %4336 = vmatpush.msra.mxu0 %v3221
        %4337 = vmatpush.msra.mxu0 %v3217
        %4338 = vmatpush.msra.mxu0 %v3213
        %4339 = vmatpush.msra.mxu0 %v3209
        %4340 = vmatpush.msra.mxu0 %v3205
        %4341 = vmatmul.f32.gmra.mxu0 %v3730
        %v4342 = vpop.f32.mrf.mxu0
        %v4343 = vadd.f32 %v4323, %v4342
        %4344 = vdwg.mxu0
        %4345 = vmatpush.msra.mxu0 %v3329
        %4346 = vmatpush.msra.mxu0 %v3325
        %4347 = vmatpush.msra.mxu0 %v3321
        %4348 = vmatpush.msra.mxu0 %v3317
        %4349 = vmatpush.msra.mxu0 %v3313
        %4350 = vmatpush.msra.mxu0 %v3309
        %4351 = vmatpush.msra.mxu0 %v3305
        %4352 = vmatpush.msra.mxu0 %v3301
        %4353 = vmatpush.msra.mxu0 %v3297
        %4354 = vmatpush.msra.mxu0 %v3293
        %4355 = vmatpush.msra.mxu0 %v3289
        %4356 = vmatpush.msra.mxu0 %v3285
        %4357 = vmatpush.msra.mxu0 %v3281
        %4358 = vmatpush.msra.mxu0 %v3277
        %4359 = vmatpush.msra.mxu0 %v3273
        %4360 = vmatpush.msra.mxu0 %v3269
        %4361 = vmatmul.f32.gmra.mxu0 %v3731
        %v4362 = vpop.f32.mrf.mxu0
        %v4363 = vadd.f32 %v4343, %v4362
        %4364 = vdwg.mxu0
        %4365 = vmatpush.msra.mxu0 %v3393
        %4366 = vmatpush.msra.mxu0 %v3389
        %4367 = vmatpush.msra.mxu0 %v3385
        %4368 = vmatpush.msra.mxu0 %v3381
        %4369 = vmatpush.msra.mxu0 %v3377
        %4370 = vmatpush.msra.mxu0 %v3373
        %4371 = vmatpush.msra.mxu0 %v3369
        %4372 = vmatpush.msra.mxu0 %v3365
        %4373 = vmatpush.msra.mxu0 %v3361
        %4374 = vmatpush.msra.mxu0 %v3357
        %4375 = vmatpush.msra.mxu0 %v3353
        %4376 = vmatpush.msra.mxu0 %v3349
        %4377 = vmatpush.msra.mxu0 %v3345
        %4378 = vmatpush.msra.mxu0 %v3341
        %4379 = vmatpush.msra.mxu0 %v3337
        %4380 = vmatpush.msra.mxu0 %v3333
        %4381 = vmatmul.f32.gmra.mxu0 %v3732
        %v4382 = vpop.f32.mrf.mxu0
        %v4383 = vadd.f32 %v4363, %v4382
        %4384 = vdwg.mxu0
        %4385 = vmatpush.msra.mxu0 %v3457
        %4386 = vmatpush.msra.mxu0 %v3453
        %4387 = vmatpush.msra.mxu0 %v3449
        %4388 = vmatpush.msra.mxu0 %v3445
        %4389 = vmatpush.msra.mxu0 %v3441
        %4390 = vmatpush.msra.mxu0 %v3437
        %4391 = vmatpush.msra.mxu0 %v3433
        %4392 = vmatpush.msra.mxu0 %v3429
        %4393 = vmatpush.msra.mxu0 %v3425
        %4394 = vmatpush.msra.mxu0 %v3421
        %4395 = vmatpush.msra.mxu0 %v3417
        %4396 = vmatpush.msra.mxu0 %v3413
        %4397 = vmatpush.msra.mxu0 %v3409
        %4398 = vmatpush.msra.mxu0 %v3405
        %4399 = vmatpush.msra.mxu0 %v3401
        %4400 = vmatpush.msra.mxu0 %v3397
        %4401 = vmatmul.f32.gmra.mxu0 %v3733
        %v4402 = vpop.f32.mrf.mxu0
        %v4403 = vadd.f32 %v4383, %v4402
        %4404 = vdwg.mxu0
        %4405 = vmatpush.msra.mxu0 %v3521
        %4406 = vmatpush.msra.mxu0 %v3517
        %4407 = vmatpush.msra.mxu0 %v3513
        %4408 = vmatpush.msra.mxu0 %v3509
        %4409 = vmatpush.msra.mxu0 %v3505
        %4410 = vmatpush.msra.mxu0 %v3501
        %4411 = vmatpush.msra.mxu0 %v3497
        %4412 = vmatpush.msra.mxu0 %v3493
        %4413 = vmatpush.msra.mxu0 %v3489
        %4414 = vmatpush.msra.mxu0 %v3485
        %4415 = vmatpush.msra.mxu0 %v3481
        %4416 = vmatpush.msra.mxu0 %v3477
        %4417 = vmatpush.msra.mxu0 %v3473
        %4418 = vmatpush.msra.mxu0 %v3469
        %4419 = vmatpush.msra.mxu0 %v3465
        %4420 = vmatpush.msra.mxu0 %v3461
        %4421 = vmatmul.f32.gmra.mxu0 %v3734
        %v4422 = vpop.f32.mrf.mxu0
        %v4423 = vadd.f32 %v4403, %v4422
        %4424 = vdwg.mxu0
        %4425 = vmatpush.msra.mxu0 %v3585
        %4426 = vmatpush.msra.mxu0 %v3581
        %4427 = vmatpush.msra.mxu0 %v3577
        %4428 = vmatpush.msra.mxu0 %v3573
        %4429 = vmatpush.msra.mxu0 %v3569
        %4430 = vmatpush.msra.mxu0 %v3565
        %4431 = vmatpush.msra.mxu0 %v3561
        %4432 = vmatpush.msra.mxu0 %v3557
        %4433 = vmatpush.msra.mxu0 %v3553
        %4434 = vmatpush.msra.mxu0 %v3549
        %4435 = vmatpush.msra.mxu0 %v3545
        %4436 = vmatpush.msra.mxu0 %v3541
        %4437 = vmatpush.msra.mxu0 %v3537
        %4438 = vmatpush.msra.mxu0 %v3533
        %4439 = vmatpush.msra.mxu0 %v3529
        %4440 = vmatpush.msra.mxu0 %v3525
        %4441 = vmatmul.f32.gmra.mxu0 %v3735
        %v4442 = vpop.f32.mrf.mxu0
        %v4443 = vadd.f32 %v4423, %v4442
        %4444 = vdwg.mxu0
        %4445 = vmatpush.msra.mxu0 %v3649
        %4446 = vmatpush.msra.mxu0 %v3645
        %4447 = vmatpush.msra.mxu0 %v3641
        %4448 = vmatpush.msra.mxu0 %v3637
        %4449 = vmatpush.msra.mxu0 %v3633
        %4450 = vmatpush.msra.mxu0 %v3629
        %4451 = vmatpush.msra.mxu0 %v3625
        %4452 = vmatpush.msra.mxu0 %v3621
        %4453 = vmatpush.msra.mxu0 %v3617
        %4454 = vmatpush.msra.mxu0 %v3613
        %4455 = vmatpush.msra.mxu0 %v3609
        %4456 = vmatpush.msra.mxu0 %v3605
        %4457 = vmatpush.msra.mxu0 %v3601
        %4458 = vmatpush.msra.mxu0 %v3597
        %4459 = vmatpush.msra.mxu0 %v3593
        %4460 = vmatpush.msra.mxu0 %v3589
        %4461 = vmatmul.f32.gmra.mxu0 %v3736
        %v4462 = vpop.f32.mrf.mxu0
        %v4463 = vadd.f32 %v4443, %v4462
        %4464 = vdwg.mxu0
        %4465 = vmatpush.msra.mxu0 %v3713
        %4466 = vmatpush.msra.mxu0 %v3709
        %4467 = vmatpush.msra.mxu0 %v3705
        %4468 = vmatpush.msra.mxu0 %v3701
        %4469 = vmatpush.msra.mxu0 %v3697
        %4470 = vmatpush.msra.mxu0 %v3693
        %4471 = vmatpush.msra.mxu0 %v3689
        %4472 = vmatpush.msra.mxu0 %v3685
        %4473 = vmatpush.msra.mxu0 %v3681
        %4474 = vmatpush.msra.mxu0 %v3677
        %4475 = vmatpush.msra.mxu0 %v3673
        %4476 = vmatpush.msra.mxu0 %v3669
        %4477 = vmatpush.msra.mxu0 %v3665
        %4478 = vmatpush.msra.mxu0 %v3661
        %4479 = vmatpush.msra.mxu0 %v3657
        %4480 = vmatpush.msra.mxu0 %v3653
        %4481 = vmatmul.f32.gmra.mxu0 %v3737
        %v4482 = vpop.f32.mrf.mxu0
        %v4483 = vadd.f32 %v4463, %v4482
        %4484 = vdwg.mxu0
        %4485 = vmatpush.msra.mxu0 %v2626
        %4486 = vmatpush.msra.mxu0 %v2622
        %4487 = vmatpush.msra.mxu0 %v2618
        %4488 = vmatpush.msra.mxu0 %v2614
        %4489 = vmatpush.msra.mxu0 %v2610
        %4490 = vmatpush.msra.mxu0 %v2606
        %4491 = vmatpush.msra.mxu0 %v2602
        %4492 = vmatpush.msra.mxu0 %v2598
        %4493 = vmatpush.msra.mxu0 %v2594
        %4494 = vmatpush.msra.mxu0 %v2590
        %4495 = vmatpush.msra.mxu0 %v2586
        %4496 = vmatpush.msra.mxu0 %v2582
        %4497 = vmatpush.msra.mxu0 %v2578
        %4498 = vmatpush.msra.mxu0 %v2574
        %4499 = vmatpush.msra.mxu0 %v2570
        %4500 = vmatpush.msra.mxu0 %v2566
        %4501 = vmatmul.f32.gmra.mxu0 %v3720
        %v4502 = vpop.f32.mrf.mxu0
        %v4503 = vadd.f32 %v3759, %v4502
        %4504 = vdwg.mxu0
        %4505 = vmatpush.msra.mxu0 %v2690
        %4506 = vmatpush.msra.mxu0 %v2686
        %4507 = vmatpush.msra.mxu0 %v2682
        %4508 = vmatpush.msra.mxu0 %v2678
        %4509 = vmatpush.msra.mxu0 %v2674
        %4510 = vmatpush.msra.mxu0 %v2670
        %4511 = vmatpush.msra.mxu0 %v2666
        %4512 = vmatpush.msra.mxu0 %v2662
        %4513 = vmatpush.msra.mxu0 %v2658
        %4514 = vmatpush.msra.mxu0 %v2654
        %4515 = vmatpush.msra.mxu0 %v2650
        %4516 = vmatpush.msra.mxu0 %v2646
        %4517 = vmatpush.msra.mxu0 %v2642
        %4518 = vmatpush.msra.mxu0 %v2638
        %4519 = vmatpush.msra.mxu0 %v2634
        %4520 = vmatpush.msra.mxu0 %v2630
        %4521 = vmatmul.f32.gmra.mxu0 %v3721
        %v4522 = vpop.f32.mrf.mxu0
        %v4523 = vadd.f32 %v4503, %v4522
        %4524 = vdwg.mxu0
        %4525 = vmatpush.msra.mxu0 %v2754
        %4526 = vmatpush.msra.mxu0 %v2750
        %4527 = vmatpush.msra.mxu0 %v2746
        %4528 = vmatpush.msra.mxu0 %v2742
        %4529 = vmatpush.msra.mxu0 %v2738
        %4530 = vmatpush.msra.mxu0 %v2734
        %4531 = vmatpush.msra.mxu0 %v2730
        %4532 = vmatpush.msra.mxu0 %v2726
        %4533 = vmatpush.msra.mxu0 %v2722
        %4534 = vmatpush.msra.mxu0 %v2718
        %4535 = vmatpush.msra.mxu0 %v2714
        %4536 = vmatpush.msra.mxu0 %v2710
        %4537 = vmatpush.msra.mxu0 %v2706
        %4538 = vmatpush.msra.mxu0 %v2702
        %4539 = vmatpush.msra.mxu0 %v2698
        %4540 = vmatpush.msra.mxu0 %v2694
        %4541 = vmatmul.f32.gmra.mxu0 %v3722
        %v4542 = vpop.f32.mrf.mxu0
        %v4543 = vadd.f32 %v4523, %v4542
        %4544 = vdwg.mxu0
        %4545 = vmatpush.msra.mxu0 %v2818
        %4546 = vmatpush.msra.mxu0 %v2814
        %4547 = vmatpush.msra.mxu0 %v2810
        %4548 = vmatpush.msra.mxu0 %v2806
        %4549 = vmatpush.msra.mxu0 %v2802
        %4550 = vmatpush.msra.mxu0 %v2798
        %4551 = vmatpush.msra.mxu0 %v2794
        %4552 = vmatpush.msra.mxu0 %v2790
        %4553 = vmatpush.msra.mxu0 %v2786
        %4554 = vmatpush.msra.mxu0 %v2782
        %4555 = vmatpush.msra.mxu0 %v2778
        %4556 = vmatpush.msra.mxu0 %v2774
        %4557 = vmatpush.msra.mxu0 %v2770
        %4558 = vmatpush.msra.mxu0 %v2766
        %4559 = vmatpush.msra.mxu0 %v2762
        %4560 = vmatpush.msra.mxu0 %v2758
        %4561 = vmatmul.f32.gmra.mxu0 %v3723
        %v4562 = vpop.f32.mrf.mxu0
        %v4563 = vadd.f32 %v4543, %v4562
        %4564 = vdwg.mxu0
        %4565 = vmatpush.msra.mxu0 %v2882
        %4566 = vmatpush.msra.mxu0 %v2878
        %4567 = vmatpush.msra.mxu0 %v2874
        %4568 = vmatpush.msra.mxu0 %v2870
        %4569 = vmatpush.msra.mxu0 %v2866
        %4570 = vmatpush.msra.mxu0 %v2862
        %4571 = vmatpush.msra.mxu0 %v2858
        %4572 = vmatpush.msra.mxu0 %v2854
        %4573 = vmatpush.msra.mxu0 %v2850
        %4574 = vmatpush.msra.mxu0 %v2846
        %4575 = vmatpush.msra.mxu0 %v2842
        %4576 = vmatpush.msra.mxu0 %v2838
        %4577 = vmatpush.msra.mxu0 %v2834
        %4578 = vmatpush.msra.mxu0 %v2830
        %4579 = vmatpush.msra.mxu0 %v2826
        %4580 = vmatpush.msra.mxu0 %v2822
        %4581 = vmatmul.f32.gmra.mxu0 %v3724
        %v4582 = vpop.f32.mrf.mxu0
        %v4583 = vadd.f32 %v4563, %v4582
        %4584 = vdwg.mxu0
        %4585 = vmatpush.msra.mxu0 %v2946
        %4586 = vmatpush.msra.mxu0 %v2942
        %4587 = vmatpush.msra.mxu0 %v2938
        %4588 = vmatpush.msra.mxu0 %v2934
        %4589 = vmatpush.msra.mxu0 %v2930
        %4590 = vmatpush.msra.mxu0 %v2926
        %4591 = vmatpush.msra.mxu0 %v2922
        %4592 = vmatpush.msra.mxu0 %v2918
        %4593 = vmatpush.msra.mxu0 %v2914
        %4594 = vmatpush.msra.mxu0 %v2910
        %4595 = vmatpush.msra.mxu0 %v2906
        %4596 = vmatpush.msra.mxu0 %v2902
        %4597 = vmatpush.msra.mxu0 %v2898
        %4598 = vmatpush.msra.mxu0 %v2894
        %4599 = vmatpush.msra.mxu0 %v2890
        %4600 = vmatpush.msra.mxu0 %v2886
        %4601 = vmatmul.f32.gmra.mxu0 %v3725
        %v4602 = vpop.f32.mrf.mxu0
        %v4603 = vadd.f32 %v4583, %v4602
        %4604 = vdwg.mxu0
        %4605 = vmatpush.msra.mxu0 %v3010
        %4606 = vmatpush.msra.mxu0 %v3006
        %4607 = vmatpush.msra.mxu0 %v3002
        %4608 = vmatpush.msra.mxu0 %v2998
        %4609 = vmatpush.msra.mxu0 %v2994
        %4610 = vmatpush.msra.mxu0 %v2990
        %4611 = vmatpush.msra.mxu0 %v2986
        %4612 = vmatpush.msra.mxu0 %v2982
        %4613 = vmatpush.msra.mxu0 %v2978
        %4614 = vmatpush.msra.mxu0 %v2974
        %4615 = vmatpush.msra.mxu0 %v2970
        %4616 = vmatpush.msra.mxu0 %v2966
        %4617 = vmatpush.msra.mxu0 %v2962
        %4618 = vmatpush.msra.mxu0 %v2958
        %4619 = vmatpush.msra.mxu0 %v2954
        %4620 = vmatpush.msra.mxu0 %v2950
        %4621 = vmatmul.f32.gmra.mxu0 %v3726
        %v4622 = vpop.f32.mrf.mxu0
        %v4623 = vadd.f32 %v4603, %v4622
        %4624 = vdwg.mxu0
        %4625 = vmatpush.msra.mxu0 %v3074
        %4626 = vmatpush.msra.mxu0 %v3070
        %4627 = vmatpush.msra.mxu0 %v3066
        %4628 = vmatpush.msra.mxu0 %v3062
        %4629 = vmatpush.msra.mxu0 %v3058
        %4630 = vmatpush.msra.mxu0 %v3054
        %4631 = vmatpush.msra.mxu0 %v3050
        %4632 = vmatpush.msra.mxu0 %v3046
        %4633 = vmatpush.msra.mxu0 %v3042
        %4634 = vmatpush.msra.mxu0 %v3038
        %4635 = vmatpush.msra.mxu0 %v3034
        %4636 = vmatpush.msra.mxu0 %v3030
        %4637 = vmatpush.msra.mxu0 %v3026
        %4638 = vmatpush.msra.mxu0 %v3022
        %4639 = vmatpush.msra.mxu0 %v3018
        %4640 = vmatpush.msra.mxu0 %v3014
        %4641 = vmatmul.f32.gmra.mxu0 %v3727
        %v4642 = vpop.f32.mrf.mxu0
        %v4643 = vadd.f32 %v4623, %v4642
        %4644 = vdwg.mxu0
        %4645 = vmatpush.msra.mxu0 %v3138
        %4646 = vmatpush.msra.mxu0 %v3134
        %4647 = vmatpush.msra.mxu0 %v3130
        %4648 = vmatpush.msra.mxu0 %v3126
        %4649 = vmatpush.msra.mxu0 %v3122
        %4650 = vmatpush.msra.mxu0 %v3118
        %4651 = vmatpush.msra.mxu0 %v3114
        %4652 = vmatpush.msra.mxu0 %v3110
        %4653 = vmatpush.msra.mxu0 %v3106
        %4654 = vmatpush.msra.mxu0 %v3102
        %4655 = vmatpush.msra.mxu0 %v3098
        %4656 = vmatpush.msra.mxu0 %v3094
        %4657 = vmatpush.msra.mxu0 %v3090
        %4658 = vmatpush.msra.mxu0 %v3086
        %4659 = vmatpush.msra.mxu0 %v3082
        %4660 = vmatpush.msra.mxu0 %v3078
        %4661 = vmatmul.f32.gmra.mxu0 %v3728
        %v4662 = vpop.f32.mrf.mxu0
        %v4663 = vadd.f32 %v4643, %v4662
        %4664 = vdwg.mxu0
        %4665 = vmatpush.msra.mxu0 %v3202
        %4666 = vmatpush.msra.mxu0 %v3198
        %4667 = vmatpush.msra.mxu0 %v3194
        %4668 = vmatpush.msra.mxu0 %v3190
        %4669 = vmatpush.msra.mxu0 %v3186
        %4670 = vmatpush.msra.mxu0 %v3182
        %4671 = vmatpush.msra.mxu0 %v3178
        %4672 = vmatpush.msra.mxu0 %v3174
        %4673 = vmatpush.msra.mxu0 %v3170
        %4674 = vmatpush.msra.mxu0 %v3166
        %4675 = vmatpush.msra.mxu0 %v3162
        %4676 = vmatpush.msra.mxu0 %v3158
        %4677 = vmatpush.msra.mxu0 %v3154
        %4678 = vmatpush.msra.mxu0 %v3150
        %4679 = vmatpush.msra.mxu0 %v3146
        %4680 = vmatpush.msra.mxu0 %v3142
        %4681 = vmatmul.f32.gmra.mxu0 %v3729
        %v4682 = vpop.f32.mrf.mxu0
        %v4683 = vadd.f32 %v4663, %v4682
        %4684 = vdwg.mxu0
        %4685 = vmatpush.msra.mxu0 %v3266
        %4686 = vmatpush.msra.mxu0 %v3262
        %4687 = vmatpush.msra.mxu0 %v3258
        %4688 = vmatpush.msra.mxu0 %v3254
        %4689 = vmatpush.msra.mxu0 %v3250
        %4690 = vmatpush.msra.mxu0 %v3246
        %4691 = vmatpush.msra.mxu0 %v3242
        %4692 = vmatpush.msra.mxu0 %v3238
        %4693 = vmatpush.msra.mxu0 %v3234
        %4694 = vmatpush.msra.mxu0 %v3230
        %4695 = vmatpush.msra.mxu0 %v3226
        %4696 = vmatpush.msra.mxu0 %v3222
        %4697 = vmatpush.msra.mxu0 %v3218
        %4698 = vmatpush.msra.mxu0 %v3214
        %4699 = vmatpush.msra.mxu0 %v3210
        %4700 = vmatpush.msra.mxu0 %v3206
        %4701 = vmatmul.f32.gmra.mxu0 %v3730
        %v4702 = vpop.f32.mrf.mxu0
        %v4703 = vadd.f32 %v4683, %v4702
        %4704 = vdwg.mxu0
        %4705 = vmatpush.msra.mxu0 %v3330
        %4706 = vmatpush.msra.mxu0 %v3326
        %4707 = vmatpush.msra.mxu0 %v3322
        %4708 = vmatpush.msra.mxu0 %v3318
        %4709 = vmatpush.msra.mxu0 %v3314
        %4710 = vmatpush.msra.mxu0 %v3310
        %4711 = vmatpush.msra.mxu0 %v3306
        %4712 = vmatpush.msra.mxu0 %v3302
        %4713 = vmatpush.msra.mxu0 %v3298
        %4714 = vmatpush.msra.mxu0 %v3294
        %4715 = vmatpush.msra.mxu0 %v3290
        %4716 = vmatpush.msra.mxu0 %v3286
        %4717 = vmatpush.msra.mxu0 %v3282
        %4718 = vmatpush.msra.mxu0 %v3278
        %4719 = vmatpush.msra.mxu0 %v3274
        %4720 = vmatpush.msra.mxu0 %v3270
        %4721 = vmatmul.f32.gmra.mxu0 %v3731
        %v4722 = vpop.f32.mrf.mxu0
        %v4723 = vadd.f32 %v4703, %v4722
        %4724 = vdwg.mxu0
        %4725 = vmatpush.msra.mxu0 %v3394
        %4726 = vmatpush.msra.mxu0 %v3390
        %4727 = vmatpush.msra.mxu0 %v3386
        %4728 = vmatpush.msra.mxu0 %v3382
        %4729 = vmatpush.msra.mxu0 %v3378
        %4730 = vmatpush.msra.mxu0 %v3374
        %4731 = vmatpush.msra.mxu0 %v3370
        %4732 = vmatpush.msra.mxu0 %v3366
        %4733 = vmatpush.msra.mxu0 %v3362
        %4734 = vmatpush.msra.mxu0 %v3358
        %4735 = vmatpush.msra.mxu0 %v3354
        %4736 = vmatpush.msra.mxu0 %v3350
        %4737 = vmatpush.msra.mxu0 %v3346
        %4738 = vmatpush.msra.mxu0 %v3342
        %4739 = vmatpush.msra.mxu0 %v3338
        %4740 = vmatpush.msra.mxu0 %v3334
        %4741 = vmatmul.f32.gmra.mxu0 %v3732
        %v4742 = vpop.f32.mrf.mxu0
        %v4743 = vadd.f32 %v4723, %v4742
        %4744 = vdwg.mxu0
        %4745 = vmatpush.msra.mxu0 %v3458
        %4746 = vmatpush.msra.mxu0 %v3454
        %4747 = vmatpush.msra.mxu0 %v3450
        %4748 = vmatpush.msra.mxu0 %v3446
        %4749 = vmatpush.msra.mxu0 %v3442
        %4750 = vmatpush.msra.mxu0 %v3438
        %4751 = vmatpush.msra.mxu0 %v3434
        %4752 = vmatpush.msra.mxu0 %v3430
        %4753 = vmatpush.msra.mxu0 %v3426
        %4754 = vmatpush.msra.mxu0 %v3422
        %4755 = vmatpush.msra.mxu0 %v3418
        %4756 = vmatpush.msra.mxu0 %v3414
        %4757 = vmatpush.msra.mxu0 %v3410
        %4758 = vmatpush.msra.mxu0 %v3406
        %4759 = vmatpush.msra.mxu0 %v3402
        %4760 = vmatpush.msra.mxu0 %v3398
        %4761 = vmatmul.f32.gmra.mxu0 %v3733
        %v4762 = vpop.f32.mrf.mxu0
        %v4763 = vadd.f32 %v4743, %v4762
        %4764 = vdwg.mxu0
        %4765 = vmatpush.msra.mxu0 %v3522
        %4766 = vmatpush.msra.mxu0 %v3518
        %4767 = vmatpush.msra.mxu0 %v3514
        %4768 = vmatpush.msra.mxu0 %v3510
        %4769 = vmatpush.msra.mxu0 %v3506
        %4770 = vmatpush.msra.mxu0 %v3502
        %4771 = vmatpush.msra.mxu0 %v3498
        %4772 = vmatpush.msra.mxu0 %v3494
        %4773 = vmatpush.msra.mxu0 %v3490
        %4774 = vmatpush.msra.mxu0 %v3486
        %4775 = vmatpush.msra.mxu0 %v3482
        %4776 = vmatpush.msra.mxu0 %v3478
        %4777 = vmatpush.msra.mxu0 %v3474
        %4778 = vmatpush.msra.mxu0 %v3470
        %4779 = vmatpush.msra.mxu0 %v3466
        %4780 = vmatpush.msra.mxu0 %v3462
        %4781 = vmatmul.f32.gmra.mxu0 %v3734
        %v4782 = vpop.f32.mrf.mxu0
        %v4783 = vadd.f32 %v4763, %v4782
        %4784 = vdwg.mxu0
        %4785 = vmatpush.msra.mxu0 %v3586
        %4786 = vmatpush.msra.mxu0 %v3582
        %4787 = vmatpush.msra.mxu0 %v3578
        %4788 = vmatpush.msra.mxu0 %v3574
        %4789 = vmatpush.msra.mxu0 %v3570
        %4790 = vmatpush.msra.mxu0 %v3566
        %4791 = vmatpush.msra.mxu0 %v3562
        %4792 = vmatpush.msra.mxu0 %v3558
        %4793 = vmatpush.msra.mxu0 %v3554
        %4794 = vmatpush.msra.mxu0 %v3550
        %4795 = vmatpush.msra.mxu0 %v3546
        %4796 = vmatpush.msra.mxu0 %v3542
        %4797 = vmatpush.msra.mxu0 %v3538
        %4798 = vmatpush.msra.mxu0 %v3534
        %4799 = vmatpush.msra.mxu0 %v3530
        %4800 = vmatpush.msra.mxu0 %v3526
        %4801 = vmatmul.f32.gmra.mxu0 %v3735
        %v4802 = vpop.f32.mrf.mxu0
        %v4803 = vadd.f32 %v4783, %v4802
        %4804 = vdwg.mxu0
        %4805 = vmatpush.msra.mxu0 %v3650
        %4806 = vmatpush.msra.mxu0 %v3646
        %4807 = vmatpush.msra.mxu0 %v3642
        %4808 = vmatpush.msra.mxu0 %v3638
        %4809 = vmatpush.msra.mxu0 %v3634
        %4810 = vmatpush.msra.mxu0 %v3630
        %4811 = vmatpush.msra.mxu0 %v3626
        %4812 = vmatpush.msra.mxu0 %v3622
        %4813 = vmatpush.msra.mxu0 %v3618
        %4814 = vmatpush.msra.mxu0 %v3614
        %4815 = vmatpush.msra.mxu0 %v3610
        %4816 = vmatpush.msra.mxu0 %v3606
        %4817 = vmatpush.msra.mxu0 %v3602
        %4818 = vmatpush.msra.mxu0 %v3598
        %4819 = vmatpush.msra.mxu0 %v3594
        %4820 = vmatpush.msra.mxu0 %v3590
        %4821 = vmatmul.f32.gmra.mxu0 %v3736
        %v4822 = vpop.f32.mrf.mxu0
        %v4823 = vadd.f32 %v4803, %v4822
        %4824 = vdwg.mxu0
        %4825 = vmatpush.msra.mxu0 %v3714
        %4826 = vmatpush.msra.mxu0 %v3710
        %4827 = vmatpush.msra.mxu0 %v3706
        %4828 = vmatpush.msra.mxu0 %v3702
        %4829 = vmatpush.msra.mxu0 %v3698
        %4830 = vmatpush.msra.mxu0 %v3694
        %4831 = vmatpush.msra.mxu0 %v3690
        %4832 = vmatpush.msra.mxu0 %v3686
        %4833 = vmatpush.msra.mxu0 %v3682
        %4834 = vmatpush.msra.mxu0 %v3678
        %4835 = vmatpush.msra.mxu0 %v3674
        %4836 = vmatpush.msra.mxu0 %v3670
        %4837 = vmatpush.msra.mxu0 %v3666
        %4838 = vmatpush.msra.mxu0 %v3662
        %4839 = vmatpush.msra.mxu0 %v3658
        %4840 = vmatpush.msra.mxu0 %v3654
        %4841 = vmatmul.f32.gmra.mxu0 %v3737
        %v4842 = vpop.f32.mrf.mxu0
        %v4843 = vadd.f32 %v4823, %v4842
        %4844 = vdwg.mxu0
        %4845 = vmatpush.msra.mxu0 %v2627
        %4846 = vmatpush.msra.mxu0 %v2623
        %4847 = vmatpush.msra.mxu0 %v2619
        %4848 = vmatpush.msra.mxu0 %v2615
        %4849 = vmatpush.msra.mxu0 %v2611
        %4850 = vmatpush.msra.mxu0 %v2607
        %4851 = vmatpush.msra.mxu0 %v2603
        %4852 = vmatpush.msra.mxu0 %v2599
        %4853 = vmatpush.msra.mxu0 %v2595
        %4854 = vmatpush.msra.mxu0 %v2591
        %4855 = vmatpush.msra.mxu0 %v2587
        %4856 = vmatpush.msra.mxu0 %v2583
        %4857 = vmatpush.msra.mxu0 %v2579
        %4858 = vmatpush.msra.mxu0 %v2575
        %4859 = vmatpush.msra.mxu0 %v2571
        %4860 = vmatpush.msra.mxu0 %v2567
        %4861 = vmatmul.f32.gmra.mxu0 %v3720
        %v4862 = vpop.f32.mrf.mxu0
        %v4863 = vadd.f32 %v3760, %v4862
        %4864 = vdwg.mxu0
        %4865 = vmatpush.msra.mxu0 %v2691
        %4866 = vmatpush.msra.mxu0 %v2687
        %4867 = vmatpush.msra.mxu0 %v2683
        %4868 = vmatpush.msra.mxu0 %v2679
        %4869 = vmatpush.msra.mxu0 %v2675
        %4870 = vmatpush.msra.mxu0 %v2671
        %4871 = vmatpush.msra.mxu0 %v2667
        %4872 = vmatpush.msra.mxu0 %v2663
        %4873 = vmatpush.msra.mxu0 %v2659
        %4874 = vmatpush.msra.mxu0 %v2655
        %4875 = vmatpush.msra.mxu0 %v2651
        %4876 = vmatpush.msra.mxu0 %v2647
        %4877 = vmatpush.msra.mxu0 %v2643
        %4878 = vmatpush.msra.mxu0 %v2639
        %4879 = vmatpush.msra.mxu0 %v2635
        %4880 = vmatpush.msra.mxu0 %v2631
        %4881 = vmatmul.f32.gmra.mxu0 %v3721
        %v4882 = vpop.f32.mrf.mxu0
        %v4883 = vadd.f32 %v4863, %v4882
        %4884 = vdwg.mxu0
        %4885 = vmatpush.msra.mxu0 %v2755
        %4886 = vmatpush.msra.mxu0 %v2751
        %4887 = vmatpush.msra.mxu0 %v2747
        %4888 = vmatpush.msra.mxu0 %v2743
        %4889 = vmatpush.msra.mxu0 %v2739
        %4890 = vmatpush.msra.mxu0 %v2735
        %4891 = vmatpush.msra.mxu0 %v2731
        %4892 = vmatpush.msra.mxu0 %v2727
        %4893 = vmatpush.msra.mxu0 %v2723
        %4894 = vmatpush.msra.mxu0 %v2719
        %4895 = vmatpush.msra.mxu0 %v2715
        %4896 = vmatpush.msra.mxu0 %v2711
        %4897 = vmatpush.msra.mxu0 %v2707
        %4898 = vmatpush.msra.mxu0 %v2703
        %4899 = vmatpush.msra.mxu0 %v2699
        %4900 = vmatpush.msra.mxu0 %v2695
        %4901 = vmatmul.f32.gmra.mxu0 %v3722
        %v4902 = vpop.f32.mrf.mxu0
        %v4903 = vadd.f32 %v4883, %v4902
        %4904 = vdwg.mxu0
        %4905 = vmatpush.msra.mxu0 %v2819
        %4906 = vmatpush.msra.mxu0 %v2815
        %4907 = vmatpush.msra.mxu0 %v2811
        %4908 = vmatpush.msra.mxu0 %v2807
        %4909 = vmatpush.msra.mxu0 %v2803
        %4910 = vmatpush.msra.mxu0 %v2799
        %4911 = vmatpush.msra.mxu0 %v2795
        %4912 = vmatpush.msra.mxu0 %v2791
        %4913 = vmatpush.msra.mxu0 %v2787
        %4914 = vmatpush.msra.mxu0 %v2783
        %4915 = vmatpush.msra.mxu0 %v2779
        %4916 = vmatpush.msra.mxu0 %v2775
        %4917 = vmatpush.msra.mxu0 %v2771
        %4918 = vmatpush.msra.mxu0 %v2767
        %4919 = vmatpush.msra.mxu0 %v2763
        %4920 = vmatpush.msra.mxu0 %v2759
        %4921 = vmatmul.f32.gmra.mxu0 %v3723
        %v4922 = vpop.f32.mrf.mxu0
        %v4923 = vadd.f32 %v4903, %v4922
        %4924 = vdwg.mxu0
        %4925 = vmatpush.msra.mxu0 %v2883
        %4926 = vmatpush.msra.mxu0 %v2879
        %4927 = vmatpush.msra.mxu0 %v2875
        %4928 = vmatpush.msra.mxu0 %v2871
        %4929 = vmatpush.msra.mxu0 %v2867
        %4930 = vmatpush.msra.mxu0 %v2863
        %4931 = vmatpush.msra.mxu0 %v2859
        %4932 = vmatpush.msra.mxu0 %v2855
        %4933 = vmatpush.msra.mxu0 %v2851
        %4934 = vmatpush.msra.mxu0 %v2847
        %4935 = vmatpush.msra.mxu0 %v2843
        %4936 = vmatpush.msra.mxu0 %v2839
        %4937 = vmatpush.msra.mxu0 %v2835
        %4938 = vmatpush.msra.mxu0 %v2831
        %4939 = vmatpush.msra.mxu0 %v2827
        %4940 = vmatpush.msra.mxu0 %v2823
        %4941 = vmatmul.f32.gmra.mxu0 %v3724
        %v4942 = vpop.f32.mrf.mxu0
        %v4943 = vadd.f32 %v4923, %v4942
        %4944 = vdwg.mxu0
        %4945 = vmatpush.msra.mxu0 %v2947
        %4946 = vmatpush.msra.mxu0 %v2943
        %4947 = vmatpush.msra.mxu0 %v2939
        %4948 = vmatpush.msra.mxu0 %v2935
        %4949 = vmatpush.msra.mxu0 %v2931
        %4950 = vmatpush.msra.mxu0 %v2927
        %4951 = vmatpush.msra.mxu0 %v2923
        %4952 = vmatpush.msra.mxu0 %v2919
        %4953 = vmatpush.msra.mxu0 %v2915
        %4954 = vmatpush.msra.mxu0 %v2911
        %4955 = vmatpush.msra.mxu0 %v2907
        %4956 = vmatpush.msra.mxu0 %v2903
        %4957 = vmatpush.msra.mxu0 %v2899
        %4958 = vmatpush.msra.mxu0 %v2895
        %4959 = vmatpush.msra.mxu0 %v2891
        %4960 = vmatpush.msra.mxu0 %v2887
        %4961 = vmatmul.f32.gmra.mxu0 %v3725
        %v4962 = vpop.f32.mrf.mxu0
        %v4963 = vadd.f32 %v4943, %v4962
        %4964 = vdwg.mxu0
        %4965 = vmatpush.msra.mxu0 %v3011
        %4966 = vmatpush.msra.mxu0 %v3007
        %4967 = vmatpush.msra.mxu0 %v3003
        %4968 = vmatpush.msra.mxu0 %v2999
        %4969 = vmatpush.msra.mxu0 %v2995
        %4970 = vmatpush.msra.mxu0 %v2991
        %4971 = vmatpush.msra.mxu0 %v2987
        %4972 = vmatpush.msra.mxu0 %v2983
        %4973 = vmatpush.msra.mxu0 %v2979
        %4974 = vmatpush.msra.mxu0 %v2975
        %4975 = vmatpush.msra.mxu0 %v2971
        %4976 = vmatpush.msra.mxu0 %v2967
        %4977 = vmatpush.msra.mxu0 %v2963
        %4978 = vmatpush.msra.mxu0 %v2959
        %4979 = vmatpush.msra.mxu0 %v2955
        %4980 = vmatpush.msra.mxu0 %v2951
        %4981 = vmatmul.f32.gmra.mxu0 %v3726
        %v4982 = vpop.f32.mrf.mxu0
        %v4983 = vadd.f32 %v4963, %v4982
        %4984 = vdwg.mxu0
        %4985 = vmatpush.msra.mxu0 %v3075
        %4986 = vmatpush.msra.mxu0 %v3071
        %4987 = vmatpush.msra.mxu0 %v3067
        %4988 = vmatpush.msra.mxu0 %v3063
        %4989 = vmatpush.msra.mxu0 %v3059
        %4990 = vmatpush.msra.mxu0 %v3055
        %4991 = vmatpush.msra.mxu0 %v3051
        %4992 = vmatpush.msra.mxu0 %v3047
        %4993 = vmatpush.msra.mxu0 %v3043
        %4994 = vmatpush.msra.mxu0 %v3039
        %4995 = vmatpush.msra.mxu0 %v3035
        %4996 = vmatpush.msra.mxu0 %v3031
        %4997 = vmatpush.msra.mxu0 %v3027
        %4998 = vmatpush.msra.mxu0 %v3023
        %4999 = vmatpush.msra.mxu0 %v3019
        %5000 = vmatpush.msra.mxu0 %v3015
        %5001 = vmatmul.f32.gmra.mxu0 %v3727
        %v5002 = vpop.f32.mrf.mxu0
        %v5003 = vadd.f32 %v4983, %v5002
        %5004 = vdwg.mxu0
        %5005 = vmatpush.msra.mxu0 %v3139
        %5006 = vmatpush.msra.mxu0 %v3135
        %5007 = vmatpush.msra.mxu0 %v3131
        %5008 = vmatpush.msra.mxu0 %v3127
        %5009 = vmatpush.msra.mxu0 %v3123
        %5010 = vmatpush.msra.mxu0 %v3119
        %5011 = vmatpush.msra.mxu0 %v3115
        %5012 = vmatpush.msra.mxu0 %v3111
        %5013 = vmatpush.msra.mxu0 %v3107
        %5014 = vmatpush.msra.mxu0 %v3103
        %5015 = vmatpush.msra.mxu0 %v3099
        %5016 = vmatpush.msra.mxu0 %v3095
        %5017 = vmatpush.msra.mxu0 %v3091
        %5018 = vmatpush.msra.mxu0 %v3087
        %5019 = vmatpush.msra.mxu0 %v3083
        %5020 = vmatpush.msra.mxu0 %v3079
        %5021 = vmatmul.f32.gmra.mxu0 %v3728
        %v5022 = vpop.f32.mrf.mxu0
        %v5023 = vadd.f32 %v5003, %v5022
        %5024 = vdwg.mxu0
        %5025 = vmatpush.msra.mxu0 %v3203
        %5026 = vmatpush.msra.mxu0 %v3199
        %5027 = vmatpush.msra.mxu0 %v3195
        %5028 = vmatpush.msra.mxu0 %v3191
        %5029 = vmatpush.msra.mxu0 %v3187
        %5030 = vmatpush.msra.mxu0 %v3183
        %5031 = vmatpush.msra.mxu0 %v3179
        %5032 = vmatpush.msra.mxu0 %v3175
        %5033 = vmatpush.msra.mxu0 %v3171
        %5034 = vmatpush.msra.mxu0 %v3167
        %5035 = vmatpush.msra.mxu0 %v3163
        %5036 = vmatpush.msra.mxu0 %v3159
        %5037 = vmatpush.msra.mxu0 %v3155
        %5038 = vmatpush.msra.mxu0 %v3151
        %5039 = vmatpush.msra.mxu0 %v3147
        %5040 = vmatpush.msra.mxu0 %v3143
        %5041 = vmatmul.f32.gmra.mxu0 %v3729
        %v5042 = vpop.f32.mrf.mxu0
        %v5043 = vadd.f32 %v5023, %v5042
        %5044 = vdwg.mxu0
        %5045 = vmatpush.msra.mxu0 %v3267
        %5046 = vmatpush.msra.mxu0 %v3263
        %5047 = vmatpush.msra.mxu0 %v3259
        %5048 = vmatpush.msra.mxu0 %v3255
        %5049 = vmatpush.msra.mxu0 %v3251
        %5050 = vmatpush.msra.mxu0 %v3247
        %5051 = vmatpush.msra.mxu0 %v3243
        %5052 = vmatpush.msra.mxu0 %v3239
        %5053 = vmatpush.msra.mxu0 %v3235
        %5054 = vmatpush.msra.mxu0 %v3231
        %5055 = vmatpush.msra.mxu0 %v3227
        %5056 = vmatpush.msra.mxu0 %v3223
        %5057 = vmatpush.msra.mxu0 %v3219
        %5058 = vmatpush.msra.mxu0 %v3215
        %5059 = vmatpush.msra.mxu0 %v3211
        %5060 = vmatpush.msra.mxu0 %v3207
        %5061 = vmatmul.f32.gmra.mxu0 %v3730
        %v5062 = vpop.f32.mrf.mxu0
        %v5063 = vadd.f32 %v5043, %v5062
        %5064 = vdwg.mxu0
        %5065 = vmatpush.msra.mxu0 %v3331
        %5066 = vmatpush.msra.mxu0 %v3327
        %5067 = vmatpush.msra.mxu0 %v3323
        %5068 = vmatpush.msra.mxu0 %v3319
        %5069 = vmatpush.msra.mxu0 %v3315
        %5070 = vmatpush.msra.mxu0 %v3311
        %5071 = vmatpush.msra.mxu0 %v3307
        %5072 = vmatpush.msra.mxu0 %v3303
        %5073 = vmatpush.msra.mxu0 %v3299
        %5074 = vmatpush.msra.mxu0 %v3295
        %5075 = vmatpush.msra.mxu0 %v3291
        %5076 = vmatpush.msra.mxu0 %v3287
        %5077 = vmatpush.msra.mxu0 %v3283
        %5078 = vmatpush.msra.mxu0 %v3279
        %5079 = vmatpush.msra.mxu0 %v3275
        %5080 = vmatpush.msra.mxu0 %v3271
        %5081 = vmatmul.f32.gmra.mxu0 %v3731
        %v5082 = vpop.f32.mrf.mxu0
        %v5083 = vadd.f32 %v5063, %v5082
        %5084 = vdwg.mxu0
        %5085 = vmatpush.msra.mxu0 %v3395
        %5086 = vmatpush.msra.mxu0 %v3391
        %5087 = vmatpush.msra.mxu0 %v3387
        %5088 = vmatpush.msra.mxu0 %v3383
        %5089 = vmatpush.msra.mxu0 %v3379
        %5090 = vmatpush.msra.mxu0 %v3375
        %5091 = vmatpush.msra.mxu0 %v3371
        %5092 = vmatpush.msra.mxu0 %v3367
        %5093 = vmatpush.msra.mxu0 %v3363
        %5094 = vmatpush.msra.mxu0 %v3359
        %5095 = vmatpush.msra.mxu0 %v3355
        %5096 = vmatpush.msra.mxu0 %v3351
        %5097 = vmatpush.msra.mxu0 %v3347
        %5098 = vmatpush.msra.mxu0 %v3343
        %5099 = vmatpush.msra.mxu0 %v3339
        %5100 = vmatpush.msra.mxu0 %v3335
        %5101 = vmatmul.f32.gmra.mxu0 %v3732
        %v5102 = vpop.f32.mrf.mxu0
        %v5103 = vadd.f32 %v5083, %v5102
        %5104 = vdwg.mxu0
        %5105 = vmatpush.msra.mxu0 %v3459
        %5106 = vmatpush.msra.mxu0 %v3455
        %5107 = vmatpush.msra.mxu0 %v3451
        %5108 = vmatpush.msra.mxu0 %v3447
        %5109 = vmatpush.msra.mxu0 %v3443
        %5110 = vmatpush.msra.mxu0 %v3439
        %5111 = vmatpush.msra.mxu0 %v3435
        %5112 = vmatpush.msra.mxu0 %v3431
        %5113 = vmatpush.msra.mxu0 %v3427
        %5114 = vmatpush.msra.mxu0 %v3423
        %5115 = vmatpush.msra.mxu0 %v3419
        %5116 = vmatpush.msra.mxu0 %v3415
        %5117 = vmatpush.msra.mxu0 %v3411
        %5118 = vmatpush.msra.mxu0 %v3407
        %5119 = vmatpush.msra.mxu0 %v3403
        %5120 = vmatpush.msra.mxu0 %v3399
        %5121 = vmatmul.f32.gmra.mxu0 %v3733
        %v5122 = vpop.f32.mrf.mxu0
        %v5123 = vadd.f32 %v5103, %v5122
        %5124 = vdwg.mxu0
        %5125 = vmatpush.msra.mxu0 %v3523
        %5126 = vmatpush.msra.mxu0 %v3519
        %5127 = vmatpush.msra.mxu0 %v3515
        %5128 = vmatpush.msra.mxu0 %v3511
        %5129 = vmatpush.msra.mxu0 %v3507
        %5130 = vmatpush.msra.mxu0 %v3503
        %5131 = vmatpush.msra.mxu0 %v3499
        %5132 = vmatpush.msra.mxu0 %v3495
        %5133 = vmatpush.msra.mxu0 %v3491
        %5134 = vmatpush.msra.mxu0 %v3487
        %5135 = vmatpush.msra.mxu0 %v3483
        %5136 = vmatpush.msra.mxu0 %v3479
        %5137 = vmatpush.msra.mxu0 %v3475
        %5138 = vmatpush.msra.mxu0 %v3471
        %5139 = vmatpush.msra.mxu0 %v3467
        %5140 = vmatpush.msra.mxu0 %v3463
        %5141 = vmatmul.f32.gmra.mxu0 %v3734
        %v5142 = vpop.f32.mrf.mxu0
        %v5143 = vadd.f32 %v5123, %v5142
        %5144 = vdwg.mxu0
        %5145 = vmatpush.msra.mxu0 %v3587
        %5146 = vmatpush.msra.mxu0 %v3583
        %5147 = vmatpush.msra.mxu0 %v3579
        %5148 = vmatpush.msra.mxu0 %v3575
        %5149 = vmatpush.msra.mxu0 %v3571
        %5150 = vmatpush.msra.mxu0 %v3567
        %5151 = vmatpush.msra.mxu0 %v3563
        %5152 = vmatpush.msra.mxu0 %v3559
        %5153 = vmatpush.msra.mxu0 %v3555
        %5154 = vmatpush.msra.mxu0 %v3551
        %5155 = vmatpush.msra.mxu0 %v3547
        %5156 = vmatpush.msra.mxu0 %v3543
        %5157 = vmatpush.msra.mxu0 %v3539
        %5158 = vmatpush.msra.mxu0 %v3535
        %5159 = vmatpush.msra.mxu0 %v3531
        %5160 = vmatpush.msra.mxu0 %v3527
        %5161 = vmatmul.f32.gmra.mxu0 %v3735
        %v5162 = vpop.f32.mrf.mxu0
        %v5163 = vadd.f32 %v5143, %v5162
        %5164 = vdwg.mxu0
        %5165 = vmatpush.msra.mxu0 %v3651
        %5166 = vmatpush.msra.mxu0 %v3647
        %5167 = vmatpush.msra.mxu0 %v3643
        %5168 = vmatpush.msra.mxu0 %v3639
        %5169 = vmatpush.msra.mxu0 %v3635
        %5170 = vmatpush.msra.mxu0 %v3631
        %5171 = vmatpush.msra.mxu0 %v3627
        %5172 = vmatpush.msra.mxu0 %v3623
        %5173 = vmatpush.msra.mxu0 %v3619
        %5174 = vmatpush.msra.mxu0 %v3615
        %5175 = vmatpush.msra.mxu0 %v3611
        %5176 = vmatpush.msra.mxu0 %v3607
        %5177 = vmatpush.msra.mxu0 %v3603
        %5178 = vmatpush.msra.mxu0 %v3599
        %5179 = vmatpush.msra.mxu0 %v3595
        %5180 = vmatpush.msra.mxu0 %v3591
        %5181 = vmatmul.f32.gmra.mxu0 %v3736
        %v5182 = vpop.f32.mrf.mxu0
        %v5183 = vadd.f32 %v5163, %v5182
        %5184 = vdwg.mxu0
        %5185 = vmatpush.msra.mxu0 %v3715
        %5186 = vmatpush.msra.mxu0 %v3711
        %5187 = vmatpush.msra.mxu0 %v3707
        %5188 = vmatpush.msra.mxu0 %v3703
        %5189 = vmatpush.msra.mxu0 %v3699
        %5190 = vmatpush.msra.mxu0 %v3695
        %5191 = vmatpush.msra.mxu0 %v3691
        %5192 = vmatpush.msra.mxu0 %v3687
        %5193 = vmatpush.msra.mxu0 %v3683
        %5194 = vmatpush.msra.mxu0 %v3679
        %5195 = vmatpush.msra.mxu0 %v3675
        %5196 = vmatpush.msra.mxu0 %v3671
        %5197 = vmatpush.msra.mxu0 %v3667
        %5198 = vmatpush.msra.mxu0 %v3663
        %5199 = vmatpush.msra.mxu0 %v3659
        %5200 = vmatpush.msra.mxu0 %v3655
        %5201 = vmatmul.f32.gmra.mxu0 %v3737
        %v5202 = vpop.f32.mrf.mxu0
        %v5203 = vadd.f32 %v5183, %v5202
        %5204 = vdwg.mxu0
        %v5205 = vmax.f32 %v4123, 0.0
        %v5206 = vmax.f32 %v4483, 0.0
        %v5207 = vmax.f32 %v4843, 0.0
        %v5208 = vmax.f32 %v5203, 0.0
        %v5209 = vld [vmem:[#allocation13] sm:$0xff]
        %v5210 = vld [vmem:[#allocation13 + $0x8] sm:$0xff]
        %v5211 = vld [vmem:[#allocation13 + $0x10] sm:$0xff]
        %v5212 = vld [vmem:[#allocation13 + $0x18] sm:$0xff]
        %v5213 = vld [vmem:[#allocation13 + $0x20] sm:$0xff]
        %v5214 = vld [vmem:[#allocation13 + $0x28] sm:$0xff]
        %v5215 = vld [vmem:[#allocation13 + $0x30] sm:$0xff]
        %v5216 = vld [vmem:[#allocation13 + $0x38] sm:$0xff]
        %v5217 = vld [vmem:[#allocation13 + $0x40] sm:$0xff]
        %v5218 = vld [vmem:[#allocation13 + $0x48] sm:$0xff]
        %v5219 = vld [vmem:[#allocation13 + $0x50] sm:$0xff]
        %v5220 = vld [vmem:[#allocation13 + $0x58] sm:$0xff]
        %v5221 = vld [vmem:[#allocation13 + $0x60] sm:$0xff]
        %v5222 = vld [vmem:[#allocation13 + $0x68] sm:$0xff]
        %v5223 = vld [vmem:[#allocation13 + $0x70] sm:$0xff]
        %v5224 = vld [vmem:[#allocation13 + $0x78] sm:$0xff]
        %v5225 = vld [vmem:[#allocation13 + $0x80] sm:$0xff]
        %v5226 = vld [vmem:[#allocation13 + $0x88] sm:$0xff]
        %v5227 = vld [vmem:[#allocation13 + $0x90] sm:$0xff]
        %v5228 = vld [vmem:[#allocation13 + $0x98] sm:$0xff]
        %v5229 = vld [vmem:[#allocation13 + $0xa0] sm:$0xff]
        %v5230 = vld [vmem:[#allocation13 + $0xa8] sm:$0xff]
        %v5231 = vld [vmem:[#allocation13 + $0xb0] sm:$0xff]
        %v5232 = vld [vmem:[#allocation13 + $0xb8] sm:$0xff]
        %v5233 = vld [vmem:[#allocation13 + $0xc0] sm:$0xff]
        %v5234 = vld [vmem:[#allocation13 + $0xc8] sm:$0xff]
        %v5235 = vld [vmem:[#allocation13 + $0xd0] sm:$0xff]
        %v5236 = vld [vmem:[#allocation13 + $0xd8] sm:$0xff]
        %v5237 = vld [vmem:[#allocation13 + $0xe0] sm:$0xff]
        %v5238 = vld [vmem:[#allocation13 + $0xe8] sm:$0xff]
        %v5239 = vld [vmem:[#allocation13 + $0xf0] sm:$0xff]
        %v5240 = vld [vmem:[#allocation13 + $0xf8] sm:$0xff]
        %v5241 = vld [vmem:[#allocation13 + $0x100] sm:$0xff]
        %v5242 = vld [vmem:[#allocation13 + $0x108] sm:$0xff]
        %v5243 = vld [vmem:[#allocation13 + $0x110] sm:$0xff]
        %v5244 = vld [vmem:[#allocation13 + $0x118] sm:$0xff]
        %v5245 = vld [vmem:[#allocation13 + $0x120] sm:$0xff]
        %v5246 = vld [vmem:[#allocation13 + $0x128] sm:$0xff]
        %v5247 = vld [vmem:[#allocation13 + $0x130] sm:$0xff]
        %v5248 = vld [vmem:[#allocation13 + $0x138] sm:$0xff]
        %v5249 = vld [vmem:[#allocation13 + $0x140] sm:$0xff]
        %v5250 = vld [vmem:[#allocation13 + $0x148] sm:$0xff]
        %v5251 = vld [vmem:[#allocation13 + $0x150] sm:$0xff]
        %v5252 = vld [vmem:[#allocation13 + $0x158] sm:$0xff]
        %v5253 = vld [vmem:[#allocation13 + $0x160] sm:$0xff]
        %v5254 = vld [vmem:[#allocation13 + $0x168] sm:$0xff]
        %v5255 = vld [vmem:[#allocation13 + $0x170] sm:$0xff]
        %v5256 = vld [vmem:[#allocation13 + $0x178] sm:$0xff]
        %v5257 = vld [vmem:[#allocation13 + $0x180] sm:$0xff]
        %v5258 = vld [vmem:[#allocation13 + $0x188] sm:$0xff]
        %v5259 = vld [vmem:[#allocation13 + $0x190] sm:$0xff]
        %v5260 = vld [vmem:[#allocation13 + $0x198] sm:$0xff]
        %v5261 = vld [vmem:[#allocation13 + $0x1a0] sm:$0xff]
        %v5262 = vld [vmem:[#allocation13 + $0x1a8] sm:$0xff]
        %v5263 = vld [vmem:[#allocation13 + $0x1b0] sm:$0xff]
        %v5264 = vld [vmem:[#allocation13 + $0x1b8] sm:$0xff]
        %v5265 = vld [vmem:[#allocation13 + $0x1c0] sm:$0xff]
        %v5266 = vld [vmem:[#allocation13 + $0x1c8] sm:$0xff]
        %v5267 = vld [vmem:[#allocation13 + $0x1d0] sm:$0xff]
        %v5268 = vld [vmem:[#allocation13 + $0x1d8] sm:$0xff]
        %v5269 = vld [vmem:[#allocation13 + $0x1e0] sm:$0xff]
        %v5270 = vld [vmem:[#allocation13 + $0x1e8] sm:$0xff]
        %v5271 = vld [vmem:[#allocation13 + $0x1f0] sm:$0xff]
        %v5272 = vld [vmem:[#allocation13 + $0x1f8] sm:$0xff]
        %v5273 = vld [vmem:[#allocation14] sm:$0x1]
        %5274 = vmatpush.msra.mxu0 %v5224
        %5275 = vmatpush.msra.mxu0 %v5223
        %5276 = vmatpush.msra.mxu0 %v5222
        %5277 = vmatpush.msra.mxu0 %v5221
        %5278 = vmatpush.msra.mxu0 %v5220
        %5279 = vmatpush.msra.mxu0 %v5219
        %5280 = vmatpush.msra.mxu0 %v5218
        %5281 = vmatpush.msra.mxu0 %v5217
        %5282 = vmatpush.msra.mxu0 %v5216
        %5283 = vmatpush.msra.mxu0 %v5215
        %5284 = vmatpush.msra.mxu0 %v5214
        %5285 = vmatpush.msra.mxu0 %v5213
        %5286 = vmatpush.msra.mxu0 %v5212
        %5287 = vmatpush.msra.mxu0 %v5211
        %5288 = vmatpush.msra.mxu0 %v5210
        %5289 = vmatpush.msra.mxu0 %v5209
        %5290 = vmatmul.f32.gmra.mxu0 %v5205
        %v5291 = vpop.f32.mrf.mxu0
        %v5292 = vadd.f32 %v5273, %v5291
        %5293 = vdwg.mxu0
        %5294 = vmatpush.msra.mxu0 %v5240
        %5295 = vmatpush.msra.mxu0 %v5239
        %5296 = vmatpush.msra.mxu0 %v5238
        %5297 = vmatpush.msra.mxu0 %v5237
        %5298 = vmatpush.msra.mxu0 %v5236
        %5299 = vmatpush.msra.mxu0 %v5235
        %5300 = vmatpush.msra.mxu0 %v5234
        %5301 = vmatpush.msra.mxu0 %v5233
        %5302 = vmatpush.msra.mxu0 %v5232
        %5303 = vmatpush.msra.mxu0 %v5231
        %5304 = vmatpush.msra.mxu0 %v5230
        %5305 = vmatpush.msra.mxu0 %v5229
        %5306 = vmatpush.msra.mxu0 %v5228
        %5307 = vmatpush.msra.mxu0 %v5227
        %5308 = vmatpush.msra.mxu0 %v5226
        %5309 = vmatpush.msra.mxu0 %v5225
        %5310 = vmatmul.f32.gmra.mxu0 %v5206
        %v5311 = vpop.f32.mrf.mxu0
        %v5312 = vadd.f32 %v5292, %v5311
        %5313 = vdwg.mxu0
        %5314 = vmatpush.msra.mxu0 %v5256
        %5315 = vmatpush.msra.mxu0 %v5255
        %5316 = vmatpush.msra.mxu0 %v5254
        %5317 = vmatpush.msra.mxu0 %v5253
        %5318 = vmatpush.msra.mxu0 %v5252
        %5319 = vmatpush.msra.mxu0 %v5251
        %5320 = vmatpush.msra.mxu0 %v5250
        %5321 = vmatpush.msra.mxu0 %v5249
        %5322 = vmatpush.msra.mxu0 %v5248
        %5323 = vmatpush.msra.mxu0 %v5247
        %5324 = vmatpush.msra.mxu0 %v5246
        %5325 = vmatpush.msra.mxu0 %v5245
        %5326 = vmatpush.msra.mxu0 %v5244
        %5327 = vmatpush.msra.mxu0 %v5243
        %5328 = vmatpush.msra.mxu0 %v5242
        %5329 = vmatpush.msra.mxu0 %v5241
        %5330 = vmatmul.f32.gmra.mxu0 %v5207
        %v5331 = vpop.f32.mrf.mxu0
        %v5332 = vadd.f32 %v5312, %v5331
        %5333 = vdwg.mxu0
        %5334 = vmatpush.msra.mxu0 %v5272
        %5335 = vmatpush.msra.mxu0 %v5271
        %5336 = vmatpush.msra.mxu0 %v5270
        %5337 = vmatpush.msra.mxu0 %v5269
        %5338 = vmatpush.msra.mxu0 %v5268
        %5339 = vmatpush.msra.mxu0 %v5267
        %5340 = vmatpush.msra.mxu0 %v5266
        %5341 = vmatpush.msra.mxu0 %v5265
        %5342 = vmatpush.msra.mxu0 %v5264
        %5343 = vmatpush.msra.mxu0 %v5263
        %5344 = vmatpush.msra.mxu0 %v5262
        %5345 = vmatpush.msra.mxu0 %v5261
        %5346 = vmatpush.msra.mxu0 %v5260
        %5347 = vmatpush.msra.mxu0 %v5259
        %5348 = vmatpush.msra.mxu0 %v5258
        %5349 = vmatpush.msra.mxu0 %v5257
        %5350 = vmatmul.f32.gmra.mxu0 %v5208
        %v5351 = vpop.f32.mrf.mxu0
        %v5352 = vadd.f32 %v5332, %v5351
        %5353 = vdwg.mxu0
        %5354 = vst [vmem:[%s458] sm:$0x1] %v5352
        %s5355 = sand.u32 %s256, 1
        %s5356 = scalar_lea.sflag [#allocation7], %s5355
        %s5357 = sand.u32 %s256, 1
        %s5358 = scalar_lea.vmem [#allocation16], %s5357
        // Predicated region
        $region85: #{cnn_forward.1} parent=59 // pred_check
          %p5359 = pneg %p266
        $region86: #{cnn_forward.1} parent=59 // pred_check_branch
          %5361 = sbr.rel (%p5359) target = $region88
        $region87: #{cnn_forward.1} parent=59 // pred_region
          %5363 = vsyncadd %s5356, 0
          %s5364 = scalar_lea.hbm %s10, %s28
          %s5366 = sshll.u32 %s5358, 4
          %s5367 = int_to_ptr.vmem [resolvable:$true] %s5366
          %s5368 = sshll.u32 %s5364, 4
          %s5369 = int_to_ptr.hbm [resolvable:$true] %s5368
          %5371 = dma.vmem_to_hbm [thread:$0]  %s5367, 16, %s5369, %s5356
        $region88: #{cnn_forward.1} parent=59 // pred_fallthru
          _
      $region60: #{cnn_forward.1} parent=5 // pred_fallthru
        _
      %p5372 = scmp.le.s32.totalorder 2, %s23
      // Predicated region
      $region89: #{cnn_forward.1} parent=5 // pred_check
        %p5373 = pneg %p5372
      $region90: #{cnn_forward.1} parent=5 // pred_check_branch
        %5375 = sbr.rel (%p5373) target = $region92
      $region91: #{cnn_forward.1} parent=5 // pred_region
        %s5376 = ssub.s32 %s23, 2
        // Predicated region
        $region93: #{cnn_forward.1} parent=91 // pred_check
          %p5377 = pneg %p272
        $region94: #{cnn_forward.1} parent=91 // pred_check_branch
          %5379 = sbr.rel (%p5377) target = $region96
        $region95: #{cnn_forward.1} parent=91 // pred_region
          %s5380 = sand.u32 %s257, 1
          %s5381 = scalar_lea.sflag [#allocation7], %s5380
          %s5382 = sand.u32 %s257, 1
          %s5383 = scalar_lea.vmem [#allocation16], %s5382
          %5385 = dma.done %s5381, 16
        $region96: #{cnn_forward.1} parent=91 // pred_fallthru
          _
      $region92: #{cnn_forward.1} parent=5 // pred_fallthru
        _
    $region6: #{cnn_forward.1} parent=1 // loop_footer
      %s27 = sadd.s32 1, %s23
    $region7: #{cnn_forward.1} parent=1 // loop_footer_branch
      %22 = sbr.rel target = $region3
    $region8: #{cnn_forward.1} parent=1 // loop_exit
      _
    %5386 = vsyncpa [#allocation6], 1
    %s5387 = scalar_lea.sflag [#allocation6], 1
    %5388 = vsyncpa %s5387, 1
    %5389 = vsyncpa [#allocation9], 1
    %5390 = vsyncpa [#allocation12], 1
    %5391 = vsyncpa [#allocation15], 1
    %5392 = vsyncpa [#allocation7], 1
    %s5393 = scalar_lea.sflag [#allocation7], 1
    %5394 = vsyncpa %s5393, 1

</llo_original>
